<compile_context>
chip_gen: v7x
topology: tpu7x:2x2x1
jax: 0.10.0
libtpu: 0.0.40
codegen_flags: <defaults>
</compile_context>

<pallas_src>
import functools

import jax
import jax.numpy as jnp
import numpy as np
from jax import lax
from jax.experimental import pallas as pl
from jax.experimental.pallas import tpu as pltpu

CPAD = 128  # lane-dense channel padding


# ----------------------------------------------------------------------------
# Fused Pallas kernel: 4 conv blocks + 3 heads, everything VMEM-resident.
# ----------------------------------------------------------------------------
def discriminator_kernel(x_ref, g1_ref, g2_ref, g3_ref, g4_ref,
                         w_ref, b_ref, s_ref, t_ref, wh_ref, bh_ref,
                         adv_ref, aux_ref, lat_ref, *, n_classes, code_dim):
    x = x_ref[...]                                      # (N*H*W, 128) f32
    g_refs = (g1_ref, g2_ref, g3_ref, g4_ref)

    for blk, g_ref in enumerate(g_refs):
        m_out = g_ref.shape[1]
        acc = jnp.zeros((m_out, CPAD), jnp.float32)
        for k in range(9):                              # 3x3 conv taps
            tap = jnp.dot(g_ref[k], x,                  # gather (im2col tap)
                          preferred_element_type=jnp.float32)
            acc = acc + jnp.dot(tap, w_ref[blk * 9 + k],
                                preferred_element_type=jnp.float32)
        y = acc + b_ref[blk]                            # conv bias
        y = jnp.where(y > 0, y, 0.2 * y)                # LeakyReLU(0.2)
        # Dropout2d(0.25) is identity in inference mode.
        x = y * s_ref[blk] + t_ref[blk]                 # BatchNorm2d (eval)

    # x is now the (N, 128) flattened feature matrix (ds_size == 1).
    z = jnp.dot(x, wh_ref[...],
                preferred_element_type=jnp.float32) + bh_ref[...]   # (N, 128)

    logits = z[:, 0:n_classes]                          # aux head
    m = jnp.max(logits, axis=-1, keepdims=True)
    e = jnp.exp(logits - m)
    aux_ref[...] = e / jnp.sum(e, axis=-1, keepdims=True)           # Softmax
    lat_ref[...] = z[:, n_classes:n_classes + code_dim]             # latent
    adv_ref[...] = z[:, n_classes + code_dim:n_classes + code_dim + 1]


# ----------------------------------------------------------------------------
# Host-side parameter packing (done once at init).
# ----------------------------------------------------------------------------
def make_gather_matrix(batch, h, w):
    """0/1 matrices G[k] with (G[k] @ X)[row] = input pixel feeding conv tap k.

    Folds im2col, stride=2 and pad=1 into a plain matmul; out-of-bounds taps
    are all-zero rows (implicit zero padding)."""
    ho, wo = h // 2, w // 2
    g = np.zeros((9, batch * ho * wo, batch * h * w), np.float32)
    for n in range(batch):
        for i in range(ho):
            for j in range(wo):
                row = n * ho * wo + i * wo + j
                for kh in range(3):
                    for kw in range(3):
                        ih, iw = 2 * i + kh - 1, 2 * j + kw - 1
                        if 0 <= ih < h and 0 <= iw < w:
                            g[kh * 3 + kw, row, n * h * w + ih * w + iw] = 1.0
    return g


def pack_params(params, batch, img_size):
    # TODO(synk): ds_size > 1 would need the NCHW flatten permutation folded
    # into the head weights; only img_size // 2**4 == 1 is handled here.
    assert img_size // 2 ** 4 == 1, "packing assumes ds_size == 1"

    gathers = [jnp.asarray(make_gather_matrix(batch, img_size >> b, img_size >> b))
               for b in range(4)]

    w_taps = np.zeros((4 * 9, CPAD, CPAD), np.float32)
    biases = np.zeros((4, 1, CPAD), np.float32)
    scales = np.ones((4, 1, CPAD), np.float32)    # padded lanes: scale=1
    shifts = np.zeros((4, 1, CPAD), np.float32)   # padded lanes: shift=0
    for blk, (w, bias, scale, shift) in enumerate(params["blocks"]):
        w = np.asarray(w)
        cin, cout = w.shape[2], w.shape[3]
        for kh in range(3):
            for kw in range(3):
                w_taps[blk * 9 + kh * 3 + kw, :cin, :cout] = w[kh, kw]
        biases[blk, 0, :cout] = np.asarray(bias)
        scales[blk, 0, :cout] = np.asarray(scale)
        shifts[blk, 0, :cout] = np.asarray(shift)

    wa, ba, wx, bx, wl, bl = params["heads"]
    feat_dim = wa.shape[0]
    assert feat_dim == CPAD
    n_classes, code_dim = wx.shape[1], wl.shape[1]
    wh = np.zeros((CPAD, CPAD), np.float32)      # [aux | latent | adv | 0...]
    bh = np.zeros((1, CPAD), np.float32)
    wh[:, 0:n_classes] = np.asarray(wx)
    wh[:, n_classes:n_classes + code_dim] = np.asarray(wl)
    wh[:, n_classes + code_dim:n_classes + code_dim + 1] = np.asarray(wa)
    bh[0, 0:n_classes] = np.asarray(bx)
    bh[0, n_classes:n_classes + code_dim] = np.asarray(bl)
    bh[0, n_classes + code_dim] = np.asarray(ba)[0]

    return {
        "gathers": gathers,
        "w_taps": jnp.asarray(w_taps),
        "biases": jnp.asarray(biases),
        "scales": jnp.asarray(scales),
        "shifts": jnp.asarray(shifts),
        "wh": jnp.asarray(wh),
        "bh": jnp.asarray(bh),
        "n_classes": int(n_classes),
        "code_dim": int(code_dim),
    }


# ----------------------------------------------------------------------------
# Forward wrapper: one pallas_call for the entire network.
# ----------------------------------------------------------------------------
def discriminator_forward(img_nchw, packed):
    n, c, h, w = img_nchw.shape
    # Input prep (tiny, one-time): NCHW -> (N*H*W, C) rows, pad C to 128 lanes.
    x = jnp.transpose(img_nchw, (0, 2, 3, 1)).astype(jnp.float32)
    x = x.reshape(n * h * w, c)
    x = jnp.pad(x, ((0, 0), (0, CPAD - c)))

    g1, g2, g3, g4 = packed["gathers"]
    kernel = functools.partial(discriminator_kernel,
                               n_classes=packed["n_classes"],
                               code_dim=packed["code_dim"])
    out_shape = (
        jax.ShapeDtypeStruct((n, 1), jnp.float32),                   # validity
        jax.ShapeDtypeStruct((n, packed["n_classes"]), jnp.float32), # label
        jax.ShapeDtypeStruct((n, packed["code_dim"]), jnp.float32),  # latent
    )
    validity, label, latent = pl.pallas_call(
        kernel,
        out_shape=out_shape,
        compiler_params=pltpu.CompilerParams(vmem_limit_bytes=32 * 1024 * 1024),
    )(x, g1, g2, g3, g4, packed["w_taps"], packed["biases"],
      packed["scales"], packed["shifts"], packed["wh"], packed["bh"])
    return validity, label, latent


# ----------------------------------------------------------------------------
# Parameter init (logical, unpadded) and pure-JAX reference.
# ----------------------------------------------------------------------------
def init_params(key, channels=4, img_size=16, n_classes=10, code_dim=2):
    keys = jax.random.split(key, 24)
    ki = 0
    eps = 0.8   # nn.BatchNorm2d(out_filters, 0.8) -> eps=0.8
    cins, couts = [channels, 16, 32, 64], [16, 32, 64, 128]
    blocks = []
    for i, (cin, cout) in enumerate(zip(cins, couts)):
        w = 0.05 * jax.random.normal(keys[ki], (3, 3, cin, cout), jnp.float32); ki += 1
        b = 0.05 * jax.random.normal(keys[ki], (cout,), jnp.float32); ki += 1
        if i == 0:          # first block has bn=False
            scale = jnp.ones((cout,), jnp.float32)
            shift = jnp.zeros((cout,), jnp.float32)
        else:               # inference BN with running_mean=0, running_var=1
            gamma = 1.0 + 0.1 * jax.random.normal(keys[ki], (cout,), jnp.float32); ki += 1
            beta = 0.1 * jax.random.normal(keys[ki], (cout,), jnp.float32); ki += 1
            scale = gamma / jnp.sqrt(1.0 + eps)
            shift = beta
        blocks.append((w, b, scale, shift))

    feat_dim = 128 * (img_size // 2 ** 4) ** 2
    def lin(shape):
        nonlocal ki
        w = 0.05 * jax.random.normal(keys[ki], shape, jnp.float32); ki += 1
        b = 0.05 * jax.random.normal(keys[ki], (shape[1],), jnp.float32); ki += 1
        return w, b
    wa, ba = lin((feat_dim, 1))
    wx, bx = lin((feat_dim, n_classes))
    wl, bl = lin((feat_dim, code_dim))
    return {"blocks": blocks, "heads": (wa, ba, wx, bx, wl, bl)}


def reference_forward(img_nchw, params):
    x = jnp.transpose(img_nchw, (0, 2, 3, 1)).astype(jnp.float32)
    for (w, b, scale, shift) in params["blocks"]:
        y = lax.conv_general_dilated(
            x, w, window_strides=(2, 2), padding=((1, 1), (1, 1)),
            dimension_numbers=("NHWC", "HWIO", "NHWC"),
            precision=lax.Precision.HIGHEST) + b
        y = jnp.where(y > 0, y, 0.2 * y)
        x = y * scale + shift
    feat = jnp.transpose(x, (0, 3, 1, 2)).reshape(x.shape[0], -1)
    wa, ba, wx, bx, wl, bl = params["heads"]
    validity = feat @ wa + ba
    label = jax.nn.softmax(feat @ wx + bx, axis=1)
    latent = feat @ wl + bl
    return validity, label, latent


if __name__ == "__main__":
    key = jax.random.PRNGKey(0)
    k_img, k_params = jax.random.split(key)

    channels, img_size, n_classes, code_dim, batch = 4, 16, 10, 2, 2
    params = init_params(k_params, channels, img_size, n_classes, code_dim)
    packed = pack_params(params, batch, img_size)
    img = jax.random.normal(k_img, (batch, channels, img_size, img_size),
                            jnp.float32)

    fwd = jax.jit(lambda x: discriminator_forward(x, packed))
    validity, label, latent = fwd(img)
    jax.block_until_ready((validity, label, latent))

    assert validity.shape == (batch, 1)
    assert label.shape == (batch, n_classes)
    assert latent.shape == (batch, code_dim)

    # Sanity check against a pure-JAX reference.
    v_ref, l_ref, c_ref = reference_forward(img, params)
    np.testing.assert_allclose(np.asarray(validity), np.asarray(v_ref),
                               rtol=5e-3, atol=5e-3)
    np.testing.assert_allclose(np.asarray(label), np.asarray(l_ref),
                               rtol=5e-3, atol=5e-3)
    np.testing.assert_allclose(np.asarray(latent), np.asarray(c_ref),
                               rtol=5e-3, atol=5e-3)

    # TODO(synk): training-mode Dropout2d / batch-stat BatchNorm not implemented
    # (inference semantics used: dropout = identity, BN uses running stats).
    print("KERNEL_OK")
</pallas_src>

<mosaic_0001>
module attributes {stable_mosaic.version = 11 : i64} {
  func.func @discriminator_kernel(%arg0: memref<512x128xf32, #tpu.memory_space<vmem>>, %arg1: memref<9x128x512xf32, #tpu.memory_space<vmem>>, %arg2: memref<9x32x128xf32, #tpu.memory_space<vmem>>, %arg3: memref<9x8x32xf32, #tpu.memory_space<vmem>>, %arg4: memref<9x2x8xf32, #tpu.memory_space<vmem>>, %arg5: memref<36x128x128xf32, #tpu.memory_space<vmem>>, %arg6: memref<4x1x128xf32, #tpu.memory_space<vmem>>, %arg7: memref<4x1x128xf32, #tpu.memory_space<vmem>>, %arg8: memref<4x1x128xf32, #tpu.memory_space<vmem>>, %arg9: memref<128x128xf32, #tpu.memory_space<vmem>>, %arg10: memref<1x128xf32, #tpu.memory_space<vmem>>, %arg11: memref<2x1xf32, #tpu.memory_space<vmem>>, %arg12: memref<2x10xf32, #tpu.memory_space<vmem>>, %arg13: memref<2x2xf32, #tpu.memory_space<vmem>>) attributes {dimension_semantics = [], scalar_prefetch = 0 : i64, scratch_operands = 0 : i64, tpu.core_type = #tpu.core_type<tc>} {
    %c0 = arith.constant 0 : index
    %c0_0 = arith.constant 0 : index
    %0 = vector.load %arg0[%c0, %c0_0] : memref<512x128xf32, #tpu.memory_space<vmem>>, vector<512x128xf32>
    %cst = arith.constant 0.000000e+00 : f32
    %1 = vector.broadcast %cst : f32 to vector<128x128xf32>
    %c0_1 = arith.constant 0 : index
    %c0_2 = arith.constant 0 : index
    %c0_3 = arith.constant 0 : index
    %2 = vector.load %arg1[%c0_1, %c0_2, %c0_3] : memref<9x128x512xf32, #tpu.memory_space<vmem>>, vector<1x128x512xf32>
    %3 = vector.shape_cast %2 : vector<1x128x512xf32> to vector<128x512xf32>
    %cst_4 = arith.constant dense<0.000000e+00> : vector<128x128xf32>
    %4 = tpu.matmul %3, %0, %cst_4 {dimension_numbers = #tpu.dot_dimension_numbers<[1], [0], [0], [1], [0, 0, 1, 1], [], []>} : vector<128x512xf32>, vector<512x128xf32>, vector<128x128xf32> -> vector<128x128xf32>
    %c0_5 = arith.constant 0 : index
    %c0_6 = arith.constant 0 : index
    %c0_7 = arith.constant 0 : index
    %5 = vector.load %arg5[%c0_5, %c0_6, %c0_7] : memref<36x128x128xf32, #tpu.memory_space<vmem>>, vector<1x128x128xf32>
    %6 = vector.shape_cast %5 : vector<1x128x128xf32> to vector<128x128xf32>
    %cst_8 = arith.constant dense<0.000000e+00> : vector<128x128xf32>
    %7 = tpu.matmul %4, %6, %cst_8 {dimension_numbers = #tpu.dot_dimension_numbers<[1], [0], [0], [1], [0, 0, 1, 1], [], []>} : vector<128x128xf32>, vector<128x128xf32>, vector<128x128xf32> -> vector<128x128xf32>
    %8 = arith.addf %1, %7 : vector<128x128xf32>
    %c1 = arith.constant 1 : index
    %c0_9 = arith.constant 0 : index
    %c0_10 = arith.constant 0 : index
    %9 = vector.load %arg1[%c1, %c0_9, %c0_10] : memref<9x128x512xf32, #tpu.memory_space<vmem>>, vector<1x128x512xf32>
    %10 = vector.shape_cast %9 : vector<1x128x512xf32> to vector<128x512xf32>
    %cst_11 = arith.constant dense<0.000000e+00> : vector<128x128xf32>
    %11 = tpu.matmul %10, %0, %cst_11 {dimension_numbers = #tpu.dot_dimension_numbers<[1], [0], [0], [1], [0, 0, 1, 1], [], []>} : vector<128x512xf32>, vector<512x128xf32>, vector<128x128xf32> -> vector<128x128xf32>
    %c1_12 = arith.constant 1 : index
    %c0_13 = arith.constant 0 : index
    %c0_14 = arith.constant 0 : index
    %12 = vector.load %arg5[%c1_12, %c0_13, %c0_14] : memref<36x128x128xf32, #tpu.memory_space<vmem>>, vector<1x128x128xf32>
    %13 = vector.shape_cast %12 : vector<1x128x128xf32> to vector<128x128xf32>
    %cst_15 = arith.constant dense<0.000000e+00> : vector<128x128xf32>
    %14 = tpu.matmul %11, %13, %cst_15 {dimension_numbers = #tpu.dot_dimension_numbers<[1], [0], [0], [1], [0, 0, 1, 1], [], []>} : vector<128x128xf32>, vector<128x128xf32>, vector<128x128xf32> -> vector<128x128xf32>
    %15 = arith.addf %8, %14 : vector<128x128xf32>
    %c2 = arith.constant 2 : index
    %c0_16 = arith.constant 0 : index
    %c0_17 = arith.constant 0 : index
    %16 = vector.load %arg1[%c2, %c0_16, %c0_17] : memref<9x128x512xf32, #tpu.memory_space<vmem>>, vector<1x128x512xf32>
    %17 = vector.shape_cast %16 : vector<1x128x512xf32> to vector<128x512xf32>
    %cst_18 = arith.constant dense<0.000000e+00> : vector<128x128xf32>
    %18 = tpu.matmul %17, %0, %cst_18 {dimension_numbers = #tpu.dot_dimension_numbers<[1], [0], [0], [1], [0, 0, 1, 1], [], []>} : vector<128x512xf32>, vector<512x128xf32>, vector<128x128xf32> -> vector<128x128xf32>
    %c2_19 = arith.constant 2 : index
    %c0_20 = arith.constant 0 : index
    %c0_21 = arith.constant 0 : index
    %19 = vector.load %arg5[%c2_19, %c0_20, %c0_21] : memref<36x128x128xf32, #tpu.memory_space<vmem>>, vector<1x128x128xf32>
    %20 = vector.shape_cast %19 : vector<1x128x128xf32> to vector<128x128xf32>
    %cst_22 = arith.constant dense<0.000000e+00> : vector<128x128xf32>
    %21 = tpu.matmul %18, %20, %cst_22 {dimension_numbers = #tpu.dot_dimension_numbers<[1], [0], [0], [1], [0, 0, 1, 1], [], []>} : vector<128x128xf32>, vector<128x128xf32>, vector<128x128xf32> -> vector<128x128xf32>
    %22 = arith.addf %15, %21 : vector<128x128xf32>
    %c3 = arith.constant 3 : index
    %c0_23 = arith.constant 0 : index
    %c0_24 = arith.constant 0 : index
    %23 = vector.load %arg1[%c3, %c0_23, %c0_24] : memref<9x128x512xf32, #tpu.memory_space<vmem>>, vector<1x128x512xf32>
    %24 = vector.shape_cast %23 : vector<1x128x512xf32> to vector<128x512xf32>
    %cst_25 = arith.constant dense<0.000000e+00> : vector<128x128xf32>
    %25 = tpu.matmul %24, %0, %cst_25 {dimension_numbers = #tpu.dot_dimension_numbers<[1], [0], [0], [1], [0, 0, 1, 1], [], []>} : vector<128x512xf32>, vector<512x128xf32>, vector<128x128xf32> -> vector<128x128xf32>
    %c3_26 = arith.constant 3 : index
    %c0_27 = arith.constant 0 : index
    %c0_28 = arith.constant 0 : index
    %26 = vector.load %arg5[%c3_26, %c0_27, %c0_28] : memref<36x128x128xf32, #tpu.memory_space<vmem>>, vector<1x128x128xf32>
    %27 = vector.shape_cast %26 : vector<1x128x128xf32> to vector<128x128xf32>
    %cst_29 = arith.constant dense<0.000000e+00> : vector<128x128xf32>
    %28 = tpu.matmul %25, %27, %cst_29 {dimension_numbers = #tpu.dot_dimension_numbers<[1], [0], [0], [1], [0, 0, 1, 1], [], []>} : vector<128x128xf32>, vector<128x128xf32>, vector<128x128xf32> -> vector<128x128xf32>
    %29 = arith.addf %22, %28 : vector<128x128xf32>
    %c4 = arith.constant 4 : index
    %c0_30 = arith.constant 0 : index
    %c0_31 = arith.constant 0 : index
    %30 = vector.load %arg1[%c4, %c0_30, %c0_31] : memref<9x128x512xf32, #tpu.memory_space<vmem>>, vector<1x128x512xf32>
    %31 = vector.shape_cast %30 : vector<1x128x512xf32> to vector<128x512xf32>
    %cst_32 = arith.constant dense<0.000000e+00> : vector<128x128xf32>
    %32 = tpu.matmul %31, %0, %cst_32 {dimension_numbers = #tpu.dot_dimension_numbers<[1], [0], [0], [1], [0, 0, 1, 1], [], []>} : vector<128x512xf32>, vector<512x128xf32>, vector<128x128xf32> -> vector<128x128xf32>
    %c4_33 = arith.constant 4 : index
    %c0_34 = arith.constant 0 : index
    %c0_35 = arith.constant 0 : index
    %33 = vector.load %arg5[%c4_33, %c0_34, %c0_35] : memref<36x128x128xf32, #tpu.memory_space<vmem>>, vector<1x128x128xf32>
    %34 = vector.shape_cast %33 : vector<1x128x128xf32> to vector<128x128xf32>
    %cst_36 = arith.constant dense<0.000000e+00> : vector<128x128xf32>
    %35 = tpu.matmul %32, %34, %cst_36 {dimension_numbers = #tpu.dot_dimension_numbers<[1], [0], [0], [1], [0, 0, 1, 1], [], []>} : vector<128x128xf32>, vector<128x128xf32>, vector<128x128xf32> -> vector<128x128xf32>
    %36 = arith.addf %29, %35 : vector<128x128xf32>
    %c5 = arith.constant 5 : index
    %c0_37 = arith.constant 0 : index
    %c0_38 = arith.constant 0 : index
    %37 = vector.load %arg1[%c5, %c0_37, %c0_38] : memref<9x128x512xf32, #tpu.memory_space<vmem>>, vector<1x128x512xf32>
    %38 = vector.shape_cast %37 : vector<1x128x512xf32> to vector<128x512xf32>
    %cst_39 = arith.constant dense<0.000000e+00> : vector<128x128xf32>
    %39 = tpu.matmul %38, %0, %cst_39 {dimension_numbers = #tpu.dot_dimension_numbers<[1], [0], [0], [1], [0, 0, 1, 1], [], []>} : vector<128x512xf32>, vector<512x128xf32>, vector<128x128xf32> -> vector<128x128xf32>
    %c5_40 = arith.constant 5 : index
    %c0_41 = arith.constant 0 : index
    %c0_42 = arith.constant 0 : index
    %40 = vector.load %arg5[%c5_40, %c0_41, %c0_42] : memref<36x128x128xf32, #tpu.memory_space<vmem>>, vector<1x128x128xf32>
    %41 = vector.shape_cast %40 : vector<1x128x128xf32> to vector<128x128xf32>
    %cst_43 = arith.constant dense<0.000000e+00> : vector<128x128xf32>
    %42 = tpu.matmul %39, %41, %cst_43 {dimension_numbers = #tpu.dot_dimension_numbers<[1], [0], [0], [1], [0, 0, 1, 1], [], []>} : vector<128x128xf32>, vector<128x128xf32>, vector<128x128xf32> -> vector<128x128xf32>
    %43 = arith.addf %36, %42 : vector<128x128xf32>
    %c6 = arith.constant 6 : index
    %c0_44 = arith.constant 0 : index
    %c0_45 = arith.constant 0 : index
    %44 = vector.load %arg1[%c6, %c0_44, %c0_45] : memref<9x128x512xf32, #tpu.memory_space<vmem>>, vector<1x128x512xf32>
    %45 = vector.shape_cast %44 : vector<1x128x512xf32> to vector<128x512xf32>
    %cst_46 = arith.constant dense<0.000000e+00> : vector<128x128xf32>
    %46 = tpu.matmul %45, %0, %cst_46 {dimension_numbers = #tpu.dot_dimension_numbers<[1], [0], [0], [1], [0, 0, 1, 1], [], []>} : vector<128x512xf32>, vector<512x128xf32>, vector<128x128xf32> -> vector<128x128xf32>
    %c6_47 = arith.constant 6 : index
    %c0_48 = arith.constant 0 : index
    %c0_49 = arith.constant 0 : index
    %47 = vector.load %arg5[%c6_47, %c0_48, %c0_49] : memref<36x128x128xf32, #tpu.memory_space<vmem>>, vector<1x128x128xf32>
    %48 = vector.shape_cast %47 : vector<1x128x128xf32> to vector<128x128xf32>
    %cst_50 = arith.constant dense<0.000000e+00> : vector<128x128xf32>
    %49 = tpu.matmul %46, %48, %cst_50 {dimension_numbers = #tpu.dot_dimension_numbers<[1], [0], [0], [1], [0, 0, 1, 1], [], []>} : vector<128x128xf32>, vector<128x128xf32>, vector<128x128xf32> -> vector<128x128xf32>
    %50 = arith.addf %43, %49 : vector<128x128xf32>
    %c7 = arith.constant 7 : index
    %c0_51 = arith.constant 0 : index
    %c0_52 = arith.constant 0 : index
    %51 = vector.load %arg1[%c7, %c0_51, %c0_52] : memref<9x128x512xf32, #tpu.memory_space<vmem>>, vector<1x128x512xf32>
    %52 = vector.shape_cast %51 : vector<1x128x512xf32> to vector<128x512xf32>
    %cst_53 = arith.constant dense<0.000000e+00> : vector<128x128xf32>
    %53 = tpu.matmul %52, %0, %cst_53 {dimension_numbers = #tpu.dot_dimension_numbers<[1], [0], [0], [1], [0, 0, 1, 1], [], []>} : vector<128x512xf32>, vector<512x128xf32>, vector<128x128xf32> -> vector<128x128xf32>
    %c7_54 = arith.constant 7 : index
    %c0_55 = arith.constant 0 : index
    %c0_56 = arith.constant 0 : index
    %54 = vector.load %arg5[%c7_54, %c0_55, %c0_56] : memref<36x128x128xf32, #tpu.memory_space<vmem>>, vector<1x128x128xf32>
    %55 = vector.shape_cast %54 : vector<1x128x128xf32> to vector<128x128xf32>
    %cst_57 = arith.constant dense<0.000000e+00> : vector<128x128xf32>
    %56 = tpu.matmul %53, %55, %cst_57 {dimension_numbers = #tpu.dot_dimension_numbers<[1], [0], [0], [1], [0, 0, 1, 1], [], []>} : vector<128x128xf32>, vector<128x128xf32>, vector<128x128xf32> -> vector<128x128xf32>
    %57 = arith.addf %50, %56 : vector<128x128xf32>
    %c8 = arith.constant 8 : index
    %c0_58 = arith.constant 0 : index
    %c0_59 = arith.constant 0 : index
    %58 = vector.load %arg1[%c8, %c0_58, %c0_59] : memref<9x128x512xf32, #tpu.memory_space<vmem>>, vector<1x128x512xf32>
    %59 = vector.shape_cast %58 : vector<1x128x512xf32> to vector<128x512xf32>
    %cst_60 = arith.constant dense<0.000000e+00> : vector<128x128xf32>
    %60 = tpu.matmul %59, %0, %cst_60 {dimension_numbers = #tpu.dot_dimension_numbers<[1], [0], [0], [1], [0, 0, 1, 1], [], []>} : vector<128x512xf32>, vector<512x128xf32>, vector<128x128xf32> -> vector<128x128xf32>
    %c8_61 = arith.constant 8 : index
    %c0_62 = arith.constant 0 : index
    %c0_63 = arith.constant 0 : index
    %61 = vector.load %arg5[%c8_61, %c0_62, %c0_63] : memref<36x128x128xf32, #tpu.memory_space<vmem>>, vector<1x128x128xf32>
    %62 = vector.shape_cast %61 : vector<1x128x128xf32> to vector<128x128xf32>
    %cst_64 = arith.constant dense<0.000000e+00> : vector<128x128xf32>
    %63 = tpu.matmul %60, %62, %cst_64 {dimension_numbers = #tpu.dot_dimension_numbers<[1], [0], [0], [1], [0, 0, 1, 1], [], []>} : vector<128x128xf32>, vector<128x128xf32>, vector<128x128xf32> -> vector<128x128xf32>
    %64 = arith.addf %57, %63 : vector<128x128xf32>
    %c0_65 = arith.constant 0 : index
    %c0_66 = arith.constant 0 : index
    %c0_67 = arith.constant 0 : index
    %65 = vector.load %arg6[%c0_65, %c0_66, %c0_67] : memref<4x1x128xf32, #tpu.memory_space<vmem>>, vector<1x1x128xf32>
    %66 = vector.shape_cast %65 : vector<1x1x128xf32> to vector<1x128xf32>
    %67 = vector.broadcast %66 : vector<1x128xf32> to vector<128x128xf32>
    %68 = arith.addf %64, %67 : vector<128x128xf32>
    %cst_68 = arith.constant 0.000000e+00 : f32
    %69 = vector.broadcast %cst_68 : f32 to vector<128x128xf32>
    %70 = arith.cmpf ogt, %68, %69 : vector<128x128xf32>
    %cst_69 = arith.constant 2.000000e-01 : f32
    %71 = vector.broadcast %cst_69 : f32 to vector<128x128xf32>
    %72 = arith.mulf %71, %68 : vector<128x128xf32>
    %73 = arith.select %70, %68, %72 : vector<128x128xi1>, vector<128x128xf32>
    %c0_70 = arith.constant 0 : index
    %c0_71 = arith.constant 0 : index
    %c0_72 = arith.constant 0 : index
    %74 = vector.load %arg7[%c0_70, %c0_71, %c0_72] : memref<4x1x128xf32, #tpu.memory_space<vmem>>, vector<1x1x128xf32>
    %75 = vector.shape_cast %74 : vector<1x1x128xf32> to vector<1x128xf32>
    %76 = vector.broadcast %75 : vector<1x128xf32> to vector<128x128xf32>
    %77 = arith.mulf %73, %76 : vector<128x128xf32>
    %c0_73 = arith.constant 0 : index
    %c0_74 = arith.constant 0 : index
    %c0_75 = arith.constant 0 : index
    %78 = vector.load %arg8[%c0_73, %c0_74, %c0_75] : memref<4x1x128xf32, #tpu.memory_space<vmem>>, vector<1x1x128xf32>
    %79 = vector.shape_cast %78 : vector<1x1x128xf32> to vector<1x128xf32>
    %80 = vector.broadcast %79 : vector<1x128xf32> to vector<128x128xf32>
    %81 = arith.addf %77, %80 : vector<128x128xf32>
    %cst_76 = arith.constant 0.000000e+00 : f32
    %82 = vector.broadcast %cst_76 : f32 to vector<32x128xf32>
    %c0_77 = arith.constant 0 : index
    %c0_78 = arith.constant 0 : index
    %c0_79 = arith.constant 0 : index
    %83 = vector.load %arg2[%c0_77, %c0_78, %c0_79] : memref<9x32x128xf32, #tpu.memory_space<vmem>>, vector<1x32x128xf32>
    %84 = vector.shape_cast %83 : vector<1x32x128xf32> to vector<32x128xf32>
    %cst_80 = arith.constant dense<0.000000e+00> : vector<32x128xf32>
    %85 = tpu.matmul %84, %81, %cst_80 {dimension_numbers = #tpu.dot_dimension_numbers<[1], [0], [0], [1], [0, 0, 1, 1], [], []>} : vector<32x128xf32>, vector<128x128xf32>, vector<32x128xf32> -> vector<32x128xf32>
    %c9 = arith.constant 9 : index
    %c0_81 = arith.constant 0 : index
    %c0_82 = arith.constant 0 : index
    %86 = vector.load %arg5[%c9, %c0_81, %c0_82] : memref<36x128x128xf32, #tpu.memory_space<vmem>>, vector<1x128x128xf32>
    %87 = vector.shape_cast %86 : vector<1x128x128xf32> to vector<128x128xf32>
    %cst_83 = arith.constant dense<0.000000e+00> : vector<32x128xf32>
    %88 = tpu.matmul %85, %87, %cst_83 {dimension_numbers = #tpu.dot_dimension_numbers<[1], [0], [0], [1], [0, 0, 1, 1], [], []>} : vector<32x128xf32>, vector<128x128xf32>, vector<32x128xf32> -> vector<32x128xf32>
    %89 = arith.addf %82, %88 : vector<32x128xf32>
    %c1_84 = arith.constant 1 : index
    %c0_85 = arith.constant 0 : index
    %c0_86 = arith.constant 0 : index
    %90 = vector.load %arg2[%c1_84, %c0_85, %c0_86] : memref<9x32x128xf32, #tpu.memory_space<vmem>>, vector<1x32x128xf32>
    %91 = vector.shape_cast %90 : vector<1x32x128xf32> to vector<32x128xf32>
    %cst_87 = arith.constant dense<0.000000e+00> : vector<32x128xf32>
    %92 = tpu.matmul %91, %81, %cst_87 {dimension_numbers = #tpu.dot_dimension_numbers<[1], [0], [0], [1], [0, 0, 1, 1], [], []>} : vector<32x128xf32>, vector<128x128xf32>, vector<32x128xf32> -> vector<32x128xf32>
    %c10 = arith.constant 10 : index
    %c0_88 = arith.constant 0 : index
    %c0_89 = arith.constant 0 : index
    %93 = vector.load %arg5[%c10, %c0_88, %c0_89] : memref<36x128x128xf32, #tpu.memory_space<vmem>>, vector<1x128x128xf32>
    %94 = vector.shape_cast %93 : vector<1x128x128xf32> to vector<128x128xf32>
    %cst_90 = arith.constant dense<0.000000e+00> : vector<32x128xf32>
    %95 = tpu.matmul %92, %94, %cst_90 {dimension_numbers = #tpu.dot_dimension_numbers<[1], [0], [0], [1], [0, 0, 1, 1], [], []>} : vector<32x128xf32>, vector<128x128xf32>, vector<32x128xf32> -> vector<32x128xf32>
    %96 = arith.addf %89, %95 : vector<32x128xf32>
    %c2_91 = arith.constant 2 : index
    %c0_92 = arith.constant 0 : index
    %c0_93 = arith.constant 0 : index
    %97 = vector.load %arg2[%c2_91, %c0_92, %c0_93] : memref<9x32x128xf32, #tpu.memory_space<vmem>>, vector<1x32x128xf32>
    %98 = vector.shape_cast %97 : vector<1x32x128xf32> to vector<32x128xf32>
    %cst_94 = arith.constant dense<0.000000e+00> : vector<32x128xf32>
    %99 = tpu.matmul %98, %81, %cst_94 {dimension_numbers = #tpu.dot_dimension_numbers<[1], [0], [0], [1], [0, 0, 1, 1], [], []>} : vector<32x128xf32>, vector<128x128xf32>, vector<32x128xf32> -> vector<32x128xf32>
    %c11 = arith.constant 11 : index
    %c0_95 = arith.constant 0 : index
    %c0_96 = arith.constant 0 : index
    %100 = vector.load %arg5[%c11, %c0_95, %c0_96] : memref<36x128x128xf32, #tpu.memory_space<vmem>>, vector<1x128x128xf32>
    %101 = vector.shape_cast %100 : vector<1x128x128xf32> to vector<128x128xf32>
    %cst_97 = arith.constant dense<0.000000e+00> : vector<32x128xf32>
    %102 = tpu.matmul %99, %101, %cst_97 {dimension_numbers = #tpu.dot_dimension_numbers<[1], [0], [0], [1], [0, 0, 1, 1], [], []>} : vector<32x128xf32>, vector<128x128xf32>, vector<32x128xf32> -> vector<32x128xf32>
    %103 = arith.addf %96, %102 : vector<32x128xf32>
    %c3_98 = arith.constant 3 : index
    %c0_99 = arith.constant 0 : index
    %c0_100 = arith.constant 0 : index
    %104 = vector.load %arg2[%c3_98, %c0_99, %c0_100] : memref<9x32x128xf32, #tpu.memory_space<vmem>>, vector<1x32x128xf32>
    %105 = vector.shape_cast %104 : vector<1x32x128xf32> to vector<32x128xf32>
    %cst_101 = arith.constant dense<0.000000e+00> : vector<32x128xf32>
    %106 = tpu.matmul %105, %81, %cst_101 {dimension_numbers = #tpu.dot_dimension_numbers<[1], [0], [0], [1], [0, 0, 1, 1], [], []>} : vector<32x128xf32>, vector<128x128xf32>, vector<32x128xf32> -> vector<32x128xf32>
    %c12 = arith.constant 12 : index
    %c0_102 = arith.constant 0 : index
    %c0_103 = arith.constant 0 : index
    %107 = vector.load %arg5[%c12, %c0_102, %c0_103] : memref<36x128x128xf32, #tpu.memory_space<vmem>>, vector<1x128x128xf32>
    %108 = vector.shape_cast %107 : vector<1x128x128xf32> to vector<128x128xf32>
    %cst_104 = arith.constant dense<0.000000e+00> : vector<32x128xf32>
    %109 = tpu.matmul %106, %108, %cst_104 {dimension_numbers = #tpu.dot_dimension_numbers<[1], [0], [0], [1], [0, 0, 1, 1], [], []>} : vector<32x128xf32>, vector<128x128xf32>, vector<32x128xf32> -> vector<32x128xf32>
    %110 = arith.addf %103, %109 : vector<32x128xf32>
    %c4_105 = arith.constant 4 : index
    %c0_106 = arith.constant 0 : index
    %c0_107 = arith.constant 0 : index
    %111 = vector.load %arg2[%c4_105, %c0_106, %c0_107] : memref<9x32x128xf32, #tpu.memory_space<vmem>>, vector<1x32x128xf32>
    %112 = vector.shape_cast %111 : vector<1x32x128xf32> to vector<32x128xf32>
    %cst_108 = arith.constant dense<0.000000e+00> : vector<32x128xf32>
    %113 = tpu.matmul %112, %81, %cst_108 {dimension_numbers = #tpu.dot_dimension_numbers<[1], [0], [0], [1], [0, 0, 1, 1], [], []>} : vector<32x128xf32>, vector<128x128xf32>, vector<32x128xf32> -> vector<32x128xf32>
    %c13 = arith.constant 13 : index
    %c0_109 = arith.constant 0 : index
    %c0_110 = arith.constant 0 : index
    %114 = vector.load %arg5[%c13, %c0_109, %c0_110] : memref<36x128x128xf32, #tpu.memory_space<vmem>>, vector<1x128x128xf32>
    %115 = vector.shape_cast %114 : vector<1x128x128xf32> to vector<128x128xf32>
    %cst_111 = arith.constant dense<0.000000e+00> : vector<32x128xf32>
    %116 = tpu.matmul %113, %115, %cst_111 {dimension_numbers = #tpu.dot_dimension_numbers<[1], [0], [0], [1], [0, 0, 1, 1], [], []>} : vector<32x128xf32>, vector<128x128xf32>, vector<32x128xf32> -> vector<32x128xf32>
    %117 = arith.addf %110, %116 : vector<32x128xf32>
    %c5_112 = arith.constant 5 : index
    %c0_113 = arith.constant 0 : index
    %c0_114 = arith.constant 0 : index
    %118 = vector.load %arg2[%c5_112, %c0_113, %c0_114] : memref<9x32x128xf32, #tpu.memory_space<vmem>>, vector<1x32x128xf32>
    %119 = vector.shape_cast %118 : vector<1x32x128xf32> to vector<32x128xf32>
    %cst_115 = arith.constant dense<0.000000e+00> : vector<32x128xf32>
    %120 = tpu.matmul %119, %81, %cst_115 {dimension_numbers = #tpu.dot_dimension_numbers<[1], [0], [0], [1], [0, 0, 1, 1], [], []>} : vector<32x128xf32>, vector<128x128xf32>, vector<32x128xf32> -> vector<32x128xf32>
    %c14 = arith.constant 14 : index
    %c0_116 = arith.constant 0 : index
    %c0_117 = arith.constant 0 : index
    %121 = vector.load %arg5[%c14, %c0_116, %c0_117] : memref<36x128x128xf32, #tpu.memory_space<vmem>>, vector<1x128x128xf32>
    %122 = vector.shape_cast %121 : vector<1x128x128xf32> to vector<128x128xf32>
    %cst_118 = arith.constant dense<0.000000e+00> : vector<32x128xf32>
    %123 = tpu.matmul %120, %122, %cst_118 {dimension_numbers = #tpu.dot_dimension_numbers<[1], [0], [0], [1], [0, 0, 1, 1], [], []>} : vector<32x128xf32>, vector<128x128xf32>, vector<32x128xf32> -> vector<32x128xf32>
    %124 = arith.addf %117, %123 : vector<32x128xf32>
    %c6_119 = arith.constant 6 : index
    %c0_120 = arith.constant 0 : index
    %c0_121 = arith.constant 0 : index
    %125 = vector.load %arg2[%c6_119, %c0_120, %c0_121] : memref<9x32x128xf32, #tpu.memory_space<vmem>>, vector<1x32x128xf32>
    %126 = vector.shape_cast %125 : vector<1x32x128xf32> to vector<32x128xf32>
    %cst_122 = arith.constant dense<0.000000e+00> : vector<32x128xf32>
    %127 = tpu.matmul %126, %81, %cst_122 {dimension_numbers = #tpu.dot_dimension_numbers<[1], [0], [0], [1], [0, 0, 1, 1], [], []>} : vector<32x128xf32>, vector<128x128xf32>, vector<32x128xf32> -> vector<32x128xf32>
    %c15 = arith.constant 15 : index
    %c0_123 = arith.constant 0 : index
    %c0_124 = arith.constant 0 : index
    %128 = vector.load %arg5[%c15, %c0_123, %c0_124] : memref<36x128x128xf32, #tpu.memory_space<vmem>>, vector<1x128x128xf32>
    %129 = vector.shape_cast %128 : vector<1x128x128xf32> to vector<128x128xf32>
    %cst_125 = arith.constant dense<0.000000e+00> : vector<32x128xf32>
    %130 = tpu.matmul %127, %129, %cst_125 {dimension_numbers = #tpu.dot_dimension_numbers<[1], [0], [0], [1], [0, 0, 1, 1], [], []>} : vector<32x128xf32>, vector<128x128xf32>, vector<32x128xf32> -> vector<32x128xf32>
    %131 = arith.addf %124, %130 : vector<32x128xf32>
    %c7_126 = arith.constant 7 : index
    %c0_127 = arith.constant 0 : index
    %c0_128 = arith.constant 0 : index
    %132 = vector.load %arg2[%c7_126, %c0_127, %c0_128] : memref<9x32x128xf32, #tpu.memory_space<vmem>>, vector<1x32x128xf32>
    %133 = vector.shape_cast %132 : vector<1x32x128xf32> to vector<32x128xf32>
    %cst_129 = arith.constant dense<0.000000e+00> : vector<32x128xf32>
    %134 = tpu.matmul %133, %81, %cst_129 {dimension_numbers = #tpu.dot_dimension_numbers<[1], [0], [0], [1], [0, 0, 1, 1], [], []>} : vector<32x128xf32>, vector<128x128xf32>, vector<32x128xf32> -> vector<32x128xf32>
    %c16 = arith.constant 16 : index
    %c0_130 = arith.constant 0 : index
    %c0_131 = arith.constant 0 : index
    %135 = vector.load %arg5[%c16, %c0_130, %c0_131] : memref<36x128x128xf32, #tpu.memory_space<vmem>>, vector<1x128x128xf32>
    %136 = vector.shape_cast %135 : vector<1x128x128xf32> to vector<128x128xf32>
    %cst_132 = arith.constant dense<0.000000e+00> : vector<32x128xf32>
    %137 = tpu.matmul %134, %136, %cst_132 {dimension_numbers = #tpu.dot_dimension_numbers<[1], [0], [0], [1], [0, 0, 1, 1], [], []>} : vector<32x128xf32>, vector<128x128xf32>, vector<32x128xf32> -> vector<32x128xf32>
    %138 = arith.addf %131, %137 : vector<32x128xf32>
    %c8_133 = arith.constant 8 : index
    %c0_134 = arith.constant 0 : index
    %c0_135 = arith.constant 0 : index
    %139 = vector.load %arg2[%c8_133, %c0_134, %c0_135] : memref<9x32x128xf32, #tpu.memory_space<vmem>>, vector<1x32x128xf32>
    %140 = vector.shape_cast %139 : vector<1x32x128xf32> to vector<32x128xf32>
    %cst_136 = arith.constant dense<0.000000e+00> : vector<32x128xf32>
    %141 = tpu.matmul %140, %81, %cst_136 {dimension_numbers = #tpu.dot_dimension_numbers<[1], [0], [0], [1], [0, 0, 1, 1], [], []>} : vector<32x128xf32>, vector<128x128xf32>, vector<32x128xf32> -> vector<32x128xf32>
    %c17 = arith.constant 17 : index
    %c0_137 = arith.constant 0 : index
    %c0_138 = arith.constant 0 : index
    %142 = vector.load %arg5[%c17, %c0_137, %c0_138] : memref<36x128x128xf32, #tpu.memory_space<vmem>>, vector<1x128x128xf32>
    %143 = vector.shape_cast %142 : vector<1x128x128xf32> to vector<128x128xf32>
    %cst_139 = arith.constant dense<0.000000e+00> : vector<32x128xf32>
    %144 = tpu.matmul %141, %143, %cst_139 {dimension_numbers = #tpu.dot_dimension_numbers<[1], [0], [0], [1], [0, 0, 1, 1], [], []>} : vector<32x128xf32>, vector<128x128xf32>, vector<32x128xf32> -> vector<32x128xf32>
    %145 = arith.addf %138, %144 : vector<32x128xf32>
    %c1_140 = arith.constant 1 : index
    %c0_141 = arith.constant 0 : index
    %c0_142 = arith.constant 0 : index
    %146 = vector.load %arg6[%c1_140, %c0_141, %c0_142] : memref<4x1x128xf32, #tpu.memory_space<vmem>>, vector<1x1x128xf32>
    %147 = vector.shape_cast %146 : vector<1x1x128xf32> to vector<1x128xf32>
    %148 = vector.broadcast %147 : vector<1x128xf32> to vector<32x128xf32>
    %149 = arith.addf %145, %148 : vector<32x128xf32>
    %cst_143 = arith.constant 0.000000e+00 : f32
    %150 = vector.broadcast %cst_143 : f32 to vector<32x128xf32>
    %151 = arith.cmpf ogt, %149, %150 : vector<32x128xf32>
    %cst_144 = arith.constant 2.000000e-01 : f32
    %152 = vector.broadcast %cst_144 : f32 to vector<32x128xf32>
    %153 = arith.mulf %152, %149 : vector<32x128xf32>
    %154 = arith.select %151, %149, %153 : vector<32x128xi1>, vector<32x128xf32>
    %c1_145 = arith.constant 1 : index
    %c0_146 = arith.constant 0 : index
    %c0_147 = arith.constant 0 : index
    %155 = vector.load %arg7[%c1_145, %c0_146, %c0_147] : memref<4x1x128xf32, #tpu.memory_space<vmem>>, vector<1x1x128xf32>
    %156 = vector.shape_cast %155 : vector<1x1x128xf32> to vector<1x128xf32>
    %157 = vector.broadcast %156 : vector<1x128xf32> to vector<32x128xf32>
    %158 = arith.mulf %154, %157 : vector<32x128xf32>
    %c1_148 = arith.constant 1 : index
    %c0_149 = arith.constant 0 : index
    %c0_150 = arith.constant 0 : index
    %159 = vector.load %arg8[%c1_148, %c0_149, %c0_150] : memref<4x1x128xf32, #tpu.memory_space<vmem>>, vector<1x1x128xf32>
    %160 = vector.shape_cast %159 : vector<1x1x128xf32> to vector<1x128xf32>
    %161 = vector.broadcast %160 : vector<1x128xf32> to vector<32x128xf32>
    %162 = arith.addf %158, %161 : vector<32x128xf32>
    %cst_151 = arith.constant 0.000000e+00 : f32
    %163 = vector.broadcast %cst_151 : f32 to vector<8x128xf32>
    %c0_152 = arith.constant 0 : index
    %c0_153 = arith.constant 0 : index
    %c0_154 = arith.constant 0 : index
    %164 = vector.load %arg3[%c0_152, %c0_153, %c0_154] : memref<9x8x32xf32, #tpu.memory_space<vmem>>, vector<1x8x32xf32>
    %165 = vector.shape_cast %164 : vector<1x8x32xf32> to vector<8x32xf32>
    %cst_155 = arith.constant dense<0.000000e+00> : vector<8x128xf32>
    %166 = tpu.matmul %165, %162, %cst_155 {dimension_numbers = #tpu.dot_dimension_numbers<[1], [0], [0], [1], [0, 0, 1, 1], [], []>} : vector<8x32xf32>, vector<32x128xf32>, vector<8x128xf32> -> vector<8x128xf32>
    %c18 = arith.constant 18 : index
    %c0_156 = arith.constant 0 : index
    %c0_157 = arith.constant 0 : index
    %167 = vector.load %arg5[%c18, %c0_156, %c0_157] : memref<36x128x128xf32, #tpu.memory_space<vmem>>, vector<1x128x128xf32>
    %168 = vector.shape_cast %167 : vector<1x128x128xf32> to vector<128x128xf32>
    %cst_158 = arith.constant dense<0.000000e+00> : vector<8x128xf32>
    %169 = tpu.matmul %166, %168, %cst_158 {dimension_numbers = #tpu.dot_dimension_numbers<[1], [0], [0], [1], [0, 0, 1, 1], [], []>} : vector<8x128xf32>, vector<128x128xf32>, vector<8x128xf32> -> vector<8x128xf32>
    %170 = arith.addf %163, %169 : vector<8x128xf32>
    %c1_159 = arith.constant 1 : index
    %c0_160 = arith.constant 0 : index
    %c0_161 = arith.constant 0 : index
    %171 = vector.load %arg3[%c1_159, %c0_160, %c0_161] : memref<9x8x32xf32, #tpu.memory_space<vmem>>, vector<1x8x32xf32>
    %172 = vector.shape_cast %171 : vector<1x8x32xf32> to vector<8x32xf32>
    %cst_162 = arith.constant dense<0.000000e+00> : vector<8x128xf32>
    %173 = tpu.matmul %172, %162, %cst_162 {dimension_numbers = #tpu.dot_dimension_numbers<[1], [0], [0], [1], [0, 0, 1, 1], [], []>} : vector<8x32xf32>, vector<32x128xf32>, vector<8x128xf32> -> vector<8x128xf32>
    %c19 = arith.constant 19 : index
    %c0_163 = arith.constant 0 : index
    %c0_164 = arith.constant 0 : index
    %174 = vector.load %arg5[%c19, %c0_163, %c0_164] : memref<36x128x128xf32, #tpu.memory_space<vmem>>, vector<1x128x128xf32>
    %175 = vector.shape_cast %174 : vector<1x128x128xf32> to vector<128x128xf32>
    %cst_165 = arith.constant dense<0.000000e+00> : vector<8x128xf32>
    %176 = tpu.matmul %173, %175, %cst_165 {dimension_numbers = #tpu.dot_dimension_numbers<[1], [0], [0], [1], [0, 0, 1, 1], [], []>} : vector<8x128xf32>, vector<128x128xf32>, vector<8x128xf32> -> vector<8x128xf32>
    %177 = arith.addf %170, %176 : vector<8x128xf32>
    %c2_166 = arith.constant 2 : index
    %c0_167 = arith.constant 0 : index
    %c0_168 = arith.constant 0 : index
    %178 = vector.load %arg3[%c2_166, %c0_167, %c0_168] : memref<9x8x32xf32, #tpu.memory_space<vmem>>, vector<1x8x32xf32>
    %179 = vector.shape_cast %178 : vector<1x8x32xf32> to vector<8x32xf32>
    %cst_169 = arith.constant dense<0.000000e+00> : vector<8x128xf32>
    %180 = tpu.matmul %179, %162, %cst_169 {dimension_numbers = #tpu.dot_dimension_numbers<[1], [0], [0], [1], [0, 0, 1, 1], [], []>} : vector<8x32xf32>, vector<32x128xf32>, vector<8x128xf32> -> vector<8x128xf32>
    %c20 = arith.constant 20 : index
    %c0_170 = arith.constant 0 : index
    %c0_171 = arith.constant 0 : index
    %181 = vector.load %arg5[%c20, %c0_170, %c0_171] : memref<36x128x128xf32, #tpu.memory_space<vmem>>, vector<1x128x128xf32>
    %182 = vector.shape_cast %181 : vector<1x128x128xf32> to vector<128x128xf32>
    %cst_172 = arith.constant dense<0.000000e+00> : vector<8x128xf32>
    %183 = tpu.matmul %180, %182, %cst_172 {dimension_numbers = #tpu.dot_dimension_numbers<[1], [0], [0], [1], [0, 0, 1, 1], [], []>} : vector<8x128xf32>, vector<128x128xf32>, vector<8x128xf32> -> vector<8x128xf32>
    %184 = arith.addf %177, %183 : vector<8x128xf32>
    %c3_173 = arith.constant 3 : index
    %c0_174 = arith.constant 0 : index
    %c0_175 = arith.constant 0 : index
    %185 = vector.load %arg3[%c3_173, %c0_174, %c0_175] : memref<9x8x32xf32, #tpu.memory_space<vmem>>, vector<1x8x32xf32>
    %186 = vector.shape_cast %185 : vector<1x8x32xf32> to vector<8x32xf32>
    %cst_176 = arith.constant dense<0.000000e+00> : vector<8x128xf32>
    %187 = tpu.matmul %186, %162, %cst_176 {dimension_numbers = #tpu.dot_dimension_numbers<[1], [0], [0], [1], [0, 0, 1, 1], [], []>} : vector<8x32xf32>, vector<32x128xf32>, vector<8x128xf32> -> vector<8x128xf32>
    %c21 = arith.constant 21 : index
    %c0_177 = arith.constant 0 : index
    %c0_178 = arith.constant 0 : index
    %188 = vector.load %arg5[%c21, %c0_177, %c0_178] : memref<36x128x128xf32, #tpu.memory_space<vmem>>, vector<1x128x128xf32>
    %189 = vector.shape_cast %188 : vector<1x128x128xf32> to vector<128x128xf32>
    %cst_179 = arith.constant dense<0.000000e+00> : vector<8x128xf32>
    %190 = tpu.matmul %187, %189, %cst_179 {dimension_numbers = #tpu.dot_dimension_numbers<[1], [0], [0], [1], [0, 0, 1, 1], [], []>} : vector<8x128xf32>, vector<128x128xf32>, vector<8x128xf32> -> vector<8x128xf32>
    %191 = arith.addf %184, %190 : vector<8x128xf32>
    %c4_180 = arith.constant 4 : index
    %c0_181 = arith.constant 0 : index
    %c0_182 = arith.constant 0 : index
    %192 = vector.load %arg3[%c4_180, %c0_181, %c0_182] : memref<9x8x32xf32, #tpu.memory_space<vmem>>, vector<1x8x32xf32>
    %193 = vector.shape_cast %192 : vector<1x8x32xf32> to vector<8x32xf32>
    %cst_183 = arith.constant dense<0.000000e+00> : vector<8x128xf32>
    %194 = tpu.matmul %193, %162, %cst_183 {dimension_numbers = #tpu.dot_dimension_numbers<[1], [0], [0], [1], [0, 0, 1, 1], [], []>} : vector<8x32xf32>, vector<32x128xf32>, vector<8x128xf32> -> vector<8x128xf32>
    %c22 = arith.constant 22 : index
    %c0_184 = arith.constant 0 : index
    %c0_185 = arith.constant 0 : index
    %195 = vector.load %arg5[%c22, %c0_184, %c0_185] : memref<36x128x128xf32, #tpu.memory_space<vmem>>, vector<1x128x128xf32>
    %196 = vector.shape_cast %195 : vector<1x128x128xf32> to vector<128x128xf32>
    %cst_186 = arith.constant dense<0.000000e+00> : vector<8x128xf32>
    %197 = tpu.matmul %194, %196, %cst_186 {dimension_numbers = #tpu.dot_dimension_numbers<[1], [0], [0], [1], [0, 0, 1, 1], [], []>} : vector<8x128xf32>, vector<128x128xf32>, vector<8x128xf32> -> vector<8x128xf32>
    %198 = arith.addf %191, %197 : vector<8x128xf32>
    %c5_187 = arith.constant 5 : index
    %c0_188 = arith.constant 0 : index
    %c0_189 = arith.constant 0 : index
    %199 = vector.load %arg3[%c5_187, %c0_188, %c0_189] : memref<9x8x32xf32, #tpu.memory_space<vmem>>, vector<1x8x32xf32>
    %200 = vector.shape_cast %199 : vector<1x8x32xf32> to vector<8x32xf32>
    %cst_190 = arith.constant dense<0.000000e+00> : vector<8x128xf32>
    %201 = tpu.matmul %200, %162, %cst_190 {dimension_numbers = #tpu.dot_dimension_numbers<[1], [0], [0], [1], [0, 0, 1, 1], [], []>} : vector<8x32xf32>, vector<32x128xf32>, vector<8x128xf32> -> vector<8x128xf32>
    %c23 = arith.constant 23 : index
    %c0_191 = arith.constant 0 : index
    %c0_192 = arith.constant 0 : index
    %202 = vector.load %arg5[%c23, %c0_191, %c0_192] : memref<36x128x128xf32, #tpu.memory_space<vmem>>, vector<1x128x128xf32>
    %203 = vector.shape_cast %202 : vector<1x128x128xf32> to vector<128x128xf32>
    %cst_193 = arith.constant dense<0.000000e+00> : vector<8x128xf32>
    %204 = tpu.matmul %201, %203, %cst_193 {dimension_numbers = #tpu.dot_dimension_numbers<[1], [0], [0], [1], [0, 0, 1, 1], [], []>} : vector<8x128xf32>, vector<128x128xf32>, vector<8x128xf32> -> vector<8x128xf32>
    %205 = arith.addf %198, %204 : vector<8x128xf32>
    %c6_194 = arith.constant 6 : index
    %c0_195 = arith.constant 0 : index
    %c0_196 = arith.constant 0 : index
    %206 = vector.load %arg3[%c6_194, %c0_195, %c0_196] : memref<9x8x32xf32, #tpu.memory_space<vmem>>, vector<1x8x32xf32>
    %207 = vector.shape_cast %206 : vector<1x8x32xf32> to vector<8x32xf32>
    %cst_197 = arith.constant dense<0.000000e+00> : vector<8x128xf32>
    %208 = tpu.matmul %207, %162, %cst_197 {dimension_numbers = #tpu.dot_dimension_numbers<[1], [0], [0], [1], [0, 0, 1, 1], [], []>} : vector<8x32xf32>, vector<32x128xf32>, vector<8x128xf32> -> vector<8x128xf32>
    %c24 = arith.constant 24 : index
    %c0_198 = arith.constant 0 : index
    %c0_199 = arith.constant 0 : index
    %209 = vector.load %arg5[%c24, %c0_198, %c0_199] : memref<36x128x128xf32, #tpu.memory_space<vmem>>, vector<1x128x128xf32>
    %210 = vector.shape_cast %209 : vector<1x128x128xf32> to vector<128x128xf32>
    %cst_200 = arith.constant dense<0.000000e+00> : vector<8x128xf32>
    %211 = tpu.matmul %208, %210, %cst_200 {dimension_numbers = #tpu.dot_dimension_numbers<[1], [0], [0], [1], [0, 0, 1, 1], [], []>} : vector<8x128xf32>, vector<128x128xf32>, vector<8x128xf32> -> vector<8x128xf32>
    %212 = arith.addf %205, %211 : vector<8x128xf32>
    %c7_201 = arith.constant 7 : index
    %c0_202 = arith.constant 0 : index
    %c0_203 = arith.constant 0 : index
    %213 = vector.load %arg3[%c7_201, %c0_202, %c0_203] : memref<9x8x32xf32, #tpu.memory_space<vmem>>, vector<1x8x32xf32>
    %214 = vector.shape_cast %213 : vector<1x8x32xf32> to vector<8x32xf32>
    %cst_204 = arith.constant dense<0.000000e+00> : vector<8x128xf32>
    %215 = tpu.matmul %214, %162, %cst_204 {dimension_numbers = #tpu.dot_dimension_numbers<[1], [0], [0], [1], [0, 0, 1, 1], [], []>} : vector<8x32xf32>, vector<32x128xf32>, vector<8x128xf32> -> vector<8x128xf32>
    %c25 = arith.constant 25 : index
    %c0_205 = arith.constant 0 : index
    %c0_206 = arith.constant 0 : index
    %216 = vector.load %arg5[%c25, %c0_205, %c0_206] : memref<36x128x128xf32, #tpu.memory_space<vmem>>, vector<1x128x128xf32>
    %217 = vector.shape_cast %216 : vector<1x128x128xf32> to vector<128x128xf32>
    %cst_207 = arith.constant dense<0.000000e+00> : vector<8x128xf32>
    %218 = tpu.matmul %215, %217, %cst_207 {dimension_numbers = #tpu.dot_dimension_numbers<[1], [0], [0], [1], [0, 0, 1, 1], [], []>} : vector<8x128xf32>, vector<128x128xf32>, vector<8x128xf32> -> vector<8x128xf32>
    %219 = arith.addf %212, %218 : vector<8x128xf32>
    %c8_208 = arith.constant 8 : index
    %c0_209 = arith.constant 0 : index
    %c0_210 = arith.constant 0 : index
    %220 = vector.load %arg3[%c8_208, %c0_209, %c0_210] : memref<9x8x32xf32, #tpu.memory_space<vmem>>, vector<1x8x32xf32>
    %221 = vector.shape_cast %220 : vector<1x8x32xf32> to vector<8x32xf32>
    %cst_211 = arith.constant dense<0.000000e+00> : vector<8x128xf32>
    %222 = tpu.matmul %221, %162, %cst_211 {dimension_numbers = #tpu.dot_dimension_numbers<[1], [0], [0], [1], [0, 0, 1, 1], [], []>} : vector<8x32xf32>, vector<32x128xf32>, vector<8x128xf32> -> vector<8x128xf32>
    %c26 = arith.constant 26 : index
    %c0_212 = arith.constant 0 : index
    %c0_213 = arith.constant 0 : index
    %223 = vector.load %arg5[%c26, %c0_212, %c0_213] : memref<36x128x128xf32, #tpu.memory_space<vmem>>, vector<1x128x128xf32>
    %224 = vector.shape_cast %223 : vector<1x128x128xf32> to vector<128x128xf32>
    %cst_214 = arith.constant dense<0.000000e+00> : vector<8x128xf32>
    %225 = tpu.matmul %222, %224, %cst_214 {dimension_numbers = #tpu.dot_dimension_numbers<[1], [0], [0], [1], [0, 0, 1, 1], [], []>} : vector<8x128xf32>, vector<128x128xf32>, vector<8x128xf32> -> vector<8x128xf32>
    %226 = arith.addf %219, %225 : vector<8x128xf32>
    %c2_215 = arith.constant 2 : index
    %c0_216 = arith.constant 0 : index
    %c0_217 = arith.constant 0 : index
    %227 = vector.load %arg6[%c2_215, %c0_216, %c0_217] : memref<4x1x128xf32, #tpu.memory_space<vmem>>, vector<1x1x128xf32>
    %228 = vector.shape_cast %227 : vector<1x1x128xf32> to vector<1x128xf32>
    %229 = vector.broadcast %228 : vector<1x128xf32> to vector<8x128xf32>
    %230 = arith.addf %226, %229 : vector<8x128xf32>
    %cst_218 = arith.constant 0.000000e+00 : f32
    %231 = vector.broadcast %cst_218 : f32 to vector<8x128xf32>
    %232 = arith.cmpf ogt, %230, %231 : vector<8x128xf32>
    %cst_219 = arith.constant 2.000000e-01 : f32
    %233 = vector.broadcast %cst_219 : f32 to vector<8x128xf32>
    %234 = arith.mulf %233, %230 : vector<8x128xf32>
    %235 = arith.select %232, %230, %234 : vector<8x128xi1>, vector<8x128xf32>
    %c2_220 = arith.constant 2 : index
    %c0_221 = arith.constant 0 : index
    %c0_222 = arith.constant 0 : index
    %236 = vector.load %arg7[%c2_220, %c0_221, %c0_222] : memref<4x1x128xf32, #tpu.memory_space<vmem>>, vector<1x1x128xf32>
    %237 = vector.shape_cast %236 : vector<1x1x128xf32> to vector<1x128xf32>
    %238 = vector.broadcast %237 : vector<1x128xf32> to vector<8x128xf32>
    %239 = arith.mulf %235, %238 : vector<8x128xf32>
    %c2_223 = arith.constant 2 : index
    %c0_224 = arith.constant 0 : index
    %c0_225 = arith.constant 0 : index
    %240 = vector.load %arg8[%c2_223, %c0_224, %c0_225] : memref<4x1x128xf32, #tpu.memory_space<vmem>>, vector<1x1x128xf32>
    %241 = vector.shape_cast %240 : vector<1x1x128xf32> to vector<1x128xf32>
    %242 = vector.broadcast %241 : vector<1x128xf32> to vector<8x128xf32>
    %243 = arith.addf %239, %242 : vector<8x128xf32>
    %cst_226 = arith.constant 0.000000e+00 : f32
    %244 = vector.broadcast %cst_226 : f32 to vector<2x128xf32>
    %c0_227 = arith.constant 0 : index
    %c0_228 = arith.constant 0 : index
    %c0_229 = arith.constant 0 : index
    %245 = vector.load %arg4[%c0_227, %c0_228, %c0_229] : memref<9x2x8xf32, #tpu.memory_space<vmem>>, vector<1x2x8xf32>
    %246 = vector.shape_cast %245 : vector<1x2x8xf32> to vector<2x8xf32>
    %cst_230 = arith.constant dense<0.000000e+00> : vector<2x128xf32>
    %247 = tpu.matmul %246, %243, %cst_230 {dimension_numbers = #tpu.dot_dimension_numbers<[1], [0], [0], [1], [0, 0, 1, 1], [], []>} : vector<2x8xf32>, vector<8x128xf32>, vector<2x128xf32> -> vector<2x128xf32>
    %c27 = arith.constant 27 : index
    %c0_231 = arith.constant 0 : index
    %c0_232 = arith.constant 0 : index
    %248 = vector.load %arg5[%c27, %c0_231, %c0_232] : memref<36x128x128xf32, #tpu.memory_space<vmem>>, vector<1x128x128xf32>
    %249 = vector.shape_cast %248 : vector<1x128x128xf32> to vector<128x128xf32>
    %cst_233 = arith.constant dense<0.000000e+00> : vector<2x128xf32>
    %250 = tpu.matmul %247, %249, %cst_233 {dimension_numbers = #tpu.dot_dimension_numbers<[1], [0], [0], [1], [0, 0, 1, 1], [], []>} : vector<2x128xf32>, vector<128x128xf32>, vector<2x128xf32> -> vector<2x128xf32>
    %251 = arith.addf %244, %250 : vector<2x128xf32>
    %c1_234 = arith.constant 1 : index
    %c0_235 = arith.constant 0 : index
    %c0_236 = arith.constant 0 : index
    %252 = vector.load %arg4[%c1_234, %c0_235, %c0_236] : memref<9x2x8xf32, #tpu.memory_space<vmem>>, vector<1x2x8xf32>
    %253 = vector.shape_cast %252 : vector<1x2x8xf32> to vector<2x8xf32>
    %cst_237 = arith.constant dense<0.000000e+00> : vector<2x128xf32>
    %254 = tpu.matmul %253, %243, %cst_237 {dimension_numbers = #tpu.dot_dimension_numbers<[1], [0], [0], [1], [0, 0, 1, 1], [], []>} : vector<2x8xf32>, vector<8x128xf32>, vector<2x128xf32> -> vector<2x128xf32>
    %c28 = arith.constant 28 : index
    %c0_238 = arith.constant 0 : index
    %c0_239 = arith.constant 0 : index
    %255 = vector.load %arg5[%c28, %c0_238, %c0_239] : memref<36x128x128xf32, #tpu.memory_space<vmem>>, vector<1x128x128xf32>
    %256 = vector.shape_cast %255 : vector<1x128x128xf32> to vector<128x128xf32>
    %cst_240 = arith.constant dense<0.000000e+00> : vector<2x128xf32>
    %257 = tpu.matmul %254, %256, %cst_240 {dimension_numbers = #tpu.dot_dimension_numbers<[1], [0], [0], [1], [0, 0, 1, 1], [], []>} : vector<2x128xf32>, vector<128x128xf32>, vector<2x128xf32> -> vector<2x128xf32>
    %258 = arith.addf %251, %257 : vector<2x128xf32>
    %c2_241 = arith.constant 2 : index
    %c0_242 = arith.constant 0 : index
    %c0_243 = arith.constant 0 : index
    %259 = vector.load %arg4[%c2_241, %c0_242, %c0_243] : memref<9x2x8xf32, #tpu.memory_space<vmem>>, vector<1x2x8xf32>
    %260 = vector.shape_cast %259 : vector<1x2x8xf32> to vector<2x8xf32>
    %cst_244 = arith.constant dense<0.000000e+00> : vector<2x128xf32>
    %261 = tpu.matmul %260, %243, %cst_244 {dimension_numbers = #tpu.dot_dimension_numbers<[1], [0], [0], [1], [0, 0, 1, 1], [], []>} : vector<2x8xf32>, vector<8x128xf32>, vector<2x128xf32> -> vector<2x128xf32>
    %c29 = arith.constant 29 : index
    %c0_245 = arith.constant 0 : index
    %c0_246 = arith.constant 0 : index
    %262 = vector.load %arg5[%c29, %c0_245, %c0_246] : memref<36x128x128xf32, #tpu.memory_space<vmem>>, vector<1x128x128xf32>
    %263 = vector.shape_cast %262 : vector<1x128x128xf32> to vector<128x128xf32>
    %cst_247 = arith.constant dense<0.000000e+00> : vector<2x128xf32>
    %264 = tpu.matmul %261, %263, %cst_247 {dimension_numbers = #tpu.dot_dimension_numbers<[1], [0], [0], [1], [0, 0, 1, 1], [], []>} : vector<2x128xf32>, vector<128x128xf32>, vector<2x128xf32> -> vector<2x128xf32>
    %265 = arith.addf %258, %264 : vector<2x128xf32>
    %c3_248 = arith.constant 3 : index
    %c0_249 = arith.constant 0 : index
    %c0_250 = arith.constant 0 : index
    %266 = vector.load %arg4[%c3_248, %c0_249, %c0_250] : memref<9x2x8xf32, #tpu.memory_space<vmem>>, vector<1x2x8xf32>
    %267 = vector.shape_cast %266 : vector<1x2x8xf32> to vector<2x8xf32>
    %cst_251 = arith.constant dense<0.000000e+00> : vector<2x128xf32>
    %268 = tpu.matmul %267, %243, %cst_251 {dimension_numbers = #tpu.dot_dimension_numbers<[1], [0], [0], [1], [0, 0, 1, 1], [], []>} : vector<2x8xf32>, vector<8x128xf32>, vector<2x128xf32> -> vector<2x128xf32>
    %c30 = arith.constant 30 : index
    %c0_252 = arith.constant 0 : index
    %c0_253 = arith.constant 0 : index
    %269 = vector.load %arg5[%c30, %c0_252, %c0_253] : memref<36x128x128xf32, #tpu.memory_space<vmem>>, vector<1x128x128xf32>
    %270 = vector.shape_cast %269 : vector<1x128x128xf32> to vector<128x128xf32>
    %cst_254 = arith.constant dense<0.000000e+00> : vector<2x128xf32>
    %271 = tpu.matmul %268, %270, %cst_254 {dimension_numbers = #tpu.dot_dimension_numbers<[1], [0], [0], [1], [0, 0, 1, 1], [], []>} : vector<2x128xf32>, vector<128x128xf32>, vector<2x128xf32> -> vector<2x128xf32>
    %272 = arith.addf %265, %271 : vector<2x128xf32>
    %c4_255 = arith.constant 4 : index
    %c0_256 = arith.constant 0 : index
    %c0_257 = arith.constant 0 : index
    %273 = vector.load %arg4[%c4_255, %c0_256, %c0_257] : memref<9x2x8xf32, #tpu.memory_space<vmem>>, vector<1x2x8xf32>
    %274 = vector.shape_cast %273 : vector<1x2x8xf32> to vector<2x8xf32>
    %cst_258 = arith.constant dense<0.000000e+00> : vector<2x128xf32>
    %275 = tpu.matmul %274, %243, %cst_258 {dimension_numbers = #tpu.dot_dimension_numbers<[1], [0], [0], [1], [0, 0, 1, 1], [], []>} : vector<2x8xf32>, vector<8x128xf32>, vector<2x128xf32> -> vector<2x128xf32>
    %c31 = arith.constant 31 : index
    %c0_259 = arith.constant 0 : index
    %c0_260 = arith.constant 0 : index
    %276 = vector.load %arg5[%c31, %c0_259, %c0_260] : memref<36x128x128xf32, #tpu.memory_space<vmem>>, vector<1x128x128xf32>
    %277 = vector.shape_cast %276 : vector<1x128x128xf32> to vector<128x128xf32>
    %cst_261 = arith.constant dense<0.000000e+00> : vector<2x128xf32>
    %278 = tpu.matmul %275, %277, %cst_261 {dimension_numbers = #tpu.dot_dimension_numbers<[1], [0], [0], [1], [0, 0, 1, 1], [], []>} : vector<2x128xf32>, vector<128x128xf32>, vector<2x128xf32> -> vector<2x128xf32>
    %279 = arith.addf %272, %278 : vector<2x128xf32>
    %c5_262 = arith.constant 5 : index
    %c0_263 = arith.constant 0 : index
    %c0_264 = arith.constant 0 : index
    %280 = vector.load %arg4[%c5_262, %c0_263, %c0_264] : memref<9x2x8xf32, #tpu.memory_space<vmem>>, vector<1x2x8xf32>
    %281 = vector.shape_cast %280 : vector<1x2x8xf32> to vector<2x8xf32>
    %cst_265 = arith.constant dense<0.000000e+00> : vector<2x128xf32>
    %282 = tpu.matmul %281, %243, %cst_265 {dimension_numbers = #tpu.dot_dimension_numbers<[1], [0], [0], [1], [0, 0, 1, 1], [], []>} : vector<2x8xf32>, vector<8x128xf32>, vector<2x128xf32> -> vector<2x128xf32>
    %c32 = arith.constant 32 : index
    %c0_266 = arith.constant 0 : index
    %c0_267 = arith.constant 0 : index
    %283 = vector.load %arg5[%c32, %c0_266, %c0_267] : memref<36x128x128xf32, #tpu.memory_space<vmem>>, vector<1x128x128xf32>
    %284 = vector.shape_cast %283 : vector<1x128x128xf32> to vector<128x128xf32>
    %cst_268 = arith.constant dense<0.000000e+00> : vector<2x128xf32>
    %285 = tpu.matmul %282, %284, %cst_268 {dimension_numbers = #tpu.dot_dimension_numbers<[1], [0], [0], [1], [0, 0, 1, 1], [], []>} : vector<2x128xf32>, vector<128x128xf32>, vector<2x128xf32> -> vector<2x128xf32>
    %286 = arith.addf %279, %285 : vector<2x128xf32>
    %c6_269 = arith.constant 6 : index
    %c0_270 = arith.constant 0 : index
    %c0_271 = arith.constant 0 : index
    %287 = vector.load %arg4[%c6_269, %c0_270, %c0_271] : memref<9x2x8xf32, #tpu.memory_space<vmem>>, vector<1x2x8xf32>
    %288 = vector.shape_cast %287 : vector<1x2x8xf32> to vector<2x8xf32>
    %cst_272 = arith.constant dense<0.000000e+00> : vector<2x128xf32>
    %289 = tpu.matmul %288, %243, %cst_272 {dimension_numbers = #tpu.dot_dimension_numbers<[1], [0], [0], [1], [0, 0, 1, 1], [], []>} : vector<2x8xf32>, vector<8x128xf32>, vector<2x128xf32> -> vector<2x128xf32>
    %c33 = arith.constant 33 : index
    %c0_273 = arith.constant 0 : index
    %c0_274 = arith.constant 0 : index
    %290 = vector.load %arg5[%c33, %c0_273, %c0_274] : memref<36x128x128xf32, #tpu.memory_space<vmem>>, vector<1x128x128xf32>
    %291 = vector.shape_cast %290 : vector<1x128x128xf32> to vector<128x128xf32>
    %cst_275 = arith.constant dense<0.000000e+00> : vector<2x128xf32>
    %292 = tpu.matmul %289, %291, %cst_275 {dimension_numbers = #tpu.dot_dimension_numbers<[1], [0], [0], [1], [0, 0, 1, 1], [], []>} : vector<2x128xf32>, vector<128x128xf32>, vector<2x128xf32> -> vector<2x128xf32>
    %293 = arith.addf %286, %292 : vector<2x128xf32>
    %c7_276 = arith.constant 7 : index
    %c0_277 = arith.constant 0 : index
    %c0_278 = arith.constant 0 : index
    %294 = vector.load %arg4[%c7_276, %c0_277, %c0_278] : memref<9x2x8xf32, #tpu.memory_space<vmem>>, vector<1x2x8xf32>
    %295 = vector.shape_cast %294 : vector<1x2x8xf32> to vector<2x8xf32>
    %cst_279 = arith.constant dense<0.000000e+00> : vector<2x128xf32>
    %296 = tpu.matmul %295, %243, %cst_279 {dimension_numbers = #tpu.dot_dimension_numbers<[1], [0], [0], [1], [0, 0, 1, 1], [], []>} : vector<2x8xf32>, vector<8x128xf32>, vector<2x128xf32> -> vector<2x128xf32>
    %c34 = arith.constant 34 : index
    %c0_280 = arith.constant 0 : index
    %c0_281 = arith.constant 0 : index
    %297 = vector.load %arg5[%c34, %c0_280, %c0_281] : memref<36x128x128xf32, #tpu.memory_space<vmem>>, vector<1x128x128xf32>
    %298 = vector.shape_cast %297 : vector<1x128x128xf32> to vector<128x128xf32>
    %cst_282 = arith.constant dense<0.000000e+00> : vector<2x128xf32>
    %299 = tpu.matmul %296, %298, %cst_282 {dimension_numbers = #tpu.dot_dimension_numbers<[1], [0], [0], [1], [0, 0, 1, 1], [], []>} : vector<2x128xf32>, vector<128x128xf32>, vector<2x128xf32> -> vector<2x128xf32>
    %300 = arith.addf %293, %299 : vector<2x128xf32>
    %c8_283 = arith.constant 8 : index
    %c0_284 = arith.constant 0 : index
    %c0_285 = arith.constant 0 : index
    %301 = vector.load %arg4[%c8_283, %c0_284, %c0_285] : memref<9x2x8xf32, #tpu.memory_space<vmem>>, vector<1x2x8xf32>
    %302 = vector.shape_cast %301 : vector<1x2x8xf32> to vector<2x8xf32>
    %cst_286 = arith.constant dense<0.000000e+00> : vector<2x128xf32>
    %303 = tpu.matmul %302, %243, %cst_286 {dimension_numbers = #tpu.dot_dimension_numbers<[1], [0], [0], [1], [0, 0, 1, 1], [], []>} : vector<2x8xf32>, vector<8x128xf32>, vector<2x128xf32> -> vector<2x128xf32>
    %c35 = arith.constant 35 : index
    %c0_287 = arith.constant 0 : index
    %c0_288 = arith.constant 0 : index
    %304 = vector.load %arg5[%c35, %c0_287, %c0_288] : memref<36x128x128xf32, #tpu.memory_space<vmem>>, vector<1x128x128xf32>
    %305 = vector.shape_cast %304 : vector<1x128x128xf32> to vector<128x128xf32>
    %cst_289 = arith.constant dense<0.000000e+00> : vector<2x128xf32>
    %306 = tpu.matmul %303, %305, %cst_289 {dimension_numbers = #tpu.dot_dimension_numbers<[1], [0], [0], [1], [0, 0, 1, 1], [], []>} : vector<2x128xf32>, vector<128x128xf32>, vector<2x128xf32> -> vector<2x128xf32>
    %307 = arith.addf %300, %306 : vector<2x128xf32>
    %c3_290 = arith.constant 3 : index
    %c0_291 = arith.constant 0 : index
    %c0_292 = arith.constant 0 : index
    %308 = vector.load %arg6[%c3_290, %c0_291, %c0_292] : memref<4x1x128xf32, #tpu.memory_space<vmem>>, vector<1x1x128xf32>
    %309 = vector.shape_cast %308 : vector<1x1x128xf32> to vector<1x128xf32>
    %310 = vector.broadcast %309 : vector<1x128xf32> to vector<2x128xf32>
    %311 = arith.addf %307, %310 : vector<2x128xf32>
    %cst_293 = arith.constant 0.000000e+00 : f32
    %312 = vector.broadcast %cst_293 : f32 to vector<2x128xf32>
    %313 = arith.cmpf ogt, %311, %312 : vector<2x128xf32>
    %cst_294 = arith.constant 2.000000e-01 : f32
    %314 = vector.broadcast %cst_294 : f32 to vector<2x128xf32>
    %315 = arith.mulf %314, %311 : vector<2x128xf32>
    %316 = arith.select %313, %311, %315 : vector<2x128xi1>, vector<2x128xf32>
    %c3_295 = arith.constant 3 : index
    %c0_296 = arith.constant 0 : index
    %c0_297 = arith.constant 0 : index
    %317 = vector.load %arg7[%c3_295, %c0_296, %c0_297] : memref<4x1x128xf32, #tpu.memory_space<vmem>>, vector<1x1x128xf32>
    %318 = vector.shape_cast %317 : vector<1x1x128xf32> to vector<1x128xf32>
    %319 = vector.broadcast %318 : vector<1x128xf32> to vector<2x128xf32>
    %320 = arith.mulf %316, %319 : vector<2x128xf32>
    %c3_298 = arith.constant 3 : index
    %c0_299 = arith.constant 0 : index
    %c0_300 = arith.constant 0 : index
    %321 = vector.load %arg8[%c3_298, %c0_299, %c0_300] : memref<4x1x128xf32, #tpu.memory_space<vmem>>, vector<1x1x128xf32>
    %322 = vector.shape_cast %321 : vector<1x1x128xf32> to vector<1x128xf32>
    %323 = vector.broadcast %322 : vector<1x128xf32> to vector<2x128xf32>
    %324 = arith.addf %320, %323 : vector<2x128xf32>
    %c0_301 = arith.constant 0 : index
    %c0_302 = arith.constant 0 : index
    %325 = vector.load %arg9[%c0_301, %c0_302] : memref<128x128xf32, #tpu.memory_space<vmem>>, vector<128x128xf32>
    %cst_303 = arith.constant dense<0.000000e+00> : vector<2x128xf32>
    %326 = tpu.matmul %324, %325, %cst_303 {dimension_numbers = #tpu.dot_dimension_numbers<[1], [0], [0], [1], [0, 0, 1, 1], [], []>} : vector<2x128xf32>, vector<128x128xf32>, vector<2x128xf32> -> vector<2x128xf32>
    %c0_304 = arith.constant 0 : index
    %c0_305 = arith.constant 0 : index
    %327 = vector.load %arg10[%c0_304, %c0_305] : memref<1x128xf32, #tpu.memory_space<vmem>>, vector<1x128xf32>
    %328 = vector.broadcast %327 : vector<1x128xf32> to vector<2x128xf32>
    %329 = arith.addf %326, %328 : vector<2x128xf32>
    %330 = vector.extract_strided_slice %329 {offsets = [0, 0], sizes = [2, 10], strides = [1, 1]} : vector<2x128xf32> to vector<2x10xf32>
    %cst_306 = arith.constant dense<0xFF800000> : vector<2xf32>
    %331 = vector.multi_reduction <maximumf>, %330, %cst_306 [1] : vector<2x10xf32> to vector<2xf32>
    %332 = vector.shape_cast %331 : vector<2xf32> to vector<2x1xf32>
    %333 = vector.broadcast %332 : vector<2x1xf32> to vector<2x10xf32>
    %334 = arith.subf %330, %333 : vector<2x10xf32>
    %335 = math.exp %334 : vector<2x10xf32>
    %cst_307 = arith.constant dense<0.000000e+00> : vector<2xf32>
    %336 = vector.multi_reduction <add>, %335, %cst_307 [1] : vector<2x10xf32> to vector<2xf32>
    %337 = vector.shape_cast %336 : vector<2xf32> to vector<2x1xf32>
    %338 = vector.broadcast %337 : vector<2x1xf32> to vector<2x10xf32>
    %339 = arith.divf %335, %338 : vector<2x10xf32>
    %c0_308 = arith.constant 0 : index
    %c0_309 = arith.constant 0 : index
    %340 = vector.load %arg12[%c0_308, %c0_309] : memref<2x10xf32, #tpu.memory_space<vmem>>, vector<2x10xf32>
    tpu.vector_store %arg12[%c0_308, %c0_309], %339 {strides = array<i32>} : memref<2x10xf32, #tpu.memory_space<vmem>>, vector<2x10xf32>,
    %341 = vector.extract_strided_slice %329 {offsets = [0, 10], sizes = [2, 2], strides = [1, 1]} : vector<2x128xf32> to vector<2x2xf32>
    %c0_310 = arith.constant 0 : index
    %c0_311 = arith.constant 0 : index
    %342 = vector.load %arg13[%c0_310, %c0_311] : memref<2x2xf32, #tpu.memory_space<vmem>>, vector<2x2xf32>
    tpu.vector_store %arg13[%c0_310, %c0_311], %341 {strides = array<i32>} : memref<2x2xf32, #tpu.memory_space<vmem>>, vector<2x2xf32>,
    %343 = vector.extract_strided_slice %329 {offsets = [0, 12], sizes = [2, 1], strides = [1, 1]} : vector<2x128xf32> to vector<2x1xf32>
    %c0_312 = arith.constant 0 : index
    %c0_313 = arith.constant 0 : index
    %344 = vector.load %arg11[%c0_312, %c0_313] : memref<2x1xf32, #tpu.memory_space<vmem>>, vector<2x1xf32>
    tpu.vector_store %arg11[%c0_312, %c0_313], %343 {strides = array<i32>} : memref<2x1xf32, #tpu.memory_space<vmem>>, vector<2x1xf32>,
    return
  }
}

</mosaic_0001>

<llo_original>
// kernel: _lambda_.1
$region0: #{_lambda_.1}
  #allocation0 [shape = 'u32[]', space=smem, size = 0x4, offset = 0x4, fixed_abs, tag = 'smem constant byte address 0x4 - core index']
  #allocation1 [shape = 'u32[144,128]{1,0:T(1,128)}', space=vmem, size = 0x12000, scoped, tag = 'internal scratch']
  %s0 = inlined_call_operand.vmem [shape: f32[512,128], index: 0, kind: input, shape index: {}]
  %s1 = inlined_call_operand.hbm [shape: f32[9,128,512], index: 1, kind: input, shape index: {}]
  %s2 = inlined_call_operand.hbm [shape: f32[9,32,128], index: 2, kind: input, shape index: {}]
  %s3 = inlined_call_operand.hbm [shape: f32[9,8,32], index: 3, kind: input, shape index: {}]
  %s4 = inlined_call_operand.hbm [shape: f32[9,2,8], index: 4, kind: input, shape index: {}]
  %s5 = inlined_call_operand.hbm [shape: f32[36,128,128], index: 5, kind: input, shape index: {}]
  %s6 = inlined_call_operand.hbm [shape: f32[4,1,128], index: 6, kind: input, shape index: {}]
  %s7 = inlined_call_operand.hbm [shape: f32[4,1,128], index: 7, kind: input, shape index: {}]
  %s8 = inlined_call_operand.hbm [shape: f32[4,1,128], index: 8, kind: input, shape index: {}]
  %s9 = inlined_call_operand.hbm [shape: f32[128,128], index: 9, kind: input, shape index: {}]
  %s10 = inlined_call_operand.hbm [shape: f32[1,128], index: 10, kind: input, shape index: {}]
  %s11 = inlined_call_operand.vmem [shape: f32[2,1], index: 11, kind: output, shape index: {0}]
  %s12 = inlined_call_operand.hbm [shape: f32[2,10], index: 12, kind: output, shape index: {1}]
  %s13 = inlined_call_operand.hbm [shape: f32[2,2], index: 13, kind: output, shape index: {2}]
  %14 = xla_tuple %s11, %s12, %s13
  %s15 = sld [smem:[#allocation0]]
  $region110: #{_lambda_.1} parent=0
    _
  %s17 = ssub.s32 1, %s15
  %s18 = scalar_select 0, %s17, %s15
  $region1: #{_lambda_.1} parent=0
    #allocation2 [shape = 'u8[2359296]{0}', space=vmem, size = 0x240000, scoped, tag = 'input window, operand 1, single buffered']
    #allocation3 [shape = 's32[1]{0}', space=sflag, size = 0x4, scoped, tag = 'scoped memory for _lambda_.1']
    #allocation4 [shape = 's32[1]{0}', space=sflag, size = 0x4, scoped, tag = 'scoped memory for _lambda_.1']
    #allocation5 [shape = 'u8[147456]{0}', space=vmem, size = 0x24000, scoped, tag = 'input window, operand 2, single buffered']
    #allocation6 [shape = 's32[1]{0}', space=sflag, size = 0x4, scoped, tag = 'scoped memory for _lambda_.1']
    #allocation7 [shape = 'u8[36864]{0}', space=vmem, size = 0x9000, scoped, tag = 'input window, operand 3, single buffered']
    #allocation8 [shape = 'u8[9216]{0}', space=vmem, size = 0x2400, scoped, tag = 'input window, operand 4, single buffered']
    #allocation9 [shape = 's32[1]{0}', space=sflag, size = 0x4, scoped, tag = 'scoped memory for _lambda_.1']
    #allocation10 [shape = 'u8[2359296]{0}', space=vmem, size = 0x240000, scoped, tag = 'input window, operand 5, single buffered']
    #allocation11 [shape = 'u8[2048]{0}', space=vmem, size = 0x800, scoped, tag = 'input window, operand 6, single buffered']
    #allocation12 [shape = 's32[1]{0}', space=sflag, size = 0x4, scoped, tag = 'scoped memory for _lambda_.1']
    #allocation13 [shape = 'u8[2048]{0}', space=vmem, size = 0x800, scoped, tag = 'input window, operand 7, single buffered']
    #allocation14 [shape = 'u8[2048]{0}', space=vmem, size = 0x800, scoped, tag = 'input window, operand 8, single buffered']
    #allocation15 [shape = 's32[1]{0}', space=sflag, size = 0x4, scoped, tag = 'scoped memory for _lambda_.1']
    #allocation16 [shape = 'u8[65536]{0}', space=vmem, size = 0x10000, scoped, tag = 'input window, operand 9, single buffered']
    #allocation17 [shape = 'u8[512]{0}', space=vmem, size = 0x400, scoped, tag = 'input window, operand 10, single buffered']
    #allocation18 [shape = 's32[1]{0}', space=sflag, size = 0x4, scoped, tag = 'scoped memory for _lambda_.1']
    #allocation19 [shape = 'u8[1024]{0}', space=vmem, size = 0x400, scoped, tag = 'output window, operand 1, single buffered']
    #allocation20 [shape = 'u8[1024]{0}', space=vmem, size = 0x400, scoped, tag = 'output window, operand 2, single buffered']
    #allocation21 [shape = 's32[1]{0}', space=sflag, size = 0x4, scoped, tag = 'scoped memory for _lambda_.1']
    %19 = vsyncpa [#allocation3], 0
    %20 = vsyncpa [#allocation6], 0
    %21 = vsyncpa [#allocation9], 0
    %22 = vsyncpa [#allocation12], 0
    %23 = vsyncpa [#allocation15], 0
    %24 = vsyncpa [#allocation18], 0
    %25 = vsyncpa [#allocation4], 0
    %26 = vsyncpa [#allocation21], 0
    // Predicated region
    $region2: #{_lambda_.1} parent=1 // pred_check
      _
    $region3: #{_lambda_.1} parent=1 // pred_check_branch
      %28 = sbr.rel (0) target = $region5
    $region4: #{_lambda_.1} parent=1 // pred_region
      _
    $region5: #{_lambda_.1} parent=1 // pred_fallthru
      _
    // Predicated region
    $region6: #{_lambda_.1} parent=1 // pred_check
      _
    $region7: #{_lambda_.1} parent=1 // pred_check_branch
      %30 = sbr.rel (0) target = $region9
    $region8: #{_lambda_.1} parent=1 // pred_region
      %s32 = ssub.s32 73728, 73728
      %33 = vsyncadd [#allocation3], %s32
      %s34 = sshll.u32 [#allocation2], 4
      %s35 = int_to_ptr.vmem [resolvable:$true] %s34
      %40 = dma.hbm_to_vmem [thread:$0]  %s1, 73728, %s35, [#allocation3], 512, 512, 32
    $region9: #{_lambda_.1} parent=1 // pred_fallthru
      _
    // Predicated region
    $region10: #{_lambda_.1} parent=1 // pred_check
      _
    $region11: #{_lambda_.1} parent=1 // pred_check_branch
      %42 = sbr.rel (0) target = $region13
    $region12: #{_lambda_.1} parent=1 // pred_region
      %s44 = ssub.s32 4608, 4608
      %45 = vsyncadd [#allocation6], %s44
      %s46 = sshll.u32 [#allocation5], 4
      %s47 = int_to_ptr.vmem [resolvable:$true] %s46
      %52 = dma.hbm_to_vmem [thread:$0]  %s2, 4608, %s47, [#allocation6], 128, 128, 8
    $region13: #{_lambda_.1} parent=1 // pred_fallthru
      _
    // Predicated region
    $region14: #{_lambda_.1} parent=1 // pred_check
      _
    $region15: #{_lambda_.1} parent=1 // pred_check_branch
      %54 = sbr.rel (0) target = $region17
    $region16: #{_lambda_.1} parent=1 // pred_region
      %s56 = ssub.s32 1152, 1152
      %57 = vsyncadd [#allocation6], %s56
      %s58 = sshll.u32 [#allocation7], 4
      %s59 = int_to_ptr.vmem [resolvable:$true] %s58
      %64 = dma.hbm_to_vmem [thread:$0]  %s3, 1152, %s59, [#allocation6], 128, 128, 8
    $region17: #{_lambda_.1} parent=1 // pred_fallthru
      _
    // Predicated region
    $region18: #{_lambda_.1} parent=1 // pred_check
      _
    $region19: #{_lambda_.1} parent=1 // pred_check_branch
      %66 = sbr.rel (0) target = $region21
    $region20: #{_lambda_.1} parent=1 // pred_region
      %s68 = ssub.s32 288, 288
      %69 = vsyncadd [#allocation9], %s68
      %s70 = sshll.u32 [#allocation8], 4
      %s71 = int_to_ptr.vmem [resolvable:$true] %s70
      %76 = dma.hbm_to_vmem [thread:$0]  %s4, 288, %s71, [#allocation9], 32, 32, 2
    $region21: #{_lambda_.1} parent=1 // pred_fallthru
      _
    // Predicated region
    $region22: #{_lambda_.1} parent=1 // pred_check
      _
    $region23: #{_lambda_.1} parent=1 // pred_check_branch
      %78 = sbr.rel (0) target = $region25
    $region24: #{_lambda_.1} parent=1 // pred_region
      %s80 = ssub.s32 73728, 73728
      %81 = vsyncadd [#allocation9], %s80
      %s82 = sshll.u32 [#allocation10], 4
      %s83 = int_to_ptr.vmem [resolvable:$true] %s82
      %88 = dma.hbm_to_vmem [thread:$0]  %s5, 73728, %s83, [#allocation9], 128, 128, 8
    $region25: #{_lambda_.1} parent=1 // pred_fallthru
      _
    // Predicated region
    $region26: #{_lambda_.1} parent=1 // pred_check
      _
    $region27: #{_lambda_.1} parent=1 // pred_check_branch
      %90 = sbr.rel (0) target = $region29
    $region28: #{_lambda_.1} parent=1 // pred_region
      %s92 = ssub.s32 64, 64
      %93 = vsyncadd [#allocation12], %s92
      %s94 = sshll.u32 [#allocation11], 4
      %s95 = int_to_ptr.vmem [resolvable:$true] %s94
      %100 = dma.hbm_to_vmem [thread:$0]  %s6, 64, %s95, [#allocation12], 16, 16, 1
    $region29: #{_lambda_.1} parent=1 // pred_fallthru
      _
    // Predicated region
    $region30: #{_lambda_.1} parent=1 // pred_check
      _
    $region31: #{_lambda_.1} parent=1 // pred_check_branch
      %102 = sbr.rel (0) target = $region33
    $region32: #{_lambda_.1} parent=1 // pred_region
      %s104 = ssub.s32 64, 64
      %105 = vsyncadd [#allocation12], %s104
      %s106 = sshll.u32 [#allocation13], 4
      %s107 = int_to_ptr.vmem [resolvable:$true] %s106
      %112 = dma.hbm_to_vmem [thread:$0]  %s7, 64, %s107, [#allocation12], 16, 16, 1
    $region33: #{_lambda_.1} parent=1 // pred_fallthru
      _
    // Predicated region
    $region34: #{_lambda_.1} parent=1 // pred_check
      _
    $region35: #{_lambda_.1} parent=1 // pred_check_branch
      %114 = sbr.rel (0) target = $region37
    $region36: #{_lambda_.1} parent=1 // pred_region
      %s116 = ssub.s32 64, 64
      %117 = vsyncadd [#allocation15], %s116
      %s118 = sshll.u32 [#allocation14], 4
      %s119 = int_to_ptr.vmem [resolvable:$true] %s118
      %124 = dma.hbm_to_vmem [thread:$0]  %s8, 64, %s119, [#allocation15], 16, 16, 1
    $region37: #{_lambda_.1} parent=1 // pred_fallthru
      _
    // Predicated region
    $region38: #{_lambda_.1} parent=1 // pred_check
      _
    $region39: #{_lambda_.1} parent=1 // pred_check_branch
      %126 = sbr.rel (0) target = $region41
    $region40: #{_lambda_.1} parent=1 // pred_region
      %s128 = ssub.s32 2048, 2048
      %129 = vsyncadd [#allocation15], %s128
      %s130 = sshll.u32 [#allocation16], 4
      %s131 = int_to_ptr.vmem [resolvable:$true] %s130
      %136 = dma.hbm_to_vmem [thread:$0]  %s9, 2048, %s131, [#allocation15], 128, 128, 8
    $region41: #{_lambda_.1} parent=1 // pred_fallthru
      _
    // Predicated region
    $region42: #{_lambda_.1} parent=1 // pred_check
      _
    $region43: #{_lambda_.1} parent=1 // pred_check_branch
      %138 = sbr.rel (0) target = $region45
    $region44: #{_lambda_.1} parent=1 // pred_region
      %s140 = ssub.s32 16, 16
      %141 = vsyncadd [#allocation18], %s140
      %s143 = sshll.u32 [#allocation17], 4
      %s144 = int_to_ptr.vmem [resolvable:$true] %s143
      %146 = dma.hbm_to_vmem [thread:$0]  %s10, 16, %s144, [#allocation18]
    $region45: #{_lambda_.1} parent=1 // pred_fallthru
      _
    // Predicated region
    $region46: #{_lambda_.1} parent=1 // pred_check
      _
    $region47: #{_lambda_.1} parent=1 // pred_check_branch
      %148 = sbr.rel (0) target = $region49
    $region48: #{_lambda_.1} parent=1 // pred_region
      %149 = dma.done [#allocation3], 73728
    $region49: #{_lambda_.1} parent=1 // pred_fallthru
      _
    // Predicated region
    $region50: #{_lambda_.1} parent=1 // pred_check
      _
    $region51: #{_lambda_.1} parent=1 // pred_check_branch
      %151 = sbr.rel (0) target = $region53
    $region52: #{_lambda_.1} parent=1 // pred_region
      %152 = dma.done [#allocation6], 4608
    $region53: #{_lambda_.1} parent=1 // pred_fallthru
      _
    // Predicated region
    $region54: #{_lambda_.1} parent=1 // pred_check
      _
    $region55: #{_lambda_.1} parent=1 // pred_check_branch
      %154 = sbr.rel (0) target = $region57
    $region56: #{_lambda_.1} parent=1 // pred_region
      %155 = dma.done [#allocation6], 1152
    $region57: #{_lambda_.1} parent=1 // pred_fallthru
      _
    // Predicated region
    $region58: #{_lambda_.1} parent=1 // pred_check
      _
    $region59: #{_lambda_.1} parent=1 // pred_check_branch
      %157 = sbr.rel (0) target = $region61
    $region60: #{_lambda_.1} parent=1 // pred_region
      %158 = dma.done [#allocation9], 288
    $region61: #{_lambda_.1} parent=1 // pred_fallthru
      _
    // Predicated region
    $region62: #{_lambda_.1} parent=1 // pred_check
      _
    $region63: #{_lambda_.1} parent=1 // pred_check_branch
      %160 = sbr.rel (0) target = $region65
    $region64: #{_lambda_.1} parent=1 // pred_region
      %161 = dma.done [#allocation9], 73728
    $region65: #{_lambda_.1} parent=1 // pred_fallthru
      _
    // Predicated region
    $region66: #{_lambda_.1} parent=1 // pred_check
      _
    $region67: #{_lambda_.1} parent=1 // pred_check_branch
      %163 = sbr.rel (0) target = $region69
    $region68: #{_lambda_.1} parent=1 // pred_region
      %164 = dma.done [#allocation12], 64
    $region69: #{_lambda_.1} parent=1 // pred_fallthru
      _
    // Predicated region
    $region70: #{_lambda_.1} parent=1 // pred_check
      _
    $region71: #{_lambda_.1} parent=1 // pred_check_branch
      %166 = sbr.rel (0) target = $region73
    $region72: #{_lambda_.1} parent=1 // pred_region
      %167 = dma.done [#allocation12], 64
    $region73: #{_lambda_.1} parent=1 // pred_fallthru
      _
    // Predicated region
    $region74: #{_lambda_.1} parent=1 // pred_check
      _
    $region75: #{_lambda_.1} parent=1 // pred_check_branch
      %169 = sbr.rel (0) target = $region77
    $region76: #{_lambda_.1} parent=1 // pred_region
      %170 = dma.done [#allocation15], 64
    $region77: #{_lambda_.1} parent=1 // pred_fallthru
      _
    // Predicated region
    $region78: #{_lambda_.1} parent=1 // pred_check
      _
    $region79: #{_lambda_.1} parent=1 // pred_check_branch
      %172 = sbr.rel (0) target = $region81
    $region80: #{_lambda_.1} parent=1 // pred_region
      %173 = dma.done [#allocation15], 2048
    $region81: #{_lambda_.1} parent=1 // pred_fallthru
      _
    // Predicated region
    $region82: #{_lambda_.1} parent=1 // pred_check
      _
    $region83: #{_lambda_.1} parent=1 // pred_check_branch
      %175 = sbr.rel (0) target = $region85
    $region84: #{_lambda_.1} parent=1 // pred_region
      %176 = dma.done [#allocation18], 16
    $region85: #{_lambda_.1} parent=1 // pred_fallthru
      _
    %v177 = vld [vmem:[%s0] sm:$0xff]
    %v178 = vld [vmem:[%s0 + $0x8] sm:$0xff]
    %v179 = vld [vmem:[%s0 + $0x10] sm:$0xff]
    %v180 = vld [vmem:[%s0 + $0x18] sm:$0xff]
    %v181 = vld [vmem:[%s0 + $0x20] sm:$0xff]
    %v182 = vld [vmem:[%s0 + $0x28] sm:$0xff]
    %v183 = vld [vmem:[%s0 + $0x30] sm:$0xff]
    %v184 = vld [vmem:[%s0 + $0x38] sm:$0xff]
    %v185 = vld [vmem:[%s0 + $0x40] sm:$0xff]
    %v186 = vld [vmem:[%s0 + $0x48] sm:$0xff]
    %v187 = vld [vmem:[%s0 + $0x50] sm:$0xff]
    %v188 = vld [vmem:[%s0 + $0x58] sm:$0xff]
    %v189 = vld [vmem:[%s0 + $0x60] sm:$0xff]
    %v190 = vld [vmem:[%s0 + $0x68] sm:$0xff]
    %v191 = vld [vmem:[%s0 + $0x70] sm:$0xff]
    %v192 = vld [vmem:[%s0 + $0x78] sm:$0xff]
    %v193 = vld [vmem:[%s0 + $0x80] sm:$0xff]
    %v194 = vld [vmem:[%s0 + $0x88] sm:$0xff]
    %v195 = vld [vmem:[%s0 + $0x90] sm:$0xff]
    %v196 = vld [vmem:[%s0 + $0x98] sm:$0xff]
    %v197 = vld [vmem:[%s0 + $0xa0] sm:$0xff]
    %v198 = vld [vmem:[%s0 + $0xa8] sm:$0xff]
    %v199 = vld [vmem:[%s0 + $0xb0] sm:$0xff]
    %v200 = vld [vmem:[%s0 + $0xb8] sm:$0xff]
    %v201 = vld [vmem:[%s0 + $0xc0] sm:$0xff]
    %v202 = vld [vmem:[%s0 + $0xc8] sm:$0xff]
    %v203 = vld [vmem:[%s0 + $0xd0] sm:$0xff]
    %v204 = vld [vmem:[%s0 + $0xd8] sm:$0xff]
    %v205 = vld [vmem:[%s0 + $0xe0] sm:$0xff]
    %v206 = vld [vmem:[%s0 + $0xe8] sm:$0xff]
    %v207 = vld [vmem:[%s0 + $0xf0] sm:$0xff]
    %v208 = vld [vmem:[%s0 + $0xf8] sm:$0xff]
    %v209 = vld [vmem:[%s0 + $0x100] sm:$0xff]
    %v210 = vld [vmem:[%s0 + $0x108] sm:$0xff]
    %v211 = vld [vmem:[%s0 + $0x110] sm:$0xff]
    %v212 = vld [vmem:[%s0 + $0x118] sm:$0xff]
    %v213 = vld [vmem:[%s0 + $0x120] sm:$0xff]
    %v214 = vld [vmem:[%s0 + $0x128] sm:$0xff]
    %v215 = vld [vmem:[%s0 + $0x130] sm:$0xff]
    %v216 = vld [vmem:[%s0 + $0x138] sm:$0xff]
    %v217 = vld [vmem:[%s0 + $0x140] sm:$0xff]
    %v218 = vld [vmem:[%s0 + $0x148] sm:$0xff]
    %v219 = vld [vmem:[%s0 + $0x150] sm:$0xff]
    %v220 = vld [vmem:[%s0 + $0x158] sm:$0xff]
    %v221 = vld [vmem:[%s0 + $0x160] sm:$0xff]
    %v222 = vld [vmem:[%s0 + $0x168] sm:$0xff]
    %v223 = vld [vmem:[%s0 + $0x170] sm:$0xff]
    %v224 = vld [vmem:[%s0 + $0x178] sm:$0xff]
    %v225 = vld [vmem:[%s0 + $0x180] sm:$0xff]
    %v226 = vld [vmem:[%s0 + $0x188] sm:$0xff]
    %v227 = vld [vmem:[%s0 + $0x190] sm:$0xff]
    %v228 = vld [vmem:[%s0 + $0x198] sm:$0xff]
    %v229 = vld [vmem:[%s0 + $0x1a0] sm:$0xff]
    %v230 = vld [vmem:[%s0 + $0x1a8] sm:$0xff]
    %v231 = vld [vmem:[%s0 + $0x1b0] sm:$0xff]
    %v232 = vld [vmem:[%s0 + $0x1b8] sm:$0xff]
    %v233 = vld [vmem:[%s0 + $0x1c0] sm:$0xff]
    %v234 = vld [vmem:[%s0 + $0x1c8] sm:$0xff]
    %v235 = vld [vmem:[%s0 + $0x1d0] sm:$0xff]
    %v236 = vld [vmem:[%s0 + $0x1d8] sm:$0xff]
    %v237 = vld [vmem:[%s0 + $0x1e0] sm:$0xff]
    %v238 = vld [vmem:[%s0 + $0x1e8] sm:$0xff]
    %v239 = vld [vmem:[%s0 + $0x1f0] sm:$0xff]
    %v240 = vld [vmem:[%s0 + $0x1f8] sm:$0xff]
    %v241 = vld [vmem:[#allocation2] sm:$0xff]
    %v242 = vld [vmem:[#allocation2 + $0x8] sm:$0xff]
    %v243 = vld [vmem:[#allocation2 + $0x10] sm:$0xff]
    %v244 = vld [vmem:[#allocation2 + $0x18] sm:$0xff]
    %v245 = vld [vmem:[#allocation2 + $0x20] sm:$0xff]
    %v246 = vld [vmem:[#allocation2 + $0x28] sm:$0xff]
    %v247 = vld [vmem:[#allocation2 + $0x30] sm:$0xff]
    %v248 = vld [vmem:[#allocation2 + $0x38] sm:$0xff]
    %v249 = vld [vmem:[#allocation2 + $0x40] sm:$0xff]
    %v250 = vld [vmem:[#allocation2 + $0x48] sm:$0xff]
    %v251 = vld [vmem:[#allocation2 + $0x50] sm:$0xff]
    %v252 = vld [vmem:[#allocation2 + $0x58] sm:$0xff]
    %v253 = vld [vmem:[#allocation2 + $0x60] sm:$0xff]
    %v254 = vld [vmem:[#allocation2 + $0x68] sm:$0xff]
    %v255 = vld [vmem:[#allocation2 + $0x70] sm:$0xff]
    %v256 = vld [vmem:[#allocation2 + $0x78] sm:$0xff]
    %v257 = vld [vmem:[#allocation2 + $0x80] sm:$0xff]
    %v258 = vld [vmem:[#allocation2 + $0x88] sm:$0xff]
    %v259 = vld [vmem:[#allocation2 + $0x90] sm:$0xff]
    %v260 = vld [vmem:[#allocation2 + $0x98] sm:$0xff]
    %v261 = vld [vmem:[#allocation2 + $0xa0] sm:$0xff]
    %v262 = vld [vmem:[#allocation2 + $0xa8] sm:$0xff]
    %v263 = vld [vmem:[#allocation2 + $0xb0] sm:$0xff]
    %v264 = vld [vmem:[#allocation2 + $0xb8] sm:$0xff]
    %v265 = vld [vmem:[#allocation2 + $0xc0] sm:$0xff]
    %v266 = vld [vmem:[#allocation2 + $0xc8] sm:$0xff]
    %v267 = vld [vmem:[#allocation2 + $0xd0] sm:$0xff]
    %v268 = vld [vmem:[#allocation2 + $0xd8] sm:$0xff]
    %v269 = vld [vmem:[#allocation2 + $0xe0] sm:$0xff]
    %v270 = vld [vmem:[#allocation2 + $0xe8] sm:$0xff]
    %v271 = vld [vmem:[#allocation2 + $0xf0] sm:$0xff]
    %v272 = vld [vmem:[#allocation2 + $0xf8] sm:$0xff]
    %v273 = vld [vmem:[#allocation2 + $0x100] sm:$0xff]
    %v274 = vld [vmem:[#allocation2 + $0x108] sm:$0xff]
    %v275 = vld [vmem:[#allocation2 + $0x110] sm:$0xff]
    %v276 = vld [vmem:[#allocation2 + $0x118] sm:$0xff]
    %v277 = vld [vmem:[#allocation2 + $0x120] sm:$0xff]
    %v278 = vld [vmem:[#allocation2 + $0x128] sm:$0xff]
    %v279 = vld [vmem:[#allocation2 + $0x130] sm:$0xff]
    %v280 = vld [vmem:[#allocation2 + $0x138] sm:$0xff]
    %v281 = vld [vmem:[#allocation2 + $0x140] sm:$0xff]
    %v282 = vld [vmem:[#allocation2 + $0x148] sm:$0xff]
    %v283 = vld [vmem:[#allocation2 + $0x150] sm:$0xff]
    %v284 = vld [vmem:[#allocation2 + $0x158] sm:$0xff]
    %v285 = vld [vmem:[#allocation2 + $0x160] sm:$0xff]
    %v286 = vld [vmem:[#allocation2 + $0x168] sm:$0xff]
    %v287 = vld [vmem:[#allocation2 + $0x170] sm:$0xff]
    %v288 = vld [vmem:[#allocation2 + $0x178] sm:$0xff]
    %v289 = vld [vmem:[#allocation2 + $0x180] sm:$0xff]
    %v290 = vld [vmem:[#allocation2 + $0x188] sm:$0xff]
    %v291 = vld [vmem:[#allocation2 + $0x190] sm:$0xff]
    %v292 = vld [vmem:[#allocation2 + $0x198] sm:$0xff]
    %v293 = vld [vmem:[#allocation2 + $0x1a0] sm:$0xff]
    %v294 = vld [vmem:[#allocation2 + $0x1a8] sm:$0xff]
    %v295 = vld [vmem:[#allocation2 + $0x1b0] sm:$0xff]
    %v296 = vld [vmem:[#allocation2 + $0x1b8] sm:$0xff]
    %v297 = vld [vmem:[#allocation2 + $0x1c0] sm:$0xff]
    %v298 = vld [vmem:[#allocation2 + $0x1c8] sm:$0xff]
    %v299 = vld [vmem:[#allocation2 + $0x1d0] sm:$0xff]
    %v300 = vld [vmem:[#allocation2 + $0x1d8] sm:$0xff]
    %v301 = vld [vmem:[#allocation2 + $0x1e0] sm:$0xff]
    %v302 = vld [vmem:[#allocation2 + $0x1e8] sm:$0xff]
    %v303 = vld [vmem:[#allocation2 + $0x1f0] sm:$0xff]
    %v304 = vld [vmem:[#allocation2 + $0x1f8] sm:$0xff]
    %305 = vmatprep.subr.mxu0 0.0
    %306 = vmatpush1.msra.mxu0 %v177
    %307 = vmatprep.subr.mxu0 0.0
    %308 = vmatpush1.msra.mxu0 %v178
    %309 = vmatprep.subr.mxu0 0.0
    %310 = vmatpush1.msra.mxu0 %v179
    %311 = vmatprep.subr.mxu0 0.0
    %312 = vmatpush1.msra.mxu0 %v180
    %313 = vmatprep.subr.mxu0 0.0
    %314 = vmatpush1.msra.mxu0 %v181
    %315 = vmatprep.subr.mxu0 0.0
    %316 = vmatpush1.msra.mxu0 %v182
    %317 = vmatprep.subr.mxu0 0.0
    %318 = vmatpush1.msra.mxu0 %v183
    %319 = vmatprep.subr.mxu0 0.0
    %320 = vmatpush1.msra.mxu0 %v184
    %321 = vmatprep.subr.mxu0 0.0
    %322 = vmatpush1.msra.mxu0 %v185
    %323 = vmatprep.subr.mxu0 0.0
    %324 = vmatpush1.msra.mxu0 %v186
    %325 = vmatprep.subr.mxu0 0.0
    %326 = vmatpush1.msra.mxu0 %v187
    %327 = vmatprep.subr.mxu0 0.0
    %328 = vmatpush1.msra.mxu0 %v188
    %329 = vmatprep.subr.mxu0 0.0
    %330 = vmatpush1.msra.mxu0 %v189
    %331 = vmatprep.subr.mxu0 0.0
    %332 = vmatpush1.msra.mxu0 %v190
    %333 = vmatprep.subr.mxu0 0.0
    %334 = vmatpush1.msra.mxu0 %v191
    %335 = vmatprep.subr.mxu0 0.0
    %336 = vmatpush1.msra.mxu0 %v192
    %337 = vmatprep.subr.mxu0 0.0
    %338 = vmatpush1.msra.mxu0 %v193
    %339 = vmatprep.subr.mxu0 0.0
    %340 = vmatpush1.msra.mxu0 %v194
    %341 = vmatprep.subr.mxu0 0.0
    %342 = vmatpush1.msra.mxu0 %v195
    %343 = vmatprep.subr.mxu0 0.0
    %344 = vmatpush1.msra.mxu0 %v196
    %345 = vmatprep.subr.mxu0 0.0
    %346 = vmatpush1.msra.mxu0 %v197
    %347 = vmatprep.subr.mxu0 0.0
    %348 = vmatpush1.msra.mxu0 %v198
    %349 = vmatprep.subr.mxu0 0.0
    %350 = vmatpush1.msra.mxu0 %v199
    %351 = vmatprep.subr.mxu0 0.0
    %352 = vmatpush1.msra.mxu0 %v200
    %353 = vmatprep.subr.mxu0 0.0
    %354 = vmatpush1.msra.mxu0 %v201
    %355 = vmatprep.subr.mxu0 0.0
    %356 = vmatpush1.msra.mxu0 %v202
    %357 = vmatprep.subr.mxu0 0.0
    %358 = vmatpush1.msra.mxu0 %v203
    %359 = vmatprep.subr.mxu0 0.0
    %360 = vmatpush1.msra.mxu0 %v204
    %361 = vmatprep.subr.mxu0 0.0
    %362 = vmatpush1.msra.mxu0 %v205
    %363 = vmatprep.subr.mxu0 0.0
    %364 = vmatpush1.msra.mxu0 %v206
    %365 = vmatprep.subr.mxu0 0.0
    %366 = vmatpush1.msra.mxu0 %v207
    %367 = vmatprep.subr.mxu0 0.0
    %368 = vmatpush1.msra.mxu0 %v208
    %369 = vmatprep.mubr.f32.mxu0 %v242
    %370 = vmatmul.mubr.f32.gmra.mrb[0].mxu0 %v241
    %v371 = vpop.f32.mrb[0].mxu0
    %v372 = vadd.f32 0.0, %v371
    %v373 = vpop.f32.mrb[0].mxu0
    %374 = vmatprep.mubr.f32.mxu0 %v246
    %375 = vmatmul.mubr.f32.gmra.mrb[0].mxu0 %v245
    %v376 = vpop.f32.mrb[0].mxu0
    %v377 = vadd.f32 0.0, %v376
    %v378 = vpop.f32.mrb[0].mxu0
    %379 = vmatprep.mubr.f32.mxu0 %v250
    %380 = vmatmul.mubr.f32.gmra.mrb[0].mxu0 %v249
    %v381 = vpop.f32.mrb[0].mxu0
    %v382 = vadd.f32 0.0, %v381
    %v383 = vpop.f32.mrb[0].mxu0
    %384 = vmatprep.mubr.f32.mxu0 %v254
    %385 = vmatmul.mubr.f32.gmra.mrb[0].mxu0 %v253
    %v386 = vpop.f32.mrb[0].mxu0
    %v387 = vadd.f32 0.0, %v386
    %v388 = vpop.f32.mrb[0].mxu0
    %389 = vmatprep.mubr.f32.mxu0 %v258
    %390 = vmatmul.mubr.f32.gmra.mrb[0].mxu0 %v257
    %v391 = vpop.f32.mrb[0].mxu0
    %v392 = vadd.f32 0.0, %v391
    %v393 = vpop.f32.mrb[0].mxu0
    %394 = vmatprep.mubr.f32.mxu0 %v262
    %395 = vmatmul.mubr.f32.gmra.mrb[0].mxu0 %v261
    %v396 = vpop.f32.mrb[0].mxu0
    %v397 = vadd.f32 0.0, %v396
    %v398 = vpop.f32.mrb[0].mxu0
    %399 = vmatprep.mubr.f32.mxu0 %v266
    %400 = vmatmul.mubr.f32.gmra.mrb[0].mxu0 %v265
    %v401 = vpop.f32.mrb[0].mxu0
    %v402 = vadd.f32 0.0, %v401
    %v403 = vpop.f32.mrb[0].mxu0
    %404 = vmatprep.mubr.f32.mxu0 %v270
    %405 = vmatmul.mubr.f32.gmra.mrb[0].mxu0 %v269
    %v406 = vpop.f32.mrb[0].mxu0
    %v407 = vadd.f32 0.0, %v406
    %v408 = vpop.f32.mrb[0].mxu0
    %409 = vmatprep.mubr.f32.mxu0 %v274
    %410 = vmatmul.mubr.f32.gmra.mrb[0].mxu0 %v273
    %v411 = vpop.f32.mrb[0].mxu0
    %v412 = vadd.f32 0.0, %v411
    %v413 = vpop.f32.mrb[0].mxu0
    %414 = vmatprep.mubr.f32.mxu0 %v278
    %415 = vmatmul.mubr.f32.gmra.mrb[0].mxu0 %v277
    %v416 = vpop.f32.mrb[0].mxu0
    %v417 = vadd.f32 0.0, %v416
    %v418 = vpop.f32.mrb[0].mxu0
    %419 = vmatprep.mubr.f32.mxu0 %v282
    %420 = vmatmul.mubr.f32.gmra.mrb[0].mxu0 %v281
    %v421 = vpop.f32.mrb[0].mxu0
    %v422 = vadd.f32 0.0, %v421
    %v423 = vpop.f32.mrb[0].mxu0
    %424 = vmatprep.mubr.f32.mxu0 %v286
    %425 = vmatmul.mubr.f32.gmra.mrb[0].mxu0 %v285
    %v426 = vpop.f32.mrb[0].mxu0
    %v427 = vadd.f32 0.0, %v426
    %v428 = vpop.f32.mrb[0].mxu0
    %429 = vmatprep.mubr.f32.mxu0 %v290
    %430 = vmatmul.mubr.f32.gmra.mrb[0].mxu0 %v289
    %v431 = vpop.f32.mrb[0].mxu0
    %v432 = vadd.f32 0.0, %v431
    %v433 = vpop.f32.mrb[0].mxu0
    %434 = vmatprep.mubr.f32.mxu0 %v294
    %435 = vmatmul.mubr.f32.gmra.mrb[0].mxu0 %v293
    %v436 = vpop.f32.mrb[0].mxu0
    %v437 = vadd.f32 0.0, %v436
    %v438 = vpop.f32.mrb[0].mxu0
    %439 = vmatprep.mubr.f32.mxu0 %v298
    %440 = vmatmul.mubr.f32.gmra.mrb[0].mxu0 %v297
    %v441 = vpop.f32.mrb[0].mxu0
    %v442 = vadd.f32 0.0, %v441
    %v443 = vpop.f32.mrb[0].mxu0
    %444 = vmatprep.mubr.f32.mxu0 %v302
    %445 = vmatmul.mubr.f32.gmra.mrb[0].mxu0 %v301
    %v446 = vpop.f32.mrb[0].mxu0
    %v447 = vadd.f32 0.0, %v446
    %v448 = vpop.f32.mrb[0].mxu0
    %449 = vdwg.mxu0
    %450 = vmatprep.subr.mxu0 0.0
    %451 = vmatpush1.msra.mxu0 %v209
    %452 = vmatprep.subr.mxu0 0.0
    %453 = vmatpush1.msra.mxu0 %v210
    %454 = vmatprep.subr.mxu0 0.0
    %455 = vmatpush1.msra.mxu0 %v211
    %456 = vmatprep.subr.mxu0 0.0
    %457 = vmatpush1.msra.mxu0 %v212
    %458 = vmatprep.subr.mxu0 0.0
    %459 = vmatpush1.msra.mxu0 %v213
    %460 = vmatprep.subr.mxu0 0.0
    %461 = vmatpush1.msra.mxu0 %v214
    %462 = vmatprep.subr.mxu0 0.0
    %463 = vmatpush1.msra.mxu0 %v215
    %464 = vmatprep.subr.mxu0 0.0
    %465 = vmatpush1.msra.mxu0 %v216
    %466 = vmatprep.subr.mxu0 0.0
    %467 = vmatpush1.msra.mxu0 %v217
    %468 = vmatprep.subr.mxu0 0.0
    %469 = vmatpush1.msra.mxu0 %v218
    %470 = vmatprep.subr.mxu0 0.0
    %471 = vmatpush1.msra.mxu0 %v219
    %472 = vmatprep.subr.mxu0 0.0
    %473 = vmatpush1.msra.mxu0 %v220
    %474 = vmatprep.subr.mxu0 0.0
    %475 = vmatpush1.msra.mxu0 %v221
    %476 = vmatprep.subr.mxu0 0.0
    %477 = vmatpush1.msra.mxu0 %v222
    %478 = vmatprep.subr.mxu0 0.0
    %479 = vmatpush1.msra.mxu0 %v223
    %480 = vmatprep.subr.mxu0 0.0
    %481 = vmatpush1.msra.mxu0 %v224
    %482 = vmatprep.subr.mxu0 0.0
    %483 = vmatpush1.msra.mxu0 %v225
    %484 = vmatprep.subr.mxu0 0.0
    %485 = vmatpush1.msra.mxu0 %v226
    %486 = vmatprep.subr.mxu0 0.0
    %487 = vmatpush1.msra.mxu0 %v227
    %488 = vmatprep.subr.mxu0 0.0
    %489 = vmatpush1.msra.mxu0 %v228
    %490 = vmatprep.subr.mxu0 0.0
    %491 = vmatpush1.msra.mxu0 %v229
    %492 = vmatprep.subr.mxu0 0.0
    %493 = vmatpush1.msra.mxu0 %v230
    %494 = vmatprep.subr.mxu0 0.0
    %495 = vmatpush1.msra.mxu0 %v231
    %496 = vmatprep.subr.mxu0 0.0
    %497 = vmatpush1.msra.mxu0 %v232
    %498 = vmatprep.subr.mxu0 0.0
    %499 = vmatpush1.msra.mxu0 %v233
    %500 = vmatprep.subr.mxu0 0.0
    %501 = vmatpush1.msra.mxu0 %v234
    %502 = vmatprep.subr.mxu0 0.0
    %503 = vmatpush1.msra.mxu0 %v235
    %504 = vmatprep.subr.mxu0 0.0
    %505 = vmatpush1.msra.mxu0 %v236
    %506 = vmatprep.subr.mxu0 0.0
    %507 = vmatpush1.msra.mxu0 %v237
    %508 = vmatprep.subr.mxu0 0.0
    %509 = vmatpush1.msra.mxu0 %v238
    %510 = vmatprep.subr.mxu0 0.0
    %511 = vmatpush1.msra.mxu0 %v239
    %512 = vmatprep.subr.mxu0 0.0
    %513 = vmatpush1.msra.mxu0 %v240
    %514 = vmatprep.mubr.f32.mxu0 %v244
    %515 = vmatmul.mubr.f32.gmra.mrb[0].mxu0 %v243
    %v516 = vpop.f32.mrb[0].mxu0
    %v517 = vadd.f32 %v372, %v516
    %v518 = vpop.f32.mrb[0].mxu0
    %519 = vmatprep.mubr.f32.mxu0 %v248
    %520 = vmatmul.mubr.f32.gmra.mrb[0].mxu0 %v247
    %v521 = vpop.f32.mrb[0].mxu0
    %v522 = vadd.f32 %v377, %v521
    %v523 = vpop.f32.mrb[0].mxu0
    %524 = vmatprep.mubr.f32.mxu0 %v252
    %525 = vmatmul.mubr.f32.gmra.mrb[0].mxu0 %v251
    %v526 = vpop.f32.mrb[0].mxu0
    %v527 = vadd.f32 %v382, %v526
    %v528 = vpop.f32.mrb[0].mxu0
    %529 = vmatprep.mubr.f32.mxu0 %v256
    %530 = vmatmul.mubr.f32.gmra.mrb[0].mxu0 %v255
    %v531 = vpop.f32.mrb[0].mxu0
    %v532 = vadd.f32 %v387, %v531
    %v533 = vpop.f32.mrb[0].mxu0
    %534 = vmatprep.mubr.f32.mxu0 %v260
    %535 = vmatmul.mubr.f32.gmra.mrb[0].mxu0 %v259
    %v536 = vpop.f32.mrb[0].mxu0
    %v537 = vadd.f32 %v392, %v536
    %v538 = vpop.f32.mrb[0].mxu0
    %539 = vmatprep.mubr.f32.mxu0 %v264
    %540 = vmatmul.mubr.f32.gmra.mrb[0].mxu0 %v263
    %v541 = vpop.f32.mrb[0].mxu0
    %v542 = vadd.f32 %v397, %v541
    %v543 = vpop.f32.mrb[0].mxu0
    %544 = vmatprep.mubr.f32.mxu0 %v268
    %545 = vmatmul.mubr.f32.gmra.mrb[0].mxu0 %v267
    %v546 = vpop.f32.mrb[0].mxu0
    %v547 = vadd.f32 %v402, %v546
    %v548 = vpop.f32.mrb[0].mxu0
    %549 = vmatprep.mubr.f32.mxu0 %v272
    %550 = vmatmul.mubr.f32.gmra.mrb[0].mxu0 %v271
    %v551 = vpop.f32.mrb[0].mxu0
    %v552 = vadd.f32 %v407, %v551
    %v553 = vpop.f32.mrb[0].mxu0
    %554 = vmatprep.mubr.f32.mxu0 %v276
    %555 = vmatmul.mubr.f32.gmra.mrb[0].mxu0 %v275
    %v556 = vpop.f32.mrb[0].mxu0
    %v557 = vadd.f32 %v412, %v556
    %v558 = vpop.f32.mrb[0].mxu0
    %559 = vmatprep.mubr.f32.mxu0 %v280
    %560 = vmatmul.mubr.f32.gmra.mrb[0].mxu0 %v279
    %v561 = vpop.f32.mrb[0].mxu0
    %v562 = vadd.f32 %v417, %v561
    %v563 = vpop.f32.mrb[0].mxu0
    %564 = vmatprep.mubr.f32.mxu0 %v284
    %565 = vmatmul.mubr.f32.gmra.mrb[0].mxu0 %v283
    %v566 = vpop.f32.mrb[0].mxu0
    %v567 = vadd.f32 %v422, %v566
    %v568 = vpop.f32.mrb[0].mxu0
    %569 = vmatprep.mubr.f32.mxu0 %v288
    %570 = vmatmul.mubr.f32.gmra.mrb[0].mxu0 %v287
    %v571 = vpop.f32.mrb[0].mxu0
    %v572 = vadd.f32 %v427, %v571
    %v573 = vpop.f32.mrb[0].mxu0
    %574 = vmatprep.mubr.f32.mxu0 %v292
    %575 = vmatmul.mubr.f32.gmra.mrb[0].mxu0 %v291
    %v576 = vpop.f32.mrb[0].mxu0
    %v577 = vadd.f32 %v432, %v576
    %v578 = vpop.f32.mrb[0].mxu0
    %579 = vmatprep.mubr.f32.mxu0 %v296
    %580 = vmatmul.mubr.f32.gmra.mrb[0].mxu0 %v295
    %v581 = vpop.f32.mrb[0].mxu0
    %v582 = vadd.f32 %v437, %v581
    %v583 = vpop.f32.mrb[0].mxu0
    %584 = vmatprep.mubr.f32.mxu0 %v300
    %585 = vmatmul.mubr.f32.gmra.mrb[0].mxu0 %v299
    %v586 = vpop.f32.mrb[0].mxu0
    %v587 = vadd.f32 %v442, %v586
    %v588 = vpop.f32.mrb[0].mxu0
    %589 = vmatprep.mubr.f32.mxu0 %v304
    %590 = vmatmul.mubr.f32.gmra.mrb[0].mxu0 %v303
    %v591 = vpop.f32.mrb[0].mxu0
    %v592 = vadd.f32 %v447, %v591
    %v593 = vpop.f32.mrb[0].mxu0
    %594 = vdwg.mxu0
    %v595 = vld [vmem:[#allocation10] sm:$0xff]
    %v596 = vld [vmem:[#allocation10 + $0x8] sm:$0xff]
    %v597 = vld [vmem:[#allocation10 + $0x10] sm:$0xff]
    %v598 = vld [vmem:[#allocation10 + $0x18] sm:$0xff]
    %v599 = vld [vmem:[#allocation10 + $0x20] sm:$0xff]
    %v600 = vld [vmem:[#allocation10 + $0x28] sm:$0xff]
    %v601 = vld [vmem:[#allocation10 + $0x30] sm:$0xff]
    %v602 = vld [vmem:[#allocation10 + $0x38] sm:$0xff]
    %v603 = vld [vmem:[#allocation10 + $0x40] sm:$0xff]
    %v604 = vld [vmem:[#allocation10 + $0x48] sm:$0xff]
    %v605 = vld [vmem:[#allocation10 + $0x50] sm:$0xff]
    %v606 = vld [vmem:[#allocation10 + $0x58] sm:$0xff]
    %v607 = vld [vmem:[#allocation10 + $0x60] sm:$0xff]
    %v608 = vld [vmem:[#allocation10 + $0x68] sm:$0xff]
    %v609 = vld [vmem:[#allocation10 + $0x70] sm:$0xff]
    %v610 = vld [vmem:[#allocation10 + $0x78] sm:$0xff]
    %s611 = scalar_lea.vmem [#allocation2], 512
    %v612 = vld [vmem:[%s611] sm:$0xff]
    %v613 = vld [vmem:[%s611 + $0x8] sm:$0xff]
    %v614 = vld [vmem:[%s611 + $0x10] sm:$0xff]
    %v615 = vld [vmem:[%s611 + $0x18] sm:$0xff]
    %v616 = vld [vmem:[%s611 + $0x20] sm:$0xff]
    %v617 = vld [vmem:[%s611 + $0x28] sm:$0xff]
    %v618 = vld [vmem:[%s611 + $0x30] sm:$0xff]
    %v619 = vld [vmem:[%s611 + $0x38] sm:$0xff]
    %v620 = vld [vmem:[%s611 + $0x40] sm:$0xff]
    %v621 = vld [vmem:[%s611 + $0x48] sm:$0xff]
    %v622 = vld [vmem:[%s611 + $0x50] sm:$0xff]
    %v623 = vld [vmem:[%s611 + $0x58] sm:$0xff]
    %v624 = vld [vmem:[%s611 + $0x60] sm:$0xff]
    %v625 = vld [vmem:[%s611 + $0x68] sm:$0xff]
    %v626 = vld [vmem:[%s611 + $0x70] sm:$0xff]
    %v627 = vld [vmem:[%s611 + $0x78] sm:$0xff]
    %v628 = vld [vmem:[%s611 + $0x80] sm:$0xff]
    %v629 = vld [vmem:[%s611 + $0x88] sm:$0xff]
    %v630 = vld [vmem:[%s611 + $0x90] sm:$0xff]
    %v631 = vld [vmem:[%s611 + $0x98] sm:$0xff]
    %v632 = vld [vmem:[%s611 + $0xa0] sm:$0xff]
    %v633 = vld [vmem:[%s611 + $0xa8] sm:$0xff]
    %v634 = vld [vmem:[%s611 + $0xb0] sm:$0xff]
    %v635 = vld [vmem:[%s611 + $0xb8] sm:$0xff]
    %v636 = vld [vmem:[%s611 + $0xc0] sm:$0xff]
    %v637 = vld [vmem:[%s611 + $0xc8] sm:$0xff]
    %v638 = vld [vmem:[%s611 + $0xd0] sm:$0xff]
    %v639 = vld [vmem:[%s611 + $0xd8] sm:$0xff]
    %v640 = vld [vmem:[%s611 + $0xe0] sm:$0xff]
    %v641 = vld [vmem:[%s611 + $0xe8] sm:$0xff]
    %v642 = vld [vmem:[%s611 + $0xf0] sm:$0xff]
    %v643 = vld [vmem:[%s611 + $0xf8] sm:$0xff]
    %v644 = vld [vmem:[%s611 + $0x100] sm:$0xff]
    %v645 = vld [vmem:[%s611 + $0x108] sm:$0xff]
    %v646 = vld [vmem:[%s611 + $0x110] sm:$0xff]
    %v647 = vld [vmem:[%s611 + $0x118] sm:$0xff]
    %v648 = vld [vmem:[%s611 + $0x120] sm:$0xff]
    %v649 = vld [vmem:[%s611 + $0x128] sm:$0xff]
    %v650 = vld [vmem:[%s611 + $0x130] sm:$0xff]
    %v651 = vld [vmem:[%s611 + $0x138] sm:$0xff]
    %v652 = vld [vmem:[%s611 + $0x140] sm:$0xff]
    %v653 = vld [vmem:[%s611 + $0x148] sm:$0xff]
    %v654 = vld [vmem:[%s611 + $0x150] sm:$0xff]
    %v655 = vld [vmem:[%s611 + $0x158] sm:$0xff]
    %v656 = vld [vmem:[%s611 + $0x160] sm:$0xff]
    %v657 = vld [vmem:[%s611 + $0x168] sm:$0xff]
    %v658 = vld [vmem:[%s611 + $0x170] sm:$0xff]
    %v659 = vld [vmem:[%s611 + $0x178] sm:$0xff]
    %v660 = vld [vmem:[%s611 + $0x180] sm:$0xff]
    %v661 = vld [vmem:[%s611 + $0x188] sm:$0xff]
    %v662 = vld [vmem:[%s611 + $0x190] sm:$0xff]
    %v663 = vld [vmem:[%s611 + $0x198] sm:$0xff]
    %v664 = vld [vmem:[%s611 + $0x1a0] sm:$0xff]
    %v665 = vld [vmem:[%s611 + $0x1a8] sm:$0xff]
    %v666 = vld [vmem:[%s611 + $0x1b0] sm:$0xff]
    %v667 = vld [vmem:[%s611 + $0x1b8] sm:$0xff]
    %v668 = vld [vmem:[%s611 + $0x1c0] sm:$0xff]
    %v669 = vld [vmem:[%s611 + $0x1c8] sm:$0xff]
    %v670 = vld [vmem:[%s611 + $0x1d0] sm:$0xff]
    %v671 = vld [vmem:[%s611 + $0x1d8] sm:$0xff]
    %v672 = vld [vmem:[%s611 + $0x1e0] sm:$0xff]
    %v673 = vld [vmem:[%s611 + $0x1e8] sm:$0xff]
    %v674 = vld [vmem:[%s611 + $0x1f0] sm:$0xff]
    %v675 = vld [vmem:[%s611 + $0x1f8] sm:$0xff]
    %676 = vmatprep.subr.mxu0 0.0
    %677 = vmatpush1.msra.mxu0 %v177
    %678 = vmatprep.subr.mxu0 0.0
    %679 = vmatpush1.msra.mxu0 %v178
    %680 = vmatprep.subr.mxu0 0.0
    %681 = vmatpush1.msra.mxu0 %v179
    %682 = vmatprep.subr.mxu0 0.0
    %683 = vmatpush1.msra.mxu0 %v180
    %684 = vmatprep.subr.mxu0 0.0
    %685 = vmatpush1.msra.mxu0 %v181
    %686 = vmatprep.subr.mxu0 0.0
    %687 = vmatpush1.msra.mxu0 %v182
    %688 = vmatprep.subr.mxu0 0.0
    %689 = vmatpush1.msra.mxu0 %v183
    %690 = vmatprep.subr.mxu0 0.0
    %691 = vmatpush1.msra.mxu0 %v184
    %692 = vmatprep.subr.mxu0 0.0
    %693 = vmatpush1.msra.mxu0 %v185
    %694 = vmatprep.subr.mxu0 0.0
    %695 = vmatpush1.msra.mxu0 %v186
    %696 = vmatprep.subr.mxu0 0.0
    %697 = vmatpush1.msra.mxu0 %v187
    %698 = vmatprep.subr.mxu0 0.0
    %699 = vmatpush1.msra.mxu0 %v188
    %700 = vmatprep.subr.mxu0 0.0
    %701 = vmatpush1.msra.mxu0 %v189
    %702 = vmatprep.subr.mxu0 0.0
    %703 = vmatpush1.msra.mxu0 %v190
    %704 = vmatprep.subr.mxu0 0.0
    %705 = vmatpush1.msra.mxu0 %v191
    %706 = vmatprep.subr.mxu0 0.0
    %707 = vmatpush1.msra.mxu0 %v192
    %708 = vmatprep.subr.mxu0 0.0
    %709 = vmatpush1.msra.mxu0 %v193
    %710 = vmatprep.subr.mxu0 0.0
    %711 = vmatpush1.msra.mxu0 %v194
    %712 = vmatprep.subr.mxu0 0.0
    %713 = vmatpush1.msra.mxu0 %v195
    %714 = vmatprep.subr.mxu0 0.0
    %715 = vmatpush1.msra.mxu0 %v196
    %716 = vmatprep.subr.mxu0 0.0
    %717 = vmatpush1.msra.mxu0 %v197
    %718 = vmatprep.subr.mxu0 0.0
    %719 = vmatpush1.msra.mxu0 %v198
    %720 = vmatprep.subr.mxu0 0.0
    %721 = vmatpush1.msra.mxu0 %v199
    %722 = vmatprep.subr.mxu0 0.0
    %723 = vmatpush1.msra.mxu0 %v200
    %724 = vmatprep.subr.mxu0 0.0
    %725 = vmatpush1.msra.mxu0 %v201
    %726 = vmatprep.subr.mxu0 0.0
    %727 = vmatpush1.msra.mxu0 %v202
    %728 = vmatprep.subr.mxu0 0.0
    %729 = vmatpush1.msra.mxu0 %v203
    %730 = vmatprep.subr.mxu0 0.0
    %731 = vmatpush1.msra.mxu0 %v204
    %732 = vmatprep.subr.mxu0 0.0
    %733 = vmatpush1.msra.mxu0 %v205
    %734 = vmatprep.subr.mxu0 0.0
    %735 = vmatpush1.msra.mxu0 %v206
    %736 = vmatprep.subr.mxu0 0.0
    %737 = vmatpush1.msra.mxu0 %v207
    %738 = vmatprep.subr.mxu0 0.0
    %739 = vmatpush1.msra.mxu0 %v208
    %740 = vmatprep.mubr.f32.mxu0 %v613
    %741 = vmatmul.mubr.f32.gmra.mrb[0].mxu0 %v612
    %v742 = vpop.f32.mrb[0].mxu0
    %v743 = vadd.f32 0.0, %v742
    %v744 = vpop.f32.mrb[0].mxu0
    %745 = vmatprep.mubr.f32.mxu0 %v617
    %746 = vmatmul.mubr.f32.gmra.mrb[0].mxu0 %v616
    %v747 = vpop.f32.mrb[0].mxu0
    %v748 = vadd.f32 0.0, %v747
    %v749 = vpop.f32.mrb[0].mxu0
    %750 = vmatprep.mubr.f32.mxu0 %v621
    %751 = vmatmul.mubr.f32.gmra.mrb[0].mxu0 %v620
    %v752 = vpop.f32.mrb[0].mxu0
    %v753 = vadd.f32 0.0, %v752
    %v754 = vpop.f32.mrb[0].mxu0
    %755 = vmatprep.mubr.f32.mxu0 %v625
    %756 = vmatmul.mubr.f32.gmra.mrb[0].mxu0 %v624
    %v757 = vpop.f32.mrb[0].mxu0
    %v758 = vadd.f32 0.0, %v757
    %v759 = vpop.f32.mrb[0].mxu0
    %760 = vmatprep.mubr.f32.mxu0 %v629
    %761 = vmatmul.mubr.f32.gmra.mrb[0].mxu0 %v628
    %v762 = vpop.f32.mrb[0].mxu0
    %v763 = vadd.f32 0.0, %v762
    %v764 = vpop.f32.mrb[0].mxu0
    %765 = vmatprep.mubr.f32.mxu0 %v633
    %766 = vmatmul.mubr.f32.gmra.mrb[0].mxu0 %v632
    %v767 = vpop.f32.mrb[0].mxu0
    %v768 = vadd.f32 0.0, %v767
    %v769 = vpop.f32.mrb[0].mxu0
    %770 = vmatprep.mubr.f32.mxu0 %v637
    %771 = vmatmul.mubr.f32.gmra.mrb[0].mxu0 %v636
    %v772 = vpop.f32.mrb[0].mxu0
    %v773 = vadd.f32 0.0, %v772
    %v774 = vpop.f32.mrb[0].mxu0
    %775 = vmatprep.mubr.f32.mxu0 %v641
    %776 = vmatmul.mubr.f32.gmra.mrb[0].mxu0 %v640
    %v777 = vpop.f32.mrb[0].mxu0
    %v778 = vadd.f32 0.0, %v777
    %v779 = vpop.f32.mrb[0].mxu0
    %780 = vmatprep.mubr.f32.mxu0 %v645
    %781 = vmatmul.mubr.f32.gmra.mrb[0].mxu0 %v644
    %v782 = vpop.f32.mrb[0].mxu0
    %v783 = vadd.f32 0.0, %v782
    %v784 = vpop.f32.mrb[0].mxu0
    %785 = vmatprep.mubr.f32.mxu0 %v649
    %786 = vmatmul.mubr.f32.gmra.mrb[0].mxu0 %v648
    %v787 = vpop.f32.mrb[0].mxu0
    %v788 = vadd.f32 0.0, %v787
    %v789 = vpop.f32.mrb[0].mxu0
    %790 = vmatprep.mubr.f32.mxu0 %v653
    %791 = vmatmul.mubr.f32.gmra.mrb[0].mxu0 %v652
    %v792 = vpop.f32.mrb[0].mxu0
    %v793 = vadd.f32 0.0, %v792
    %v794 = vpop.f32.mrb[0].mxu0
    %795 = vmatprep.mubr.f32.mxu0 %v657
    %796 = vmatmul.mubr.f32.gmra.mrb[0].mxu0 %v656
    %v797 = vpop.f32.mrb[0].mxu0
    %v798 = vadd.f32 0.0, %v797
    %v799 = vpop.f32.mrb[0].mxu0
    %800 = vmatprep.mubr.f32.mxu0 %v661
    %801 = vmatmul.mubr.f32.gmra.mrb[0].mxu0 %v660
    %v802 = vpop.f32.mrb[0].mxu0
    %v803 = vadd.f32 0.0, %v802
    %v804 = vpop.f32.mrb[0].mxu0
    %805 = vmatprep.mubr.f32.mxu0 %v665
    %806 = vmatmul.mubr.f32.gmra.mrb[0].mxu0 %v664
    %v807 = vpop.f32.mrb[0].mxu0
    %v808 = vadd.f32 0.0, %v807
    %v809 = vpop.f32.mrb[0].mxu0
    %810 = vmatprep.mubr.f32.mxu0 %v669
    %811 = vmatmul.mubr.f32.gmra.mrb[0].mxu0 %v668
    %v812 = vpop.f32.mrb[0].mxu0
    %v813 = vadd.f32 0.0, %v812
    %v814 = vpop.f32.mrb[0].mxu0
    %815 = vmatprep.mubr.f32.mxu0 %v673
    %816 = vmatmul.mubr.f32.gmra.mrb[0].mxu0 %v672
    %v817 = vpop.f32.mrb[0].mxu0
    %v818 = vadd.f32 0.0, %v817
    %v819 = vpop.f32.mrb[0].mxu0
    %820 = vdwg.mxu0
    %821 = vmatprep.subr.mxu0 0.0
    %822 = vmatpush1.msra.mxu0 %v209
    %823 = vmatprep.subr.mxu0 0.0
    %824 = vmatpush1.msra.mxu0 %v210
    %825 = vmatprep.subr.mxu0 0.0
    %826 = vmatpush1.msra.mxu0 %v211
    %827 = vmatprep.subr.mxu0 0.0
    %828 = vmatpush1.msra.mxu0 %v212
    %829 = vmatprep.subr.mxu0 0.0
    %830 = vmatpush1.msra.mxu0 %v213
    %831 = vmatprep.subr.mxu0 0.0
    %832 = vmatpush1.msra.mxu0 %v214
    %833 = vmatprep.subr.mxu0 0.0
    %834 = vmatpush1.msra.mxu0 %v215
    %835 = vmatprep.subr.mxu0 0.0
    %836 = vmatpush1.msra.mxu0 %v216
    %837 = vmatprep.subr.mxu0 0.0
    %838 = vmatpush1.msra.mxu0 %v217
    %839 = vmatprep.subr.mxu0 0.0
    %840 = vmatpush1.msra.mxu0 %v218
    %841 = vmatprep.subr.mxu0 0.0
    %842 = vmatpush1.msra.mxu0 %v219
    %843 = vmatprep.subr.mxu0 0.0
    %844 = vmatpush1.msra.mxu0 %v220
    %845 = vmatprep.subr.mxu0 0.0
    %846 = vmatpush1.msra.mxu0 %v221
    %847 = vmatprep.subr.mxu0 0.0
    %848 = vmatpush1.msra.mxu0 %v222
    %849 = vmatprep.subr.mxu0 0.0
    %850 = vmatpush1.msra.mxu0 %v223
    %851 = vmatprep.subr.mxu0 0.0
    %852 = vmatpush1.msra.mxu0 %v224
    %853 = vmatprep.subr.mxu0 0.0
    %854 = vmatpush1.msra.mxu0 %v225
    %855 = vmatprep.subr.mxu0 0.0
    %856 = vmatpush1.msra.mxu0 %v226
    %857 = vmatprep.subr.mxu0 0.0
    %858 = vmatpush1.msra.mxu0 %v227
    %859 = vmatprep.subr.mxu0 0.0
    %860 = vmatpush1.msra.mxu0 %v228
    %861 = vmatprep.subr.mxu0 0.0
    %862 = vmatpush1.msra.mxu0 %v229
    %863 = vmatprep.subr.mxu0 0.0
    %864 = vmatpush1.msra.mxu0 %v230
    %865 = vmatprep.subr.mxu0 0.0
    %866 = vmatpush1.msra.mxu0 %v231
    %867 = vmatprep.subr.mxu0 0.0
    %868 = vmatpush1.msra.mxu0 %v232
    %869 = vmatprep.subr.mxu0 0.0
    %870 = vmatpush1.msra.mxu0 %v233
    %871 = vmatprep.subr.mxu0 0.0
    %872 = vmatpush1.msra.mxu0 %v234
    %873 = vmatprep.subr.mxu0 0.0
    %874 = vmatpush1.msra.mxu0 %v235
    %875 = vmatprep.subr.mxu0 0.0
    %876 = vmatpush1.msra.mxu0 %v236
    %877 = vmatprep.subr.mxu0 0.0
    %878 = vmatpush1.msra.mxu0 %v237
    %879 = vmatprep.subr.mxu0 0.0
    %880 = vmatpush1.msra.mxu0 %v238
    %881 = vmatprep.subr.mxu0 0.0
    %882 = vmatpush1.msra.mxu0 %v239
    %883 = vmatprep.subr.mxu0 0.0
    %884 = vmatpush1.msra.mxu0 %v240
    %885 = vmatprep.mubr.f32.mxu0 %v615
    %886 = vmatmul.mubr.f32.gmra.mrb[0].mxu0 %v614
    %v887 = vpop.f32.mrb[0].mxu0
    %v888 = vadd.f32 %v743, %v887
    %v889 = vpop.f32.mrb[0].mxu0
    %890 = vmatprep.mubr.f32.mxu0 %v619
    %891 = vmatmul.mubr.f32.gmra.mrb[0].mxu0 %v618
    %v892 = vpop.f32.mrb[0].mxu0
    %v893 = vadd.f32 %v748, %v892
    %v894 = vpop.f32.mrb[0].mxu0
    %895 = vmatprep.mubr.f32.mxu0 %v623
    %896 = vmatmul.mubr.f32.gmra.mrb[0].mxu0 %v622
    %v897 = vpop.f32.mrb[0].mxu0
    %v898 = vadd.f32 %v753, %v897
    %v899 = vpop.f32.mrb[0].mxu0
    %900 = vmatprep.mubr.f32.mxu0 %v627
    %901 = vmatmul.mubr.f32.gmra.mrb[0].mxu0 %v626
    %v902 = vpop.f32.mrb[0].mxu0
    %v903 = vadd.f32 %v758, %v902
    %v904 = vpop.f32.mrb[0].mxu0
    %905 = vmatprep.mubr.f32.mxu0 %v631
    %906 = vmatmul.mubr.f32.gmra.mrb[0].mxu0 %v630
    %v907 = vpop.f32.mrb[0].mxu0
    %v908 = vadd.f32 %v763, %v907
    %v909 = vpop.f32.mrb[0].mxu0
    %910 = vmatprep.mubr.f32.mxu0 %v635
    %911 = vmatmul.mubr.f32.gmra.mrb[0].mxu0 %v634
    %v912 = vpop.f32.mrb[0].mxu0
    %v913 = vadd.f32 %v768, %v912
    %v914 = vpop.f32.mrb[0].mxu0
    %915 = vmatprep.mubr.f32.mxu0 %v639
    %916 = vmatmul.mubr.f32.gmra.mrb[0].mxu0 %v638
    %v917 = vpop.f32.mrb[0].mxu0
    %v918 = vadd.f32 %v773, %v917
    %v919 = vpop.f32.mrb[0].mxu0
    %920 = vmatprep.mubr.f32.mxu0 %v643
    %921 = vmatmul.mubr.f32.gmra.mrb[0].mxu0 %v642
    %v922 = vpop.f32.mrb[0].mxu0
    %v923 = vadd.f32 %v778, %v922
    %v924 = vpop.f32.mrb[0].mxu0
    %925 = vmatprep.mubr.f32.mxu0 %v647
    %926 = vmatmul.mubr.f32.gmra.mrb[0].mxu0 %v646
    %v927 = vpop.f32.mrb[0].mxu0
    %v928 = vadd.f32 %v783, %v927
    %v929 = vpop.f32.mrb[0].mxu0
    %930 = vmatprep.mubr.f32.mxu0 %v651
    %931 = vmatmul.mubr.f32.gmra.mrb[0].mxu0 %v650
    %v932 = vpop.f32.mrb[0].mxu0
    %v933 = vadd.f32 %v788, %v932
    %v934 = vpop.f32.mrb[0].mxu0
    %935 = vmatprep.mubr.f32.mxu0 %v655
    %936 = vmatmul.mubr.f32.gmra.mrb[0].mxu0 %v654
    %v937 = vpop.f32.mrb[0].mxu0
    %v938 = vadd.f32 %v793, %v937
    %v939 = vpop.f32.mrb[0].mxu0
    %940 = vmatprep.mubr.f32.mxu0 %v659
    %941 = vmatmul.mubr.f32.gmra.mrb[0].mxu0 %v658
    %v942 = vpop.f32.mrb[0].mxu0
    %v943 = vadd.f32 %v798, %v942
    %v944 = vpop.f32.mrb[0].mxu0
    %945 = vmatprep.mubr.f32.mxu0 %v663
    %946 = vmatmul.mubr.f32.gmra.mrb[0].mxu0 %v662
    %v947 = vpop.f32.mrb[0].mxu0
    %v948 = vadd.f32 %v803, %v947
    %v949 = vpop.f32.mrb[0].mxu0
    %950 = vmatprep.mubr.f32.mxu0 %v667
    %951 = vmatmul.mubr.f32.gmra.mrb[0].mxu0 %v666
    %v952 = vpop.f32.mrb[0].mxu0
    %v953 = vadd.f32 %v808, %v952
    %v954 = vpop.f32.mrb[0].mxu0
    %955 = vmatprep.mubr.f32.mxu0 %v671
    %956 = vmatmul.mubr.f32.gmra.mrb[0].mxu0 %v670
    %v957 = vpop.f32.mrb[0].mxu0
    %v958 = vadd.f32 %v813, %v957
    %v959 = vpop.f32.mrb[0].mxu0
    %960 = vmatprep.mubr.f32.mxu0 %v675
    %961 = vmatmul.mubr.f32.gmra.mrb[0].mxu0 %v674
    %v962 = vpop.f32.mrb[0].mxu0
    %v963 = vadd.f32 %v818, %v962
    %v964 = vpop.f32.mrb[0].mxu0
    %965 = vdwg.mxu0
    %s966 = scalar_lea.vmem [#allocation10], 128
    %v967 = vld [vmem:[%s966] sm:$0xff]
    %v968 = vld [vmem:[%s966 + $0x8] sm:$0xff]
    %v969 = vld [vmem:[%s966 + $0x10] sm:$0xff]
    %v970 = vld [vmem:[%s966 + $0x18] sm:$0xff]
    %v971 = vld [vmem:[%s966 + $0x20] sm:$0xff]
    %v972 = vld [vmem:[%s966 + $0x28] sm:$0xff]
    %v973 = vld [vmem:[%s966 + $0x30] sm:$0xff]
    %v974 = vld [vmem:[%s966 + $0x38] sm:$0xff]
    %v975 = vld [vmem:[%s966 + $0x40] sm:$0xff]
    %v976 = vld [vmem:[%s966 + $0x48] sm:$0xff]
    %v977 = vld [vmem:[%s966 + $0x50] sm:$0xff]
    %v978 = vld [vmem:[%s966 + $0x58] sm:$0xff]
    %v979 = vld [vmem:[%s966 + $0x60] sm:$0xff]
    %v980 = vld [vmem:[%s966 + $0x68] sm:$0xff]
    %v981 = vld [vmem:[%s966 + $0x70] sm:$0xff]
    %v982 = vld [vmem:[%s966 + $0x78] sm:$0xff]
    %983 = vmatprep.subr.mxu0 0.0
    %984 = vmatpush1.msra.mxu0 %v967
    %985 = vmatprep.subr.mxu0 0.0
    %986 = vmatpush1.msra.mxu0 %v968
    %987 = vmatprep.subr.mxu0 0.0
    %988 = vmatpush1.msra.mxu0 %v969
    %989 = vmatprep.subr.mxu0 0.0
    %990 = vmatpush1.msra.mxu0 %v970
    %991 = vmatprep.subr.mxu0 0.0
    %992 = vmatpush1.msra.mxu0 %v971
    %993 = vmatprep.subr.mxu0 0.0
    %994 = vmatpush1.msra.mxu0 %v972
    %995 = vmatprep.subr.mxu0 0.0
    %996 = vmatpush1.msra.mxu0 %v973
    %997 = vmatprep.subr.mxu0 0.0
    %998 = vmatpush1.msra.mxu0 %v974
    %999 = vmatprep.subr.mxu0 0.0
    %1000 = vmatpush1.msra.mxu0 %v975
    %1001 = vmatprep.subr.mxu0 0.0
    %1002 = vmatpush1.msra.mxu0 %v976
    %1003 = vmatprep.subr.mxu0 0.0
    %1004 = vmatpush1.msra.mxu0 %v977
    %1005 = vmatprep.subr.mxu0 0.0
    %1006 = vmatpush1.msra.mxu0 %v978
    %1007 = vmatprep.subr.mxu0 0.0
    %1008 = vmatpush1.msra.mxu0 %v979
    %1009 = vmatprep.subr.mxu0 0.0
    %1010 = vmatpush1.msra.mxu0 %v980
    %1011 = vmatprep.subr.mxu0 0.0
    %1012 = vmatpush1.msra.mxu0 %v981
    %1013 = vmatprep.subr.mxu0 0.0
    %1014 = vmatpush1.msra.mxu0 %v982
    %1015 = vmatprep.subr.mxu0 0.0
    %1016 = vmatpush1.msra.mxu0 0.0
    %1017 = vmatprep.subr.mxu0 0.0
    %1018 = vmatpush1.msra.mxu0 0.0
    %1019 = vmatprep.subr.mxu0 0.0
    %1020 = vmatpush1.msra.mxu0 0.0
    %1021 = vmatprep.subr.mxu0 0.0
    %1022 = vmatpush1.msra.mxu0 0.0
    %1023 = vmatprep.subr.mxu0 0.0
    %1024 = vmatpush1.msra.mxu0 0.0
    %1025 = vmatprep.subr.mxu0 0.0
    %1026 = vmatpush1.msra.mxu0 0.0
    %1027 = vmatprep.subr.mxu0 0.0
    %1028 = vmatpush1.msra.mxu0 0.0
    %1029 = vmatprep.subr.mxu0 0.0
    %1030 = vmatpush1.msra.mxu0 0.0
    %1031 = vmatprep.subr.mxu0 0.0
    %1032 = vmatpush1.msra.mxu0 0.0
    %1033 = vmatprep.subr.mxu0 0.0
    %1034 = vmatpush1.msra.mxu0 0.0
    %1035 = vmatprep.subr.mxu0 0.0
    %1036 = vmatpush1.msra.mxu0 0.0
    %1037 = vmatprep.subr.mxu0 0.0
    %1038 = vmatpush1.msra.mxu0 0.0
    %1039 = vmatprep.subr.mxu0 0.0
    %1040 = vmatpush1.msra.mxu0 0.0
    %1041 = vmatprep.subr.mxu0 0.0
    %1042 = vmatpush1.msra.mxu0 0.0
    %1043 = vmatprep.subr.mxu0 0.0
    %1044 = vmatpush1.msra.mxu0 0.0
    %1045 = vmatprep.subr.mxu0 0.0
    %1046 = vmatpush1.msra.mxu0 0.0
    %1047 = vmatprep.mubr.f32.mxu0 0.0
    %1048 = vmatmul.mubr.f32.gmra.mrb[0].mxu0 %v888
    %v1049 = vpop.f32.mrb[0].mxu0
    %v1050 = vadd.f32 0.0, %v1049
    %v1051 = vpop.f32.mrb[0].mxu0
    %1052 = vmatprep.mubr.f32.mxu0 0.0
    %1053 = vmatmul.mubr.f32.gmra.mrb[0].mxu0 %v893
    %v1054 = vpop.f32.mrb[0].mxu0
    %v1055 = vadd.f32 0.0, %v1054
    %v1056 = vpop.f32.mrb[0].mxu0
    %1057 = vmatprep.mubr.f32.mxu0 0.0
    %1058 = vmatmul.mubr.f32.gmra.mrb[0].mxu0 %v898
    %v1059 = vpop.f32.mrb[0].mxu0
    %v1060 = vadd.f32 0.0, %v1059
    %v1061 = vpop.f32.mrb[0].mxu0
    %1062 = vmatprep.mubr.f32.mxu0 0.0
    %1063 = vmatmul.mubr.f32.gmra.mrb[0].mxu0 %v903
    %v1064 = vpop.f32.mrb[0].mxu0
    %v1065 = vadd.f32 0.0, %v1064
    %v1066 = vpop.f32.mrb[0].mxu0
    %1067 = vmatprep.mubr.f32.mxu0 0.0
    %1068 = vmatmul.mubr.f32.gmra.mrb[0].mxu0 %v908
    %v1069 = vpop.f32.mrb[0].mxu0
    %v1070 = vadd.f32 0.0, %v1069
    %v1071 = vpop.f32.mrb[0].mxu0
    %1072 = vmatprep.mubr.f32.mxu0 0.0
    %1073 = vmatmul.mubr.f32.gmra.mrb[0].mxu0 %v913
    %v1074 = vpop.f32.mrb[0].mxu0
    %v1075 = vadd.f32 0.0, %v1074
    %v1076 = vpop.f32.mrb[0].mxu0
    %1077 = vmatprep.mubr.f32.mxu0 0.0
    %1078 = vmatmul.mubr.f32.gmra.mrb[0].mxu0 %v918
    %v1079 = vpop.f32.mrb[0].mxu0
    %v1080 = vadd.f32 0.0, %v1079
    %v1081 = vpop.f32.mrb[0].mxu0
    %1082 = vmatprep.mubr.f32.mxu0 0.0
    %1083 = vmatmul.mubr.f32.gmra.mrb[0].mxu0 %v923
    %v1084 = vpop.f32.mrb[0].mxu0
    %v1085 = vadd.f32 0.0, %v1084
    %v1086 = vpop.f32.mrb[0].mxu0
    %1087 = vmatprep.mubr.f32.mxu0 0.0
    %1088 = vmatmul.mubr.f32.gmra.mrb[0].mxu0 %v928
    %v1089 = vpop.f32.mrb[0].mxu0
    %v1090 = vadd.f32 0.0, %v1089
    %v1091 = vpop.f32.mrb[0].mxu0
    %1092 = vmatprep.mubr.f32.mxu0 0.0
    %1093 = vmatmul.mubr.f32.gmra.mrb[0].mxu0 %v933
    %v1094 = vpop.f32.mrb[0].mxu0
    %v1095 = vadd.f32 0.0, %v1094
    %v1096 = vpop.f32.mrb[0].mxu0
    %1097 = vmatprep.mubr.f32.mxu0 0.0
    %1098 = vmatmul.mubr.f32.gmra.mrb[0].mxu0 %v938
    %v1099 = vpop.f32.mrb[0].mxu0
    %v1100 = vadd.f32 0.0, %v1099
    %v1101 = vpop.f32.mrb[0].mxu0
    %1102 = vmatprep.mubr.f32.mxu0 0.0
    %1103 = vmatmul.mubr.f32.gmra.mrb[0].mxu0 %v943
    %v1104 = vpop.f32.mrb[0].mxu0
    %v1105 = vadd.f32 0.0, %v1104
    %v1106 = vpop.f32.mrb[0].mxu0
    %1107 = vmatprep.mubr.f32.mxu0 0.0
    %1108 = vmatmul.mubr.f32.gmra.mrb[0].mxu0 %v948
    %v1109 = vpop.f32.mrb[0].mxu0
    %v1110 = vadd.f32 0.0, %v1109
    %v1111 = vpop.f32.mrb[0].mxu0
    %1112 = vmatprep.mubr.f32.mxu0 0.0
    %1113 = vmatmul.mubr.f32.gmra.mrb[0].mxu0 %v953
    %v1114 = vpop.f32.mrb[0].mxu0
    %v1115 = vadd.f32 0.0, %v1114
    %v1116 = vpop.f32.mrb[0].mxu0
    %1117 = vmatprep.mubr.f32.mxu0 0.0
    %1118 = vmatmul.mubr.f32.gmra.mrb[0].mxu0 %v958
    %v1119 = vpop.f32.mrb[0].mxu0
    %v1120 = vadd.f32 0.0, %v1119
    %v1121 = vpop.f32.mrb[0].mxu0
    %1122 = vmatprep.mubr.f32.mxu0 0.0
    %1123 = vmatmul.mubr.f32.gmra.mrb[0].mxu0 %v963
    %v1124 = vpop.f32.mrb[0].mxu0
    %v1125 = vadd.f32 0.0, %v1124
    %v1126 = vpop.f32.mrb[0].mxu0
    %1127 = vdwg.mxu0
    %1128 = vmatprep.subr.mxu0 0.0
    %1129 = vmatpush1.msra.mxu0 %v595
    %1130 = vmatprep.subr.mxu0 0.0
    %1131 = vmatpush1.msra.mxu0 %v596
    %1132 = vmatprep.subr.mxu0 0.0
    %1133 = vmatpush1.msra.mxu0 %v597
    %1134 = vmatprep.subr.mxu0 0.0
    %1135 = vmatpush1.msra.mxu0 %v598
    %1136 = vmatprep.subr.mxu0 0.0
    %1137 = vmatpush1.msra.mxu0 %v599
    %1138 = vmatprep.subr.mxu0 0.0
    %1139 = vmatpush1.msra.mxu0 %v600
    %1140 = vmatprep.subr.mxu0 0.0
    %1141 = vmatpush1.msra.mxu0 %v601
    %1142 = vmatprep.subr.mxu0 0.0
    %1143 = vmatpush1.msra.mxu0 %v602
    %1144 = vmatprep.subr.mxu0 0.0
    %1145 = vmatpush1.msra.mxu0 %v603
    %1146 = vmatprep.subr.mxu0 0.0
    %1147 = vmatpush1.msra.mxu0 %v604
    %1148 = vmatprep.subr.mxu0 0.0
    %1149 = vmatpush1.msra.mxu0 %v605
    %1150 = vmatprep.subr.mxu0 0.0
    %1151 = vmatpush1.msra.mxu0 %v606
    %1152 = vmatprep.subr.mxu0 0.0
    %1153 = vmatpush1.msra.mxu0 %v607
    %1154 = vmatprep.subr.mxu0 0.0
    %1155 = vmatpush1.msra.mxu0 %v608
    %1156 = vmatprep.subr.mxu0 0.0
    %1157 = vmatpush1.msra.mxu0 %v609
    %1158 = vmatprep.subr.mxu0 0.0
    %1159 = vmatpush1.msra.mxu0 %v610
    %1160 = vmatprep.subr.mxu0 0.0
    %1161 = vmatpush1.msra.mxu0 0.0
    %1162 = vmatprep.subr.mxu0 0.0
    %1163 = vmatpush1.msra.mxu0 0.0
    %1164 = vmatprep.subr.mxu0 0.0
    %1165 = vmatpush1.msra.mxu0 0.0
    %1166 = vmatprep.subr.mxu0 0.0
    %1167 = vmatpush1.msra.mxu0 0.0
    %1168 = vmatprep.subr.mxu0 0.0
    %1169 = vmatpush1.msra.mxu0 0.0
    %1170 = vmatprep.subr.mxu0 0.0
    %1171 = vmatpush1.msra.mxu0 0.0
    %1172 = vmatprep.subr.mxu0 0.0
    %1173 = vmatpush1.msra.mxu0 0.0
    %1174 = vmatprep.subr.mxu0 0.0
    %1175 = vmatpush1.msra.mxu0 0.0
    %1176 = vmatprep.subr.mxu0 0.0
    %1177 = vmatpush1.msra.mxu0 0.0
    %1178 = vmatprep.subr.mxu0 0.0
    %1179 = vmatpush1.msra.mxu0 0.0
    %1180 = vmatprep.subr.mxu0 0.0
    %1181 = vmatpush1.msra.mxu0 0.0
    %1182 = vmatprep.subr.mxu0 0.0
    %1183 = vmatpush1.msra.mxu0 0.0
    %1184 = vmatprep.subr.mxu0 0.0
    %1185 = vmatpush1.msra.mxu0 0.0
    %1186 = vmatprep.subr.mxu0 0.0
    %1187 = vmatpush1.msra.mxu0 0.0
    %1188 = vmatprep.subr.mxu0 0.0
    %1189 = vmatpush1.msra.mxu0 0.0
    %1190 = vmatprep.subr.mxu0 0.0
    %1191 = vmatpush1.msra.mxu0 0.0
    %1192 = vmatprep.mubr.f32.mxu0 0.0
    %1193 = vmatmul.mubr.f32.gmra.mrb[0].mxu0 %v517
    %v1194 = vpop.f32.mrb[0].mxu0
    %v1195 = vadd.f32 %v1050, %v1194
    %v1196 = vpop.f32.mrb[0].mxu0
    %1197 = vmatprep.mubr.f32.mxu0 0.0
    %1198 = vmatmul.mubr.f32.gmra.mrb[0].mxu0 %v522
    %v1199 = vpop.f32.mrb[0].mxu0
    %v1200 = vadd.f32 %v1055, %v1199
    %v1201 = vpop.f32.mrb[0].mxu0
    %1202 = vmatprep.mubr.f32.mxu0 0.0
    %1203 = vmatmul.mubr.f32.gmra.mrb[0].mxu0 %v527
    %v1204 = vpop.f32.mrb[0].mxu0
    %v1205 = vadd.f32 %v1060, %v1204
    %v1206 = vpop.f32.mrb[0].mxu0
    %1207 = vmatprep.mubr.f32.mxu0 0.0
    %1208 = vmatmul.mubr.f32.gmra.mrb[0].mxu0 %v532
    %v1209 = vpop.f32.mrb[0].mxu0
    %v1210 = vadd.f32 %v1065, %v1209
    %v1211 = vpop.f32.mrb[0].mxu0
    %1212 = vmatprep.mubr.f32.mxu0 0.0
    %1213 = vmatmul.mubr.f32.gmra.mrb[0].mxu0 %v537
    %v1214 = vpop.f32.mrb[0].mxu0
    %v1215 = vadd.f32 %v1070, %v1214
    %v1216 = vpop.f32.mrb[0].mxu0
    %1217 = vmatprep.mubr.f32.mxu0 0.0
    %1218 = vmatmul.mubr.f32.gmra.mrb[0].mxu0 %v542
    %v1219 = vpop.f32.mrb[0].mxu0
    %v1220 = vadd.f32 %v1075, %v1219
    %v1221 = vpop.f32.mrb[0].mxu0
    %1222 = vmatprep.mubr.f32.mxu0 0.0
    %1223 = vmatmul.mubr.f32.gmra.mrb[0].mxu0 %v547
    %v1224 = vpop.f32.mrb[0].mxu0
    %v1225 = vadd.f32 %v1080, %v1224
    %v1226 = vpop.f32.mrb[0].mxu0
    %1227 = vmatprep.mubr.f32.mxu0 0.0
    %1228 = vmatmul.mubr.f32.gmra.mrb[0].mxu0 %v552
    %v1229 = vpop.f32.mrb[0].mxu0
    %v1230 = vadd.f32 %v1085, %v1229
    %v1231 = vpop.f32.mrb[0].mxu0
    %1232 = vmatprep.mubr.f32.mxu0 0.0
    %1233 = vmatmul.mubr.f32.gmra.mrb[0].mxu0 %v557
    %v1234 = vpop.f32.mrb[0].mxu0
    %v1235 = vadd.f32 %v1090, %v1234
    %v1236 = vpop.f32.mrb[0].mxu0
    %1237 = vmatprep.mubr.f32.mxu0 0.0
    %1238 = vmatmul.mubr.f32.gmra.mrb[0].mxu0 %v562
    %v1239 = vpop.f32.mrb[0].mxu0
    %v1240 = vadd.f32 %v1095, %v1239
    %v1241 = vpop.f32.mrb[0].mxu0
    %1242 = vmatprep.mubr.f32.mxu0 0.0
    %1243 = vmatmul.mubr.f32.gmra.mrb[0].mxu0 %v567
    %v1244 = vpop.f32.mrb[0].mxu0
    %v1245 = vadd.f32 %v1100, %v1244
    %v1246 = vpop.f32.mrb[0].mxu0
    %1247 = vmatprep.mubr.f32.mxu0 0.0
    %1248 = vmatmul.mubr.f32.gmra.mrb[0].mxu0 %v572
    %v1249 = vpop.f32.mrb[0].mxu0
    %v1250 = vadd.f32 %v1105, %v1249
    %v1251 = vpop.f32.mrb[0].mxu0
    %1252 = vmatprep.mubr.f32.mxu0 0.0
    %1253 = vmatmul.mubr.f32.gmra.mrb[0].mxu0 %v577
    %v1254 = vpop.f32.mrb[0].mxu0
    %v1255 = vadd.f32 %v1110, %v1254
    %v1256 = vpop.f32.mrb[0].mxu0
    %1257 = vmatprep.mubr.f32.mxu0 0.0
    %1258 = vmatmul.mubr.f32.gmra.mrb[0].mxu0 %v582
    %v1259 = vpop.f32.mrb[0].mxu0
    %v1260 = vadd.f32 %v1115, %v1259
    %v1261 = vpop.f32.mrb[0].mxu0
    %1262 = vmatprep.mubr.f32.mxu0 0.0
    %1263 = vmatmul.mubr.f32.gmra.mrb[0].mxu0 %v587
    %v1264 = vpop.f32.mrb[0].mxu0
    %v1265 = vadd.f32 %v1120, %v1264
    %v1266 = vpop.f32.mrb[0].mxu0
    %1267 = vmatprep.mubr.f32.mxu0 0.0
    %1268 = vmatmul.mubr.f32.gmra.mrb[0].mxu0 %v592
    %v1269 = vpop.f32.mrb[0].mxu0
    %v1270 = vadd.f32 %v1125, %v1269
    %v1271 = vpop.f32.mrb[0].mxu0
    %1272 = vdwg.mxu0
    %s1273 = scalar_lea.vmem [#allocation2], 1024
    %v1274 = vld [vmem:[%s1273] sm:$0xff]
    %v1275 = vld [vmem:[%s1273 + $0x8] sm:$0xff]
    %v1276 = vld [vmem:[%s1273 + $0x10] sm:$0xff]
    %v1277 = vld [vmem:[%s1273 + $0x18] sm:$0xff]
    %v1278 = vld [vmem:[%s1273 + $0x20] sm:$0xff]
    %v1279 = vld [vmem:[%s1273 + $0x28] sm:$0xff]
    %v1280 = vld [vmem:[%s1273 + $0x30] sm:$0xff]
    %v1281 = vld [vmem:[%s1273 + $0x38] sm:$0xff]
    %v1282 = vld [vmem:[%s1273 + $0x40] sm:$0xff]
    %v1283 = vld [vmem:[%s1273 + $0x48] sm:$0xff]
    %v1284 = vld [vmem:[%s1273 + $0x50] sm:$0xff]
    %v1285 = vld [vmem:[%s1273 + $0x58] sm:$0xff]
    %v1286 = vld [vmem:[%s1273 + $0x60] sm:$0xff]
    %v1287 = vld [vmem:[%s1273 + $0x68] sm:$0xff]
    %v1288 = vld [vmem:[%s1273 + $0x70] sm:$0xff]
    %v1289 = vld [vmem:[%s1273 + $0x78] sm:$0xff]
    %v1290 = vld [vmem:[%s1273 + $0x80] sm:$0xff]
    %v1291 = vld [vmem:[%s1273 + $0x88] sm:$0xff]
    %v1292 = vld [vmem:[%s1273 + $0x90] sm:$0xff]
    %v1293 = vld [vmem:[%s1273 + $0x98] sm:$0xff]
    %v1294 = vld [vmem:[%s1273 + $0xa0] sm:$0xff]
    %v1295 = vld [vmem:[%s1273 + $0xa8] sm:$0xff]
    %v1296 = vld [vmem:[%s1273 + $0xb0] sm:$0xff]
    %v1297 = vld [vmem:[%s1273 + $0xb8] sm:$0xff]
    %v1298 = vld [vmem:[%s1273 + $0xc0] sm:$0xff]
    %v1299 = vld [vmem:[%s1273 + $0xc8] sm:$0xff]
    %v1300 = vld [vmem:[%s1273 + $0xd0] sm:$0xff]
    %v1301 = vld [vmem:[%s1273 + $0xd8] sm:$0xff]
    %v1302 = vld [vmem:[%s1273 + $0xe0] sm:$0xff]
    %v1303 = vld [vmem:[%s1273 + $0xe8] sm:$0xff]
    %v1304 = vld [vmem:[%s1273 + $0xf0] sm:$0xff]
    %v1305 = vld [vmem:[%s1273 + $0xf8] sm:$0xff]
    %v1306 = vld [vmem:[%s1273 + $0x100] sm:$0xff]
    %v1307 = vld [vmem:[%s1273 + $0x108] sm:$0xff]
    %v1308 = vld [vmem:[%s1273 + $0x110] sm:$0xff]
    %v1309 = vld [vmem:[%s1273 + $0x118] sm:$0xff]
    %v1310 = vld [vmem:[%s1273 + $0x120] sm:$0xff]
    %v1311 = vld [vmem:[%s1273 + $0x128] sm:$0xff]
    %v1312 = vld [vmem:[%s1273 + $0x130] sm:$0xff]
    %v1313 = vld [vmem:[%s1273 + $0x138] sm:$0xff]
    %v1314 = vld [vmem:[%s1273 + $0x140] sm:$0xff]
    %v1315 = vld [vmem:[%s1273 + $0x148] sm:$0xff]
    %v1316 = vld [vmem:[%s1273 + $0x150] sm:$0xff]
    %v1317 = vld [vmem:[%s1273 + $0x158] sm:$0xff]
    %v1318 = vld [vmem:[%s1273 + $0x160] sm:$0xff]
    %v1319 = vld [vmem:[%s1273 + $0x168] sm:$0xff]
    %v1320 = vld [vmem:[%s1273 + $0x170] sm:$0xff]
    %v1321 = vld [vmem:[%s1273 + $0x178] sm:$0xff]
    %v1322 = vld [vmem:[%s1273 + $0x180] sm:$0xff]
    %v1323 = vld [vmem:[%s1273 + $0x188] sm:$0xff]
    %v1324 = vld [vmem:[%s1273 + $0x190] sm:$0xff]
    %v1325 = vld [vmem:[%s1273 + $0x198] sm:$0xff]
    %v1326 = vld [vmem:[%s1273 + $0x1a0] sm:$0xff]
    %v1327 = vld [vmem:[%s1273 + $0x1a8] sm:$0xff]
    %v1328 = vld [vmem:[%s1273 + $0x1b0] sm:$0xff]
    %v1329 = vld [vmem:[%s1273 + $0x1b8] sm:$0xff]
    %v1330 = vld [vmem:[%s1273 + $0x1c0] sm:$0xff]
    %v1331 = vld [vmem:[%s1273 + $0x1c8] sm:$0xff]
    %v1332 = vld [vmem:[%s1273 + $0x1d0] sm:$0xff]
    %v1333 = vld [vmem:[%s1273 + $0x1d8] sm:$0xff]
    %v1334 = vld [vmem:[%s1273 + $0x1e0] sm:$0xff]
    %v1335 = vld [vmem:[%s1273 + $0x1e8] sm:$0xff]
    %v1336 = vld [vmem:[%s1273 + $0x1f0] sm:$0xff]
    %v1337 = vld [vmem:[%s1273 + $0x1f8] sm:$0xff]
    %1338 = vmatprep.subr.mxu0 0.0
    %1339 = vmatpush1.msra.mxu0 %v177
    %1340 = vmatprep.subr.mxu0 0.0
    %1341 = vmatpush1.msra.mxu0 %v178
    %1342 = vmatprep.subr.mxu0 0.0
    %1343 = vmatpush1.msra.mxu0 %v179
    %1344 = vmatprep.subr.mxu0 0.0
    %1345 = vmatpush1.msra.mxu0 %v180
    %1346 = vmatprep.subr.mxu0 0.0
    %1347 = vmatpush1.msra.mxu0 %v181
    %1348 = vmatprep.subr.mxu0 0.0
    %1349 = vmatpush1.msra.mxu0 %v182
    %1350 = vmatprep.subr.mxu0 0.0
    %1351 = vmatpush1.msra.mxu0 %v183
    %1352 = vmatprep.subr.mxu0 0.0
    %1353 = vmatpush1.msra.mxu0 %v184
    %1354 = vmatprep.subr.mxu0 0.0
    %1355 = vmatpush1.msra.mxu0 %v185
    %1356 = vmatprep.subr.mxu0 0.0
    %1357 = vmatpush1.msra.mxu0 %v186
    %1358 = vmatprep.subr.mxu0 0.0
    %1359 = vmatpush1.msra.mxu0 %v187
    %1360 = vmatprep.subr.mxu0 0.0
    %1361 = vmatpush1.msra.mxu0 %v188
    %1362 = vmatprep.subr.mxu0 0.0
    %1363 = vmatpush1.msra.mxu0 %v189
    %1364 = vmatprep.subr.mxu0 0.0
    %1365 = vmatpush1.msra.mxu0 %v190
    %1366 = vmatprep.subr.mxu0 0.0
    %1367 = vmatpush1.msra.mxu0 %v191
    %1368 = vmatprep.subr.mxu0 0.0
    %1369 = vmatpush1.msra.mxu0 %v192
    %1370 = vmatprep.subr.mxu0 0.0
    %1371 = vmatpush1.msra.mxu0 %v193
    %1372 = vmatprep.subr.mxu0 0.0
    %1373 = vmatpush1.msra.mxu0 %v194
    %1374 = vmatprep.subr.mxu0 0.0
    %1375 = vmatpush1.msra.mxu0 %v195
    %1376 = vmatprep.subr.mxu0 0.0
    %1377 = vmatpush1.msra.mxu0 %v196
    %1378 = vmatprep.subr.mxu0 0.0
    %1379 = vmatpush1.msra.mxu0 %v197
    %1380 = vmatprep.subr.mxu0 0.0
    %1381 = vmatpush1.msra.mxu0 %v198
    %1382 = vmatprep.subr.mxu0 0.0
    %1383 = vmatpush1.msra.mxu0 %v199
    %1384 = vmatprep.subr.mxu0 0.0
    %1385 = vmatpush1.msra.mxu0 %v200
    %1386 = vmatprep.subr.mxu0 0.0
    %1387 = vmatpush1.msra.mxu0 %v201
    %1388 = vmatprep.subr.mxu0 0.0
    %1389 = vmatpush1.msra.mxu0 %v202
    %1390 = vmatprep.subr.mxu0 0.0
    %1391 = vmatpush1.msra.mxu0 %v203
    %1392 = vmatprep.subr.mxu0 0.0
    %1393 = vmatpush1.msra.mxu0 %v204
    %1394 = vmatprep.subr.mxu0 0.0
    %1395 = vmatpush1.msra.mxu0 %v205
    %1396 = vmatprep.subr.mxu0 0.0
    %1397 = vmatpush1.msra.mxu0 %v206
    %1398 = vmatprep.subr.mxu0 0.0
    %1399 = vmatpush1.msra.mxu0 %v207
    %1400 = vmatprep.subr.mxu0 0.0
    %1401 = vmatpush1.msra.mxu0 %v208
    %1402 = vmatprep.mubr.f32.mxu0 %v1275
    %1403 = vmatmul.mubr.f32.gmra.mrb[0].mxu0 %v1274
    %v1404 = vpop.f32.mrb[0].mxu0
    %v1405 = vadd.f32 0.0, %v1404
    %v1406 = vpop.f32.mrb[0].mxu0
    %1407 = vmatprep.mubr.f32.mxu0 %v1279
    %1408 = vmatmul.mubr.f32.gmra.mrb[0].mxu0 %v1278
    %v1409 = vpop.f32.mrb[0].mxu0
    %v1410 = vadd.f32 0.0, %v1409
    %v1411 = vpop.f32.mrb[0].mxu0
    %1412 = vmatprep.mubr.f32.mxu0 %v1283
    %1413 = vmatmul.mubr.f32.gmra.mrb[0].mxu0 %v1282
    %v1414 = vpop.f32.mrb[0].mxu0
    %v1415 = vadd.f32 0.0, %v1414
    %v1416 = vpop.f32.mrb[0].mxu0
    %1417 = vmatprep.mubr.f32.mxu0 %v1287
    %1418 = vmatmul.mubr.f32.gmra.mrb[0].mxu0 %v1286
    %v1419 = vpop.f32.mrb[0].mxu0
    %v1420 = vadd.f32 0.0, %v1419
    %v1421 = vpop.f32.mrb[0].mxu0
    %1422 = vmatprep.mubr.f32.mxu0 %v1291
    %1423 = vmatmul.mubr.f32.gmra.mrb[0].mxu0 %v1290
    %v1424 = vpop.f32.mrb[0].mxu0
    %v1425 = vadd.f32 0.0, %v1424
    %v1426 = vpop.f32.mrb[0].mxu0
    %1427 = vmatprep.mubr.f32.mxu0 %v1295
    %1428 = vmatmul.mubr.f32.gmra.mrb[0].mxu0 %v1294
    %v1429 = vpop.f32.mrb[0].mxu0
    %v1430 = vadd.f32 0.0, %v1429
    %v1431 = vpop.f32.mrb[0].mxu0
    %1432 = vmatprep.mubr.f32.mxu0 %v1299
    %1433 = vmatmul.mubr.f32.gmra.mrb[0].mxu0 %v1298
    %v1434 = vpop.f32.mrb[0].mxu0
    %v1435 = vadd.f32 0.0, %v1434
    %v1436 = vpop.f32.mrb[0].mxu0
    %1437 = vmatprep.mubr.f32.mxu0 %v1303
    %1438 = vmatmul.mubr.f32.gmra.mrb[0].mxu0 %v1302
    %v1439 = vpop.f32.mrb[0].mxu0
    %v1440 = vadd.f32 0.0, %v1439
    %v1441 = vpop.f32.mrb[0].mxu0
    %1442 = vmatprep.mubr.f32.mxu0 %v1307
    %1443 = vmatmul.mubr.f32.gmra.mrb[0].mxu0 %v1306
    %v1444 = vpop.f32.mrb[0].mxu0
    %v1445 = vadd.f32 0.0, %v1444
    %v1446 = vpop.f32.mrb[0].mxu0
    %1447 = vmatprep.mubr.f32.mxu0 %v1311
    %1448 = vmatmul.mubr.f32.gmra.mrb[0].mxu0 %v1310
    %v1449 = vpop.f32.mrb[0].mxu0
    %v1450 = vadd.f32 0.0, %v1449
    %v1451 = vpop.f32.mrb[0].mxu0
    %1452 = vmatprep.mubr.f32.mxu0 %v1315
    %1453 = vmatmul.mubr.f32.gmra.mrb[0].mxu0 %v1314
    %v1454 = vpop.f32.mrb[0].mxu0
    %v1455 = vadd.f32 0.0, %v1454
    %v1456 = vpop.f32.mrb[0].mxu0
    %1457 = vmatprep.mubr.f32.mxu0 %v1319
    %1458 = vmatmul.mubr.f32.gmra.mrb[0].mxu0 %v1318
    %v1459 = vpop.f32.mrb[0].mxu0
    %v1460 = vadd.f32 0.0, %v1459
    %v1461 = vpop.f32.mrb[0].mxu0
    %1462 = vmatprep.mubr.f32.mxu0 %v1323
    %1463 = vmatmul.mubr.f32.gmra.mrb[0].mxu0 %v1322
    %v1464 = vpop.f32.mrb[0].mxu0
    %v1465 = vadd.f32 0.0, %v1464
    %v1466 = vpop.f32.mrb[0].mxu0
    %1467 = vmatprep.mubr.f32.mxu0 %v1327
    %1468 = vmatmul.mubr.f32.gmra.mrb[0].mxu0 %v1326
    %v1469 = vpop.f32.mrb[0].mxu0
    %v1470 = vadd.f32 0.0, %v1469
    %v1471 = vpop.f32.mrb[0].mxu0
    %1472 = vmatprep.mubr.f32.mxu0 %v1331
    %1473 = vmatmul.mubr.f32.gmra.mrb[0].mxu0 %v1330
    %v1474 = vpop.f32.mrb[0].mxu0
    %v1475 = vadd.f32 0.0, %v1474
    %v1476 = vpop.f32.mrb[0].mxu0
    %1477 = vmatprep.mubr.f32.mxu0 %v1335
    %1478 = vmatmul.mubr.f32.gmra.mrb[0].mxu0 %v1334
    %v1479 = vpop.f32.mrb[0].mxu0
    %v1480 = vadd.f32 0.0, %v1479
    %v1481 = vpop.f32.mrb[0].mxu0
    %1482 = vdwg.mxu0
    %1483 = vmatprep.subr.mxu0 0.0
    %1484 = vmatpush1.msra.mxu0 %v209
    %1485 = vmatprep.subr.mxu0 0.0
    %1486 = vmatpush1.msra.mxu0 %v210
    %1487 = vmatprep.subr.mxu0 0.0
    %1488 = vmatpush1.msra.mxu0 %v211
    %1489 = vmatprep.subr.mxu0 0.0
    %1490 = vmatpush1.msra.mxu0 %v212
    %1491 = vmatprep.subr.mxu0 0.0
    %1492 = vmatpush1.msra.mxu0 %v213
    %1493 = vmatprep.subr.mxu0 0.0
    %1494 = vmatpush1.msra.mxu0 %v214
    %1495 = vmatprep.subr.mxu0 0.0
    %1496 = vmatpush1.msra.mxu0 %v215
    %1497 = vmatprep.subr.mxu0 0.0
    %1498 = vmatpush1.msra.mxu0 %v216
    %1499 = vmatprep.subr.mxu0 0.0
    %1500 = vmatpush1.msra.mxu0 %v217
    %1501 = vmatprep.subr.mxu0 0.0
    %1502 = vmatpush1.msra.mxu0 %v218
    %1503 = vmatprep.subr.mxu0 0.0
    %1504 = vmatpush1.msra.mxu0 %v219
    %1505 = vmatprep.subr.mxu0 0.0
    %1506 = vmatpush1.msra.mxu0 %v220
    %1507 = vmatprep.subr.mxu0 0.0
    %1508 = vmatpush1.msra.mxu0 %v221
    %1509 = vmatprep.subr.mxu0 0.0
    %1510 = vmatpush1.msra.mxu0 %v222
    %1511 = vmatprep.subr.mxu0 0.0
    %1512 = vmatpush1.msra.mxu0 %v223
    %1513 = vmatprep.subr.mxu0 0.0
    %1514 = vmatpush1.msra.mxu0 %v224
    %1515 = vmatprep.subr.mxu0 0.0
    %1516 = vmatpush1.msra.mxu0 %v225
    %1517 = vmatprep.subr.mxu0 0.0
    %1518 = vmatpush1.msra.mxu0 %v226
    %1519 = vmatprep.subr.mxu0 0.0
    %1520 = vmatpush1.msra.mxu0 %v227
    %1521 = vmatprep.subr.mxu0 0.0
    %1522 = vmatpush1.msra.mxu0 %v228
    %1523 = vmatprep.subr.mxu0 0.0
    %1524 = vmatpush1.msra.mxu0 %v229
    %1525 = vmatprep.subr.mxu0 0.0
    %1526 = vmatpush1.msra.mxu0 %v230
    %1527 = vmatprep.subr.mxu0 0.0
    %1528 = vmatpush1.msra.mxu0 %v231
    %1529 = vmatprep.subr.mxu0 0.0
    %1530 = vmatpush1.msra.mxu0 %v232
    %1531 = vmatprep.subr.mxu0 0.0
    %1532 = vmatpush1.msra.mxu0 %v233
    %1533 = vmatprep.subr.mxu0 0.0
    %1534 = vmatpush1.msra.mxu0 %v234
    %1535 = vmatprep.subr.mxu0 0.0
    %1536 = vmatpush1.msra.mxu0 %v235
    %1537 = vmatprep.subr.mxu0 0.0
    %1538 = vmatpush1.msra.mxu0 %v236
    %1539 = vmatprep.subr.mxu0 0.0
    %1540 = vmatpush1.msra.mxu0 %v237
    %1541 = vmatprep.subr.mxu0 0.0
    %1542 = vmatpush1.msra.mxu0 %v238
    %1543 = vmatprep.subr.mxu0 0.0
    %1544 = vmatpush1.msra.mxu0 %v239
    %1545 = vmatprep.subr.mxu0 0.0
    %1546 = vmatpush1.msra.mxu0 %v240
    %1547 = vmatprep.mubr.f32.mxu0 %v1277
    %1548 = vmatmul.mubr.f32.gmra.mrb[0].mxu0 %v1276
    %v1549 = vpop.f32.mrb[0].mxu0
    %v1550 = vadd.f32 %v1405, %v1549
    %v1551 = vpop.f32.mrb[0].mxu0
    %1552 = vmatprep.mubr.f32.mxu0 %v1281
    %1553 = vmatmul.mubr.f32.gmra.mrb[0].mxu0 %v1280
    %v1554 = vpop.f32.mrb[0].mxu0
    %v1555 = vadd.f32 %v1410, %v1554
    %v1556 = vpop.f32.mrb[0].mxu0
    %1557 = vmatprep.mubr.f32.mxu0 %v1285
    %1558 = vmatmul.mubr.f32.gmra.mrb[0].mxu0 %v1284
    %v1559 = vpop.f32.mrb[0].mxu0
    %v1560 = vadd.f32 %v1415, %v1559
    %v1561 = vpop.f32.mrb[0].mxu0
    %1562 = vmatprep.mubr.f32.mxu0 %v1289
    %1563 = vmatmul.mubr.f32.gmra.mrb[0].mxu0 %v1288
    %v1564 = vpop.f32.mrb[0].mxu0
    %v1565 = vadd.f32 %v1420, %v1564
    %v1566 = vpop.f32.mrb[0].mxu0
    %1567 = vmatprep.mubr.f32.mxu0 %v1293
    %1568 = vmatmul.mubr.f32.gmra.mrb[0].mxu0 %v1292
    %v1569 = vpop.f32.mrb[0].mxu0
    %v1570 = vadd.f32 %v1425, %v1569
    %v1571 = vpop.f32.mrb[0].mxu0
    %1572 = vmatprep.mubr.f32.mxu0 %v1297
    %1573 = vmatmul.mubr.f32.gmra.mrb[0].mxu0 %v1296
    %v1574 = vpop.f32.mrb[0].mxu0
    %v1575 = vadd.f32 %v1430, %v1574
    %v1576 = vpop.f32.mrb[0].mxu0
    %1577 = vmatprep.mubr.f32.mxu0 %v1301
    %1578 = vmatmul.mubr.f32.gmra.mrb[0].mxu0 %v1300
    %v1579 = vpop.f32.mrb[0].mxu0
    %v1580 = vadd.f32 %v1435, %v1579
    %v1581 = vpop.f32.mrb[0].mxu0
    %1582 = vmatprep.mubr.f32.mxu0 %v1305
    %1583 = vmatmul.mubr.f32.gmra.mrb[0].mxu0 %v1304
    %v1584 = vpop.f32.mrb[0].mxu0
    %v1585 = vadd.f32 %v1440, %v1584
    %v1586 = vpop.f32.mrb[0].mxu0
    %1587 = vmatprep.mubr.f32.mxu0 %v1309
    %1588 = vmatmul.mubr.f32.gmra.mrb[0].mxu0 %v1308
    %v1589 = vpop.f32.mrb[0].mxu0
    %v1590 = vadd.f32 %v1445, %v1589
    %v1591 = vpop.f32.mrb[0].mxu0
    %1592 = vmatprep.mubr.f32.mxu0 %v1313
    %1593 = vmatmul.mubr.f32.gmra.mrb[0].mxu0 %v1312
    %v1594 = vpop.f32.mrb[0].mxu0
    %v1595 = vadd.f32 %v1450, %v1594
    %v1596 = vpop.f32.mrb[0].mxu0
    %1597 = vmatprep.mubr.f32.mxu0 %v1317
    %1598 = vmatmul.mubr.f32.gmra.mrb[0].mxu0 %v1316
    %v1599 = vpop.f32.mrb[0].mxu0
    %v1600 = vadd.f32 %v1455, %v1599
    %v1601 = vpop.f32.mrb[0].mxu0
    %1602 = vmatprep.mubr.f32.mxu0 %v1321
    %1603 = vmatmul.mubr.f32.gmra.mrb[0].mxu0 %v1320
    %v1604 = vpop.f32.mrb[0].mxu0
    %v1605 = vadd.f32 %v1460, %v1604
    %v1606 = vpop.f32.mrb[0].mxu0
    %1607 = vmatprep.mubr.f32.mxu0 %v1325
    %1608 = vmatmul.mubr.f32.gmra.mrb[0].mxu0 %v1324
    %v1609 = vpop.f32.mrb[0].mxu0
    %v1610 = vadd.f32 %v1465, %v1609
    %v1611 = vpop.f32.mrb[0].mxu0
    %1612 = vmatprep.mubr.f32.mxu0 %v1329
    %1613 = vmatmul.mubr.f32.gmra.mrb[0].mxu0 %v1328
    %v1614 = vpop.f32.mrb[0].mxu0
    %v1615 = vadd.f32 %v1470, %v1614
    %v1616 = vpop.f32.mrb[0].mxu0
    %1617 = vmatprep.mubr.f32.mxu0 %v1333
    %1618 = vmatmul.mubr.f32.gmra.mrb[0].mxu0 %v1332
    %v1619 = vpop.f32.mrb[0].mxu0
    %v1620 = vadd.f32 %v1475, %v1619
    %v1621 = vpop.f32.mrb[0].mxu0
    %1622 = vmatprep.mubr.f32.mxu0 %v1337
    %1623 = vmatmul.mubr.f32.gmra.mrb[0].mxu0 %v1336
    %v1624 = vpop.f32.mrb[0].mxu0
    %v1625 = vadd.f32 %v1480, %v1624
    %v1626 = vpop.f32.mrb[0].mxu0
    %1627 = vdwg.mxu0
    %s1628 = scalar_lea.vmem [#allocation10], 256
    %v1629 = vld [vmem:[%s1628] sm:$0xff]
    %v1630 = vld [vmem:[%s1628 + $0x8] sm:$0xff]
    %v1631 = vld [vmem:[%s1628 + $0x10] sm:$0xff]
    %v1632 = vld [vmem:[%s1628 + $0x18] sm:$0xff]
    %v1633 = vld [vmem:[%s1628 + $0x20] sm:$0xff]
    %v1634 = vld [vmem:[%s1628 + $0x28] sm:$0xff]
    %v1635 = vld [vmem:[%s1628 + $0x30] sm:$0xff]
    %v1636 = vld [vmem:[%s1628 + $0x38] sm:$0xff]
    %v1637 = vld [vmem:[%s1628 + $0x40] sm:$0xff]
    %v1638 = vld [vmem:[%s1628 + $0x48] sm:$0xff]
    %v1639 = vld [vmem:[%s1628 + $0x50] sm:$0xff]
    %v1640 = vld [vmem:[%s1628 + $0x58] sm:$0xff]
    %v1641 = vld [vmem:[%s1628 + $0x60] sm:$0xff]
    %v1642 = vld [vmem:[%s1628 + $0x68] sm:$0xff]
    %v1643 = vld [vmem:[%s1628 + $0x70] sm:$0xff]
    %v1644 = vld [vmem:[%s1628 + $0x78] sm:$0xff]
    %1645 = vmatprep.subr.mxu0 0.0
    %1646 = vmatpush1.msra.mxu0 %v1629
    %1647 = vmatprep.subr.mxu0 0.0
    %1648 = vmatpush1.msra.mxu0 %v1630
    %1649 = vmatprep.subr.mxu0 0.0
    %1650 = vmatpush1.msra.mxu0 %v1631
    %1651 = vmatprep.subr.mxu0 0.0
    %1652 = vmatpush1.msra.mxu0 %v1632
    %1653 = vmatprep.subr.mxu0 0.0
    %1654 = vmatpush1.msra.mxu0 %v1633
    %1655 = vmatprep.subr.mxu0 0.0
    %1656 = vmatpush1.msra.mxu0 %v1634
    %1657 = vmatprep.subr.mxu0 0.0
    %1658 = vmatpush1.msra.mxu0 %v1635
    %1659 = vmatprep.subr.mxu0 0.0
    %1660 = vmatpush1.msra.mxu0 %v1636
    %1661 = vmatprep.subr.mxu0 0.0
    %1662 = vmatpush1.msra.mxu0 %v1637
    %1663 = vmatprep.subr.mxu0 0.0
    %1664 = vmatpush1.msra.mxu0 %v1638
    %1665 = vmatprep.subr.mxu0 0.0
    %1666 = vmatpush1.msra.mxu0 %v1639
    %1667 = vmatprep.subr.mxu0 0.0
    %1668 = vmatpush1.msra.mxu0 %v1640
    %1669 = vmatprep.subr.mxu0 0.0
    %1670 = vmatpush1.msra.mxu0 %v1641
    %1671 = vmatprep.subr.mxu0 0.0
    %1672 = vmatpush1.msra.mxu0 %v1642
    %1673 = vmatprep.subr.mxu0 0.0
    %1674 = vmatpush1.msra.mxu0 %v1643
    %1675 = vmatprep.subr.mxu0 0.0
    %1676 = vmatpush1.msra.mxu0 %v1644
    %1677 = vmatprep.subr.mxu0 0.0
    %1678 = vmatpush1.msra.mxu0 0.0
    %1679 = vmatprep.subr.mxu0 0.0
    %1680 = vmatpush1.msra.mxu0 0.0
    %1681 = vmatprep.subr.mxu0 0.0
    %1682 = vmatpush1.msra.mxu0 0.0
    %1683 = vmatprep.subr.mxu0 0.0
    %1684 = vmatpush1.msra.mxu0 0.0
    %1685 = vmatprep.subr.mxu0 0.0
    %1686 = vmatpush1.msra.mxu0 0.0
    %1687 = vmatprep.subr.mxu0 0.0
    %1688 = vmatpush1.msra.mxu0 0.0
    %1689 = vmatprep.subr.mxu0 0.0
    %1690 = vmatpush1.msra.mxu0 0.0
    %1691 = vmatprep.subr.mxu0 0.0
    %1692 = vmatpush1.msra.mxu0 0.0
    %1693 = vmatprep.subr.mxu0 0.0
    %1694 = vmatpush1.msra.mxu0 0.0
    %1695 = vmatprep.subr.mxu0 0.0
    %1696 = vmatpush1.msra.mxu0 0.0
    %1697 = vmatprep.subr.mxu0 0.0
    %1698 = vmatpush1.msra.mxu0 0.0
    %1699 = vmatprep.subr.mxu0 0.0
    %1700 = vmatpush1.msra.mxu0 0.0
    %1701 = vmatprep.subr.mxu0 0.0
    %1702 = vmatpush1.msra.mxu0 0.0
    %1703 = vmatprep.subr.mxu0 0.0
    %1704 = vmatpush1.msra.mxu0 0.0
    %1705 = vmatprep.subr.mxu0 0.0
    %1706 = vmatpush1.msra.mxu0 0.0
    %1707 = vmatprep.subr.mxu0 0.0
    %1708 = vmatpush1.msra.mxu0 0.0
    %1709 = vmatprep.mubr.f32.mxu0 0.0
    %1710 = vmatmul.mubr.f32.gmra.mrb[0].mxu0 %v1550
    %v1711 = vpop.f32.mrb[0].mxu0
    %v1712 = vadd.f32 0.0, %v1711
    %v1713 = vpop.f32.mrb[0].mxu0
    %1714 = vmatprep.mubr.f32.mxu0 0.0
    %1715 = vmatmul.mubr.f32.gmra.mrb[0].mxu0 %v1555
    %v1716 = vpop.f32.mrb[0].mxu0
    %v1717 = vadd.f32 0.0, %v1716
    %v1718 = vpop.f32.mrb[0].mxu0
    %1719 = vmatprep.mubr.f32.mxu0 0.0
    %1720 = vmatmul.mubr.f32.gmra.mrb[0].mxu0 %v1560
    %v1721 = vpop.f32.mrb[0].mxu0
    %v1722 = vadd.f32 0.0, %v1721
    %v1723 = vpop.f32.mrb[0].mxu0
    %1724 = vmatprep.mubr.f32.mxu0 0.0
    %1725 = vmatmul.mubr.f32.gmra.mrb[0].mxu0 %v1565
    %v1726 = vpop.f32.mrb[0].mxu0
    %v1727 = vadd.f32 0.0, %v1726
    %v1728 = vpop.f32.mrb[0].mxu0
    %1729 = vmatprep.mubr.f32.mxu0 0.0
    %1730 = vmatmul.mubr.f32.gmra.mrb[0].mxu0 %v1570
    %v1731 = vpop.f32.mrb[0].mxu0
    %v1732 = vadd.f32 0.0, %v1731
    %v1733 = vpop.f32.mrb[0].mxu0
    %1734 = vmatprep.mubr.f32.mxu0 0.0
    %1735 = vmatmul.mubr.f32.gmra.mrb[0].mxu0 %v1575
    %v1736 = vpop.f32.mrb[0].mxu0
    %v1737 = vadd.f32 0.0, %v1736
    %v1738 = vpop.f32.mrb[0].mxu0
    %1739 = vmatprep.mubr.f32.mxu0 0.0
    %1740 = vmatmul.mubr.f32.gmra.mrb[0].mxu0 %v1580
    %v1741 = vpop.f32.mrb[0].mxu0
    %v1742 = vadd.f32 0.0, %v1741
    %v1743 = vpop.f32.mrb[0].mxu0
    %1744 = vmatprep.mubr.f32.mxu0 0.0
    %1745 = vmatmul.mubr.f32.gmra.mrb[0].mxu0 %v1585
    %v1746 = vpop.f32.mrb[0].mxu0
    %v1747 = vadd.f32 0.0, %v1746
    %v1748 = vpop.f32.mrb[0].mxu0
    %1749 = vmatprep.mubr.f32.mxu0 0.0
    %1750 = vmatmul.mubr.f32.gmra.mrb[0].mxu0 %v1590
    %v1751 = vpop.f32.mrb[0].mxu0
    %v1752 = vadd.f32 0.0, %v1751
    %v1753 = vpop.f32.mrb[0].mxu0
    %1754 = vmatprep.mubr.f32.mxu0 0.0
    %1755 = vmatmul.mubr.f32.gmra.mrb[0].mxu0 %v1595
    %v1756 = vpop.f32.mrb[0].mxu0
    %v1757 = vadd.f32 0.0, %v1756
    %v1758 = vpop.f32.mrb[0].mxu0
    %1759 = vmatprep.mubr.f32.mxu0 0.0
    %1760 = vmatmul.mubr.f32.gmra.mrb[0].mxu0 %v1600
    %v1761 = vpop.f32.mrb[0].mxu0
    %v1762 = vadd.f32 0.0, %v1761
    %v1763 = vpop.f32.mrb[0].mxu0
    %1764 = vmatprep.mubr.f32.mxu0 0.0
    %1765 = vmatmul.mubr.f32.gmra.mrb[0].mxu0 %v1605
    %v1766 = vpop.f32.mrb[0].mxu0
    %v1767 = vadd.f32 0.0, %v1766
    %v1768 = vpop.f32.mrb[0].mxu0
    %1769 = vmatprep.mubr.f32.mxu0 0.0
    %1770 = vmatmul.mubr.f32.gmra.mrb[0].mxu0 %v1610
    %v1771 = vpop.f32.mrb[0].mxu0
    %v1772 = vadd.f32 0.0, %v1771
    %v1773 = vpop.f32.mrb[0].mxu0
    %1774 = vmatprep.mubr.f32.mxu0 0.0
    %1775 = vmatmul.mubr.f32.gmra.mrb[0].mxu0 %v1615
    %v1776 = vpop.f32.mrb[0].mxu0
    %v1777 = vadd.f32 0.0, %v1776
    %v1778 = vpop.f32.mrb[0].mxu0
    %1779 = vmatprep.mubr.f32.mxu0 0.0
    %1780 = vmatmul.mubr.f32.gmra.mrb[0].mxu0 %v1620
    %v1781 = vpop.f32.mrb[0].mxu0
    %v1782 = vadd.f32 0.0, %v1781
    %v1783 = vpop.f32.mrb[0].mxu0
    %1784 = vmatprep.mubr.f32.mxu0 0.0
    %1785 = vmatmul.mubr.f32.gmra.mrb[0].mxu0 %v1625
    %v1786 = vpop.f32.mrb[0].mxu0
    %v1787 = vadd.f32 0.0, %v1786
    %v1788 = vpop.f32.mrb[0].mxu0
    %1789 = vdwg.mxu0
    %v1790 = vadd.f32 %v1195, %v1712
    %v1791 = vadd.f32 %v1200, %v1717
    %v1792 = vadd.f32 %v1205, %v1722
    %v1793 = vadd.f32 %v1210, %v1727
    %v1794 = vadd.f32 %v1215, %v1732
    %v1795 = vadd.f32 %v1220, %v1737
    %v1796 = vadd.f32 %v1225, %v1742
    %v1797 = vadd.f32 %v1230, %v1747
    %v1798 = vadd.f32 %v1235, %v1752
    %v1799 = vadd.f32 %v1240, %v1757
    %v1800 = vadd.f32 %v1245, %v1762
    %v1801 = vadd.f32 %v1250, %v1767
    %v1802 = vadd.f32 %v1255, %v1772
    %v1803 = vadd.f32 %v1260, %v1777
    %v1804 = vadd.f32 %v1265, %v1782
    %v1805 = vadd.f32 %v1270, %v1787
    %s1806 = scalar_lea.vmem [#allocation2], 1536
    %v1807 = vld [vmem:[%s1806] sm:$0xff]
    %v1808 = vld [vmem:[%s1806 + $0x8] sm:$0xff]
    %v1809 = vld [vmem:[%s1806 + $0x10] sm:$0xff]
    %v1810 = vld [vmem:[%s1806 + $0x18] sm:$0xff]
    %v1811 = vld [vmem:[%s1806 + $0x20] sm:$0xff]
    %v1812 = vld [vmem:[%s1806 + $0x28] sm:$0xff]
    %v1813 = vld [vmem:[%s1806 + $0x30] sm:$0xff]
    %v1814 = vld [vmem:[%s1806 + $0x38] sm:$0xff]
    %v1815 = vld [vmem:[%s1806 + $0x40] sm:$0xff]
    %v1816 = vld [vmem:[%s1806 + $0x48] sm:$0xff]
    %v1817 = vld [vmem:[%s1806 + $0x50] sm:$0xff]
    %v1818 = vld [vmem:[%s1806 + $0x58] sm:$0xff]
    %v1819 = vld [vmem:[%s1806 + $0x60] sm:$0xff]
    %v1820 = vld [vmem:[%s1806 + $0x68] sm:$0xff]
    %v1821 = vld [vmem:[%s1806 + $0x70] sm:$0xff]
    %v1822 = vld [vmem:[%s1806 + $0x78] sm:$0xff]
    %v1823 = vld [vmem:[%s1806 + $0x80] sm:$0xff]
    %v1824 = vld [vmem:[%s1806 + $0x88] sm:$0xff]
    %v1825 = vld [vmem:[%s1806 + $0x90] sm:$0xff]
    %v1826 = vld [vmem:[%s1806 + $0x98] sm:$0xff]
    %v1827 = vld [vmem:[%s1806 + $0xa0] sm:$0xff]
    %v1828 = vld [vmem:[%s1806 + $0xa8] sm:$0xff]
    %v1829 = vld [vmem:[%s1806 + $0xb0] sm:$0xff]
    %v1830 = vld [vmem:[%s1806 + $0xb8] sm:$0xff]
    %v1831 = vld [vmem:[%s1806 + $0xc0] sm:$0xff]
    %v1832 = vld [vmem:[%s1806 + $0xc8] sm:$0xff]
    %v1833 = vld [vmem:[%s1806 + $0xd0] sm:$0xff]
    %v1834 = vld [vmem:[%s1806 + $0xd8] sm:$0xff]
    %v1835 = vld [vmem:[%s1806 + $0xe0] sm:$0xff]
    %v1836 = vld [vmem:[%s1806 + $0xe8] sm:$0xff]
    %v1837 = vld [vmem:[%s1806 + $0xf0] sm:$0xff]
    %v1838 = vld [vmem:[%s1806 + $0xf8] sm:$0xff]
    %v1839 = vld [vmem:[%s1806 + $0x100] sm:$0xff]
    %v1840 = vld [vmem:[%s1806 + $0x108] sm:$0xff]
    %v1841 = vld [vmem:[%s1806 + $0x110] sm:$0xff]
    %v1842 = vld [vmem:[%s1806 + $0x118] sm:$0xff]
    %v1843 = vld [vmem:[%s1806 + $0x120] sm:$0xff]
    %v1844 = vld [vmem:[%s1806 + $0x128] sm:$0xff]
    %v1845 = vld [vmem:[%s1806 + $0x130] sm:$0xff]
    %v1846 = vld [vmem:[%s1806 + $0x138] sm:$0xff]
    %v1847 = vld [vmem:[%s1806 + $0x140] sm:$0xff]
    %v1848 = vld [vmem:[%s1806 + $0x148] sm:$0xff]
    %v1849 = vld [vmem:[%s1806 + $0x150] sm:$0xff]
    %v1850 = vld [vmem:[%s1806 + $0x158] sm:$0xff]
    %v1851 = vld [vmem:[%s1806 + $0x160] sm:$0xff]
    %v1852 = vld [vmem:[%s1806 + $0x168] sm:$0xff]
    %v1853 = vld [vmem:[%s1806 + $0x170] sm:$0xff]
    %v1854 = vld [vmem:[%s1806 + $0x178] sm:$0xff]
    %v1855 = vld [vmem:[%s1806 + $0x180] sm:$0xff]
    %v1856 = vld [vmem:[%s1806 + $0x188] sm:$0xff]
    %v1857 = vld [vmem:[%s1806 + $0x190] sm:$0xff]
    %v1858 = vld [vmem:[%s1806 + $0x198] sm:$0xff]
    %v1859 = vld [vmem:[%s1806 + $0x1a0] sm:$0xff]
    %v1860 = vld [vmem:[%s1806 + $0x1a8] sm:$0xff]
    %v1861 = vld [vmem:[%s1806 + $0x1b0] sm:$0xff]
    %v1862 = vld [vmem:[%s1806 + $0x1b8] sm:$0xff]
    %v1863 = vld [vmem:[%s1806 + $0x1c0] sm:$0xff]
    %v1864 = vld [vmem:[%s1806 + $0x1c8] sm:$0xff]
    %v1865 = vld [vmem:[%s1806 + $0x1d0] sm:$0xff]
    %v1866 = vld [vmem:[%s1806 + $0x1d8] sm:$0xff]
    %v1867 = vld [vmem:[%s1806 + $0x1e0] sm:$0xff]
    %v1868 = vld [vmem:[%s1806 + $0x1e8] sm:$0xff]
    %v1869 = vld [vmem:[%s1806 + $0x1f0] sm:$0xff]
    %v1870 = vld [vmem:[%s1806 + $0x1f8] sm:$0xff]
    %1871 = vmatprep.subr.mxu0 0.0
    %1872 = vmatpush1.msra.mxu0 %v177
    %1873 = vmatprep.subr.mxu0 0.0
    %1874 = vmatpush1.msra.mxu0 %v178
    %1875 = vmatprep.subr.mxu0 0.0
    %1876 = vmatpush1.msra.mxu0 %v179
    %1877 = vmatprep.subr.mxu0 0.0
    %1878 = vmatpush1.msra.mxu0 %v180
    %1879 = vmatprep.subr.mxu0 0.0
    %1880 = vmatpush1.msra.mxu0 %v181
    %1881 = vmatprep.subr.mxu0 0.0
    %1882 = vmatpush1.msra.mxu0 %v182
    %1883 = vmatprep.subr.mxu0 0.0
    %1884 = vmatpush1.msra.mxu0 %v183
    %1885 = vmatprep.subr.mxu0 0.0
    %1886 = vmatpush1.msra.mxu0 %v184
    %1887 = vmatprep.subr.mxu0 0.0
    %1888 = vmatpush1.msra.mxu0 %v185
    %1889 = vmatprep.subr.mxu0 0.0
    %1890 = vmatpush1.msra.mxu0 %v186
    %1891 = vmatprep.subr.mxu0 0.0
    %1892 = vmatpush1.msra.mxu0 %v187
    %1893 = vmatprep.subr.mxu0 0.0
    %1894 = vmatpush1.msra.mxu0 %v188
    %1895 = vmatprep.subr.mxu0 0.0
    %1896 = vmatpush1.msra.mxu0 %v189
    %1897 = vmatprep.subr.mxu0 0.0
    %1898 = vmatpush1.msra.mxu0 %v190
    %1899 = vmatprep.subr.mxu0 0.0
    %1900 = vmatpush1.msra.mxu0 %v191
    %1901 = vmatprep.subr.mxu0 0.0
    %1902 = vmatpush1.msra.mxu0 %v192
    %1903 = vmatprep.subr.mxu0 0.0
    %1904 = vmatpush1.msra.mxu0 %v193
    %1905 = vmatprep.subr.mxu0 0.0
    %1906 = vmatpush1.msra.mxu0 %v194
    %1907 = vmatprep.subr.mxu0 0.0
    %1908 = vmatpush1.msra.mxu0 %v195
    %1909 = vmatprep.subr.mxu0 0.0
    %1910 = vmatpush1.msra.mxu0 %v196
    %1911 = vmatprep.subr.mxu0 0.0
    %1912 = vmatpush1.msra.mxu0 %v197
    %1913 = vmatprep.subr.mxu0 0.0
    %1914 = vmatpush1.msra.mxu0 %v198
    %1915 = vmatprep.subr.mxu0 0.0
    %1916 = vmatpush1.msra.mxu0 %v199
    %1917 = vmatprep.subr.mxu0 0.0
    %1918 = vmatpush1.msra.mxu0 %v200
    %1919 = vmatprep.subr.mxu0 0.0
    %1920 = vmatpush1.msra.mxu0 %v201
    %1921 = vmatprep.subr.mxu0 0.0
    %1922 = vmatpush1.msra.mxu0 %v202
    %1923 = vmatprep.subr.mxu0 0.0
    %1924 = vmatpush1.msra.mxu0 %v203
    %1925 = vmatprep.subr.mxu0 0.0
    %1926 = vmatpush1.msra.mxu0 %v204
    %1927 = vmatprep.subr.mxu0 0.0
    %1928 = vmatpush1.msra.mxu0 %v205
    %1929 = vmatprep.subr.mxu0 0.0
    %1930 = vmatpush1.msra.mxu0 %v206
    %1931 = vmatprep.subr.mxu0 0.0
    %1932 = vmatpush1.msra.mxu0 %v207
    %1933 = vmatprep.subr.mxu0 0.0
    %1934 = vmatpush1.msra.mxu0 %v208
    %1935 = vmatprep.mubr.f32.mxu0 %v1808
    %1936 = vmatmul.mubr.f32.gmra.mrb[0].mxu0 %v1807
    %v1937 = vpop.f32.mrb[0].mxu0
    %v1938 = vadd.f32 0.0, %v1937
    %v1939 = vpop.f32.mrb[0].mxu0
    %1940 = vmatprep.mubr.f32.mxu0 %v1812
    %1941 = vmatmul.mubr.f32.gmra.mrb[0].mxu0 %v1811
    %v1942 = vpop.f32.mrb[0].mxu0
    %v1943 = vadd.f32 0.0, %v1942
    %v1944 = vpop.f32.mrb[0].mxu0
    %1945 = vmatprep.mubr.f32.mxu0 %v1816
    %1946 = vmatmul.mubr.f32.gmra.mrb[0].mxu0 %v1815
    %v1947 = vpop.f32.mrb[0].mxu0
    %v1948 = vadd.f32 0.0, %v1947
    %v1949 = vpop.f32.mrb[0].mxu0
    %1950 = vmatprep.mubr.f32.mxu0 %v1820
    %1951 = vmatmul.mubr.f32.gmra.mrb[0].mxu0 %v1819
    %v1952 = vpop.f32.mrb[0].mxu0
    %v1953 = vadd.f32 0.0, %v1952
    %v1954 = vpop.f32.mrb[0].mxu0
    %1955 = vmatprep.mubr.f32.mxu0 %v1824
    %1956 = vmatmul.mubr.f32.gmra.mrb[0].mxu0 %v1823
    %v1957 = vpop.f32.mrb[0].mxu0
    %v1958 = vadd.f32 0.0, %v1957
    %v1959 = vpop.f32.mrb[0].mxu0
    %1960 = vmatprep.mubr.f32.mxu0 %v1828
    %1961 = vmatmul.mubr.f32.gmra.mrb[0].mxu0 %v1827
    %v1962 = vpop.f32.mrb[0].mxu0
    %v1963 = vadd.f32 0.0, %v1962
    %v1964 = vpop.f32.mrb[0].mxu0
    %1965 = vmatprep.mubr.f32.mxu0 %v1832
    %1966 = vmatmul.mubr.f32.gmra.mrb[0].mxu0 %v1831
    %v1967 = vpop.f32.mrb[0].mxu0
    %v1968 = vadd.f32 0.0, %v1967
    %v1969 = vpop.f32.mrb[0].mxu0
    %1970 = vmatprep.mubr.f32.mxu0 %v1836
    %1971 = vmatmul.mubr.f32.gmra.mrb[0].mxu0 %v1835
    %v1972 = vpop.f32.mrb[0].mxu0
    %v1973 = vadd.f32 0.0, %v1972
    %v1974 = vpop.f32.mrb[0].mxu0
    %1975 = vmatprep.mubr.f32.mxu0 %v1840
    %1976 = vmatmul.mubr.f32.gmra.mrb[0].mxu0 %v1839
    %v1977 = vpop.f32.mrb[0].mxu0
    %v1978 = vadd.f32 0.0, %v1977
    %v1979 = vpop.f32.mrb[0].mxu0
    %1980 = vmatprep.mubr.f32.mxu0 %v1844
    %1981 = vmatmul.mubr.f32.gmra.mrb[0].mxu0 %v1843
    %v1982 = vpop.f32.mrb[0].mxu0
    %v1983 = vadd.f32 0.0, %v1982
    %v1984 = vpop.f32.mrb[0].mxu0
    %1985 = vmatprep.mubr.f32.mxu0 %v1848
    %1986 = vmatmul.mubr.f32.gmra.mrb[0].mxu0 %v1847
    %v1987 = vpop.f32.mrb[0].mxu0
    %v1988 = vadd.f32 0.0, %v1987
    %v1989 = vpop.f32.mrb[0].mxu0
    %1990 = vmatprep.mubr.f32.mxu0 %v1852
    %1991 = vmatmul.mubr.f32.gmra.mrb[0].mxu0 %v1851
    %v1992 = vpop.f32.mrb[0].mxu0
    %v1993 = vadd.f32 0.0, %v1992
    %v1994 = vpop.f32.mrb[0].mxu0
    %1995 = vmatprep.mubr.f32.mxu0 %v1856
    %1996 = vmatmul.mubr.f32.gmra.mrb[0].mxu0 %v1855
    %v1997 = vpop.f32.mrb[0].mxu0
    %v1998 = vadd.f32 0.0, %v1997
    %v1999 = vpop.f32.mrb[0].mxu0
    %2000 = vmatprep.mubr.f32.mxu0 %v1860
    %2001 = vmatmul.mubr.f32.gmra.mrb[0].mxu0 %v1859
    %v2002 = vpop.f32.mrb[0].mxu0
    %v2003 = vadd.f32 0.0, %v2002
    %v2004 = vpop.f32.mrb[0].mxu0
    %2005 = vmatprep.mubr.f32.mxu0 %v1864
    %2006 = vmatmul.mubr.f32.gmra.mrb[0].mxu0 %v1863
    %v2007 = vpop.f32.mrb[0].mxu0
    %v2008 = vadd.f32 0.0, %v2007
    %v2009 = vpop.f32.mrb[0].mxu0
    %2010 = vmatprep.mubr.f32.mxu0 %v1868
    %2011 = vmatmul.mubr.f32.gmra.mrb[0].mxu0 %v1867
    %v2012 = vpop.f32.mrb[0].mxu0
    %v2013 = vadd.f32 0.0, %v2012
    %v2014 = vpop.f32.mrb[0].mxu0
    %2015 = vdwg.mxu0
    %2016 = vmatprep.subr.mxu0 0.0
    %2017 = vmatpush1.msra.mxu0 %v209
    %2018 = vmatprep.subr.mxu0 0.0
    %2019 = vmatpush1.msra.mxu0 %v210
    %2020 = vmatprep.subr.mxu0 0.0
    %2021 = vmatpush1.msra.mxu0 %v211
    %2022 = vmatprep.subr.mxu0 0.0
    %2023 = vmatpush1.msra.mxu0 %v212
    %2024 = vmatprep.subr.mxu0 0.0
    %2025 = vmatpush1.msra.mxu0 %v213
    %2026 = vmatprep.subr.mxu0 0.0
    %2027 = vmatpush1.msra.mxu0 %v214
    %2028 = vmatprep.subr.mxu0 0.0
    %2029 = vmatpush1.msra.mxu0 %v215
    %2030 = vmatprep.subr.mxu0 0.0
    %2031 = vmatpush1.msra.mxu0 %v216
    %2032 = vmatprep.subr.mxu0 0.0
    %2033 = vmatpush1.msra.mxu0 %v217
    %2034 = vmatprep.subr.mxu0 0.0
    %2035 = vmatpush1.msra.mxu0 %v218
    %2036 = vmatprep.subr.mxu0 0.0
    %2037 = vmatpush1.msra.mxu0 %v219
    %2038 = vmatprep.subr.mxu0 0.0
    %2039 = vmatpush1.msra.mxu0 %v220
    %2040 = vmatprep.subr.mxu0 0.0
    %2041 = vmatpush1.msra.mxu0 %v221
    %2042 = vmatprep.subr.mxu0 0.0
    %2043 = vmatpush1.msra.mxu0 %v222
    %2044 = vmatprep.subr.mxu0 0.0
    %2045 = vmatpush1.msra.mxu0 %v223
    %2046 = vmatprep.subr.mxu0 0.0
    %2047 = vmatpush1.msra.mxu0 %v224
    %2048 = vmatprep.subr.mxu0 0.0
    %2049 = vmatpush1.msra.mxu0 %v225
    %2050 = vmatprep.subr.mxu0 0.0
    %2051 = vmatpush1.msra.mxu0 %v226
    %2052 = vmatprep.subr.mxu0 0.0
    %2053 = vmatpush1.msra.mxu0 %v227
    %2054 = vmatprep.subr.mxu0 0.0
    %2055 = vmatpush1.msra.mxu0 %v228
    %2056 = vmatprep.subr.mxu0 0.0
    %2057 = vmatpush1.msra.mxu0 %v229
    %2058 = vmatprep.subr.mxu0 0.0
    %2059 = vmatpush1.msra.mxu0 %v230
    %2060 = vmatprep.subr.mxu0 0.0
    %2061 = vmatpush1.msra.mxu0 %v231
    %2062 = vmatprep.subr.mxu0 0.0
    %2063 = vmatpush1.msra.mxu0 %v232
    %2064 = vmatprep.subr.mxu0 0.0
    %2065 = vmatpush1.msra.mxu0 %v233
    %2066 = vmatprep.subr.mxu0 0.0
    %2067 = vmatpush1.msra.mxu0 %v234
    %2068 = vmatprep.subr.mxu0 0.0
    %2069 = vmatpush1.msra.mxu0 %v235
    %2070 = vmatprep.subr.mxu0 0.0
    %2071 = vmatpush1.msra.mxu0 %v236
    %2072 = vmatprep.subr.mxu0 0.0
    %2073 = vmatpush1.msra.mxu0 %v237
    %2074 = vmatprep.subr.mxu0 0.0
    %2075 = vmatpush1.msra.mxu0 %v238
    %2076 = vmatprep.subr.mxu0 0.0
    %2077 = vmatpush1.msra.mxu0 %v239
    %2078 = vmatprep.subr.mxu0 0.0
    %2079 = vmatpush1.msra.mxu0 %v240
    %2080 = vmatprep.mubr.f32.mxu0 %v1810
    %2081 = vmatmul.mubr.f32.gmra.mrb[0].mxu0 %v1809
    %v2082 = vpop.f32.mrb[0].mxu0
    %v2083 = vadd.f32 %v1938, %v2082
    %v2084 = vpop.f32.mrb[0].mxu0
    %2085 = vmatprep.mubr.f32.mxu0 %v1814
    %2086 = vmatmul.mubr.f32.gmra.mrb[0].mxu0 %v1813
    %v2087 = vpop.f32.mrb[0].mxu0
    %v2088 = vadd.f32 %v1943, %v2087
    %v2089 = vpop.f32.mrb[0].mxu0
    %2090 = vmatprep.mubr.f32.mxu0 %v1818
    %2091 = vmatmul.mubr.f32.gmra.mrb[0].mxu0 %v1817
    %v2092 = vpop.f32.mrb[0].mxu0
    %v2093 = vadd.f32 %v1948, %v2092
    %v2094 = vpop.f32.mrb[0].mxu0
    %2095 = vmatprep.mubr.f32.mxu0 %v1822
    %2096 = vmatmul.mubr.f32.gmra.mrb[0].mxu0 %v1821
    %v2097 = vpop.f32.mrb[0].mxu0
    %v2098 = vadd.f32 %v1953, %v2097
    %v2099 = vpop.f32.mrb[0].mxu0
    %2100 = vmatprep.mubr.f32.mxu0 %v1826
    %2101 = vmatmul.mubr.f32.gmra.mrb[0].mxu0 %v1825
    %v2102 = vpop.f32.mrb[0].mxu0
    %v2103 = vadd.f32 %v1958, %v2102
    %v2104 = vpop.f32.mrb[0].mxu0
    %2105 = vmatprep.mubr.f32.mxu0 %v1830
    %2106 = vmatmul.mubr.f32.gmra.mrb[0].mxu0 %v1829
    %v2107 = vpop.f32.mrb[0].mxu0
    %v2108 = vadd.f32 %v1963, %v2107
    %v2109 = vpop.f32.mrb[0].mxu0
    %2110 = vmatprep.mubr.f32.mxu0 %v1834
    %2111 = vmatmul.mubr.f32.gmra.mrb[0].mxu0 %v1833
    %v2112 = vpop.f32.mrb[0].mxu0
    %v2113 = vadd.f32 %v1968, %v2112
    %v2114 = vpop.f32.mrb[0].mxu0
    %2115 = vmatprep.mubr.f32.mxu0 %v1838
    %2116 = vmatmul.mubr.f32.gmra.mrb[0].mxu0 %v1837
    %v2117 = vpop.f32.mrb[0].mxu0
    %v2118 = vadd.f32 %v1973, %v2117
    %v2119 = vpop.f32.mrb[0].mxu0
    %2120 = vmatprep.mubr.f32.mxu0 %v1842
    %2121 = vmatmul.mubr.f32.gmra.mrb[0].mxu0 %v1841
    %v2122 = vpop.f32.mrb[0].mxu0
    %v2123 = vadd.f32 %v1978, %v2122
    %v2124 = vpop.f32.mrb[0].mxu0
    %2125 = vmatprep.mubr.f32.mxu0 %v1846
    %2126 = vmatmul.mubr.f32.gmra.mrb[0].mxu0 %v1845
    %v2127 = vpop.f32.mrb[0].mxu0
    %v2128 = vadd.f32 %v1983, %v2127
    %v2129 = vpop.f32.mrb[0].mxu0
    %2130 = vmatprep.mubr.f32.mxu0 %v1850
    %2131 = vmatmul.mubr.f32.gmra.mrb[0].mxu0 %v1849
    %v2132 = vpop.f32.mrb[0].mxu0
    %v2133 = vadd.f32 %v1988, %v2132
    %v2134 = vpop.f32.mrb[0].mxu0
    %2135 = vmatprep.mubr.f32.mxu0 %v1854
    %2136 = vmatmul.mubr.f32.gmra.mrb[0].mxu0 %v1853
    %v2137 = vpop.f32.mrb[0].mxu0
    %v2138 = vadd.f32 %v1993, %v2137
    %v2139 = vpop.f32.mrb[0].mxu0
    %2140 = vmatprep.mubr.f32.mxu0 %v1858
    %2141 = vmatmul.mubr.f32.gmra.mrb[0].mxu0 %v1857
    %v2142 = vpop.f32.mrb[0].mxu0
    %v2143 = vadd.f32 %v1998, %v2142
    %v2144 = vpop.f32.mrb[0].mxu0
    %2145 = vmatprep.mubr.f32.mxu0 %v1862
    %2146 = vmatmul.mubr.f32.gmra.mrb[0].mxu0 %v1861
    %v2147 = vpop.f32.mrb[0].mxu0
    %v2148 = vadd.f32 %v2003, %v2147
    %v2149 = vpop.f32.mrb[0].mxu0
    %2150 = vmatprep.mubr.f32.mxu0 %v1866
    %2151 = vmatmul.mubr.f32.gmra.mrb[0].mxu0 %v1865
    %v2152 = vpop.f32.mrb[0].mxu0
    %v2153 = vadd.f32 %v2008, %v2152
    %v2154 = vpop.f32.mrb[0].mxu0
    %2155 = vmatprep.mubr.f32.mxu0 %v1870
    %2156 = vmatmul.mubr.f32.gmra.mrb[0].mxu0 %v1869
    %v2157 = vpop.f32.mrb[0].mxu0
    %v2158 = vadd.f32 %v2013, %v2157
    %v2159 = vpop.f32.mrb[0].mxu0
    %2160 = vdwg.mxu0
    %s2161 = scalar_lea.vmem [#allocation10], 384
    %v2162 = vld [vmem:[%s2161] sm:$0xff]
    %v2163 = vld [vmem:[%s2161 + $0x8] sm:$0xff]
    %v2164 = vld [vmem:[%s2161 + $0x10] sm:$0xff]
    %v2165 = vld [vmem:[%s2161 + $0x18] sm:$0xff]
    %v2166 = vld [vmem:[%s2161 + $0x20] sm:$0xff]
    %v2167 = vld [vmem:[%s2161 + $0x28] sm:$0xff]
    %v2168 = vld [vmem:[%s2161 + $0x30] sm:$0xff]
    %v2169 = vld [vmem:[%s2161 + $0x38] sm:$0xff]
    %v2170 = vld [vmem:[%s2161 + $0x40] sm:$0xff]
    %v2171 = vld [vmem:[%s2161 + $0x48] sm:$0xff]
    %v2172 = vld [vmem:[%s2161 + $0x50] sm:$0xff]
    %v2173 = vld [vmem:[%s2161 + $0x58] sm:$0xff]
    %v2174 = vld [vmem:[%s2161 + $0x60] sm:$0xff]
    %v2175 = vld [vmem:[%s2161 + $0x68] sm:$0xff]
    %v2176 = vld [vmem:[%s2161 + $0x70] sm:$0xff]
    %v2177 = vld [vmem:[%s2161 + $0x78] sm:$0xff]
    %2178 = vmatprep.subr.mxu0 0.0
    %2179 = vmatpush1.msra.mxu0 %v2162
    %2180 = vmatprep.subr.mxu0 0.0
    %2181 = vmatpush1.msra.mxu0 %v2163
    %2182 = vmatprep.subr.mxu0 0.0
    %2183 = vmatpush1.msra.mxu0 %v2164
    %2184 = vmatprep.subr.mxu0 0.0
    %2185 = vmatpush1.msra.mxu0 %v2165
    %2186 = vmatprep.subr.mxu0 0.0
    %2187 = vmatpush1.msra.mxu0 %v2166
    %2188 = vmatprep.subr.mxu0 0.0
    %2189 = vmatpush1.msra.mxu0 %v2167
    %2190 = vmatprep.subr.mxu0 0.0
    %2191 = vmatpush1.msra.mxu0 %v2168
    %2192 = vmatprep.subr.mxu0 0.0
    %2193 = vmatpush1.msra.mxu0 %v2169
    %2194 = vmatprep.subr.mxu0 0.0
    %2195 = vmatpush1.msra.mxu0 %v2170
    %2196 = vmatprep.subr.mxu0 0.0
    %2197 = vmatpush1.msra.mxu0 %v2171
    %2198 = vmatprep.subr.mxu0 0.0
    %2199 = vmatpush1.msra.mxu0 %v2172
    %2200 = vmatprep.subr.mxu0 0.0
    %2201 = vmatpush1.msra.mxu0 %v2173
    %2202 = vmatprep.subr.mxu0 0.0
    %2203 = vmatpush1.msra.mxu0 %v2174
    %2204 = vmatprep.subr.mxu0 0.0
    %2205 = vmatpush1.msra.mxu0 %v2175
    %2206 = vmatprep.subr.mxu0 0.0
    %2207 = vmatpush1.msra.mxu0 %v2176
    %2208 = vmatprep.subr.mxu0 0.0
    %2209 = vmatpush1.msra.mxu0 %v2177
    %2210 = vmatprep.subr.mxu0 0.0
    %2211 = vmatpush1.msra.mxu0 0.0
    %2212 = vmatprep.subr.mxu0 0.0
    %2213 = vmatpush1.msra.mxu0 0.0
    %2214 = vmatprep.subr.mxu0 0.0
    %2215 = vmatpush1.msra.mxu0 0.0
    %2216 = vmatprep.subr.mxu0 0.0
    %2217 = vmatpush1.msra.mxu0 0.0
    %2218 = vmatprep.subr.mxu0 0.0
    %2219 = vmatpush1.msra.mxu0 0.0
    %2220 = vmatprep.subr.mxu0 0.0
    %2221 = vmatpush1.msra.mxu0 0.0
    %2222 = vmatprep.subr.mxu0 0.0
    %2223 = vmatpush1.msra.mxu0 0.0
    %2224 = vmatprep.subr.mxu0 0.0
    %2225 = vmatpush1.msra.mxu0 0.0
    %2226 = vmatprep.subr.mxu0 0.0
    %2227 = vmatpush1.msra.mxu0 0.0
    %2228 = vmatprep.subr.mxu0 0.0
    %2229 = vmatpush1.msra.mxu0 0.0
    %2230 = vmatprep.subr.mxu0 0.0
    %2231 = vmatpush1.msra.mxu0 0.0
    %2232 = vmatprep.subr.mxu0 0.0
    %2233 = vmatpush1.msra.mxu0 0.0
    %2234 = vmatprep.subr.mxu0 0.0
    %2235 = vmatpush1.msra.mxu0 0.0
    %2236 = vmatprep.subr.mxu0 0.0
    %2237 = vmatpush1.msra.mxu0 0.0
    %2238 = vmatprep.subr.mxu0 0.0
    %2239 = vmatpush1.msra.mxu0 0.0
    %2240 = vmatprep.subr.mxu0 0.0
    %2241 = vmatpush1.msra.mxu0 0.0
    %2242 = vmatprep.mubr.f32.mxu0 0.0
    %2243 = vmatmul.mubr.f32.gmra.mrb[0].mxu0 %v2083
    %v2244 = vpop.f32.mrb[0].mxu0
    %v2245 = vadd.f32 0.0, %v2244
    %v2246 = vpop.f32.mrb[0].mxu0
    %2247 = vmatprep.mubr.f32.mxu0 0.0
    %2248 = vmatmul.mubr.f32.gmra.mrb[0].mxu0 %v2088
    %v2249 = vpop.f32.mrb[0].mxu0
    %v2250 = vadd.f32 0.0, %v2249
    %v2251 = vpop.f32.mrb[0].mxu0
    %2252 = vmatprep.mubr.f32.mxu0 0.0
    %2253 = vmatmul.mubr.f32.gmra.mrb[0].mxu0 %v2093
    %v2254 = vpop.f32.mrb[0].mxu0
    %v2255 = vadd.f32 0.0, %v2254
    %v2256 = vpop.f32.mrb[0].mxu0
    %2257 = vmatprep.mubr.f32.mxu0 0.0
    %2258 = vmatmul.mubr.f32.gmra.mrb[0].mxu0 %v2098
    %v2259 = vpop.f32.mrb[0].mxu0
    %v2260 = vadd.f32 0.0, %v2259
    %v2261 = vpop.f32.mrb[0].mxu0
    %2262 = vmatprep.mubr.f32.mxu0 0.0
    %2263 = vmatmul.mubr.f32.gmra.mrb[0].mxu0 %v2103
    %v2264 = vpop.f32.mrb[0].mxu0
    %v2265 = vadd.f32 0.0, %v2264
    %v2266 = vpop.f32.mrb[0].mxu0
    %2267 = vmatprep.mubr.f32.mxu0 0.0
    %2268 = vmatmul.mubr.f32.gmra.mrb[0].mxu0 %v2108
    %v2269 = vpop.f32.mrb[0].mxu0
    %v2270 = vadd.f32 0.0, %v2269
    %v2271 = vpop.f32.mrb[0].mxu0
    %2272 = vmatprep.mubr.f32.mxu0 0.0
    %2273 = vmatmul.mubr.f32.gmra.mrb[0].mxu0 %v2113
    %v2274 = vpop.f32.mrb[0].mxu0
    %v2275 = vadd.f32 0.0, %v2274
    %v2276 = vpop.f32.mrb[0].mxu0
    %2277 = vmatprep.mubr.f32.mxu0 0.0
    %2278 = vmatmul.mubr.f32.gmra.mrb[0].mxu0 %v2118
    %v2279 = vpop.f32.mrb[0].mxu0
    %v2280 = vadd.f32 0.0, %v2279
    %v2281 = vpop.f32.mrb[0].mxu0
    %2282 = vmatprep.mubr.f32.mxu0 0.0
    %2283 = vmatmul.mubr.f32.gmra.mrb[0].mxu0 %v2123
    %v2284 = vpop.f32.mrb[0].mxu0
    %v2285 = vadd.f32 0.0, %v2284
    %v2286 = vpop.f32.mrb[0].mxu0
    %2287 = vmatprep.mubr.f32.mxu0 0.0
    %2288 = vmatmul.mubr.f32.gmra.mrb[0].mxu0 %v2128
    %v2289 = vpop.f32.mrb[0].mxu0
    %v2290 = vadd.f32 0.0, %v2289
    %v2291 = vpop.f32.mrb[0].mxu0
    %2292 = vmatprep.mubr.f32.mxu0 0.0
    %2293 = vmatmul.mubr.f32.gmra.mrb[0].mxu0 %v2133
    %v2294 = vpop.f32.mrb[0].mxu0
    %v2295 = vadd.f32 0.0, %v2294
    %v2296 = vpop.f32.mrb[0].mxu0
    %2297 = vmatprep.mubr.f32.mxu0 0.0
    %2298 = vmatmul.mubr.f32.gmra.mrb[0].mxu0 %v2138
    %v2299 = vpop.f32.mrb[0].mxu0
    %v2300 = vadd.f32 0.0, %v2299
    %v2301 = vpop.f32.mrb[0].mxu0
    %2302 = vmatprep.mubr.f32.mxu0 0.0
    %2303 = vmatmul.mubr.f32.gmra.mrb[0].mxu0 %v2143
    %v2304 = vpop.f32.mrb[0].mxu0
    %v2305 = vadd.f32 0.0, %v2304
    %v2306 = vpop.f32.mrb[0].mxu0
    %2307 = vmatprep.mubr.f32.mxu0 0.0
    %2308 = vmatmul.mubr.f32.gmra.mrb[0].mxu0 %v2148
    %v2309 = vpop.f32.mrb[0].mxu0
    %v2310 = vadd.f32 0.0, %v2309
    %v2311 = vpop.f32.mrb[0].mxu0
    %2312 = vmatprep.mubr.f32.mxu0 0.0
    %2313 = vmatmul.mubr.f32.gmra.mrb[0].mxu0 %v2153
    %v2314 = vpop.f32.mrb[0].mxu0
    %v2315 = vadd.f32 0.0, %v2314
    %v2316 = vpop.f32.mrb[0].mxu0
    %2317 = vmatprep.mubr.f32.mxu0 0.0
    %2318 = vmatmul.mubr.f32.gmra.mrb[0].mxu0 %v2158
    %v2319 = vpop.f32.mrb[0].mxu0
    %v2320 = vadd.f32 0.0, %v2319
    %v2321 = vpop.f32.mrb[0].mxu0
    %2322 = vdwg.mxu0
    %v2323 = vadd.f32 %v1790, %v2245
    %v2324 = vadd.f32 %v1791, %v2250
    %v2325 = vadd.f32 %v1792, %v2255
    %v2326 = vadd.f32 %v1793, %v2260
    %v2327 = vadd.f32 %v1794, %v2265
    %v2328 = vadd.f32 %v1795, %v2270
    %v2329 = vadd.f32 %v1796, %v2275
    %v2330 = vadd.f32 %v1797, %v2280
    %v2331 = vadd.f32 %v1798, %v2285
    %v2332 = vadd.f32 %v1799, %v2290
    %v2333 = vadd.f32 %v1800, %v2295
    %v2334 = vadd.f32 %v1801, %v2300
    %v2335 = vadd.f32 %v1802, %v2305
    %v2336 = vadd.f32 %v1803, %v2310
    %v2337 = vadd.f32 %v1804, %v2315
    %v2338 = vadd.f32 %v1805, %v2320
    %s2339 = scalar_lea.vmem [#allocation2], 2048
    %v2340 = vld [vmem:[%s2339] sm:$0xff]
    %v2341 = vld [vmem:[%s2339 + $0x8] sm:$0xff]
    %v2342 = vld [vmem:[%s2339 + $0x10] sm:$0xff]
    %v2343 = vld [vmem:[%s2339 + $0x18] sm:$0xff]
    %v2344 = vld [vmem:[%s2339 + $0x20] sm:$0xff]
    %v2345 = vld [vmem:[%s2339 + $0x28] sm:$0xff]
    %v2346 = vld [vmem:[%s2339 + $0x30] sm:$0xff]
    %v2347 = vld [vmem:[%s2339 + $0x38] sm:$0xff]
    %v2348 = vld [vmem:[%s2339 + $0x40] sm:$0xff]
    %v2349 = vld [vmem:[%s2339 + $0x48] sm:$0xff]
    %v2350 = vld [vmem:[%s2339 + $0x50] sm:$0xff]
    %v2351 = vld [vmem:[%s2339 + $0x58] sm:$0xff]
    %v2352 = vld [vmem:[%s2339 + $0x60] sm:$0xff]
    %v2353 = vld [vmem:[%s2339 + $0x68] sm:$0xff]
    %v2354 = vld [vmem:[%s2339 + $0x70] sm:$0xff]
    %v2355 = vld [vmem:[%s2339 + $0x78] sm:$0xff]
    %v2356 = vld [vmem:[%s2339 + $0x80] sm:$0xff]
    %v2357 = vld [vmem:[%s2339 + $0x88] sm:$0xff]
    %v2358 = vld [vmem:[%s2339 + $0x90] sm:$0xff]
    %v2359 = vld [vmem:[%s2339 + $0x98] sm:$0xff]
    %v2360 = vld [vmem:[%s2339 + $0xa0] sm:$0xff]
    %v2361 = vld [vmem:[%s2339 + $0xa8] sm:$0xff]
    %v2362 = vld [vmem:[%s2339 + $0xb0] sm:$0xff]
    %v2363 = vld [vmem:[%s2339 + $0xb8] sm:$0xff]
    %v2364 = vld [vmem:[%s2339 + $0xc0] sm:$0xff]
    %v2365 = vld [vmem:[%s2339 + $0xc8] sm:$0xff]
    %v2366 = vld [vmem:[%s2339 + $0xd0] sm:$0xff]
    %v2367 = vld [vmem:[%s2339 + $0xd8] sm:$0xff]
    %v2368 = vld [vmem:[%s2339 + $0xe0] sm:$0xff]
    %v2369 = vld [vmem:[%s2339 + $0xe8] sm:$0xff]
    %v2370 = vld [vmem:[%s2339 + $0xf0] sm:$0xff]
    %v2371 = vld [vmem:[%s2339 + $0xf8] sm:$0xff]
    %v2372 = vld [vmem:[%s2339 + $0x100] sm:$0xff]
    %v2373 = vld [vmem:[%s2339 + $0x108] sm:$0xff]
    %v2374 = vld [vmem:[%s2339 + $0x110] sm:$0xff]
    %v2375 = vld [vmem:[%s2339 + $0x118] sm:$0xff]
    %v2376 = vld [vmem:[%s2339 + $0x120] sm:$0xff]
    %v2377 = vld [vmem:[%s2339 + $0x128] sm:$0xff]
    %v2378 = vld [vmem:[%s2339 + $0x130] sm:$0xff]
    %v2379 = vld [vmem:[%s2339 + $0x138] sm:$0xff]
    %v2380 = vld [vmem:[%s2339 + $0x140] sm:$0xff]
    %v2381 = vld [vmem:[%s2339 + $0x148] sm:$0xff]
    %v2382 = vld [vmem:[%s2339 + $0x150] sm:$0xff]
    %v2383 = vld [vmem:[%s2339 + $0x158] sm:$0xff]
    %v2384 = vld [vmem:[%s2339 + $0x160] sm:$0xff]
    %v2385 = vld [vmem:[%s2339 + $0x168] sm:$0xff]
    %v2386 = vld [vmem:[%s2339 + $0x170] sm:$0xff]
    %v2387 = vld [vmem:[%s2339 + $0x178] sm:$0xff]
    %v2388 = vld [vmem:[%s2339 + $0x180] sm:$0xff]
    %v2389 = vld [vmem:[%s2339 + $0x188] sm:$0xff]
    %v2390 = vld [vmem:[%s2339 + $0x190] sm:$0xff]
    %v2391 = vld [vmem:[%s2339 + $0x198] sm:$0xff]
    %v2392 = vld [vmem:[%s2339 + $0x1a0] sm:$0xff]
    %v2393 = vld [vmem:[%s2339 + $0x1a8] sm:$0xff]
    %v2394 = vld [vmem:[%s2339 + $0x1b0] sm:$0xff]
    %v2395 = vld [vmem:[%s2339 + $0x1b8] sm:$0xff]
    %v2396 = vld [vmem:[%s2339 + $0x1c0] sm:$0xff]
    %v2397 = vld [vmem:[%s2339 + $0x1c8] sm:$0xff]
    %v2398 = vld [vmem:[%s2339 + $0x1d0] sm:$0xff]
    %v2399 = vld [vmem:[%s2339 + $0x1d8] sm:$0xff]
    %v2400 = vld [vmem:[%s2339 + $0x1e0] sm:$0xff]
    %v2401 = vld [vmem:[%s2339 + $0x1e8] sm:$0xff]
    %v2402 = vld [vmem:[%s2339 + $0x1f0] sm:$0xff]
    %v2403 = vld [vmem:[%s2339 + $0x1f8] sm:$0xff]
    %2404 = vmatprep.subr.mxu0 0.0
    %2405 = vmatpush1.msra.mxu0 %v177
    %2406 = vmatprep.subr.mxu0 0.0
    %2407 = vmatpush1.msra.mxu0 %v178
    %2408 = vmatprep.subr.mxu0 0.0
    %2409 = vmatpush1.msra.mxu0 %v179
    %2410 = vmatprep.subr.mxu0 0.0
    %2411 = vmatpush1.msra.mxu0 %v180
    %2412 = vmatprep.subr.mxu0 0.0
    %2413 = vmatpush1.msra.mxu0 %v181
    %2414 = vmatprep.subr.mxu0 0.0
    %2415 = vmatpush1.msra.mxu0 %v182
    %2416 = vmatprep.subr.mxu0 0.0
    %2417 = vmatpush1.msra.mxu0 %v183
    %2418 = vmatprep.subr.mxu0 0.0
    %2419 = vmatpush1.msra.mxu0 %v184
    %2420 = vmatprep.subr.mxu0 0.0
    %2421 = vmatpush1.msra.mxu0 %v185
    %2422 = vmatprep.subr.mxu0 0.0
    %2423 = vmatpush1.msra.mxu0 %v186
    %2424 = vmatprep.subr.mxu0 0.0
    %2425 = vmatpush1.msra.mxu0 %v187
    %2426 = vmatprep.subr.mxu0 0.0
    %2427 = vmatpush1.msra.mxu0 %v188
    %2428 = vmatprep.subr.mxu0 0.0
    %2429 = vmatpush1.msra.mxu0 %v189
    %2430 = vmatprep.subr.mxu0 0.0
    %2431 = vmatpush1.msra.mxu0 %v190
    %2432 = vmatprep.subr.mxu0 0.0
    %2433 = vmatpush1.msra.mxu0 %v191
    %2434 = vmatprep.subr.mxu0 0.0
    %2435 = vmatpush1.msra.mxu0 %v192
    %2436 = vmatprep.subr.mxu0 0.0
    %2437 = vmatpush1.msra.mxu0 %v193
    %2438 = vmatprep.subr.mxu0 0.0
    %2439 = vmatpush1.msra.mxu0 %v194
    %2440 = vmatprep.subr.mxu0 0.0
    %2441 = vmatpush1.msra.mxu0 %v195
    %2442 = vmatprep.subr.mxu0 0.0
    %2443 = vmatpush1.msra.mxu0 %v196
    %2444 = vmatprep.subr.mxu0 0.0
    %2445 = vmatpush1.msra.mxu0 %v197
    %2446 = vmatprep.subr.mxu0 0.0
    %2447 = vmatpush1.msra.mxu0 %v198
    %2448 = vmatprep.subr.mxu0 0.0
    %2449 = vmatpush1.msra.mxu0 %v199
    %2450 = vmatprep.subr.mxu0 0.0
    %2451 = vmatpush1.msra.mxu0 %v200
    %2452 = vmatprep.subr.mxu0 0.0
    %2453 = vmatpush1.msra.mxu0 %v201
    %2454 = vmatprep.subr.mxu0 0.0
    %2455 = vmatpush1.msra.mxu0 %v202
    %2456 = vmatprep.subr.mxu0 0.0
    %2457 = vmatpush1.msra.mxu0 %v203
    %2458 = vmatprep.subr.mxu0 0.0
    %2459 = vmatpush1.msra.mxu0 %v204
    %2460 = vmatprep.subr.mxu0 0.0
    %2461 = vmatpush1.msra.mxu0 %v205
    %2462 = vmatprep.subr.mxu0 0.0
    %2463 = vmatpush1.msra.mxu0 %v206
    %2464 = vmatprep.subr.mxu0 0.0
    %2465 = vmatpush1.msra.mxu0 %v207
    %2466 = vmatprep.subr.mxu0 0.0
    %2467 = vmatpush1.msra.mxu0 %v208
    %2468 = vmatprep.mubr.f32.mxu0 %v2341
    %2469 = vmatmul.mubr.f32.gmra.mrb[0].mxu0 %v2340
    %v2470 = vpop.f32.mrb[0].mxu0
    %v2471 = vadd.f32 0.0, %v2470
    %v2472 = vpop.f32.mrb[0].mxu0
    %2473 = vmatprep.mubr.f32.mxu0 %v2345
    %2474 = vmatmul.mubr.f32.gmra.mrb[0].mxu0 %v2344
    %v2475 = vpop.f32.mrb[0].mxu0
    %v2476 = vadd.f32 0.0, %v2475
    %v2477 = vpop.f32.mrb[0].mxu0
    %2478 = vmatprep.mubr.f32.mxu0 %v2349
    %2479 = vmatmul.mubr.f32.gmra.mrb[0].mxu0 %v2348
    %v2480 = vpop.f32.mrb[0].mxu0
    %v2481 = vadd.f32 0.0, %v2480
    %v2482 = vpop.f32.mrb[0].mxu0
    %2483 = vmatprep.mubr.f32.mxu0 %v2353
    %2484 = vmatmul.mubr.f32.gmra.mrb[0].mxu0 %v2352
    %v2485 = vpop.f32.mrb[0].mxu0
    %v2486 = vadd.f32 0.0, %v2485
    %v2487 = vpop.f32.mrb[0].mxu0
    %2488 = vmatprep.mubr.f32.mxu0 %v2357
    %2489 = vmatmul.mubr.f32.gmra.mrb[0].mxu0 %v2356
    %v2490 = vpop.f32.mrb[0].mxu0
    %v2491 = vadd.f32 0.0, %v2490
    %v2492 = vpop.f32.mrb[0].mxu0
    %2493 = vmatprep.mubr.f32.mxu0 %v2361
    %2494 = vmatmul.mubr.f32.gmra.mrb[0].mxu0 %v2360
    %v2495 = vpop.f32.mrb[0].mxu0
    %v2496 = vadd.f32 0.0, %v2495
    %v2497 = vpop.f32.mrb[0].mxu0
    %2498 = vmatprep.mubr.f32.mxu0 %v2365
    %2499 = vmatmul.mubr.f32.gmra.mrb[0].mxu0 %v2364
    %v2500 = vpop.f32.mrb[0].mxu0
    %v2501 = vadd.f32 0.0, %v2500
    %v2502 = vpop.f32.mrb[0].mxu0
    %2503 = vmatprep.mubr.f32.mxu0 %v2369
    %2504 = vmatmul.mubr.f32.gmra.mrb[0].mxu0 %v2368
    %v2505 = vpop.f32.mrb[0].mxu0
    %v2506 = vadd.f32 0.0, %v2505
    %v2507 = vpop.f32.mrb[0].mxu0
    %2508 = vmatprep.mubr.f32.mxu0 %v2373
    %2509 = vmatmul.mubr.f32.gmra.mrb[0].mxu0 %v2372
    %v2510 = vpop.f32.mrb[0].mxu0
    %v2511 = vadd.f32 0.0, %v2510
    %v2512 = vpop.f32.mrb[0].mxu0
    %2513 = vmatprep.mubr.f32.mxu0 %v2377
    %2514 = vmatmul.mubr.f32.gmra.mrb[0].mxu0 %v2376
    %v2515 = vpop.f32.mrb[0].mxu0
    %v2516 = vadd.f32 0.0, %v2515
    %v2517 = vpop.f32.mrb[0].mxu0
    %2518 = vmatprep.mubr.f32.mxu0 %v2381
    %2519 = vmatmul.mubr.f32.gmra.mrb[0].mxu0 %v2380
    %v2520 = vpop.f32.mrb[0].mxu0
    %v2521 = vadd.f32 0.0, %v2520
    %v2522 = vpop.f32.mrb[0].mxu0
    %2523 = vmatprep.mubr.f32.mxu0 %v2385
    %2524 = vmatmul.mubr.f32.gmra.mrb[0].mxu0 %v2384
    %v2525 = vpop.f32.mrb[0].mxu0
    %v2526 = vadd.f32 0.0, %v2525
    %v2527 = vpop.f32.mrb[0].mxu0
    %2528 = vmatprep.mubr.f32.mxu0 %v2389
    %2529 = vmatmul.mubr.f32.gmra.mrb[0].mxu0 %v2388
    %v2530 = vpop.f32.mrb[0].mxu0
    %v2531 = vadd.f32 0.0, %v2530
    %v2532 = vpop.f32.mrb[0].mxu0
    %2533 = vmatprep.mubr.f32.mxu0 %v2393
    %2534 = vmatmul.mubr.f32.gmra.mrb[0].mxu0 %v2392
    %v2535 = vpop.f32.mrb[0].mxu0
    %v2536 = vadd.f32 0.0, %v2535
    %v2537 = vpop.f32.mrb[0].mxu0
    %2538 = vmatprep.mubr.f32.mxu0 %v2397
    %2539 = vmatmul.mubr.f32.gmra.mrb[0].mxu0 %v2396
    %v2540 = vpop.f32.mrb[0].mxu0
    %v2541 = vadd.f32 0.0, %v2540
    %v2542 = vpop.f32.mrb[0].mxu0
    %2543 = vmatprep.mubr.f32.mxu0 %v2401
    %2544 = vmatmul.mubr.f32.gmra.mrb[0].mxu0 %v2400
    %v2545 = vpop.f32.mrb[0].mxu0
    %v2546 = vadd.f32 0.0, %v2545
    %v2547 = vpop.f32.mrb[0].mxu0
    %2548 = vdwg.mxu0
    %2549 = vmatprep.subr.mxu0 0.0
    %2550 = vmatpush1.msra.mxu0 %v209
    %2551 = vmatprep.subr.mxu0 0.0
    %2552 = vmatpush1.msra.mxu0 %v210
    %2553 = vmatprep.subr.mxu0 0.0
    %2554 = vmatpush1.msra.mxu0 %v211
    %2555 = vmatprep.subr.mxu0 0.0
    %2556 = vmatpush1.msra.mxu0 %v212
    %2557 = vmatprep.subr.mxu0 0.0
    %2558 = vmatpush1.msra.mxu0 %v213
    %2559 = vmatprep.subr.mxu0 0.0
    %2560 = vmatpush1.msra.mxu0 %v214
    %2561 = vmatprep.subr.mxu0 0.0
    %2562 = vmatpush1.msra.mxu0 %v215
    %2563 = vmatprep.subr.mxu0 0.0
    %2564 = vmatpush1.msra.mxu0 %v216
    %2565 = vmatprep.subr.mxu0 0.0
    %2566 = vmatpush1.msra.mxu0 %v217
    %2567 = vmatprep.subr.mxu0 0.0
    %2568 = vmatpush1.msra.mxu0 %v218
    %2569 = vmatprep.subr.mxu0 0.0
    %2570 = vmatpush1.msra.mxu0 %v219
    %2571 = vmatprep.subr.mxu0 0.0
    %2572 = vmatpush1.msra.mxu0 %v220
    %2573 = vmatprep.subr.mxu0 0.0
    %2574 = vmatpush1.msra.mxu0 %v221
    %2575 = vmatprep.subr.mxu0 0.0
    %2576 = vmatpush1.msra.mxu0 %v222
    %2577 = vmatprep.subr.mxu0 0.0
    %2578 = vmatpush1.msra.mxu0 %v223
    %2579 = vmatprep.subr.mxu0 0.0
    %2580 = vmatpush1.msra.mxu0 %v224
    %2581 = vmatprep.subr.mxu0 0.0
    %2582 = vmatpush1.msra.mxu0 %v225
    %2583 = vmatprep.subr.mxu0 0.0
    %2584 = vmatpush1.msra.mxu0 %v226
    %2585 = vmatprep.subr.mxu0 0.0
    %2586 = vmatpush1.msra.mxu0 %v227
    %2587 = vmatprep.subr.mxu0 0.0
    %2588 = vmatpush1.msra.mxu0 %v228
    %2589 = vmatprep.subr.mxu0 0.0
    %2590 = vmatpush1.msra.mxu0 %v229
    %2591 = vmatprep.subr.mxu0 0.0
    %2592 = vmatpush1.msra.mxu0 %v230
    %2593 = vmatprep.subr.mxu0 0.0
    %2594 = vmatpush1.msra.mxu0 %v231
    %2595 = vmatprep.subr.mxu0 0.0
    %2596 = vmatpush1.msra.mxu0 %v232
    %2597 = vmatprep.subr.mxu0 0.0
    %2598 = vmatpush1.msra.mxu0 %v233
    %2599 = vmatprep.subr.mxu0 0.0
    %2600 = vmatpush1.msra.mxu0 %v234
    %2601 = vmatprep.subr.mxu0 0.0
    %2602 = vmatpush1.msra.mxu0 %v235
    %2603 = vmatprep.subr.mxu0 0.0
    %2604 = vmatpush1.msra.mxu0 %v236
    %2605 = vmatprep.subr.mxu0 0.0
    %2606 = vmatpush1.msra.mxu0 %v237
    %2607 = vmatprep.subr.mxu0 0.0
    %2608 = vmatpush1.msra.mxu0 %v238
    %2609 = vmatprep.subr.mxu0 0.0
    %2610 = vmatpush1.msra.mxu0 %v239
    %2611 = vmatprep.subr.mxu0 0.0
    %2612 = vmatpush1.msra.mxu0 %v240
    %2613 = vmatprep.mubr.f32.mxu0 %v2343
    %2614 = vmatmul.mubr.f32.gmra.mrb[0].mxu0 %v2342
    %v2615 = vpop.f32.mrb[0].mxu0
    %v2616 = vadd.f32 %v2471, %v2615
    %v2617 = vpop.f32.mrb[0].mxu0
    %2618 = vmatprep.mubr.f32.mxu0 %v2347
    %2619 = vmatmul.mubr.f32.gmra.mrb[0].mxu0 %v2346
    %v2620 = vpop.f32.mrb[0].mxu0
    %v2621 = vadd.f32 %v2476, %v2620
    %v2622 = vpop.f32.mrb[0].mxu0
    %2623 = vmatprep.mubr.f32.mxu0 %v2351
    %2624 = vmatmul.mubr.f32.gmra.mrb[0].mxu0 %v2350
    %v2625 = vpop.f32.mrb[0].mxu0
    %v2626 = vadd.f32 %v2481, %v2625
    %v2627 = vpop.f32.mrb[0].mxu0
    %2628 = vmatprep.mubr.f32.mxu0 %v2355
    %2629 = vmatmul.mubr.f32.gmra.mrb[0].mxu0 %v2354
    %v2630 = vpop.f32.mrb[0].mxu0
    %v2631 = vadd.f32 %v2486, %v2630
    %v2632 = vpop.f32.mrb[0].mxu0
    %2633 = vmatprep.mubr.f32.mxu0 %v2359
    %2634 = vmatmul.mubr.f32.gmra.mrb[0].mxu0 %v2358
    %v2635 = vpop.f32.mrb[0].mxu0
    %v2636 = vadd.f32 %v2491, %v2635
    %v2637 = vpop.f32.mrb[0].mxu0
    %2638 = vmatprep.mubr.f32.mxu0 %v2363
    %2639 = vmatmul.mubr.f32.gmra.mrb[0].mxu0 %v2362
    %v2640 = vpop.f32.mrb[0].mxu0
    %v2641 = vadd.f32 %v2496, %v2640
    %v2642 = vpop.f32.mrb[0].mxu0
    %2643 = vmatprep.mubr.f32.mxu0 %v2367
    %2644 = vmatmul.mubr.f32.gmra.mrb[0].mxu0 %v2366
    %v2645 = vpop.f32.mrb[0].mxu0
    %v2646 = vadd.f32 %v2501, %v2645
    %v2647 = vpop.f32.mrb[0].mxu0
    %2648 = vmatprep.mubr.f32.mxu0 %v2371
    %2649 = vmatmul.mubr.f32.gmra.mrb[0].mxu0 %v2370
    %v2650 = vpop.f32.mrb[0].mxu0
    %v2651 = vadd.f32 %v2506, %v2650
    %v2652 = vpop.f32.mrb[0].mxu0
    %2653 = vmatprep.mubr.f32.mxu0 %v2375
    %2654 = vmatmul.mubr.f32.gmra.mrb[0].mxu0 %v2374
    %v2655 = vpop.f32.mrb[0].mxu0
    %v2656 = vadd.f32 %v2511, %v2655
    %v2657 = vpop.f32.mrb[0].mxu0
    %2658 = vmatprep.mubr.f32.mxu0 %v2379
    %2659 = vmatmul.mubr.f32.gmra.mrb[0].mxu0 %v2378
    %v2660 = vpop.f32.mrb[0].mxu0
    %v2661 = vadd.f32 %v2516, %v2660
    %v2662 = vpop.f32.mrb[0].mxu0
    %2663 = vmatprep.mubr.f32.mxu0 %v2383
    %2664 = vmatmul.mubr.f32.gmra.mrb[0].mxu0 %v2382
    %v2665 = vpop.f32.mrb[0].mxu0
    %v2666 = vadd.f32 %v2521, %v2665
    %v2667 = vpop.f32.mrb[0].mxu0
    %2668 = vmatprep.mubr.f32.mxu0 %v2387
    %2669 = vmatmul.mubr.f32.gmra.mrb[0].mxu0 %v2386
    %v2670 = vpop.f32.mrb[0].mxu0
    %v2671 = vadd.f32 %v2526, %v2670
    %v2672 = vpop.f32.mrb[0].mxu0
    %2673 = vmatprep.mubr.f32.mxu0 %v2391
    %2674 = vmatmul.mubr.f32.gmra.mrb[0].mxu0 %v2390
    %v2675 = vpop.f32.mrb[0].mxu0
    %v2676 = vadd.f32 %v2531, %v2675
    %v2677 = vpop.f32.mrb[0].mxu0
    %2678 = vmatprep.mubr.f32.mxu0 %v2395
    %2679 = vmatmul.mubr.f32.gmra.mrb[0].mxu0 %v2394
    %v2680 = vpop.f32.mrb[0].mxu0
    %v2681 = vadd.f32 %v2536, %v2680
    %v2682 = vpop.f32.mrb[0].mxu0
    %2683 = vmatprep.mubr.f32.mxu0 %v2399
    %2684 = vmatmul.mubr.f32.gmra.mrb[0].mxu0 %v2398
    %v2685 = vpop.f32.mrb[0].mxu0
    %v2686 = vadd.f32 %v2541, %v2685
    %v2687 = vpop.f32.mrb[0].mxu0
    %2688 = vmatprep.mubr.f32.mxu0 %v2403
    %2689 = vmatmul.mubr.f32.gmra.mrb[0].mxu0 %v2402
    %v2690 = vpop.f32.mrb[0].mxu0
    %v2691 = vadd.f32 %v2546, %v2690
    %v2692 = vpop.f32.mrb[0].mxu0
    %2693 = vdwg.mxu0
    %s2694 = scalar_lea.vmem [#allocation10], 512
    %v2695 = vld [vmem:[%s2694] sm:$0xff]
    %v2696 = vld [vmem:[%s2694 + $0x8] sm:$0xff]
    %v2697 = vld [vmem:[%s2694 + $0x10] sm:$0xff]
    %v2698 = vld [vmem:[%s2694 + $0x18] sm:$0xff]
    %v2699 = vld [vmem:[%s2694 + $0x20] sm:$0xff]
    %v2700 = vld [vmem:[%s2694 + $0x28] sm:$0xff]
    %v2701 = vld [vmem:[%s2694 + $0x30] sm:$0xff]
    %v2702 = vld [vmem:[%s2694 + $0x38] sm:$0xff]
    %v2703 = vld [vmem:[%s2694 + $0x40] sm:$0xff]
    %v2704 = vld [vmem:[%s2694 + $0x48] sm:$0xff]
    %v2705 = vld [vmem:[%s2694 + $0x50] sm:$0xff]
    %v2706 = vld [vmem:[%s2694 + $0x58] sm:$0xff]
    %v2707 = vld [vmem:[%s2694 + $0x60] sm:$0xff]
    %v2708 = vld [vmem:[%s2694 + $0x68] sm:$0xff]
    %v2709 = vld [vmem:[%s2694 + $0x70] sm:$0xff]
    %v2710 = vld [vmem:[%s2694 + $0x78] sm:$0xff]
    %2711 = vmatprep.subr.mxu0 0.0
    %2712 = vmatpush1.msra.mxu0 %v2695
    %2713 = vmatprep.subr.mxu0 0.0
    %2714 = vmatpush1.msra.mxu0 %v2696
    %2715 = vmatprep.subr.mxu0 0.0
    %2716 = vmatpush1.msra.mxu0 %v2697
    %2717 = vmatprep.subr.mxu0 0.0
    %2718 = vmatpush1.msra.mxu0 %v2698
    %2719 = vmatprep.subr.mxu0 0.0
    %2720 = vmatpush1.msra.mxu0 %v2699
    %2721 = vmatprep.subr.mxu0 0.0
    %2722 = vmatpush1.msra.mxu0 %v2700
    %2723 = vmatprep.subr.mxu0 0.0
    %2724 = vmatpush1.msra.mxu0 %v2701
    %2725 = vmatprep.subr.mxu0 0.0
    %2726 = vmatpush1.msra.mxu0 %v2702
    %2727 = vmatprep.subr.mxu0 0.0
    %2728 = vmatpush1.msra.mxu0 %v2703
    %2729 = vmatprep.subr.mxu0 0.0
    %2730 = vmatpush1.msra.mxu0 %v2704
    %2731 = vmatprep.subr.mxu0 0.0
    %2732 = vmatpush1.msra.mxu0 %v2705
    %2733 = vmatprep.subr.mxu0 0.0
    %2734 = vmatpush1.msra.mxu0 %v2706
    %2735 = vmatprep.subr.mxu0 0.0
    %2736 = vmatpush1.msra.mxu0 %v2707
    %2737 = vmatprep.subr.mxu0 0.0
    %2738 = vmatpush1.msra.mxu0 %v2708
    %2739 = vmatprep.subr.mxu0 0.0
    %2740 = vmatpush1.msra.mxu0 %v2709
    %2741 = vmatprep.subr.mxu0 0.0
    %2742 = vmatpush1.msra.mxu0 %v2710
    %2743 = vmatprep.subr.mxu0 0.0
    %2744 = vmatpush1.msra.mxu0 0.0
    %2745 = vmatprep.subr.mxu0 0.0
    %2746 = vmatpush1.msra.mxu0 0.0
    %2747 = vmatprep.subr.mxu0 0.0
    %2748 = vmatpush1.msra.mxu0 0.0
    %2749 = vmatprep.subr.mxu0 0.0
    %2750 = vmatpush1.msra.mxu0 0.0
    %2751 = vmatprep.subr.mxu0 0.0
    %2752 = vmatpush1.msra.mxu0 0.0
    %2753 = vmatprep.subr.mxu0 0.0
    %2754 = vmatpush1.msra.mxu0 0.0
    %2755 = vmatprep.subr.mxu0 0.0
    %2756 = vmatpush1.msra.mxu0 0.0
    %2757 = vmatprep.subr.mxu0 0.0
    %2758 = vmatpush1.msra.mxu0 0.0
    %2759 = vmatprep.subr.mxu0 0.0
    %2760 = vmatpush1.msra.mxu0 0.0
    %2761 = vmatprep.subr.mxu0 0.0
    %2762 = vmatpush1.msra.mxu0 0.0
    %2763 = vmatprep.subr.mxu0 0.0
    %2764 = vmatpush1.msra.mxu0 0.0
    %2765 = vmatprep.subr.mxu0 0.0
    %2766 = vmatpush1.msra.mxu0 0.0
    %2767 = vmatprep.subr.mxu0 0.0
    %2768 = vmatpush1.msra.mxu0 0.0
    %2769 = vmatprep.subr.mxu0 0.0
    %2770 = vmatpush1.msra.mxu0 0.0
    %2771 = vmatprep.subr.mxu0 0.0
    %2772 = vmatpush1.msra.mxu0 0.0
    %2773 = vmatprep.subr.mxu0 0.0
    %2774 = vmatpush1.msra.mxu0 0.0
    %2775 = vmatprep.mubr.f32.mxu0 0.0
    %2776 = vmatmul.mubr.f32.gmra.mrb[0].mxu0 %v2616
    %v2777 = vpop.f32.mrb[0].mxu0
    %v2778 = vadd.f32 0.0, %v2777
    %v2779 = vpop.f32.mrb[0].mxu0
    %2780 = vmatprep.mubr.f32.mxu0 0.0
    %2781 = vmatmul.mubr.f32.gmra.mrb[0].mxu0 %v2621
    %v2782 = vpop.f32.mrb[0].mxu0
    %v2783 = vadd.f32 0.0, %v2782
    %v2784 = vpop.f32.mrb[0].mxu0
    %2785 = vmatprep.mubr.f32.mxu0 0.0
    %2786 = vmatmul.mubr.f32.gmra.mrb[0].mxu0 %v2626
    %v2787 = vpop.f32.mrb[0].mxu0
    %v2788 = vadd.f32 0.0, %v2787
    %v2789 = vpop.f32.mrb[0].mxu0
    %2790 = vmatprep.mubr.f32.mxu0 0.0
    %2791 = vmatmul.mubr.f32.gmra.mrb[0].mxu0 %v2631
    %v2792 = vpop.f32.mrb[0].mxu0
    %v2793 = vadd.f32 0.0, %v2792
    %v2794 = vpop.f32.mrb[0].mxu0
    %2795 = vmatprep.mubr.f32.mxu0 0.0
    %2796 = vmatmul.mubr.f32.gmra.mrb[0].mxu0 %v2636
    %v2797 = vpop.f32.mrb[0].mxu0
    %v2798 = vadd.f32 0.0, %v2797
    %v2799 = vpop.f32.mrb[0].mxu0
    %2800 = vmatprep.mubr.f32.mxu0 0.0
    %2801 = vmatmul.mubr.f32.gmra.mrb[0].mxu0 %v2641
    %v2802 = vpop.f32.mrb[0].mxu0
    %v2803 = vadd.f32 0.0, %v2802
    %v2804 = vpop.f32.mrb[0].mxu0
    %2805 = vmatprep.mubr.f32.mxu0 0.0
    %2806 = vmatmul.mubr.f32.gmra.mrb[0].mxu0 %v2646
    %v2807 = vpop.f32.mrb[0].mxu0
    %v2808 = vadd.f32 0.0, %v2807
    %v2809 = vpop.f32.mrb[0].mxu0
    %2810 = vmatprep.mubr.f32.mxu0 0.0
    %2811 = vmatmul.mubr.f32.gmra.mrb[0].mxu0 %v2651
    %v2812 = vpop.f32.mrb[0].mxu0
    %v2813 = vadd.f32 0.0, %v2812
    %v2814 = vpop.f32.mrb[0].mxu0
    %2815 = vmatprep.mubr.f32.mxu0 0.0
    %2816 = vmatmul.mubr.f32.gmra.mrb[0].mxu0 %v2656
    %v2817 = vpop.f32.mrb[0].mxu0
    %v2818 = vadd.f32 0.0, %v2817
    %v2819 = vpop.f32.mrb[0].mxu0
    %2820 = vmatprep.mubr.f32.mxu0 0.0
    %2821 = vmatmul.mubr.f32.gmra.mrb[0].mxu0 %v2661
    %v2822 = vpop.f32.mrb[0].mxu0
    %v2823 = vadd.f32 0.0, %v2822
    %v2824 = vpop.f32.mrb[0].mxu0
    %2825 = vmatprep.mubr.f32.mxu0 0.0
    %2826 = vmatmul.mubr.f32.gmra.mrb[0].mxu0 %v2666
    %v2827 = vpop.f32.mrb[0].mxu0
    %v2828 = vadd.f32 0.0, %v2827
    %v2829 = vpop.f32.mrb[0].mxu0
    %2830 = vmatprep.mubr.f32.mxu0 0.0
    %2831 = vmatmul.mubr.f32.gmra.mrb[0].mxu0 %v2671
    %v2832 = vpop.f32.mrb[0].mxu0
    %v2833 = vadd.f32 0.0, %v2832
    %v2834 = vpop.f32.mrb[0].mxu0
    %2835 = vmatprep.mubr.f32.mxu0 0.0
    %2836 = vmatmul.mubr.f32.gmra.mrb[0].mxu0 %v2676
    %v2837 = vpop.f32.mrb[0].mxu0
    %v2838 = vadd.f32 0.0, %v2837
    %v2839 = vpop.f32.mrb[0].mxu0
    %2840 = vmatprep.mubr.f32.mxu0 0.0
    %2841 = vmatmul.mubr.f32.gmra.mrb[0].mxu0 %v2681
    %v2842 = vpop.f32.mrb[0].mxu0
    %v2843 = vadd.f32 0.0, %v2842
    %v2844 = vpop.f32.mrb[0].mxu0
    %2845 = vmatprep.mubr.f32.mxu0 0.0
    %2846 = vmatmul.mubr.f32.gmra.mrb[0].mxu0 %v2686
    %v2847 = vpop.f32.mrb[0].mxu0
    %v2848 = vadd.f32 0.0, %v2847
    %v2849 = vpop.f32.mrb[0].mxu0
    %2850 = vmatprep.mubr.f32.mxu0 0.0
    %2851 = vmatmul.mubr.f32.gmra.mrb[0].mxu0 %v2691
    %v2852 = vpop.f32.mrb[0].mxu0
    %v2853 = vadd.f32 0.0, %v2852
    %v2854 = vpop.f32.mrb[0].mxu0
    %2855 = vdwg.mxu0
    %v2856 = vadd.f32 %v2323, %v2778
    %v2857 = vadd.f32 %v2324, %v2783
    %v2858 = vadd.f32 %v2325, %v2788
    %v2859 = vadd.f32 %v2326, %v2793
    %v2860 = vadd.f32 %v2327, %v2798
    %v2861 = vadd.f32 %v2328, %v2803
    %v2862 = vadd.f32 %v2329, %v2808
    %v2863 = vadd.f32 %v2330, %v2813
    %v2864 = vadd.f32 %v2331, %v2818
    %v2865 = vadd.f32 %v2332, %v2823
    %v2866 = vadd.f32 %v2333, %v2828
    %v2867 = vadd.f32 %v2334, %v2833
    %v2868 = vadd.f32 %v2335, %v2838
    %v2869 = vadd.f32 %v2336, %v2843
    %v2870 = vadd.f32 %v2337, %v2848
    %v2871 = vadd.f32 %v2338, %v2853
    %s2872 = scalar_lea.vmem [#allocation2], 2560
    %v2873 = vld [vmem:[%s2872] sm:$0xff]
    %v2874 = vld [vmem:[%s2872 + $0x8] sm:$0xff]
    %v2875 = vld [vmem:[%s2872 + $0x10] sm:$0xff]
    %v2876 = vld [vmem:[%s2872 + $0x18] sm:$0xff]
    %v2877 = vld [vmem:[%s2872 + $0x20] sm:$0xff]
    %v2878 = vld [vmem:[%s2872 + $0x28] sm:$0xff]
    %v2879 = vld [vmem:[%s2872 + $0x30] sm:$0xff]
    %v2880 = vld [vmem:[%s2872 + $0x38] sm:$0xff]
    %v2881 = vld [vmem:[%s2872 + $0x40] sm:$0xff]
    %v2882 = vld [vmem:[%s2872 + $0x48] sm:$0xff]
    %v2883 = vld [vmem:[%s2872 + $0x50] sm:$0xff]
    %v2884 = vld [vmem:[%s2872 + $0x58] sm:$0xff]
    %v2885 = vld [vmem:[%s2872 + $0x60] sm:$0xff]
    %v2886 = vld [vmem:[%s2872 + $0x68] sm:$0xff]
    %v2887 = vld [vmem:[%s2872 + $0x70] sm:$0xff]
    %v2888 = vld [vmem:[%s2872 + $0x78] sm:$0xff]
    %v2889 = vld [vmem:[%s2872 + $0x80] sm:$0xff]
    %v2890 = vld [vmem:[%s2872 + $0x88] sm:$0xff]
    %v2891 = vld [vmem:[%s2872 + $0x90] sm:$0xff]
    %v2892 = vld [vmem:[%s2872 + $0x98] sm:$0xff]
    %v2893 = vld [vmem:[%s2872 + $0xa0] sm:$0xff]
    %v2894 = vld [vmem:[%s2872 + $0xa8] sm:$0xff]
    %v2895 = vld [vmem:[%s2872 + $0xb0] sm:$0xff]
    %v2896 = vld [vmem:[%s2872 + $0xb8] sm:$0xff]
    %v2897 = vld [vmem:[%s2872 + $0xc0] sm:$0xff]
    %v2898 = vld [vmem:[%s2872 + $0xc8] sm:$0xff]
    %v2899 = vld [vmem:[%s2872 + $0xd0] sm:$0xff]
    %v2900 = vld [vmem:[%s2872 + $0xd8] sm:$0xff]
    %v2901 = vld [vmem:[%s2872 + $0xe0] sm:$0xff]
    %v2902 = vld [vmem:[%s2872 + $0xe8] sm:$0xff]
    %v2903 = vld [vmem:[%s2872 + $0xf0] sm:$0xff]
    %v2904 = vld [vmem:[%s2872 + $0xf8] sm:$0xff]
    %v2905 = vld [vmem:[%s2872 + $0x100] sm:$0xff]
    %v2906 = vld [vmem:[%s2872 + $0x108] sm:$0xff]
    %v2907 = vld [vmem:[%s2872 + $0x110] sm:$0xff]
    %v2908 = vld [vmem:[%s2872 + $0x118] sm:$0xff]
    %v2909 = vld [vmem:[%s2872 + $0x120] sm:$0xff]
    %v2910 = vld [vmem:[%s2872 + $0x128] sm:$0xff]
    %v2911 = vld [vmem:[%s2872 + $0x130] sm:$0xff]
    %v2912 = vld [vmem:[%s2872 + $0x138] sm:$0xff]
    %v2913 = vld [vmem:[%s2872 + $0x140] sm:$0xff]
    %v2914 = vld [vmem:[%s2872 + $0x148] sm:$0xff]
    %v2915 = vld [vmem:[%s2872 + $0x150] sm:$0xff]
    %v2916 = vld [vmem:[%s2872 + $0x158] sm:$0xff]
    %v2917 = vld [vmem:[%s2872 + $0x160] sm:$0xff]
    %v2918 = vld [vmem:[%s2872 + $0x168] sm:$0xff]
    %v2919 = vld [vmem:[%s2872 + $0x170] sm:$0xff]
    %v2920 = vld [vmem:[%s2872 + $0x178] sm:$0xff]
    %v2921 = vld [vmem:[%s2872 + $0x180] sm:$0xff]
    %v2922 = vld [vmem:[%s2872 + $0x188] sm:$0xff]
    %v2923 = vld [vmem:[%s2872 + $0x190] sm:$0xff]
    %v2924 = vld [vmem:[%s2872 + $0x198] sm:$0xff]
    %v2925 = vld [vmem:[%s2872 + $0x1a0] sm:$0xff]
    %v2926 = vld [vmem:[%s2872 + $0x1a8] sm:$0xff]
    %v2927 = vld [vmem:[%s2872 + $0x1b0] sm:$0xff]
    %v2928 = vld [vmem:[%s2872 + $0x1b8] sm:$0xff]
    %v2929 = vld [vmem:[%s2872 + $0x1c0] sm:$0xff]
    %v2930 = vld [vmem:[%s2872 + $0x1c8] sm:$0xff]
    %v2931 = vld [vmem:[%s2872 + $0x1d0] sm:$0xff]
    %v2932 = vld [vmem:[%s2872 + $0x1d8] sm:$0xff]
    %v2933 = vld [vmem:[%s2872 + $0x1e0] sm:$0xff]
    %v2934 = vld [vmem:[%s2872 + $0x1e8] sm:$0xff]
    %v2935 = vld [vmem:[%s2872 + $0x1f0] sm:$0xff]
    %v2936 = vld [vmem:[%s2872 + $0x1f8] sm:$0xff]
    %2937 = vmatprep.subr.mxu0 0.0
    %2938 = vmatpush1.msra.mxu0 %v177
    %2939 = vmatprep.subr.mxu0 0.0
    %2940 = vmatpush1.msra.mxu0 %v178
    %2941 = vmatprep.subr.mxu0 0.0
    %2942 = vmatpush1.msra.mxu0 %v179
    %2943 = vmatprep.subr.mxu0 0.0
    %2944 = vmatpush1.msra.mxu0 %v180
    %2945 = vmatprep.subr.mxu0 0.0
    %2946 = vmatpush1.msra.mxu0 %v181
    %2947 = vmatprep.subr.mxu0 0.0
    %2948 = vmatpush1.msra.mxu0 %v182
    %2949 = vmatprep.subr.mxu0 0.0
    %2950 = vmatpush1.msra.mxu0 %v183
    %2951 = vmatprep.subr.mxu0 0.0
    %2952 = vmatpush1.msra.mxu0 %v184
    %2953 = vmatprep.subr.mxu0 0.0
    %2954 = vmatpush1.msra.mxu0 %v185
    %2955 = vmatprep.subr.mxu0 0.0
    %2956 = vmatpush1.msra.mxu0 %v186
    %2957 = vmatprep.subr.mxu0 0.0
    %2958 = vmatpush1.msra.mxu0 %v187
    %2959 = vmatprep.subr.mxu0 0.0
    %2960 = vmatpush1.msra.mxu0 %v188
    %2961 = vmatprep.subr.mxu0 0.0
    %2962 = vmatpush1.msra.mxu0 %v189
    %2963 = vmatprep.subr.mxu0 0.0
    %2964 = vmatpush1.msra.mxu0 %v190
    %2965 = vmatprep.subr.mxu0 0.0
    %2966 = vmatpush1.msra.mxu0 %v191
    %2967 = vmatprep.subr.mxu0 0.0
    %2968 = vmatpush1.msra.mxu0 %v192
    %2969 = vmatprep.subr.mxu0 0.0
    %2970 = vmatpush1.msra.mxu0 %v193
    %2971 = vmatprep.subr.mxu0 0.0
    %2972 = vmatpush1.msra.mxu0 %v194
    %2973 = vmatprep.subr.mxu0 0.0
    %2974 = vmatpush1.msra.mxu0 %v195
    %2975 = vmatprep.subr.mxu0 0.0
    %2976 = vmatpush1.msra.mxu0 %v196
    %2977 = vmatprep.subr.mxu0 0.0
    %2978 = vmatpush1.msra.mxu0 %v197
    %2979 = vmatprep.subr.mxu0 0.0
    %2980 = vmatpush1.msra.mxu0 %v198
    %2981 = vmatprep.subr.mxu0 0.0
    %2982 = vmatpush1.msra.mxu0 %v199
    %2983 = vmatprep.subr.mxu0 0.0
    %2984 = vmatpush1.msra.mxu0 %v200
    %2985 = vmatprep.subr.mxu0 0.0
    %2986 = vmatpush1.msra.mxu0 %v201
    %2987 = vmatprep.subr.mxu0 0.0
    %2988 = vmatpush1.msra.mxu0 %v202
    %2989 = vmatprep.subr.mxu0 0.0
    %2990 = vmatpush1.msra.mxu0 %v203
    %2991 = vmatprep.subr.mxu0 0.0
    %2992 = vmatpush1.msra.mxu0 %v204
    %2993 = vmatprep.subr.mxu0 0.0
    %2994 = vmatpush1.msra.mxu0 %v205
    %2995 = vmatprep.subr.mxu0 0.0
    %2996 = vmatpush1.msra.mxu0 %v206
    %2997 = vmatprep.subr.mxu0 0.0
    %2998 = vmatpush1.msra.mxu0 %v207
    %2999 = vmatprep.subr.mxu0 0.0
    %3000 = vmatpush1.msra.mxu0 %v208
    %3001 = vmatprep.mubr.f32.mxu0 %v2874
    %3002 = vmatmul.mubr.f32.gmra.mrb[0].mxu0 %v2873
    %v3003 = vpop.f32.mrb[0].mxu0
    %v3004 = vadd.f32 0.0, %v3003
    %v3005 = vpop.f32.mrb[0].mxu0
    %3006 = vmatprep.mubr.f32.mxu0 %v2878
    %3007 = vmatmul.mubr.f32.gmra.mrb[0].mxu0 %v2877
    %v3008 = vpop.f32.mrb[0].mxu0
    %v3009 = vadd.f32 0.0, %v3008
    %v3010 = vpop.f32.mrb[0].mxu0
    %3011 = vmatprep.mubr.f32.mxu0 %v2882
    %3012 = vmatmul.mubr.f32.gmra.mrb[0].mxu0 %v2881
    %v3013 = vpop.f32.mrb[0].mxu0
    %v3014 = vadd.f32 0.0, %v3013
    %v3015 = vpop.f32.mrb[0].mxu0
    %3016 = vmatprep.mubr.f32.mxu0 %v2886
    %3017 = vmatmul.mubr.f32.gmra.mrb[0].mxu0 %v2885
    %v3018 = vpop.f32.mrb[0].mxu0
    %v3019 = vadd.f32 0.0, %v3018
    %v3020 = vpop.f32.mrb[0].mxu0
    %3021 = vmatprep.mubr.f32.mxu0 %v2890
    %3022 = vmatmul.mubr.f32.gmra.mrb[0].mxu0 %v2889
    %v3023 = vpop.f32.mrb[0].mxu0
    %v3024 = vadd.f32 0.0, %v3023
    %v3025 = vpop.f32.mrb[0].mxu0
    %3026 = vmatprep.mubr.f32.mxu0 %v2894
    %3027 = vmatmul.mubr.f32.gmra.mrb[0].mxu0 %v2893
    %v3028 = vpop.f32.mrb[0].mxu0
    %v3029 = vadd.f32 0.0, %v3028
    %v3030 = vpop.f32.mrb[0].mxu0
    %3031 = vmatprep.mubr.f32.mxu0 %v2898
    %3032 = vmatmul.mubr.f32.gmra.mrb[0].mxu0 %v2897
    %v3033 = vpop.f32.mrb[0].mxu0
    %v3034 = vadd.f32 0.0, %v3033
    %v3035 = vpop.f32.mrb[0].mxu0
    %3036 = vmatprep.mubr.f32.mxu0 %v2902
    %3037 = vmatmul.mubr.f32.gmra.mrb[0].mxu0 %v2901
    %v3038 = vpop.f32.mrb[0].mxu0
    %v3039 = vadd.f32 0.0, %v3038
    %v3040 = vpop.f32.mrb[0].mxu0
    %3041 = vmatprep.mubr.f32.mxu0 %v2906
    %3042 = vmatmul.mubr.f32.gmra.mrb[0].mxu0 %v2905
    %v3043 = vpop.f32.mrb[0].mxu0
    %v3044 = vadd.f32 0.0, %v3043
    %v3045 = vpop.f32.mrb[0].mxu0
    %3046 = vmatprep.mubr.f32.mxu0 %v2910
    %3047 = vmatmul.mubr.f32.gmra.mrb[0].mxu0 %v2909
    %v3048 = vpop.f32.mrb[0].mxu0
    %v3049 = vadd.f32 0.0, %v3048
    %v3050 = vpop.f32.mrb[0].mxu0
    %3051 = vmatprep.mubr.f32.mxu0 %v2914
    %3052 = vmatmul.mubr.f32.gmra.mrb[0].mxu0 %v2913
    %v3053 = vpop.f32.mrb[0].mxu0
    %v3054 = vadd.f32 0.0, %v3053
    %v3055 = vpop.f32.mrb[0].mxu0
    %3056 = vmatprep.mubr.f32.mxu0 %v2918
    %3057 = vmatmul.mubr.f32.gmra.mrb[0].mxu0 %v2917
    %v3058 = vpop.f32.mrb[0].mxu0
    %v3059 = vadd.f32 0.0, %v3058
    %v3060 = vpop.f32.mrb[0].mxu0
    %3061 = vmatprep.mubr.f32.mxu0 %v2922
    %3062 = vmatmul.mubr.f32.gmra.mrb[0].mxu0 %v2921
    %v3063 = vpop.f32.mrb[0].mxu0
    %v3064 = vadd.f32 0.0, %v3063
    %v3065 = vpop.f32.mrb[0].mxu0
    %3066 = vmatprep.mubr.f32.mxu0 %v2926
    %3067 = vmatmul.mubr.f32.gmra.mrb[0].mxu0 %v2925
    %v3068 = vpop.f32.mrb[0].mxu0
    %v3069 = vadd.f32 0.0, %v3068
    %v3070 = vpop.f32.mrb[0].mxu0
    %3071 = vmatprep.mubr.f32.mxu0 %v2930
    %3072 = vmatmul.mubr.f32.gmra.mrb[0].mxu0 %v2929
    %v3073 = vpop.f32.mrb[0].mxu0
    %v3074 = vadd.f32 0.0, %v3073
    %v3075 = vpop.f32.mrb[0].mxu0
    %3076 = vmatprep.mubr.f32.mxu0 %v2934
    %3077 = vmatmul.mubr.f32.gmra.mrb[0].mxu0 %v2933
    %v3078 = vpop.f32.mrb[0].mxu0
    %v3079 = vadd.f32 0.0, %v3078
    %v3080 = vpop.f32.mrb[0].mxu0
    %3081 = vdwg.mxu0
    %3082 = vmatprep.subr.mxu0 0.0
    %3083 = vmatpush1.msra.mxu0 %v209
    %3084 = vmatprep.subr.mxu0 0.0
    %3085 = vmatpush1.msra.mxu0 %v210
    %3086 = vmatprep.subr.mxu0 0.0
    %3087 = vmatpush1.msra.mxu0 %v211
    %3088 = vmatprep.subr.mxu0 0.0
    %3089 = vmatpush1.msra.mxu0 %v212
    %3090 = vmatprep.subr.mxu0 0.0
    %3091 = vmatpush1.msra.mxu0 %v213
    %3092 = vmatprep.subr.mxu0 0.0
    %3093 = vmatpush1.msra.mxu0 %v214
    %3094 = vmatprep.subr.mxu0 0.0
    %3095 = vmatpush1.msra.mxu0 %v215
    %3096 = vmatprep.subr.mxu0 0.0
    %3097 = vmatpush1.msra.mxu0 %v216
    %3098 = vmatprep.subr.mxu0 0.0
    %3099 = vmatpush1.msra.mxu0 %v217
    %3100 = vmatprep.subr.mxu0 0.0
    %3101 = vmatpush1.msra.mxu0 %v218
    %3102 = vmatprep.subr.mxu0 0.0
    %3103 = vmatpush1.msra.mxu0 %v219
    %3104 = vmatprep.subr.mxu0 0.0
    %3105 = vmatpush1.msra.mxu0 %v220
    %3106 = vmatprep.subr.mxu0 0.0
    %3107 = vmatpush1.msra.mxu0 %v221
    %3108 = vmatprep.subr.mxu0 0.0
    %3109 = vmatpush1.msra.mxu0 %v222
    %3110 = vmatprep.subr.mxu0 0.0
    %3111 = vmatpush1.msra.mxu0 %v223
    %3112 = vmatprep.subr.mxu0 0.0
    %3113 = vmatpush1.msra.mxu0 %v224
    %3114 = vmatprep.subr.mxu0 0.0
    %3115 = vmatpush1.msra.mxu0 %v225
    %3116 = vmatprep.subr.mxu0 0.0
    %3117 = vmatpush1.msra.mxu0 %v226
    %3118 = vmatprep.subr.mxu0 0.0
    %3119 = vmatpush1.msra.mxu0 %v227
    %3120 = vmatprep.subr.mxu0 0.0
    %3121 = vmatpush1.msra.mxu0 %v228
    %3122 = vmatprep.subr.mxu0 0.0
    %3123 = vmatpush1.msra.mxu0 %v229
    %3124 = vmatprep.subr.mxu0 0.0
    %3125 = vmatpush1.msra.mxu0 %v230
    %3126 = vmatprep.subr.mxu0 0.0
    %3127 = vmatpush1.msra.mxu0 %v231
    %3128 = vmatprep.subr.mxu0 0.0
    %3129 = vmatpush1.msra.mxu0 %v232
    %3130 = vmatprep.subr.mxu0 0.0
    %3131 = vmatpush1.msra.mxu0 %v233
    %3132 = vmatprep.subr.mxu0 0.0
    %3133 = vmatpush1.msra.mxu0 %v234
    %3134 = vmatprep.subr.mxu0 0.0
    %3135 = vmatpush1.msra.mxu0 %v235
    %3136 = vmatprep.subr.mxu0 0.0
    %3137 = vmatpush1.msra.mxu0 %v236
    %3138 = vmatprep.subr.mxu0 0.0
    %3139 = vmatpush1.msra.mxu0 %v237
    %3140 = vmatprep.subr.mxu0 0.0
    %3141 = vmatpush1.msra.mxu0 %v238
    %3142 = vmatprep.subr.mxu0 0.0
    %3143 = vmatpush1.msra.mxu0 %v239
    %3144 = vmatprep.subr.mxu0 0.0
    %3145 = vmatpush1.msra.mxu0 %v240
    %3146 = vmatprep.mubr.f32.mxu0 %v2876
    %3147 = vmatmul.mubr.f32.gmra.mrb[0].mxu0 %v2875
    %v3148 = vpop.f32.mrb[0].mxu0
    %v3149 = vadd.f32 %v3004, %v3148
    %v3150 = vpop.f32.mrb[0].mxu0
    %3151 = vmatprep.mubr.f32.mxu0 %v2880
    %3152 = vmatmul.mubr.f32.gmra.mrb[0].mxu0 %v2879
    %v3153 = vpop.f32.mrb[0].mxu0
    %v3154 = vadd.f32 %v3009, %v3153
    %v3155 = vpop.f32.mrb[0].mxu0
    %3156 = vmatprep.mubr.f32.mxu0 %v2884
    %3157 = vmatmul.mubr.f32.gmra.mrb[0].mxu0 %v2883
    %v3158 = vpop.f32.mrb[0].mxu0
    %v3159 = vadd.f32 %v3014, %v3158
    %v3160 = vpop.f32.mrb[0].mxu0
    %3161 = vmatprep.mubr.f32.mxu0 %v2888
    %3162 = vmatmul.mubr.f32.gmra.mrb[0].mxu0 %v2887
    %v3163 = vpop.f32.mrb[0].mxu0
    %v3164 = vadd.f32 %v3019, %v3163
    %v3165 = vpop.f32.mrb[0].mxu0
    %3166 = vmatprep.mubr.f32.mxu0 %v2892
    %3167 = vmatmul.mubr.f32.gmra.mrb[0].mxu0 %v2891
    %v3168 = vpop.f32.mrb[0].mxu0
    %v3169 = vadd.f32 %v3024, %v3168
    %v3170 = vpop.f32.mrb[0].mxu0
    %3171 = vmatprep.mubr.f32.mxu0 %v2896
    %3172 = vmatmul.mubr.f32.gmra.mrb[0].mxu0 %v2895
    %v3173 = vpop.f32.mrb[0].mxu0
    %v3174 = vadd.f32 %v3029, %v3173
    %v3175 = vpop.f32.mrb[0].mxu0
    %3176 = vmatprep.mubr.f32.mxu0 %v2900
    %3177 = vmatmul.mubr.f32.gmra.mrb[0].mxu0 %v2899
    %v3178 = vpop.f32.mrb[0].mxu0
    %v3179 = vadd.f32 %v3034, %v3178
    %v3180 = vpop.f32.mrb[0].mxu0
    %3181 = vmatprep.mubr.f32.mxu0 %v2904
    %3182 = vmatmul.mubr.f32.gmra.mrb[0].mxu0 %v2903
    %v3183 = vpop.f32.mrb[0].mxu0
    %v3184 = vadd.f32 %v3039, %v3183
    %v3185 = vpop.f32.mrb[0].mxu0
    %3186 = vmatprep.mubr.f32.mxu0 %v2908
    %3187 = vmatmul.mubr.f32.gmra.mrb[0].mxu0 %v2907
    %v3188 = vpop.f32.mrb[0].mxu0
    %v3189 = vadd.f32 %v3044, %v3188
    %v3190 = vpop.f32.mrb[0].mxu0
    %3191 = vmatprep.mubr.f32.mxu0 %v2912
    %3192 = vmatmul.mubr.f32.gmra.mrb[0].mxu0 %v2911
    %v3193 = vpop.f32.mrb[0].mxu0
    %v3194 = vadd.f32 %v3049, %v3193
    %v3195 = vpop.f32.mrb[0].mxu0
    %3196 = vmatprep.mubr.f32.mxu0 %v2916
    %3197 = vmatmul.mubr.f32.gmra.mrb[0].mxu0 %v2915
    %v3198 = vpop.f32.mrb[0].mxu0
    %v3199 = vadd.f32 %v3054, %v3198
    %v3200 = vpop.f32.mrb[0].mxu0
    %3201 = vmatprep.mubr.f32.mxu0 %v2920
    %3202 = vmatmul.mubr.f32.gmra.mrb[0].mxu0 %v2919
    %v3203 = vpop.f32.mrb[0].mxu0
    %v3204 = vadd.f32 %v3059, %v3203
    %v3205 = vpop.f32.mrb[0].mxu0
    %3206 = vmatprep.mubr.f32.mxu0 %v2924
    %3207 = vmatmul.mubr.f32.gmra.mrb[0].mxu0 %v2923
    %v3208 = vpop.f32.mrb[0].mxu0
    %v3209 = vadd.f32 %v3064, %v3208
    %v3210 = vpop.f32.mrb[0].mxu0
    %3211 = vmatprep.mubr.f32.mxu0 %v2928
    %3212 = vmatmul.mubr.f32.gmra.mrb[0].mxu0 %v2927
    %v3213 = vpop.f32.mrb[0].mxu0
    %v3214 = vadd.f32 %v3069, %v3213
    %v3215 = vpop.f32.mrb[0].mxu0
    %3216 = vmatprep.mubr.f32.mxu0 %v2932
    %3217 = vmatmul.mubr.f32.gmra.mrb[0].mxu0 %v2931
    %v3218 = vpop.f32.mrb[0].mxu0
    %v3219 = vadd.f32 %v3074, %v3218
    %v3220 = vpop.f32.mrb[0].mxu0
    %3221 = vmatprep.mubr.f32.mxu0 %v2936
    %3222 = vmatmul.mubr.f32.gmra.mrb[0].mxu0 %v2935
    %v3223 = vpop.f32.mrb[0].mxu0
    %v3224 = vadd.f32 %v3079, %v3223
    %v3225 = vpop.f32.mrb[0].mxu0
    %3226 = vdwg.mxu0
    %s3227 = scalar_lea.vmem [#allocation10], 640
    %v3228 = vld [vmem:[%s3227] sm:$0xff]
    %v3229 = vld [vmem:[%s3227 + $0x8] sm:$0xff]
    %v3230 = vld [vmem:[%s3227 + $0x10] sm:$0xff]
    %v3231 = vld [vmem:[%s3227 + $0x18] sm:$0xff]
    %v3232 = vld [vmem:[%s3227 + $0x20] sm:$0xff]
    %v3233 = vld [vmem:[%s3227 + $0x28] sm:$0xff]
    %v3234 = vld [vmem:[%s3227 + $0x30] sm:$0xff]
    %v3235 = vld [vmem:[%s3227 + $0x38] sm:$0xff]
    %v3236 = vld [vmem:[%s3227 + $0x40] sm:$0xff]
    %v3237 = vld [vmem:[%s3227 + $0x48] sm:$0xff]
    %v3238 = vld [vmem:[%s3227 + $0x50] sm:$0xff]
    %v3239 = vld [vmem:[%s3227 + $0x58] sm:$0xff]
    %v3240 = vld [vmem:[%s3227 + $0x60] sm:$0xff]
    %v3241 = vld [vmem:[%s3227 + $0x68] sm:$0xff]
    %v3242 = vld [vmem:[%s3227 + $0x70] sm:$0xff]
    %v3243 = vld [vmem:[%s3227 + $0x78] sm:$0xff]
    %3244 = vmatprep.subr.mxu0 0.0
    %3245 = vmatpush1.msra.mxu0 %v3228
    %3246 = vmatprep.subr.mxu0 0.0
    %3247 = vmatpush1.msra.mxu0 %v3229
    %3248 = vmatprep.subr.mxu0 0.0
    %3249 = vmatpush1.msra.mxu0 %v3230
    %3250 = vmatprep.subr.mxu0 0.0
    %3251 = vmatpush1.msra.mxu0 %v3231
    %3252 = vmatprep.subr.mxu0 0.0
    %3253 = vmatpush1.msra.mxu0 %v3232
    %3254 = vmatprep.subr.mxu0 0.0
    %3255 = vmatpush1.msra.mxu0 %v3233
    %3256 = vmatprep.subr.mxu0 0.0
    %3257 = vmatpush1.msra.mxu0 %v3234
    %3258 = vmatprep.subr.mxu0 0.0
    %3259 = vmatpush1.msra.mxu0 %v3235
    %3260 = vmatprep.subr.mxu0 0.0
    %3261 = vmatpush1.msra.mxu0 %v3236
    %3262 = vmatprep.subr.mxu0 0.0
    %3263 = vmatpush1.msra.mxu0 %v3237
    %3264 = vmatprep.subr.mxu0 0.0
    %3265 = vmatpush1.msra.mxu0 %v3238
    %3266 = vmatprep.subr.mxu0 0.0
    %3267 = vmatpush1.msra.mxu0 %v3239
    %3268 = vmatprep.subr.mxu0 0.0
    %3269 = vmatpush1.msra.mxu0 %v3240
    %3270 = vmatprep.subr.mxu0 0.0
    %3271 = vmatpush1.msra.mxu0 %v3241
    %3272 = vmatprep.subr.mxu0 0.0
    %3273 = vmatpush1.msra.mxu0 %v3242
    %3274 = vmatprep.subr.mxu0 0.0
    %3275 = vmatpush1.msra.mxu0 %v3243
    %3276 = vmatprep.subr.mxu0 0.0
    %3277 = vmatpush1.msra.mxu0 0.0
    %3278 = vmatprep.subr.mxu0 0.0
    %3279 = vmatpush1.msra.mxu0 0.0
    %3280 = vmatprep.subr.mxu0 0.0
    %3281 = vmatpush1.msra.mxu0 0.0
    %3282 = vmatprep.subr.mxu0 0.0
    %3283 = vmatpush1.msra.mxu0 0.0
    %3284 = vmatprep.subr.mxu0 0.0
    %3285 = vmatpush1.msra.mxu0 0.0
    %3286 = vmatprep.subr.mxu0 0.0
    %3287 = vmatpush1.msra.mxu0 0.0
    %3288 = vmatprep.subr.mxu0 0.0
    %3289 = vmatpush1.msra.mxu0 0.0
    %3290 = vmatprep.subr.mxu0 0.0
    %3291 = vmatpush1.msra.mxu0 0.0
    %3292 = vmatprep.subr.mxu0 0.0
    %3293 = vmatpush1.msra.mxu0 0.0
    %3294 = vmatprep.subr.mxu0 0.0
    %3295 = vmatpush1.msra.mxu0 0.0
    %3296 = vmatprep.subr.mxu0 0.0
    %3297 = vmatpush1.msra.mxu0 0.0
    %3298 = vmatprep.subr.mxu0 0.0
    %3299 = vmatpush1.msra.mxu0 0.0
    %3300 = vmatprep.subr.mxu0 0.0
    %3301 = vmatpush1.msra.mxu0 0.0
    %3302 = vmatprep.subr.mxu0 0.0
    %3303 = vmatpush1.msra.mxu0 0.0
    %3304 = vmatprep.subr.mxu0 0.0
    %3305 = vmatpush1.msra.mxu0 0.0
    %3306 = vmatprep.subr.mxu0 0.0
    %3307 = vmatpush1.msra.mxu0 0.0
    %3308 = vmatprep.mubr.f32.mxu0 0.0
    %3309 = vmatmul.mubr.f32.gmra.mrb[0].mxu0 %v3149
    %v3310 = vpop.f32.mrb[0].mxu0
    %v3311 = vadd.f32 0.0, %v3310
    %v3312 = vpop.f32.mrb[0].mxu0
    %3313 = vmatprep.mubr.f32.mxu0 0.0
    %3314 = vmatmul.mubr.f32.gmra.mrb[0].mxu0 %v3154
    %v3315 = vpop.f32.mrb[0].mxu0
    %v3316 = vadd.f32 0.0, %v3315
    %v3317 = vpop.f32.mrb[0].mxu0
    %3318 = vmatprep.mubr.f32.mxu0 0.0
    %3319 = vmatmul.mubr.f32.gmra.mrb[0].mxu0 %v3159
    %v3320 = vpop.f32.mrb[0].mxu0
    %v3321 = vadd.f32 0.0, %v3320
    %v3322 = vpop.f32.mrb[0].mxu0
    %3323 = vmatprep.mubr.f32.mxu0 0.0
    %3324 = vmatmul.mubr.f32.gmra.mrb[0].mxu0 %v3164
    %v3325 = vpop.f32.mrb[0].mxu0
    %v3326 = vadd.f32 0.0, %v3325
    %v3327 = vpop.f32.mrb[0].mxu0
    %3328 = vmatprep.mubr.f32.mxu0 0.0
    %3329 = vmatmul.mubr.f32.gmra.mrb[0].mxu0 %v3169
    %v3330 = vpop.f32.mrb[0].mxu0
    %v3331 = vadd.f32 0.0, %v3330
    %v3332 = vpop.f32.mrb[0].mxu0
    %3333 = vmatprep.mubr.f32.mxu0 0.0
    %3334 = vmatmul.mubr.f32.gmra.mrb[0].mxu0 %v3174
    %v3335 = vpop.f32.mrb[0].mxu0
    %v3336 = vadd.f32 0.0, %v3335
    %v3337 = vpop.f32.mrb[0].mxu0
    %3338 = vmatprep.mubr.f32.mxu0 0.0
    %3339 = vmatmul.mubr.f32.gmra.mrb[0].mxu0 %v3179
    %v3340 = vpop.f32.mrb[0].mxu0
    %v3341 = vadd.f32 0.0, %v3340
    %v3342 = vpop.f32.mrb[0].mxu0
    %3343 = vmatprep.mubr.f32.mxu0 0.0
    %3344 = vmatmul.mubr.f32.gmra.mrb[0].mxu0 %v3184
    %v3345 = vpop.f32.mrb[0].mxu0
    %v3346 = vadd.f32 0.0, %v3345
    %v3347 = vpop.f32.mrb[0].mxu0
    %3348 = vmatprep.mubr.f32.mxu0 0.0
    %3349 = vmatmul.mubr.f32.gmra.mrb[0].mxu0 %v3189
    %v3350 = vpop.f32.mrb[0].mxu0
    %v3351 = vadd.f32 0.0, %v3350
    %v3352 = vpop.f32.mrb[0].mxu0
    %3353 = vmatprep.mubr.f32.mxu0 0.0
    %3354 = vmatmul.mubr.f32.gmra.mrb[0].mxu0 %v3194
    %v3355 = vpop.f32.mrb[0].mxu0
    %v3356 = vadd.f32 0.0, %v3355
    %v3357 = vpop.f32.mrb[0].mxu0
    %3358 = vmatprep.mubr.f32.mxu0 0.0
    %3359 = vmatmul.mubr.f32.gmra.mrb[0].mxu0 %v3199
    %v3360 = vpop.f32.mrb[0].mxu0
    %v3361 = vadd.f32 0.0, %v3360
    %v3362 = vpop.f32.mrb[0].mxu0
    %3363 = vmatprep.mubr.f32.mxu0 0.0
    %3364 = vmatmul.mubr.f32.gmra.mrb[0].mxu0 %v3204
    %v3365 = vpop.f32.mrb[0].mxu0
    %v3366 = vadd.f32 0.0, %v3365
    %v3367 = vpop.f32.mrb[0].mxu0
    %3368 = vmatprep.mubr.f32.mxu0 0.0
    %3369 = vmatmul.mubr.f32.gmra.mrb[0].mxu0 %v3209
    %v3370 = vpop.f32.mrb[0].mxu0
    %v3371 = vadd.f32 0.0, %v3370
    %v3372 = vpop.f32.mrb[0].mxu0
    %3373 = vmatprep.mubr.f32.mxu0 0.0
    %3374 = vmatmul.mubr.f32.gmra.mrb[0].mxu0 %v3214
    %v3375 = vpop.f32.mrb[0].mxu0
    %v3376 = vadd.f32 0.0, %v3375
    %v3377 = vpop.f32.mrb[0].mxu0
    %3378 = vmatprep.mubr.f32.mxu0 0.0
    %3379 = vmatmul.mubr.f32.gmra.mrb[0].mxu0 %v3219
    %v3380 = vpop.f32.mrb[0].mxu0
    %v3381 = vadd.f32 0.0, %v3380
    %v3382 = vpop.f32.mrb[0].mxu0
    %3383 = vmatprep.mubr.f32.mxu0 0.0
    %3384 = vmatmul.mubr.f32.gmra.mrb[0].mxu0 %v3224
    %v3385 = vpop.f32.mrb[0].mxu0
    %v3386 = vadd.f32 0.0, %v3385
    %v3387 = vpop.f32.mrb[0].mxu0
    %3388 = vdwg.mxu0
    %v3389 = vadd.f32 %v2856, %v3311
    %v3390 = vadd.f32 %v2857, %v3316
    %v3391 = vadd.f32 %v2858, %v3321
    %v3392 = vadd.f32 %v2859, %v3326
    %v3393 = vadd.f32 %v2860, %v3331
    %v3394 = vadd.f32 %v2861, %v3336
    %v3395 = vadd.f32 %v2862, %v3341
    %v3396 = vadd.f32 %v2863, %v3346
    %v3397 = vadd.f32 %v2864, %v3351
    %v3398 = vadd.f32 %v2865, %v3356
    %v3399 = vadd.f32 %v2866, %v3361
    %v3400 = vadd.f32 %v2867, %v3366
    %v3401 = vadd.f32 %v2868, %v3371
    %v3402 = vadd.f32 %v2869, %v3376
    %v3403 = vadd.f32 %v2870, %v3381
    %v3404 = vadd.f32 %v2871, %v3386
    %s3405 = scalar_lea.vmem [#allocation2], 3072
    %v3406 = vld [vmem:[%s3405] sm:$0xff]
    %v3407 = vld [vmem:[%s3405 + $0x8] sm:$0xff]
    %v3408 = vld [vmem:[%s3405 + $0x10] sm:$0xff]
    %v3409 = vld [vmem:[%s3405 + $0x18] sm:$0xff]
    %v3410 = vld [vmem:[%s3405 + $0x20] sm:$0xff]
    %v3411 = vld [vmem:[%s3405 + $0x28] sm:$0xff]
    %v3412 = vld [vmem:[%s3405 + $0x30] sm:$0xff]
    %v3413 = vld [vmem:[%s3405 + $0x38] sm:$0xff]
    %v3414 = vld [vmem:[%s3405 + $0x40] sm:$0xff]
    %v3415 = vld [vmem:[%s3405 + $0x48] sm:$0xff]
    %v3416 = vld [vmem:[%s3405 + $0x50] sm:$0xff]
    %v3417 = vld [vmem:[%s3405 + $0x58] sm:$0xff]
    %v3418 = vld [vmem:[%s3405 + $0x60] sm:$0xff]
    %v3419 = vld [vmem:[%s3405 + $0x68] sm:$0xff]
    %v3420 = vld [vmem:[%s3405 + $0x70] sm:$0xff]
    %v3421 = vld [vmem:[%s3405 + $0x78] sm:$0xff]
    %v3422 = vld [vmem:[%s3405 + $0x80] sm:$0xff]
    %v3423 = vld [vmem:[%s3405 + $0x88] sm:$0xff]
    %v3424 = vld [vmem:[%s3405 + $0x90] sm:$0xff]
    %v3425 = vld [vmem:[%s3405 + $0x98] sm:$0xff]
    %v3426 = vld [vmem:[%s3405 + $0xa0] sm:$0xff]
    %v3427 = vld [vmem:[%s3405 + $0xa8] sm:$0xff]
    %v3428 = vld [vmem:[%s3405 + $0xb0] sm:$0xff]
    %v3429 = vld [vmem:[%s3405 + $0xb8] sm:$0xff]
    %v3430 = vld [vmem:[%s3405 + $0xc0] sm:$0xff]
    %v3431 = vld [vmem:[%s3405 + $0xc8] sm:$0xff]
    %v3432 = vld [vmem:[%s3405 + $0xd0] sm:$0xff]
    %v3433 = vld [vmem:[%s3405 + $0xd8] sm:$0xff]
    %v3434 = vld [vmem:[%s3405 + $0xe0] sm:$0xff]
    %v3435 = vld [vmem:[%s3405 + $0xe8] sm:$0xff]
    %v3436 = vld [vmem:[%s3405 + $0xf0] sm:$0xff]
    %v3437 = vld [vmem:[%s3405 + $0xf8] sm:$0xff]
    %v3438 = vld [vmem:[%s3405 + $0x100] sm:$0xff]
    %v3439 = vld [vmem:[%s3405 + $0x108] sm:$0xff]
    %v3440 = vld [vmem:[%s3405 + $0x110] sm:$0xff]
    %v3441 = vld [vmem:[%s3405 + $0x118] sm:$0xff]
    %v3442 = vld [vmem:[%s3405 + $0x120] sm:$0xff]
    %v3443 = vld [vmem:[%s3405 + $0x128] sm:$0xff]
    %v3444 = vld [vmem:[%s3405 + $0x130] sm:$0xff]
    %v3445 = vld [vmem:[%s3405 + $0x138] sm:$0xff]
    %v3446 = vld [vmem:[%s3405 + $0x140] sm:$0xff]
    %v3447 = vld [vmem:[%s3405 + $0x148] sm:$0xff]
    %v3448 = vld [vmem:[%s3405 + $0x150] sm:$0xff]
    %v3449 = vld [vmem:[%s3405 + $0x158] sm:$0xff]
    %v3450 = vld [vmem:[%s3405 + $0x160] sm:$0xff]
    %v3451 = vld [vmem:[%s3405 + $0x168] sm:$0xff]
    %v3452 = vld [vmem:[%s3405 + $0x170] sm:$0xff]
    %v3453 = vld [vmem:[%s3405 + $0x178] sm:$0xff]
    %v3454 = vld [vmem:[%s3405 + $0x180] sm:$0xff]
    %v3455 = vld [vmem:[%s3405 + $0x188] sm:$0xff]
    %v3456 = vld [vmem:[%s3405 + $0x190] sm:$0xff]
    %v3457 = vld [vmem:[%s3405 + $0x198] sm:$0xff]
    %v3458 = vld [vmem:[%s3405 + $0x1a0] sm:$0xff]
    %v3459 = vld [vmem:[%s3405 + $0x1a8] sm:$0xff]
    %v3460 = vld [vmem:[%s3405 + $0x1b0] sm:$0xff]
    %v3461 = vld [vmem:[%s3405 + $0x1b8] sm:$0xff]
    %v3462 = vld [vmem:[%s3405 + $0x1c0] sm:$0xff]
    %v3463 = vld [vmem:[%s3405 + $0x1c8] sm:$0xff]
    %v3464 = vld [vmem:[%s3405 + $0x1d0] sm:$0xff]
    %v3465 = vld [vmem:[%s3405 + $0x1d8] sm:$0xff]
    %v3466 = vld [vmem:[%s3405 + $0x1e0] sm:$0xff]
    %v3467 = vld [vmem:[%s3405 + $0x1e8] sm:$0xff]
    %v3468 = vld [vmem:[%s3405 + $0x1f0] sm:$0xff]
    %v3469 = vld [vmem:[%s3405 + $0x1f8] sm:$0xff]
    %3470 = vmatprep.subr.mxu0 0.0
    %3471 = vmatpush1.msra.mxu0 %v177
    %3472 = vmatprep.subr.mxu0 0.0
    %3473 = vmatpush1.msra.mxu0 %v178
    %3474 = vmatprep.subr.mxu0 0.0
    %3475 = vmatpush1.msra.mxu0 %v179
    %3476 = vmatprep.subr.mxu0 0.0
    %3477 = vmatpush1.msra.mxu0 %v180
    %3478 = vmatprep.subr.mxu0 0.0
    %3479 = vmatpush1.msra.mxu0 %v181
    %3480 = vmatprep.subr.mxu0 0.0
    %3481 = vmatpush1.msra.mxu0 %v182
    %3482 = vmatprep.subr.mxu0 0.0
    %3483 = vmatpush1.msra.mxu0 %v183
    %3484 = vmatprep.subr.mxu0 0.0
    %3485 = vmatpush1.msra.mxu0 %v184
    %3486 = vmatprep.subr.mxu0 0.0
    %3487 = vmatpush1.msra.mxu0 %v185
    %3488 = vmatprep.subr.mxu0 0.0
    %3489 = vmatpush1.msra.mxu0 %v186
    %3490 = vmatprep.subr.mxu0 0.0
    %3491 = vmatpush1.msra.mxu0 %v187
    %3492 = vmatprep.subr.mxu0 0.0
    %3493 = vmatpush1.msra.mxu0 %v188
    %3494 = vmatprep.subr.mxu0 0.0
    %3495 = vmatpush1.msra.mxu0 %v189
    %3496 = vmatprep.subr.mxu0 0.0
    %3497 = vmatpush1.msra.mxu0 %v190
    %3498 = vmatprep.subr.mxu0 0.0
    %3499 = vmatpush1.msra.mxu0 %v191
    %3500 = vmatprep.subr.mxu0 0.0
    %3501 = vmatpush1.msra.mxu0 %v192
    %3502 = vmatprep.subr.mxu0 0.0
    %3503 = vmatpush1.msra.mxu0 %v193
    %3504 = vmatprep.subr.mxu0 0.0
    %3505 = vmatpush1.msra.mxu0 %v194
    %3506 = vmatprep.subr.mxu0 0.0
    %3507 = vmatpush1.msra.mxu0 %v195
    %3508 = vmatprep.subr.mxu0 0.0
    %3509 = vmatpush1.msra.mxu0 %v196
    %3510 = vmatprep.subr.mxu0 0.0
    %3511 = vmatpush1.msra.mxu0 %v197
    %3512 = vmatprep.subr.mxu0 0.0
    %3513 = vmatpush1.msra.mxu0 %v198
    %3514 = vmatprep.subr.mxu0 0.0
    %3515 = vmatpush1.msra.mxu0 %v199
    %3516 = vmatprep.subr.mxu0 0.0
    %3517 = vmatpush1.msra.mxu0 %v200
    %3518 = vmatprep.subr.mxu0 0.0
    %3519 = vmatpush1.msra.mxu0 %v201
    %3520 = vmatprep.subr.mxu0 0.0
    %3521 = vmatpush1.msra.mxu0 %v202
    %3522 = vmatprep.subr.mxu0 0.0
    %3523 = vmatpush1.msra.mxu0 %v203
    %3524 = vmatprep.subr.mxu0 0.0
    %3525 = vmatpush1.msra.mxu0 %v204
    %3526 = vmatprep.subr.mxu0 0.0
    %3527 = vmatpush1.msra.mxu0 %v205
    %3528 = vmatprep.subr.mxu0 0.0
    %3529 = vmatpush1.msra.mxu0 %v206
    %3530 = vmatprep.subr.mxu0 0.0
    %3531 = vmatpush1.msra.mxu0 %v207
    %3532 = vmatprep.subr.mxu0 0.0
    %3533 = vmatpush1.msra.mxu0 %v208
    %3534 = vmatprep.mubr.f32.mxu0 %v3407
    %3535 = vmatmul.mubr.f32.gmra.mrb[0].mxu0 %v3406
    %v3536 = vpop.f32.mrb[0].mxu0
    %v3537 = vadd.f32 0.0, %v3536
    %v3538 = vpop.f32.mrb[0].mxu0
    %3539 = vmatprep.mubr.f32.mxu0 %v3411
    %3540 = vmatmul.mubr.f32.gmra.mrb[0].mxu0 %v3410
    %v3541 = vpop.f32.mrb[0].mxu0
    %v3542 = vadd.f32 0.0, %v3541
    %v3543 = vpop.f32.mrb[0].mxu0
    %3544 = vmatprep.mubr.f32.mxu0 %v3415
    %3545 = vmatmul.mubr.f32.gmra.mrb[0].mxu0 %v3414
    %v3546 = vpop.f32.mrb[0].mxu0
    %v3547 = vadd.f32 0.0, %v3546
    %v3548 = vpop.f32.mrb[0].mxu0
    %3549 = vmatprep.mubr.f32.mxu0 %v3419
    %3550 = vmatmul.mubr.f32.gmra.mrb[0].mxu0 %v3418
    %v3551 = vpop.f32.mrb[0].mxu0
    %v3552 = vadd.f32 0.0, %v3551
    %v3553 = vpop.f32.mrb[0].mxu0
    %3554 = vmatprep.mubr.f32.mxu0 %v3423
    %3555 = vmatmul.mubr.f32.gmra.mrb[0].mxu0 %v3422
    %v3556 = vpop.f32.mrb[0].mxu0
    %v3557 = vadd.f32 0.0, %v3556
    %v3558 = vpop.f32.mrb[0].mxu0
    %3559 = vmatprep.mubr.f32.mxu0 %v3427
    %3560 = vmatmul.mubr.f32.gmra.mrb[0].mxu0 %v3426
    %v3561 = vpop.f32.mrb[0].mxu0
    %v3562 = vadd.f32 0.0, %v3561
    %v3563 = vpop.f32.mrb[0].mxu0
    %3564 = vmatprep.mubr.f32.mxu0 %v3431
    %3565 = vmatmul.mubr.f32.gmra.mrb[0].mxu0 %v3430
    %v3566 = vpop.f32.mrb[0].mxu0
    %v3567 = vadd.f32 0.0, %v3566
    %v3568 = vpop.f32.mrb[0].mxu0
    %3569 = vmatprep.mubr.f32.mxu0 %v3435
    %3570 = vmatmul.mubr.f32.gmra.mrb[0].mxu0 %v3434
    %v3571 = vpop.f32.mrb[0].mxu0
    %v3572 = vadd.f32 0.0, %v3571
    %v3573 = vpop.f32.mrb[0].mxu0
    %3574 = vmatprep.mubr.f32.mxu0 %v3439
    %3575 = vmatmul.mubr.f32.gmra.mrb[0].mxu0 %v3438
    %v3576 = vpop.f32.mrb[0].mxu0
    %v3577 = vadd.f32 0.0, %v3576
    %v3578 = vpop.f32.mrb[0].mxu0
    %3579 = vmatprep.mubr.f32.mxu0 %v3443
    %3580 = vmatmul.mubr.f32.gmra.mrb[0].mxu0 %v3442
    %v3581 = vpop.f32.mrb[0].mxu0
    %v3582 = vadd.f32 0.0, %v3581
    %v3583 = vpop.f32.mrb[0].mxu0
    %3584 = vmatprep.mubr.f32.mxu0 %v3447
    %3585 = vmatmul.mubr.f32.gmra.mrb[0].mxu0 %v3446
    %v3586 = vpop.f32.mrb[0].mxu0
    %v3587 = vadd.f32 0.0, %v3586
    %v3588 = vpop.f32.mrb[0].mxu0
    %3589 = vmatprep.mubr.f32.mxu0 %v3451
    %3590 = vmatmul.mubr.f32.gmra.mrb[0].mxu0 %v3450
    %v3591 = vpop.f32.mrb[0].mxu0
    %v3592 = vadd.f32 0.0, %v3591
    %v3593 = vpop.f32.mrb[0].mxu0
    %3594 = vmatprep.mubr.f32.mxu0 %v3455
    %3595 = vmatmul.mubr.f32.gmra.mrb[0].mxu0 %v3454
    %v3596 = vpop.f32.mrb[0].mxu0
    %v3597 = vadd.f32 0.0, %v3596
    %v3598 = vpop.f32.mrb[0].mxu0
    %3599 = vmatprep.mubr.f32.mxu0 %v3459
    %3600 = vmatmul.mubr.f32.gmra.mrb[0].mxu0 %v3458
    %v3601 = vpop.f32.mrb[0].mxu0
    %v3602 = vadd.f32 0.0, %v3601
    %v3603 = vpop.f32.mrb[0].mxu0
    %3604 = vmatprep.mubr.f32.mxu0 %v3463
    %3605 = vmatmul.mubr.f32.gmra.mrb[0].mxu0 %v3462
    %v3606 = vpop.f32.mrb[0].mxu0
    %v3607 = vadd.f32 0.0, %v3606
    %v3608 = vpop.f32.mrb[0].mxu0
    %3609 = vmatprep.mubr.f32.mxu0 %v3467
    %3610 = vmatmul.mubr.f32.gmra.mrb[0].mxu0 %v3466
    %v3611 = vpop.f32.mrb[0].mxu0
    %v3612 = vadd.f32 0.0, %v3611
    %v3613 = vpop.f32.mrb[0].mxu0
    %3614 = vdwg.mxu0
    %3615 = vmatprep.subr.mxu0 0.0
    %3616 = vmatpush1.msra.mxu0 %v209
    %3617 = vmatprep.subr.mxu0 0.0
    %3618 = vmatpush1.msra.mxu0 %v210
    %3619 = vmatprep.subr.mxu0 0.0
    %3620 = vmatpush1.msra.mxu0 %v211
    %3621 = vmatprep.subr.mxu0 0.0
    %3622 = vmatpush1.msra.mxu0 %v212
    %3623 = vmatprep.subr.mxu0 0.0
    %3624 = vmatpush1.msra.mxu0 %v213
    %3625 = vmatprep.subr.mxu0 0.0
    %3626 = vmatpush1.msra.mxu0 %v214
    %3627 = vmatprep.subr.mxu0 0.0
    %3628 = vmatpush1.msra.mxu0 %v215
    %3629 = vmatprep.subr.mxu0 0.0
    %3630 = vmatpush1.msra.mxu0 %v216
    %3631 = vmatprep.subr.mxu0 0.0
    %3632 = vmatpush1.msra.mxu0 %v217
    %3633 = vmatprep.subr.mxu0 0.0
    %3634 = vmatpush1.msra.mxu0 %v218
    %3635 = vmatprep.subr.mxu0 0.0
    %3636 = vmatpush1.msra.mxu0 %v219
    %3637 = vmatprep.subr.mxu0 0.0
    %3638 = vmatpush1.msra.mxu0 %v220
    %3639 = vmatprep.subr.mxu0 0.0
    %3640 = vmatpush1.msra.mxu0 %v221
    %3641 = vmatprep.subr.mxu0 0.0
    %3642 = vmatpush1.msra.mxu0 %v222
    %3643 = vmatprep.subr.mxu0 0.0
    %3644 = vmatpush1.msra.mxu0 %v223
    %3645 = vmatprep.subr.mxu0 0.0
    %3646 = vmatpush1.msra.mxu0 %v224
    %3647 = vmatprep.subr.mxu0 0.0
    %3648 = vmatpush1.msra.mxu0 %v225
    %3649 = vmatprep.subr.mxu0 0.0
    %3650 = vmatpush1.msra.mxu0 %v226
    %3651 = vmatprep.subr.mxu0 0.0
    %3652 = vmatpush1.msra.mxu0 %v227
    %3653 = vmatprep.subr.mxu0 0.0
    %3654 = vmatpush1.msra.mxu0 %v228
    %3655 = vmatprep.subr.mxu0 0.0
    %3656 = vmatpush1.msra.mxu0 %v229
    %3657 = vmatprep.subr.mxu0 0.0
    %3658 = vmatpush1.msra.mxu0 %v230
    %3659 = vmatprep.subr.mxu0 0.0
    %3660 = vmatpush1.msra.mxu0 %v231
    %3661 = vmatprep.subr.mxu0 0.0
    %3662 = vmatpush1.msra.mxu0 %v232
    %3663 = vmatprep.subr.mxu0 0.0
    %3664 = vmatpush1.msra.mxu0 %v233
    %3665 = vmatprep.subr.mxu0 0.0
    %3666 = vmatpush1.msra.mxu0 %v234
    %3667 = vmatprep.subr.mxu0 0.0
    %3668 = vmatpush1.msra.mxu0 %v235
    %3669 = vmatprep.subr.mxu0 0.0
    %3670 = vmatpush1.msra.mxu0 %v236
    %3671 = vmatprep.subr.mxu0 0.0
    %3672 = vmatpush1.msra.mxu0 %v237
    %3673 = vmatprep.subr.mxu0 0.0
    %3674 = vmatpush1.msra.mxu0 %v238
    %3675 = vmatprep.subr.mxu0 0.0
    %3676 = vmatpush1.msra.mxu0 %v239
    %3677 = vmatprep.subr.mxu0 0.0
    %3678 = vmatpush1.msra.mxu0 %v240
    %3679 = vmatprep.mubr.f32.mxu0 %v3409
    %3680 = vmatmul.mubr.f32.gmra.mrb[0].mxu0 %v3408
    %v3681 = vpop.f32.mrb[0].mxu0
    %v3682 = vadd.f32 %v3537, %v3681
    %v3683 = vpop.f32.mrb[0].mxu0
    %3684 = vmatprep.mubr.f32.mxu0 %v3413
    %3685 = vmatmul.mubr.f32.gmra.mrb[0].mxu0 %v3412
    %v3686 = vpop.f32.mrb[0].mxu0
    %v3687 = vadd.f32 %v3542, %v3686
    %v3688 = vpop.f32.mrb[0].mxu0
    %3689 = vmatprep.mubr.f32.mxu0 %v3417
    %3690 = vmatmul.mubr.f32.gmra.mrb[0].mxu0 %v3416
    %v3691 = vpop.f32.mrb[0].mxu0
    %v3692 = vadd.f32 %v3547, %v3691
    %v3693 = vpop.f32.mrb[0].mxu0
    %3694 = vmatprep.mubr.f32.mxu0 %v3421
    %3695 = vmatmul.mubr.f32.gmra.mrb[0].mxu0 %v3420
    %v3696 = vpop.f32.mrb[0].mxu0
    %v3697 = vadd.f32 %v3552, %v3696
    %v3698 = vpop.f32.mrb[0].mxu0
    %3699 = vmatprep.mubr.f32.mxu0 %v3425
    %3700 = vmatmul.mubr.f32.gmra.mrb[0].mxu0 %v3424
    %v3701 = vpop.f32.mrb[0].mxu0
    %v3702 = vadd.f32 %v3557, %v3701
    %v3703 = vpop.f32.mrb[0].mxu0
    %3704 = vmatprep.mubr.f32.mxu0 %v3429
    %3705 = vmatmul.mubr.f32.gmra.mrb[0].mxu0 %v3428
    %v3706 = vpop.f32.mrb[0].mxu0
    %v3707 = vadd.f32 %v3562, %v3706
    %v3708 = vpop.f32.mrb[0].mxu0
    %3709 = vmatprep.mubr.f32.mxu0 %v3433
    %3710 = vmatmul.mubr.f32.gmra.mrb[0].mxu0 %v3432
    %v3711 = vpop.f32.mrb[0].mxu0
    %v3712 = vadd.f32 %v3567, %v3711
    %v3713 = vpop.f32.mrb[0].mxu0
    %3714 = vmatprep.mubr.f32.mxu0 %v3437
    %3715 = vmatmul.mubr.f32.gmra.mrb[0].mxu0 %v3436
    %v3716 = vpop.f32.mrb[0].mxu0
    %v3717 = vadd.f32 %v3572, %v3716
    %v3718 = vpop.f32.mrb[0].mxu0
    %3719 = vmatprep.mubr.f32.mxu0 %v3441
    %3720 = vmatmul.mubr.f32.gmra.mrb[0].mxu0 %v3440
    %v3721 = vpop.f32.mrb[0].mxu0
    %v3722 = vadd.f32 %v3577, %v3721
    %v3723 = vpop.f32.mrb[0].mxu0
    %3724 = vmatprep.mubr.f32.mxu0 %v3445
    %3725 = vmatmul.mubr.f32.gmra.mrb[0].mxu0 %v3444
    %v3726 = vpop.f32.mrb[0].mxu0
    %v3727 = vadd.f32 %v3582, %v3726
    %v3728 = vpop.f32.mrb[0].mxu0
    %3729 = vmatprep.mubr.f32.mxu0 %v3449
    %3730 = vmatmul.mubr.f32.gmra.mrb[0].mxu0 %v3448
    %v3731 = vpop.f32.mrb[0].mxu0
    %v3732 = vadd.f32 %v3587, %v3731
    %v3733 = vpop.f32.mrb[0].mxu0
    %3734 = vmatprep.mubr.f32.mxu0 %v3453
    %3735 = vmatmul.mubr.f32.gmra.mrb[0].mxu0 %v3452
    %v3736 = vpop.f32.mrb[0].mxu0
    %v3737 = vadd.f32 %v3592, %v3736
    %v3738 = vpop.f32.mrb[0].mxu0
    %3739 = vmatprep.mubr.f32.mxu0 %v3457
    %3740 = vmatmul.mubr.f32.gmra.mrb[0].mxu0 %v3456
    %v3741 = vpop.f32.mrb[0].mxu0
    %v3742 = vadd.f32 %v3597, %v3741
    %v3743 = vpop.f32.mrb[0].mxu0
    %3744 = vmatprep.mubr.f32.mxu0 %v3461
    %3745 = vmatmul.mubr.f32.gmra.mrb[0].mxu0 %v3460
    %v3746 = vpop.f32.mrb[0].mxu0
    %v3747 = vadd.f32 %v3602, %v3746
    %v3748 = vpop.f32.mrb[0].mxu0
    %3749 = vmatprep.mubr.f32.mxu0 %v3465
    %3750 = vmatmul.mubr.f32.gmra.mrb[0].mxu0 %v3464
    %v3751 = vpop.f32.mrb[0].mxu0
    %v3752 = vadd.f32 %v3607, %v3751
    %v3753 = vpop.f32.mrb[0].mxu0
    %3754 = vmatprep.mubr.f32.mxu0 %v3469
    %3755 = vmatmul.mubr.f32.gmra.mrb[0].mxu0 %v3468
    %v3756 = vpop.f32.mrb[0].mxu0
    %v3757 = vadd.f32 %v3612, %v3756
    %v3758 = vpop.f32.mrb[0].mxu0
    %3759 = vdwg.mxu0
    %s3760 = scalar_lea.vmem [#allocation10], 768
    %v3761 = vld [vmem:[%s3760] sm:$0xff]
    %v3762 = vld [vmem:[%s3760 + $0x8] sm:$0xff]
    %v3763 = vld [vmem:[%s3760 + $0x10] sm:$0xff]
    %v3764 = vld [vmem:[%s3760 + $0x18] sm:$0xff]
    %v3765 = vld [vmem:[%s3760 + $0x20] sm:$0xff]
    %v3766 = vld [vmem:[%s3760 + $0x28] sm:$0xff]
    %v3767 = vld [vmem:[%s3760 + $0x30] sm:$0xff]
    %v3768 = vld [vmem:[%s3760 + $0x38] sm:$0xff]
    %v3769 = vld [vmem:[%s3760 + $0x40] sm:$0xff]
    %v3770 = vld [vmem:[%s3760 + $0x48] sm:$0xff]
    %v3771 = vld [vmem:[%s3760 + $0x50] sm:$0xff]
    %v3772 = vld [vmem:[%s3760 + $0x58] sm:$0xff]
    %v3773 = vld [vmem:[%s3760 + $0x60] sm:$0xff]
    %v3774 = vld [vmem:[%s3760 + $0x68] sm:$0xff]
    %v3775 = vld [vmem:[%s3760 + $0x70] sm:$0xff]
    %v3776 = vld [vmem:[%s3760 + $0x78] sm:$0xff]
    %3777 = vmatprep.subr.mxu0 0.0
    %3778 = vmatpush1.msra.mxu0 %v3761
    %3779 = vmatprep.subr.mxu0 0.0
    %3780 = vmatpush1.msra.mxu0 %v3762
    %3781 = vmatprep.subr.mxu0 0.0
    %3782 = vmatpush1.msra.mxu0 %v3763
    %3783 = vmatprep.subr.mxu0 0.0
    %3784 = vmatpush1.msra.mxu0 %v3764
    %3785 = vmatprep.subr.mxu0 0.0
    %3786 = vmatpush1.msra.mxu0 %v3765
    %3787 = vmatprep.subr.mxu0 0.0
    %3788 = vmatpush1.msra.mxu0 %v3766
    %3789 = vmatprep.subr.mxu0 0.0
    %3790 = vmatpush1.msra.mxu0 %v3767
    %3791 = vmatprep.subr.mxu0 0.0
    %3792 = vmatpush1.msra.mxu0 %v3768
    %3793 = vmatprep.subr.mxu0 0.0
    %3794 = vmatpush1.msra.mxu0 %v3769
    %3795 = vmatprep.subr.mxu0 0.0
    %3796 = vmatpush1.msra.mxu0 %v3770
    %3797 = vmatprep.subr.mxu0 0.0
    %3798 = vmatpush1.msra.mxu0 %v3771
    %3799 = vmatprep.subr.mxu0 0.0
    %3800 = vmatpush1.msra.mxu0 %v3772
    %3801 = vmatprep.subr.mxu0 0.0
    %3802 = vmatpush1.msra.mxu0 %v3773
    %3803 = vmatprep.subr.mxu0 0.0
    %3804 = vmatpush1.msra.mxu0 %v3774
    %3805 = vmatprep.subr.mxu0 0.0
    %3806 = vmatpush1.msra.mxu0 %v3775
    %3807 = vmatprep.subr.mxu0 0.0
    %3808 = vmatpush1.msra.mxu0 %v3776
    %3809 = vmatprep.subr.mxu0 0.0
    %3810 = vmatpush1.msra.mxu0 0.0
    %3811 = vmatprep.subr.mxu0 0.0
    %3812 = vmatpush1.msra.mxu0 0.0
    %3813 = vmatprep.subr.mxu0 0.0
    %3814 = vmatpush1.msra.mxu0 0.0
    %3815 = vmatprep.subr.mxu0 0.0
    %3816 = vmatpush1.msra.mxu0 0.0
    %3817 = vmatprep.subr.mxu0 0.0
    %3818 = vmatpush1.msra.mxu0 0.0
    %3819 = vmatprep.subr.mxu0 0.0
    %3820 = vmatpush1.msra.mxu0 0.0
    %3821 = vmatprep.subr.mxu0 0.0
    %3822 = vmatpush1.msra.mxu0 0.0
    %3823 = vmatprep.subr.mxu0 0.0
    %3824 = vmatpush1.msra.mxu0 0.0
    %3825 = vmatprep.subr.mxu0 0.0
    %3826 = vmatpush1.msra.mxu0 0.0
    %3827 = vmatprep.subr.mxu0 0.0
    %3828 = vmatpush1.msra.mxu0 0.0
    %3829 = vmatprep.subr.mxu0 0.0
    %3830 = vmatpush1.msra.mxu0 0.0
    %3831 = vmatprep.subr.mxu0 0.0
    %3832 = vmatpush1.msra.mxu0 0.0
    %3833 = vmatprep.subr.mxu0 0.0
    %3834 = vmatpush1.msra.mxu0 0.0
    %3835 = vmatprep.subr.mxu0 0.0
    %3836 = vmatpush1.msra.mxu0 0.0
    %3837 = vmatprep.subr.mxu0 0.0
    %3838 = vmatpush1.msra.mxu0 0.0
    %3839 = vmatprep.subr.mxu0 0.0
    %3840 = vmatpush1.msra.mxu0 0.0
    %3841 = vmatprep.mubr.f32.mxu0 0.0
    %3842 = vmatmul.mubr.f32.gmra.mrb[0].mxu0 %v3682
    %v3843 = vpop.f32.mrb[0].mxu0
    %v3844 = vadd.f32 0.0, %v3843
    %v3845 = vpop.f32.mrb[0].mxu0
    %3846 = vmatprep.mubr.f32.mxu0 0.0
    %3847 = vmatmul.mubr.f32.gmra.mrb[0].mxu0 %v3687
    %v3848 = vpop.f32.mrb[0].mxu0
    %v3849 = vadd.f32 0.0, %v3848
    %v3850 = vpop.f32.mrb[0].mxu0
    %3851 = vmatprep.mubr.f32.mxu0 0.0
    %3852 = vmatmul.mubr.f32.gmra.mrb[0].mxu0 %v3692
    %v3853 = vpop.f32.mrb[0].mxu0
    %v3854 = vadd.f32 0.0, %v3853
    %v3855 = vpop.f32.mrb[0].mxu0
    %3856 = vmatprep.mubr.f32.mxu0 0.0
    %3857 = vmatmul.mubr.f32.gmra.mrb[0].mxu0 %v3697
    %v3858 = vpop.f32.mrb[0].mxu0
    %v3859 = vadd.f32 0.0, %v3858
    %v3860 = vpop.f32.mrb[0].mxu0
    %3861 = vmatprep.mubr.f32.mxu0 0.0
    %3862 = vmatmul.mubr.f32.gmra.mrb[0].mxu0 %v3702
    %v3863 = vpop.f32.mrb[0].mxu0
    %v3864 = vadd.f32 0.0, %v3863
    %v3865 = vpop.f32.mrb[0].mxu0
    %3866 = vmatprep.mubr.f32.mxu0 0.0
    %3867 = vmatmul.mubr.f32.gmra.mrb[0].mxu0 %v3707
    %v3868 = vpop.f32.mrb[0].mxu0
    %v3869 = vadd.f32 0.0, %v3868
    %v3870 = vpop.f32.mrb[0].mxu0
    %3871 = vmatprep.mubr.f32.mxu0 0.0
    %3872 = vmatmul.mubr.f32.gmra.mrb[0].mxu0 %v3712
    %v3873 = vpop.f32.mrb[0].mxu0
    %v3874 = vadd.f32 0.0, %v3873
    %v3875 = vpop.f32.mrb[0].mxu0
    %3876 = vmatprep.mubr.f32.mxu0 0.0
    %3877 = vmatmul.mubr.f32.gmra.mrb[0].mxu0 %v3717
    %v3878 = vpop.f32.mrb[0].mxu0
    %v3879 = vadd.f32 0.0, %v3878
    %v3880 = vpop.f32.mrb[0].mxu0
    %3881 = vmatprep.mubr.f32.mxu0 0.0
    %3882 = vmatmul.mubr.f32.gmra.mrb[0].mxu0 %v3722
    %v3883 = vpop.f32.mrb[0].mxu0
    %v3884 = vadd.f32 0.0, %v3883
    %v3885 = vpop.f32.mrb[0].mxu0
    %3886 = vmatprep.mubr.f32.mxu0 0.0
    %3887 = vmatmul.mubr.f32.gmra.mrb[0].mxu0 %v3727
    %v3888 = vpop.f32.mrb[0].mxu0
    %v3889 = vadd.f32 0.0, %v3888
    %v3890 = vpop.f32.mrb[0].mxu0
    %3891 = vmatprep.mubr.f32.mxu0 0.0
    %3892 = vmatmul.mubr.f32.gmra.mrb[0].mxu0 %v3732
    %v3893 = vpop.f32.mrb[0].mxu0
    %v3894 = vadd.f32 0.0, %v3893
    %v3895 = vpop.f32.mrb[0].mxu0
    %3896 = vmatprep.mubr.f32.mxu0 0.0
    %3897 = vmatmul.mubr.f32.gmra.mrb[0].mxu0 %v3737
    %v3898 = vpop.f32.mrb[0].mxu0
    %v3899 = vadd.f32 0.0, %v3898
    %v3900 = vpop.f32.mrb[0].mxu0
    %3901 = vmatprep.mubr.f32.mxu0 0.0
    %3902 = vmatmul.mubr.f32.gmra.mrb[0].mxu0 %v3742
    %v3903 = vpop.f32.mrb[0].mxu0
    %v3904 = vadd.f32 0.0, %v3903
    %v3905 = vpop.f32.mrb[0].mxu0
    %3906 = vmatprep.mubr.f32.mxu0 0.0
    %3907 = vmatmul.mubr.f32.gmra.mrb[0].mxu0 %v3747
    %v3908 = vpop.f32.mrb[0].mxu0
    %v3909 = vadd.f32 0.0, %v3908
    %v3910 = vpop.f32.mrb[0].mxu0
    %3911 = vmatprep.mubr.f32.mxu0 0.0
    %3912 = vmatmul.mubr.f32.gmra.mrb[0].mxu0 %v3752
    %v3913 = vpop.f32.mrb[0].mxu0
    %v3914 = vadd.f32 0.0, %v3913
    %v3915 = vpop.f32.mrb[0].mxu0
    %3916 = vmatprep.mubr.f32.mxu0 0.0
    %3917 = vmatmul.mubr.f32.gmra.mrb[0].mxu0 %v3757
    %v3918 = vpop.f32.mrb[0].mxu0
    %v3919 = vadd.f32 0.0, %v3918
    %v3920 = vpop.f32.mrb[0].mxu0
    %3921 = vdwg.mxu0
    %v3922 = vadd.f32 %v3389, %v3844
    %v3923 = vadd.f32 %v3390, %v3849
    %v3924 = vadd.f32 %v3391, %v3854
    %v3925 = vadd.f32 %v3392, %v3859
    %v3926 = vadd.f32 %v3393, %v3864
    %v3927 = vadd.f32 %v3394, %v3869
    %v3928 = vadd.f32 %v3395, %v3874
    %v3929 = vadd.f32 %v3396, %v3879
    %v3930 = vadd.f32 %v3397, %v3884
    %v3931 = vadd.f32 %v3398, %v3889
    %v3932 = vadd.f32 %v3399, %v3894
    %v3933 = vadd.f32 %v3400, %v3899
    %v3934 = vadd.f32 %v3401, %v3904
    %v3935 = vadd.f32 %v3402, %v3909
    %v3936 = vadd.f32 %v3403, %v3914
    %v3937 = vadd.f32 %v3404, %v3919
    %s3938 = scalar_lea.vmem [#allocation2], 3584
    %v3939 = vld [vmem:[%s3938] sm:$0xff]
    %v3940 = vld [vmem:[%s3938 + $0x8] sm:$0xff]
    %v3941 = vld [vmem:[%s3938 + $0x10] sm:$0xff]
    %v3942 = vld [vmem:[%s3938 + $0x18] sm:$0xff]
    %v3943 = vld [vmem:[%s3938 + $0x20] sm:$0xff]
    %v3944 = vld [vmem:[%s3938 + $0x28] sm:$0xff]
    %v3945 = vld [vmem:[%s3938 + $0x30] sm:$0xff]
    %v3946 = vld [vmem:[%s3938 + $0x38] sm:$0xff]
    %v3947 = vld [vmem:[%s3938 + $0x40] sm:$0xff]
    %v3948 = vld [vmem:[%s3938 + $0x48] sm:$0xff]
    %v3949 = vld [vmem:[%s3938 + $0x50] sm:$0xff]
    %v3950 = vld [vmem:[%s3938 + $0x58] sm:$0xff]
    %v3951 = vld [vmem:[%s3938 + $0x60] sm:$0xff]
    %v3952 = vld [vmem:[%s3938 + $0x68] sm:$0xff]
    %v3953 = vld [vmem:[%s3938 + $0x70] sm:$0xff]
    %v3954 = vld [vmem:[%s3938 + $0x78] sm:$0xff]
    %v3955 = vld [vmem:[%s3938 + $0x80] sm:$0xff]
    %v3956 = vld [vmem:[%s3938 + $0x88] sm:$0xff]
    %v3957 = vld [vmem:[%s3938 + $0x90] sm:$0xff]
    %v3958 = vld [vmem:[%s3938 + $0x98] sm:$0xff]
    %v3959 = vld [vmem:[%s3938 + $0xa0] sm:$0xff]
    %v3960 = vld [vmem:[%s3938 + $0xa8] sm:$0xff]
    %v3961 = vld [vmem:[%s3938 + $0xb0] sm:$0xff]
    %v3962 = vld [vmem:[%s3938 + $0xb8] sm:$0xff]
    %v3963 = vld [vmem:[%s3938 + $0xc0] sm:$0xff]
    %v3964 = vld [vmem:[%s3938 + $0xc8] sm:$0xff]
    %v3965 = vld [vmem:[%s3938 + $0xd0] sm:$0xff]
    %v3966 = vld [vmem:[%s3938 + $0xd8] sm:$0xff]
    %v3967 = vld [vmem:[%s3938 + $0xe0] sm:$0xff]
    %v3968 = vld [vmem:[%s3938 + $0xe8] sm:$0xff]
    %v3969 = vld [vmem:[%s3938 + $0xf0] sm:$0xff]
    %v3970 = vld [vmem:[%s3938 + $0xf8] sm:$0xff]
    %v3971 = vld [vmem:[%s3938 + $0x100] sm:$0xff]
    %v3972 = vld [vmem:[%s3938 + $0x108] sm:$0xff]
    %v3973 = vld [vmem:[%s3938 + $0x110] sm:$0xff]
    %v3974 = vld [vmem:[%s3938 + $0x118] sm:$0xff]
    %v3975 = vld [vmem:[%s3938 + $0x120] sm:$0xff]
    %v3976 = vld [vmem:[%s3938 + $0x128] sm:$0xff]
    %v3977 = vld [vmem:[%s3938 + $0x130] sm:$0xff]
    %v3978 = vld [vmem:[%s3938 + $0x138] sm:$0xff]
    %v3979 = vld [vmem:[%s3938 + $0x140] sm:$0xff]
    %v3980 = vld [vmem:[%s3938 + $0x148] sm:$0xff]
    %v3981 = vld [vmem:[%s3938 + $0x150] sm:$0xff]
    %v3982 = vld [vmem:[%s3938 + $0x158] sm:$0xff]
    %v3983 = vld [vmem:[%s3938 + $0x160] sm:$0xff]
    %v3984 = vld [vmem:[%s3938 + $0x168] sm:$0xff]
    %v3985 = vld [vmem:[%s3938 + $0x170] sm:$0xff]
    %v3986 = vld [vmem:[%s3938 + $0x178] sm:$0xff]
    %v3987 = vld [vmem:[%s3938 + $0x180] sm:$0xff]
    %v3988 = vld [vmem:[%s3938 + $0x188] sm:$0xff]
    %v3989 = vld [vmem:[%s3938 + $0x190] sm:$0xff]
    %v3990 = vld [vmem:[%s3938 + $0x198] sm:$0xff]
    %v3991 = vld [vmem:[%s3938 + $0x1a0] sm:$0xff]
    %v3992 = vld [vmem:[%s3938 + $0x1a8] sm:$0xff]
    %v3993 = vld [vmem:[%s3938 + $0x1b0] sm:$0xff]
    %v3994 = vld [vmem:[%s3938 + $0x1b8] sm:$0xff]
    %v3995 = vld [vmem:[%s3938 + $0x1c0] sm:$0xff]
    %v3996 = vld [vmem:[%s3938 + $0x1c8] sm:$0xff]
    %v3997 = vld [vmem:[%s3938 + $0x1d0] sm:$0xff]
    %v3998 = vld [vmem:[%s3938 + $0x1d8] sm:$0xff]
    %v3999 = vld [vmem:[%s3938 + $0x1e0] sm:$0xff]
    %v4000 = vld [vmem:[%s3938 + $0x1e8] sm:$0xff]
    %v4001 = vld [vmem:[%s3938 + $0x1f0] sm:$0xff]
    %v4002 = vld [vmem:[%s3938 + $0x1f8] sm:$0xff]
    %4003 = vmatprep.subr.mxu0 0.0
    %4004 = vmatpush1.msra.mxu0 %v177
    %4005 = vmatprep.subr.mxu0 0.0
    %4006 = vmatpush1.msra.mxu0 %v178
    %4007 = vmatprep.subr.mxu0 0.0
    %4008 = vmatpush1.msra.mxu0 %v179
    %4009 = vmatprep.subr.mxu0 0.0
    %4010 = vmatpush1.msra.mxu0 %v180
    %4011 = vmatprep.subr.mxu0 0.0
    %4012 = vmatpush1.msra.mxu0 %v181
    %4013 = vmatprep.subr.mxu0 0.0
    %4014 = vmatpush1.msra.mxu0 %v182
    %4015 = vmatprep.subr.mxu0 0.0
    %4016 = vmatpush1.msra.mxu0 %v183
    %4017 = vmatprep.subr.mxu0 0.0
    %4018 = vmatpush1.msra.mxu0 %v184
    %4019 = vmatprep.subr.mxu0 0.0
    %4020 = vmatpush1.msra.mxu0 %v185
    %4021 = vmatprep.subr.mxu0 0.0
    %4022 = vmatpush1.msra.mxu0 %v186
    %4023 = vmatprep.subr.mxu0 0.0
    %4024 = vmatpush1.msra.mxu0 %v187
    %4025 = vmatprep.subr.mxu0 0.0
    %4026 = vmatpush1.msra.mxu0 %v188
    %4027 = vmatprep.subr.mxu0 0.0
    %4028 = vmatpush1.msra.mxu0 %v189
    %4029 = vmatprep.subr.mxu0 0.0
    %4030 = vmatpush1.msra.mxu0 %v190
    %4031 = vmatprep.subr.mxu0 0.0
    %4032 = vmatpush1.msra.mxu0 %v191
    %4033 = vmatprep.subr.mxu0 0.0
    %4034 = vmatpush1.msra.mxu0 %v192
    %4035 = vmatprep.subr.mxu0 0.0
    %4036 = vmatpush1.msra.mxu0 %v193
    %4037 = vmatprep.subr.mxu0 0.0
    %4038 = vmatpush1.msra.mxu0 %v194
    %4039 = vmatprep.subr.mxu0 0.0
    %4040 = vmatpush1.msra.mxu0 %v195
    %4041 = vmatprep.subr.mxu0 0.0
    %4042 = vmatpush1.msra.mxu0 %v196
    %4043 = vmatprep.subr.mxu0 0.0
    %4044 = vmatpush1.msra.mxu0 %v197
    %4045 = vmatprep.subr.mxu0 0.0
    %4046 = vmatpush1.msra.mxu0 %v198
    %4047 = vmatprep.subr.mxu0 0.0
    %4048 = vmatpush1.msra.mxu0 %v199
    %4049 = vmatprep.subr.mxu0 0.0
    %4050 = vmatpush1.msra.mxu0 %v200
    %4051 = vmatprep.subr.mxu0 0.0
    %4052 = vmatpush1.msra.mxu0 %v201
    %4053 = vmatprep.subr.mxu0 0.0
    %4054 = vmatpush1.msra.mxu0 %v202
    %4055 = vmatprep.subr.mxu0 0.0
    %4056 = vmatpush1.msra.mxu0 %v203
    %4057 = vmatprep.subr.mxu0 0.0
    %4058 = vmatpush1.msra.mxu0 %v204
    %4059 = vmatprep.subr.mxu0 0.0
    %4060 = vmatpush1.msra.mxu0 %v205
    %4061 = vmatprep.subr.mxu0 0.0
    %4062 = vmatpush1.msra.mxu0 %v206
    %4063 = vmatprep.subr.mxu0 0.0
    %4064 = vmatpush1.msra.mxu0 %v207
    %4065 = vmatprep.subr.mxu0 0.0
    %4066 = vmatpush1.msra.mxu0 %v208
    %4067 = vmatprep.mubr.f32.mxu0 %v3940
    %4068 = vmatmul.mubr.f32.gmra.mrb[0].mxu0 %v3939
    %v4069 = vpop.f32.mrb[0].mxu0
    %v4070 = vadd.f32 0.0, %v4069
    %v4071 = vpop.f32.mrb[0].mxu0
    %4072 = vmatprep.mubr.f32.mxu0 %v3944
    %4073 = vmatmul.mubr.f32.gmra.mrb[0].mxu0 %v3943
    %v4074 = vpop.f32.mrb[0].mxu0
    %v4075 = vadd.f32 0.0, %v4074
    %v4076 = vpop.f32.mrb[0].mxu0
    %4077 = vmatprep.mubr.f32.mxu0 %v3948
    %4078 = vmatmul.mubr.f32.gmra.mrb[0].mxu0 %v3947
    %v4079 = vpop.f32.mrb[0].mxu0
    %v4080 = vadd.f32 0.0, %v4079
    %v4081 = vpop.f32.mrb[0].mxu0
    %4082 = vmatprep.mubr.f32.mxu0 %v3952
    %4083 = vmatmul.mubr.f32.gmra.mrb[0].mxu0 %v3951
    %v4084 = vpop.f32.mrb[0].mxu0
    %v4085 = vadd.f32 0.0, %v4084
    %v4086 = vpop.f32.mrb[0].mxu0
    %4087 = vmatprep.mubr.f32.mxu0 %v3956
    %4088 = vmatmul.mubr.f32.gmra.mrb[0].mxu0 %v3955
    %v4089 = vpop.f32.mrb[0].mxu0
    %v4090 = vadd.f32 0.0, %v4089
    %v4091 = vpop.f32.mrb[0].mxu0
    %4092 = vmatprep.mubr.f32.mxu0 %v3960
    %4093 = vmatmul.mubr.f32.gmra.mrb[0].mxu0 %v3959
    %v4094 = vpop.f32.mrb[0].mxu0
    %v4095 = vadd.f32 0.0, %v4094
    %v4096 = vpop.f32.mrb[0].mxu0
    %4097 = vmatprep.mubr.f32.mxu0 %v3964
    %4098 = vmatmul.mubr.f32.gmra.mrb[0].mxu0 %v3963
    %v4099 = vpop.f32.mrb[0].mxu0
    %v4100 = vadd.f32 0.0, %v4099
    %v4101 = vpop.f32.mrb[0].mxu0
    %4102 = vmatprep.mubr.f32.mxu0 %v3968
    %4103 = vmatmul.mubr.f32.gmra.mrb[0].mxu0 %v3967
    %v4104 = vpop.f32.mrb[0].mxu0
    %v4105 = vadd.f32 0.0, %v4104
    %v4106 = vpop.f32.mrb[0].mxu0
    %4107 = vmatprep.mubr.f32.mxu0 %v3972
    %4108 = vmatmul.mubr.f32.gmra.mrb[0].mxu0 %v3971
    %v4109 = vpop.f32.mrb[0].mxu0
    %v4110 = vadd.f32 0.0, %v4109
    %v4111 = vpop.f32.mrb[0].mxu0
    %4112 = vmatprep.mubr.f32.mxu0 %v3976
    %4113 = vmatmul.mubr.f32.gmra.mrb[0].mxu0 %v3975
    %v4114 = vpop.f32.mrb[0].mxu0
    %v4115 = vadd.f32 0.0, %v4114
    %v4116 = vpop.f32.mrb[0].mxu0
    %4117 = vmatprep.mubr.f32.mxu0 %v3980
    %4118 = vmatmul.mubr.f32.gmra.mrb[0].mxu0 %v3979
    %v4119 = vpop.f32.mrb[0].mxu0
    %v4120 = vadd.f32 0.0, %v4119
    %v4121 = vpop.f32.mrb[0].mxu0
    %4122 = vmatprep.mubr.f32.mxu0 %v3984
    %4123 = vmatmul.mubr.f32.gmra.mrb[0].mxu0 %v3983
    %v4124 = vpop.f32.mrb[0].mxu0
    %v4125 = vadd.f32 0.0, %v4124
    %v4126 = vpop.f32.mrb[0].mxu0
    %4127 = vmatprep.mubr.f32.mxu0 %v3988
    %4128 = vmatmul.mubr.f32.gmra.mrb[0].mxu0 %v3987
    %v4129 = vpop.f32.mrb[0].mxu0
    %v4130 = vadd.f32 0.0, %v4129
    %v4131 = vpop.f32.mrb[0].mxu0
    %4132 = vmatprep.mubr.f32.mxu0 %v3992
    %4133 = vmatmul.mubr.f32.gmra.mrb[0].mxu0 %v3991
    %v4134 = vpop.f32.mrb[0].mxu0
    %v4135 = vadd.f32 0.0, %v4134
    %v4136 = vpop.f32.mrb[0].mxu0
    %4137 = vmatprep.mubr.f32.mxu0 %v3996
    %4138 = vmatmul.mubr.f32.gmra.mrb[0].mxu0 %v3995
    %v4139 = vpop.f32.mrb[0].mxu0
    %v4140 = vadd.f32 0.0, %v4139
    %v4141 = vpop.f32.mrb[0].mxu0
    %4142 = vmatprep.mubr.f32.mxu0 %v4000
    %4143 = vmatmul.mubr.f32.gmra.mrb[0].mxu0 %v3999
    %v4144 = vpop.f32.mrb[0].mxu0
    %v4145 = vadd.f32 0.0, %v4144
    %v4146 = vpop.f32.mrb[0].mxu0
    %4147 = vdwg.mxu0
    %4148 = vmatprep.subr.mxu0 0.0
    %4149 = vmatpush1.msra.mxu0 %v209
    %4150 = vmatprep.subr.mxu0 0.0
    %4151 = vmatpush1.msra.mxu0 %v210
    %4152 = vmatprep.subr.mxu0 0.0
    %4153 = vmatpush1.msra.mxu0 %v211
    %4154 = vmatprep.subr.mxu0 0.0
    %4155 = vmatpush1.msra.mxu0 %v212
    %4156 = vmatprep.subr.mxu0 0.0
    %4157 = vmatpush1.msra.mxu0 %v213
    %4158 = vmatprep.subr.mxu0 0.0
    %4159 = vmatpush1.msra.mxu0 %v214
    %4160 = vmatprep.subr.mxu0 0.0
    %4161 = vmatpush1.msra.mxu0 %v215
    %4162 = vmatprep.subr.mxu0 0.0
    %4163 = vmatpush1.msra.mxu0 %v216
    %4164 = vmatprep.subr.mxu0 0.0
    %4165 = vmatpush1.msra.mxu0 %v217
    %4166 = vmatprep.subr.mxu0 0.0
    %4167 = vmatpush1.msra.mxu0 %v218
    %4168 = vmatprep.subr.mxu0 0.0
    %4169 = vmatpush1.msra.mxu0 %v219
    %4170 = vmatprep.subr.mxu0 0.0
    %4171 = vmatpush1.msra.mxu0 %v220
    %4172 = vmatprep.subr.mxu0 0.0
    %4173 = vmatpush1.msra.mxu0 %v221
    %4174 = vmatprep.subr.mxu0 0.0
    %4175 = vmatpush1.msra.mxu0 %v222
    %4176 = vmatprep.subr.mxu0 0.0
    %4177 = vmatpush1.msra.mxu0 %v223
    %4178 = vmatprep.subr.mxu0 0.0
    %4179 = vmatpush1.msra.mxu0 %v224
    %4180 = vmatprep.subr.mxu0 0.0
    %4181 = vmatpush1.msra.mxu0 %v225
    %4182 = vmatprep.subr.mxu0 0.0
    %4183 = vmatpush1.msra.mxu0 %v226
    %4184 = vmatprep.subr.mxu0 0.0
    %4185 = vmatpush1.msra.mxu0 %v227
    %4186 = vmatprep.subr.mxu0 0.0
    %4187 = vmatpush1.msra.mxu0 %v228
    %4188 = vmatprep.subr.mxu0 0.0
    %4189 = vmatpush1.msra.mxu0 %v229
    %4190 = vmatprep.subr.mxu0 0.0
    %4191 = vmatpush1.msra.mxu0 %v230
    %4192 = vmatprep.subr.mxu0 0.0
    %4193 = vmatpush1.msra.mxu0 %v231
    %4194 = vmatprep.subr.mxu0 0.0
    %4195 = vmatpush1.msra.mxu0 %v232
    %4196 = vmatprep.subr.mxu0 0.0
    %4197 = vmatpush1.msra.mxu0 %v233
    %4198 = vmatprep.subr.mxu0 0.0
    %4199 = vmatpush1.msra.mxu0 %v234
    %4200 = vmatprep.subr.mxu0 0.0
    %4201 = vmatpush1.msra.mxu0 %v235
    %4202 = vmatprep.subr.mxu0 0.0
    %4203 = vmatpush1.msra.mxu0 %v236
    %4204 = vmatprep.subr.mxu0 0.0
    %4205 = vmatpush1.msra.mxu0 %v237
    %4206 = vmatprep.subr.mxu0 0.0
    %4207 = vmatpush1.msra.mxu0 %v238
    %4208 = vmatprep.subr.mxu0 0.0
    %4209 = vmatpush1.msra.mxu0 %v239
    %4210 = vmatprep.subr.mxu0 0.0
    %4211 = vmatpush1.msra.mxu0 %v240
    %4212 = vmatprep.mubr.f32.mxu0 %v3942
    %4213 = vmatmul.mubr.f32.gmra.mrb[0].mxu0 %v3941
    %v4214 = vpop.f32.mrb[0].mxu0
    %v4215 = vadd.f32 %v4070, %v4214
    %v4216 = vpop.f32.mrb[0].mxu0
    %4217 = vmatprep.mubr.f32.mxu0 %v3946
    %4218 = vmatmul.mubr.f32.gmra.mrb[0].mxu0 %v3945
    %v4219 = vpop.f32.mrb[0].mxu0
    %v4220 = vadd.f32 %v4075, %v4219
    %v4221 = vpop.f32.mrb[0].mxu0
    %4222 = vmatprep.mubr.f32.mxu0 %v3950
    %4223 = vmatmul.mubr.f32.gmra.mrb[0].mxu0 %v3949
    %v4224 = vpop.f32.mrb[0].mxu0
    %v4225 = vadd.f32 %v4080, %v4224
    %v4226 = vpop.f32.mrb[0].mxu0
    %4227 = vmatprep.mubr.f32.mxu0 %v3954
    %4228 = vmatmul.mubr.f32.gmra.mrb[0].mxu0 %v3953
    %v4229 = vpop.f32.mrb[0].mxu0
    %v4230 = vadd.f32 %v4085, %v4229
    %v4231 = vpop.f32.mrb[0].mxu0
    %4232 = vmatprep.mubr.f32.mxu0 %v3958
    %4233 = vmatmul.mubr.f32.gmra.mrb[0].mxu0 %v3957
    %v4234 = vpop.f32.mrb[0].mxu0
    %v4235 = vadd.f32 %v4090, %v4234
    %v4236 = vpop.f32.mrb[0].mxu0
    %4237 = vmatprep.mubr.f32.mxu0 %v3962
    %4238 = vmatmul.mubr.f32.gmra.mrb[0].mxu0 %v3961
    %v4239 = vpop.f32.mrb[0].mxu0
    %v4240 = vadd.f32 %v4095, %v4239
    %v4241 = vpop.f32.mrb[0].mxu0
    %4242 = vmatprep.mubr.f32.mxu0 %v3966
    %4243 = vmatmul.mubr.f32.gmra.mrb[0].mxu0 %v3965
    %v4244 = vpop.f32.mrb[0].mxu0
    %v4245 = vadd.f32 %v4100, %v4244
    %v4246 = vpop.f32.mrb[0].mxu0
    %4247 = vmatprep.mubr.f32.mxu0 %v3970
    %4248 = vmatmul.mubr.f32.gmra.mrb[0].mxu0 %v3969
    %v4249 = vpop.f32.mrb[0].mxu0
    %v4250 = vadd.f32 %v4105, %v4249
    %v4251 = vpop.f32.mrb[0].mxu0
    %4252 = vmatprep.mubr.f32.mxu0 %v3974
    %4253 = vmatmul.mubr.f32.gmra.mrb[0].mxu0 %v3973
    %v4254 = vpop.f32.mrb[0].mxu0
    %v4255 = vadd.f32 %v4110, %v4254
    %v4256 = vpop.f32.mrb[0].mxu0
    %4257 = vmatprep.mubr.f32.mxu0 %v3978
    %4258 = vmatmul.mubr.f32.gmra.mrb[0].mxu0 %v3977
    %v4259 = vpop.f32.mrb[0].mxu0
    %v4260 = vadd.f32 %v4115, %v4259
    %v4261 = vpop.f32.mrb[0].mxu0
    %4262 = vmatprep.mubr.f32.mxu0 %v3982
    %4263 = vmatmul.mubr.f32.gmra.mrb[0].mxu0 %v3981
    %v4264 = vpop.f32.mrb[0].mxu0
    %v4265 = vadd.f32 %v4120, %v4264
    %v4266 = vpop.f32.mrb[0].mxu0
    %4267 = vmatprep.mubr.f32.mxu0 %v3986
    %4268 = vmatmul.mubr.f32.gmra.mrb[0].mxu0 %v3985
    %v4269 = vpop.f32.mrb[0].mxu0
    %v4270 = vadd.f32 %v4125, %v4269
    %v4271 = vpop.f32.mrb[0].mxu0
    %4272 = vmatprep.mubr.f32.mxu0 %v3990
    %4273 = vmatmul.mubr.f32.gmra.mrb[0].mxu0 %v3989
    %v4274 = vpop.f32.mrb[0].mxu0
    %v4275 = vadd.f32 %v4130, %v4274
    %v4276 = vpop.f32.mrb[0].mxu0
    %4277 = vmatprep.mubr.f32.mxu0 %v3994
    %4278 = vmatmul.mubr.f32.gmra.mrb[0].mxu0 %v3993
    %v4279 = vpop.f32.mrb[0].mxu0
    %v4280 = vadd.f32 %v4135, %v4279
    %v4281 = vpop.f32.mrb[0].mxu0
    %4282 = vmatprep.mubr.f32.mxu0 %v3998
    %4283 = vmatmul.mubr.f32.gmra.mrb[0].mxu0 %v3997
    %v4284 = vpop.f32.mrb[0].mxu0
    %v4285 = vadd.f32 %v4140, %v4284
    %v4286 = vpop.f32.mrb[0].mxu0
    %4287 = vmatprep.mubr.f32.mxu0 %v4002
    %4288 = vmatmul.mubr.f32.gmra.mrb[0].mxu0 %v4001
    %v4289 = vpop.f32.mrb[0].mxu0
    %v4290 = vadd.f32 %v4145, %v4289
    %v4291 = vpop.f32.mrb[0].mxu0
    %4292 = vdwg.mxu0
    %s4293 = scalar_lea.vmem [#allocation10], 896
    %v4294 = vld [vmem:[%s4293] sm:$0xff]
    %v4295 = vld [vmem:[%s4293 + $0x8] sm:$0xff]
    %v4296 = vld [vmem:[%s4293 + $0x10] sm:$0xff]
    %v4297 = vld [vmem:[%s4293 + $0x18] sm:$0xff]
    %v4298 = vld [vmem:[%s4293 + $0x20] sm:$0xff]
    %v4299 = vld [vmem:[%s4293 + $0x28] sm:$0xff]
    %v4300 = vld [vmem:[%s4293 + $0x30] sm:$0xff]
    %v4301 = vld [vmem:[%s4293 + $0x38] sm:$0xff]
    %v4302 = vld [vmem:[%s4293 + $0x40] sm:$0xff]
    %v4303 = vld [vmem:[%s4293 + $0x48] sm:$0xff]
    %v4304 = vld [vmem:[%s4293 + $0x50] sm:$0xff]
    %v4305 = vld [vmem:[%s4293 + $0x58] sm:$0xff]
    %v4306 = vld [vmem:[%s4293 + $0x60] sm:$0xff]
    %v4307 = vld [vmem:[%s4293 + $0x68] sm:$0xff]
    %v4308 = vld [vmem:[%s4293 + $0x70] sm:$0xff]
    %v4309 = vld [vmem:[%s4293 + $0x78] sm:$0xff]
    %4310 = vmatprep.subr.mxu0 0.0
    %4311 = vmatpush1.msra.mxu0 %v4294
    %4312 = vmatprep.subr.mxu0 0.0
    %4313 = vmatpush1.msra.mxu0 %v4295
    %4314 = vmatprep.subr.mxu0 0.0
    %4315 = vmatpush1.msra.mxu0 %v4296
    %4316 = vmatprep.subr.mxu0 0.0
    %4317 = vmatpush1.msra.mxu0 %v4297
    %4318 = vmatprep.subr.mxu0 0.0
    %4319 = vmatpush1.msra.mxu0 %v4298
    %4320 = vmatprep.subr.mxu0 0.0
    %4321 = vmatpush1.msra.mxu0 %v4299
    %4322 = vmatprep.subr.mxu0 0.0
    %4323 = vmatpush1.msra.mxu0 %v4300
    %4324 = vmatprep.subr.mxu0 0.0
    %4325 = vmatpush1.msra.mxu0 %v4301
    %4326 = vmatprep.subr.mxu0 0.0
    %4327 = vmatpush1.msra.mxu0 %v4302
    %4328 = vmatprep.subr.mxu0 0.0
    %4329 = vmatpush1.msra.mxu0 %v4303
    %4330 = vmatprep.subr.mxu0 0.0
    %4331 = vmatpush1.msra.mxu0 %v4304
    %4332 = vmatprep.subr.mxu0 0.0
    %4333 = vmatpush1.msra.mxu0 %v4305
    %4334 = vmatprep.subr.mxu0 0.0
    %4335 = vmatpush1.msra.mxu0 %v4306
    %4336 = vmatprep.subr.mxu0 0.0
    %4337 = vmatpush1.msra.mxu0 %v4307
    %4338 = vmatprep.subr.mxu0 0.0
    %4339 = vmatpush1.msra.mxu0 %v4308
    %4340 = vmatprep.subr.mxu0 0.0
    %4341 = vmatpush1.msra.mxu0 %v4309
    %4342 = vmatprep.subr.mxu0 0.0
    %4343 = vmatpush1.msra.mxu0 0.0
    %4344 = vmatprep.subr.mxu0 0.0
    %4345 = vmatpush1.msra.mxu0 0.0
    %4346 = vmatprep.subr.mxu0 0.0
    %4347 = vmatpush1.msra.mxu0 0.0
    %4348 = vmatprep.subr.mxu0 0.0
    %4349 = vmatpush1.msra.mxu0 0.0
    %4350 = vmatprep.subr.mxu0 0.0
    %4351 = vmatpush1.msra.mxu0 0.0
    %4352 = vmatprep.subr.mxu0 0.0
    %4353 = vmatpush1.msra.mxu0 0.0
    %4354 = vmatprep.subr.mxu0 0.0
    %4355 = vmatpush1.msra.mxu0 0.0
    %4356 = vmatprep.subr.mxu0 0.0
    %4357 = vmatpush1.msra.mxu0 0.0
    %4358 = vmatprep.subr.mxu0 0.0
    %4359 = vmatpush1.msra.mxu0 0.0
    %4360 = vmatprep.subr.mxu0 0.0
    %4361 = vmatpush1.msra.mxu0 0.0
    %4362 = vmatprep.subr.mxu0 0.0
    %4363 = vmatpush1.msra.mxu0 0.0
    %4364 = vmatprep.subr.mxu0 0.0
    %4365 = vmatpush1.msra.mxu0 0.0
    %4366 = vmatprep.subr.mxu0 0.0
    %4367 = vmatpush1.msra.mxu0 0.0
    %4368 = vmatprep.subr.mxu0 0.0
    %4369 = vmatpush1.msra.mxu0 0.0
    %4370 = vmatprep.subr.mxu0 0.0
    %4371 = vmatpush1.msra.mxu0 0.0
    %4372 = vmatprep.subr.mxu0 0.0
    %4373 = vmatpush1.msra.mxu0 0.0
    %4374 = vmatprep.mubr.f32.mxu0 0.0
    %4375 = vmatmul.mubr.f32.gmra.mrb[0].mxu0 %v4215
    %v4376 = vpop.f32.mrb[0].mxu0
    %v4377 = vadd.f32 0.0, %v4376
    %v4378 = vpop.f32.mrb[0].mxu0
    %4379 = vmatprep.mubr.f32.mxu0 0.0
    %4380 = vmatmul.mubr.f32.gmra.mrb[0].mxu0 %v4220
    %v4381 = vpop.f32.mrb[0].mxu0
    %v4382 = vadd.f32 0.0, %v4381
    %v4383 = vpop.f32.mrb[0].mxu0
    %4384 = vmatprep.mubr.f32.mxu0 0.0
    %4385 = vmatmul.mubr.f32.gmra.mrb[0].mxu0 %v4225
    %v4386 = vpop.f32.mrb[0].mxu0
    %v4387 = vadd.f32 0.0, %v4386
    %v4388 = vpop.f32.mrb[0].mxu0
    %4389 = vmatprep.mubr.f32.mxu0 0.0
    %4390 = vmatmul.mubr.f32.gmra.mrb[0].mxu0 %v4230
    %v4391 = vpop.f32.mrb[0].mxu0
    %v4392 = vadd.f32 0.0, %v4391
    %v4393 = vpop.f32.mrb[0].mxu0
    %4394 = vmatprep.mubr.f32.mxu0 0.0
    %4395 = vmatmul.mubr.f32.gmra.mrb[0].mxu0 %v4235
    %v4396 = vpop.f32.mrb[0].mxu0
    %v4397 = vadd.f32 0.0, %v4396
    %v4398 = vpop.f32.mrb[0].mxu0
    %4399 = vmatprep.mubr.f32.mxu0 0.0
    %4400 = vmatmul.mubr.f32.gmra.mrb[0].mxu0 %v4240
    %v4401 = vpop.f32.mrb[0].mxu0
    %v4402 = vadd.f32 0.0, %v4401
    %v4403 = vpop.f32.mrb[0].mxu0
    %4404 = vmatprep.mubr.f32.mxu0 0.0
    %4405 = vmatmul.mubr.f32.gmra.mrb[0].mxu0 %v4245
    %v4406 = vpop.f32.mrb[0].mxu0
    %v4407 = vadd.f32 0.0, %v4406
    %v4408 = vpop.f32.mrb[0].mxu0
    %4409 = vmatprep.mubr.f32.mxu0 0.0
    %4410 = vmatmul.mubr.f32.gmra.mrb[0].mxu0 %v4250
    %v4411 = vpop.f32.mrb[0].mxu0
    %v4412 = vadd.f32 0.0, %v4411
    %v4413 = vpop.f32.mrb[0].mxu0
    %4414 = vmatprep.mubr.f32.mxu0 0.0
    %4415 = vmatmul.mubr.f32.gmra.mrb[0].mxu0 %v4255
    %v4416 = vpop.f32.mrb[0].mxu0
    %v4417 = vadd.f32 0.0, %v4416
    %v4418 = vpop.f32.mrb[0].mxu0
    %4419 = vmatprep.mubr.f32.mxu0 0.0
    %4420 = vmatmul.mubr.f32.gmra.mrb[0].mxu0 %v4260
    %v4421 = vpop.f32.mrb[0].mxu0
    %v4422 = vadd.f32 0.0, %v4421
    %v4423 = vpop.f32.mrb[0].mxu0
    %4424 = vmatprep.mubr.f32.mxu0 0.0
    %4425 = vmatmul.mubr.f32.gmra.mrb[0].mxu0 %v4265
    %v4426 = vpop.f32.mrb[0].mxu0
    %v4427 = vadd.f32 0.0, %v4426
    %v4428 = vpop.f32.mrb[0].mxu0
    %4429 = vmatprep.mubr.f32.mxu0 0.0
    %4430 = vmatmul.mubr.f32.gmra.mrb[0].mxu0 %v4270
    %v4431 = vpop.f32.mrb[0].mxu0
    %v4432 = vadd.f32 0.0, %v4431
    %v4433 = vpop.f32.mrb[0].mxu0
    %4434 = vmatprep.mubr.f32.mxu0 0.0
    %4435 = vmatmul.mubr.f32.gmra.mrb[0].mxu0 %v4275
    %v4436 = vpop.f32.mrb[0].mxu0
    %v4437 = vadd.f32 0.0, %v4436
    %v4438 = vpop.f32.mrb[0].mxu0
    %4439 = vmatprep.mubr.f32.mxu0 0.0
    %4440 = vmatmul.mubr.f32.gmra.mrb[0].mxu0 %v4280
    %v4441 = vpop.f32.mrb[0].mxu0
    %v4442 = vadd.f32 0.0, %v4441
    %v4443 = vpop.f32.mrb[0].mxu0
    %4444 = vmatprep.mubr.f32.mxu0 0.0
    %4445 = vmatmul.mubr.f32.gmra.mrb[0].mxu0 %v4285
    %v4446 = vpop.f32.mrb[0].mxu0
    %v4447 = vadd.f32 0.0, %v4446
    %v4448 = vpop.f32.mrb[0].mxu0
    %4449 = vmatprep.mubr.f32.mxu0 0.0
    %4450 = vmatmul.mubr.f32.gmra.mrb[0].mxu0 %v4290
    %v4451 = vpop.f32.mrb[0].mxu0
    %v4452 = vadd.f32 0.0, %v4451
    %v4453 = vpop.f32.mrb[0].mxu0
    %4454 = vdwg.mxu0
    %v4455 = vadd.f32 %v3922, %v4377
    %v4456 = vadd.f32 %v3923, %v4382
    %v4457 = vadd.f32 %v3924, %v4387
    %v4458 = vadd.f32 %v3925, %v4392
    %v4459 = vadd.f32 %v3926, %v4397
    %v4460 = vadd.f32 %v3927, %v4402
    %v4461 = vadd.f32 %v3928, %v4407
    %v4462 = vadd.f32 %v3929, %v4412
    %v4463 = vadd.f32 %v3930, %v4417
    %v4464 = vadd.f32 %v3931, %v4422
    %v4465 = vadd.f32 %v3932, %v4427
    %v4466 = vadd.f32 %v3933, %v4432
    %v4467 = vadd.f32 %v3934, %v4437
    %v4468 = vadd.f32 %v3935, %v4442
    %v4469 = vadd.f32 %v3936, %v4447
    %v4470 = vadd.f32 %v3937, %v4452
    %s4471 = scalar_lea.vmem [#allocation2], 4096
    %v4472 = vld [vmem:[%s4471] sm:$0xff]
    %v4473 = vld [vmem:[%s4471 + $0x8] sm:$0xff]
    %v4474 = vld [vmem:[%s4471 + $0x10] sm:$0xff]
    %v4475 = vld [vmem:[%s4471 + $0x18] sm:$0xff]
    %v4476 = vld [vmem:[%s4471 + $0x20] sm:$0xff]
    %v4477 = vld [vmem:[%s4471 + $0x28] sm:$0xff]
    %v4478 = vld [vmem:[%s4471 + $0x30] sm:$0xff]
    %v4479 = vld [vmem:[%s4471 + $0x38] sm:$0xff]
    %v4480 = vld [vmem:[%s4471 + $0x40] sm:$0xff]
    %v4481 = vld [vmem:[%s4471 + $0x48] sm:$0xff]
    %v4482 = vld [vmem:[%s4471 + $0x50] sm:$0xff]
    %v4483 = vld [vmem:[%s4471 + $0x58] sm:$0xff]
    %v4484 = vld [vmem:[%s4471 + $0x60] sm:$0xff]
    %v4485 = vld [vmem:[%s4471 + $0x68] sm:$0xff]
    %v4486 = vld [vmem:[%s4471 + $0x70] sm:$0xff]
    %v4487 = vld [vmem:[%s4471 + $0x78] sm:$0xff]
    %v4488 = vld [vmem:[%s4471 + $0x80] sm:$0xff]
    %v4489 = vld [vmem:[%s4471 + $0x88] sm:$0xff]
    %v4490 = vld [vmem:[%s4471 + $0x90] sm:$0xff]
    %v4491 = vld [vmem:[%s4471 + $0x98] sm:$0xff]
    %v4492 = vld [vmem:[%s4471 + $0xa0] sm:$0xff]
    %v4493 = vld [vmem:[%s4471 + $0xa8] sm:$0xff]
    %v4494 = vld [vmem:[%s4471 + $0xb0] sm:$0xff]
    %v4495 = vld [vmem:[%s4471 + $0xb8] sm:$0xff]
    %v4496 = vld [vmem:[%s4471 + $0xc0] sm:$0xff]
    %v4497 = vld [vmem:[%s4471 + $0xc8] sm:$0xff]
    %v4498 = vld [vmem:[%s4471 + $0xd0] sm:$0xff]
    %v4499 = vld [vmem:[%s4471 + $0xd8] sm:$0xff]
    %v4500 = vld [vmem:[%s4471 + $0xe0] sm:$0xff]
    %v4501 = vld [vmem:[%s4471 + $0xe8] sm:$0xff]
    %v4502 = vld [vmem:[%s4471 + $0xf0] sm:$0xff]
    %v4503 = vld [vmem:[%s4471 + $0xf8] sm:$0xff]
    %v4504 = vld [vmem:[%s4471 + $0x100] sm:$0xff]
    %v4505 = vld [vmem:[%s4471 + $0x108] sm:$0xff]
    %v4506 = vld [vmem:[%s4471 + $0x110] sm:$0xff]
    %v4507 = vld [vmem:[%s4471 + $0x118] sm:$0xff]
    %v4508 = vld [vmem:[%s4471 + $0x120] sm:$0xff]
    %v4509 = vld [vmem:[%s4471 + $0x128] sm:$0xff]
    %v4510 = vld [vmem:[%s4471 + $0x130] sm:$0xff]
    %v4511 = vld [vmem:[%s4471 + $0x138] sm:$0xff]
    %v4512 = vld [vmem:[%s4471 + $0x140] sm:$0xff]
    %v4513 = vld [vmem:[%s4471 + $0x148] sm:$0xff]
    %v4514 = vld [vmem:[%s4471 + $0x150] sm:$0xff]
    %v4515 = vld [vmem:[%s4471 + $0x158] sm:$0xff]
    %v4516 = vld [vmem:[%s4471 + $0x160] sm:$0xff]
    %v4517 = vld [vmem:[%s4471 + $0x168] sm:$0xff]
    %v4518 = vld [vmem:[%s4471 + $0x170] sm:$0xff]
    %v4519 = vld [vmem:[%s4471 + $0x178] sm:$0xff]
    %v4520 = vld [vmem:[%s4471 + $0x180] sm:$0xff]
    %v4521 = vld [vmem:[%s4471 + $0x188] sm:$0xff]
    %v4522 = vld [vmem:[%s4471 + $0x190] sm:$0xff]
    %v4523 = vld [vmem:[%s4471 + $0x198] sm:$0xff]
    %v4524 = vld [vmem:[%s4471 + $0x1a0] sm:$0xff]
    %v4525 = vld [vmem:[%s4471 + $0x1a8] sm:$0xff]
    %v4526 = vld [vmem:[%s4471 + $0x1b0] sm:$0xff]
    %v4527 = vld [vmem:[%s4471 + $0x1b8] sm:$0xff]
    %v4528 = vld [vmem:[%s4471 + $0x1c0] sm:$0xff]
    %v4529 = vld [vmem:[%s4471 + $0x1c8] sm:$0xff]
    %v4530 = vld [vmem:[%s4471 + $0x1d0] sm:$0xff]
    %v4531 = vld [vmem:[%s4471 + $0x1d8] sm:$0xff]
    %v4532 = vld [vmem:[%s4471 + $0x1e0] sm:$0xff]
    %v4533 = vld [vmem:[%s4471 + $0x1e8] sm:$0xff]
    %v4534 = vld [vmem:[%s4471 + $0x1f0] sm:$0xff]
    %v4535 = vld [vmem:[%s4471 + $0x1f8] sm:$0xff]
    %4536 = vmatprep.subr.mxu0 0.0
    %4537 = vmatpush1.msra.mxu0 %v177
    %4538 = vmatprep.subr.mxu0 0.0
    %4539 = vmatpush1.msra.mxu0 %v178
    %4540 = vmatprep.subr.mxu0 0.0
    %4541 = vmatpush1.msra.mxu0 %v179
    %4542 = vmatprep.subr.mxu0 0.0
    %4543 = vmatpush1.msra.mxu0 %v180
    %4544 = vmatprep.subr.mxu0 0.0
    %4545 = vmatpush1.msra.mxu0 %v181
    %4546 = vmatprep.subr.mxu0 0.0
    %4547 = vmatpush1.msra.mxu0 %v182
    %4548 = vmatprep.subr.mxu0 0.0
    %4549 = vmatpush1.msra.mxu0 %v183
    %4550 = vmatprep.subr.mxu0 0.0
    %4551 = vmatpush1.msra.mxu0 %v184
    %4552 = vmatprep.subr.mxu0 0.0
    %4553 = vmatpush1.msra.mxu0 %v185
    %4554 = vmatprep.subr.mxu0 0.0
    %4555 = vmatpush1.msra.mxu0 %v186
    %4556 = vmatprep.subr.mxu0 0.0
    %4557 = vmatpush1.msra.mxu0 %v187
    %4558 = vmatprep.subr.mxu0 0.0
    %4559 = vmatpush1.msra.mxu0 %v188
    %4560 = vmatprep.subr.mxu0 0.0
    %4561 = vmatpush1.msra.mxu0 %v189
    %4562 = vmatprep.subr.mxu0 0.0
    %4563 = vmatpush1.msra.mxu0 %v190
    %4564 = vmatprep.subr.mxu0 0.0
    %4565 = vmatpush1.msra.mxu0 %v191
    %4566 = vmatprep.subr.mxu0 0.0
    %4567 = vmatpush1.msra.mxu0 %v192
    %4568 = vmatprep.subr.mxu0 0.0
    %4569 = vmatpush1.msra.mxu0 %v193
    %4570 = vmatprep.subr.mxu0 0.0
    %4571 = vmatpush1.msra.mxu0 %v194
    %4572 = vmatprep.subr.mxu0 0.0
    %4573 = vmatpush1.msra.mxu0 %v195
    %4574 = vmatprep.subr.mxu0 0.0
    %4575 = vmatpush1.msra.mxu0 %v196
    %4576 = vmatprep.subr.mxu0 0.0
    %4577 = vmatpush1.msra.mxu0 %v197
    %4578 = vmatprep.subr.mxu0 0.0
    %4579 = vmatpush1.msra.mxu0 %v198
    %4580 = vmatprep.subr.mxu0 0.0
    %4581 = vmatpush1.msra.mxu0 %v199
    %4582 = vmatprep.subr.mxu0 0.0
    %4583 = vmatpush1.msra.mxu0 %v200
    %4584 = vmatprep.subr.mxu0 0.0
    %4585 = vmatpush1.msra.mxu0 %v201
    %4586 = vmatprep.subr.mxu0 0.0
    %4587 = vmatpush1.msra.mxu0 %v202
    %4588 = vmatprep.subr.mxu0 0.0
    %4589 = vmatpush1.msra.mxu0 %v203
    %4590 = vmatprep.subr.mxu0 0.0
    %4591 = vmatpush1.msra.mxu0 %v204
    %4592 = vmatprep.subr.mxu0 0.0
    %4593 = vmatpush1.msra.mxu0 %v205
    %4594 = vmatprep.subr.mxu0 0.0
    %4595 = vmatpush1.msra.mxu0 %v206
    %4596 = vmatprep.subr.mxu0 0.0
    %4597 = vmatpush1.msra.mxu0 %v207
    %4598 = vmatprep.subr.mxu0 0.0
    %4599 = vmatpush1.msra.mxu0 %v208
    %4600 = vmatprep.mubr.f32.mxu0 %v4473
    %4601 = vmatmul.mubr.f32.gmra.mrb[0].mxu0 %v4472
    %v4602 = vpop.f32.mrb[0].mxu0
    %v4603 = vadd.f32 0.0, %v4602
    %v4604 = vpop.f32.mrb[0].mxu0
    %4605 = vmatprep.mubr.f32.mxu0 %v4477
    %4606 = vmatmul.mubr.f32.gmra.mrb[0].mxu0 %v4476
    %v4607 = vpop.f32.mrb[0].mxu0
    %v4608 = vadd.f32 0.0, %v4607
    %v4609 = vpop.f32.mrb[0].mxu0
    %4610 = vmatprep.mubr.f32.mxu0 %v4481
    %4611 = vmatmul.mubr.f32.gmra.mrb[0].mxu0 %v4480
    %v4612 = vpop.f32.mrb[0].mxu0
    %v4613 = vadd.f32 0.0, %v4612
    %v4614 = vpop.f32.mrb[0].mxu0
    %4615 = vmatprep.mubr.f32.mxu0 %v4485
    %4616 = vmatmul.mubr.f32.gmra.mrb[0].mxu0 %v4484
    %v4617 = vpop.f32.mrb[0].mxu0
    %v4618 = vadd.f32 0.0, %v4617
    %v4619 = vpop.f32.mrb[0].mxu0
    %4620 = vmatprep.mubr.f32.mxu0 %v4489
    %4621 = vmatmul.mubr.f32.gmra.mrb[0].mxu0 %v4488
    %v4622 = vpop.f32.mrb[0].mxu0
    %v4623 = vadd.f32 0.0, %v4622
    %v4624 = vpop.f32.mrb[0].mxu0
    %4625 = vmatprep.mubr.f32.mxu0 %v4493
    %4626 = vmatmul.mubr.f32.gmra.mrb[0].mxu0 %v4492
    %v4627 = vpop.f32.mrb[0].mxu0
    %v4628 = vadd.f32 0.0, %v4627
    %v4629 = vpop.f32.mrb[0].mxu0
    %4630 = vmatprep.mubr.f32.mxu0 %v4497
    %4631 = vmatmul.mubr.f32.gmra.mrb[0].mxu0 %v4496
    %v4632 = vpop.f32.mrb[0].mxu0
    %v4633 = vadd.f32 0.0, %v4632
    %v4634 = vpop.f32.mrb[0].mxu0
    %4635 = vmatprep.mubr.f32.mxu0 %v4501
    %4636 = vmatmul.mubr.f32.gmra.mrb[0].mxu0 %v4500
    %v4637 = vpop.f32.mrb[0].mxu0
    %v4638 = vadd.f32 0.0, %v4637
    %v4639 = vpop.f32.mrb[0].mxu0
    %4640 = vmatprep.mubr.f32.mxu0 %v4505
    %4641 = vmatmul.mubr.f32.gmra.mrb[0].mxu0 %v4504
    %v4642 = vpop.f32.mrb[0].mxu0
    %v4643 = vadd.f32 0.0, %v4642
    %v4644 = vpop.f32.mrb[0].mxu0
    %4645 = vmatprep.mubr.f32.mxu0 %v4509
    %4646 = vmatmul.mubr.f32.gmra.mrb[0].mxu0 %v4508
    %v4647 = vpop.f32.mrb[0].mxu0
    %v4648 = vadd.f32 0.0, %v4647
    %v4649 = vpop.f32.mrb[0].mxu0
    %4650 = vmatprep.mubr.f32.mxu0 %v4513
    %4651 = vmatmul.mubr.f32.gmra.mrb[0].mxu0 %v4512
    %v4652 = vpop.f32.mrb[0].mxu0
    %v4653 = vadd.f32 0.0, %v4652
    %v4654 = vpop.f32.mrb[0].mxu0
    %4655 = vmatprep.mubr.f32.mxu0 %v4517
    %4656 = vmatmul.mubr.f32.gmra.mrb[0].mxu0 %v4516
    %v4657 = vpop.f32.mrb[0].mxu0
    %v4658 = vadd.f32 0.0, %v4657
    %v4659 = vpop.f32.mrb[0].mxu0
    %4660 = vmatprep.mubr.f32.mxu0 %v4521
    %4661 = vmatmul.mubr.f32.gmra.mrb[0].mxu0 %v4520
    %v4662 = vpop.f32.mrb[0].mxu0
    %v4663 = vadd.f32 0.0, %v4662
    %v4664 = vpop.f32.mrb[0].mxu0
    %4665 = vmatprep.mubr.f32.mxu0 %v4525
    %4666 = vmatmul.mubr.f32.gmra.mrb[0].mxu0 %v4524
    %v4667 = vpop.f32.mrb[0].mxu0
    %v4668 = vadd.f32 0.0, %v4667
    %v4669 = vpop.f32.mrb[0].mxu0
    %4670 = vmatprep.mubr.f32.mxu0 %v4529
    %4671 = vmatmul.mubr.f32.gmra.mrb[0].mxu0 %v4528
    %v4672 = vpop.f32.mrb[0].mxu0
    %v4673 = vadd.f32 0.0, %v4672
    %v4674 = vpop.f32.mrb[0].mxu0
    %4675 = vmatprep.mubr.f32.mxu0 %v4533
    %4676 = vmatmul.mubr.f32.gmra.mrb[0].mxu0 %v4532
    %v4677 = vpop.f32.mrb[0].mxu0
    %v4678 = vadd.f32 0.0, %v4677
    %v4679 = vpop.f32.mrb[0].mxu0
    %4680 = vdwg.mxu0
    %4681 = vmatprep.subr.mxu0 0.0
    %4682 = vmatpush1.msra.mxu0 %v209
    %4683 = vmatprep.subr.mxu0 0.0
    %4684 = vmatpush1.msra.mxu0 %v210
    %4685 = vmatprep.subr.mxu0 0.0
    %4686 = vmatpush1.msra.mxu0 %v211
    %4687 = vmatprep.subr.mxu0 0.0
    %4688 = vmatpush1.msra.mxu0 %v212
    %4689 = vmatprep.subr.mxu0 0.0
    %4690 = vmatpush1.msra.mxu0 %v213
    %4691 = vmatprep.subr.mxu0 0.0
    %4692 = vmatpush1.msra.mxu0 %v214
    %4693 = vmatprep.subr.mxu0 0.0
    %4694 = vmatpush1.msra.mxu0 %v215
    %4695 = vmatprep.subr.mxu0 0.0
    %4696 = vmatpush1.msra.mxu0 %v216
    %4697 = vmatprep.subr.mxu0 0.0
    %4698 = vmatpush1.msra.mxu0 %v217
    %4699 = vmatprep.subr.mxu0 0.0
    %4700 = vmatpush1.msra.mxu0 %v218
    %4701 = vmatprep.subr.mxu0 0.0
    %4702 = vmatpush1.msra.mxu0 %v219
    %4703 = vmatprep.subr.mxu0 0.0
    %4704 = vmatpush1.msra.mxu0 %v220
    %4705 = vmatprep.subr.mxu0 0.0
    %4706 = vmatpush1.msra.mxu0 %v221
    %4707 = vmatprep.subr.mxu0 0.0
    %4708 = vmatpush1.msra.mxu0 %v222
    %4709 = vmatprep.subr.mxu0 0.0
    %4710 = vmatpush1.msra.mxu0 %v223
    %4711 = vmatprep.subr.mxu0 0.0
    %4712 = vmatpush1.msra.mxu0 %v224
    %4713 = vmatprep.subr.mxu0 0.0
    %4714 = vmatpush1.msra.mxu0 %v225
    %4715 = vmatprep.subr.mxu0 0.0
    %4716 = vmatpush1.msra.mxu0 %v226
    %4717 = vmatprep.subr.mxu0 0.0
    %4718 = vmatpush1.msra.mxu0 %v227
    %4719 = vmatprep.subr.mxu0 0.0
    %4720 = vmatpush1.msra.mxu0 %v228
    %4721 = vmatprep.subr.mxu0 0.0
    %4722 = vmatpush1.msra.mxu0 %v229
    %4723 = vmatprep.subr.mxu0 0.0
    %4724 = vmatpush1.msra.mxu0 %v230
    %4725 = vmatprep.subr.mxu0 0.0
    %4726 = vmatpush1.msra.mxu0 %v231
    %4727 = vmatprep.subr.mxu0 0.0
    %4728 = vmatpush1.msra.mxu0 %v232
    %4729 = vmatprep.subr.mxu0 0.0
    %4730 = vmatpush1.msra.mxu0 %v233
    %4731 = vmatprep.subr.mxu0 0.0
    %4732 = vmatpush1.msra.mxu0 %v234
    %4733 = vmatprep.subr.mxu0 0.0
    %4734 = vmatpush1.msra.mxu0 %v235
    %4735 = vmatprep.subr.mxu0 0.0
    %4736 = vmatpush1.msra.mxu0 %v236
    %4737 = vmatprep.subr.mxu0 0.0
    %4738 = vmatpush1.msra.mxu0 %v237
    %4739 = vmatprep.subr.mxu0 0.0
    %4740 = vmatpush1.msra.mxu0 %v238
    %4741 = vmatprep.subr.mxu0 0.0
    %4742 = vmatpush1.msra.mxu0 %v239
    %4743 = vmatprep.subr.mxu0 0.0
    %4744 = vmatpush1.msra.mxu0 %v240
    %4745 = vmatprep.mubr.f32.mxu0 %v4475
    %4746 = vmatmul.mubr.f32.gmra.mrb[0].mxu0 %v4474
    %v4747 = vpop.f32.mrb[0].mxu0
    %v4748 = vadd.f32 %v4603, %v4747
    %v4749 = vpop.f32.mrb[0].mxu0
    %4750 = vmatprep.mubr.f32.mxu0 %v4479
    %4751 = vmatmul.mubr.f32.gmra.mrb[0].mxu0 %v4478
    %v4752 = vpop.f32.mrb[0].mxu0
    %v4753 = vadd.f32 %v4608, %v4752
    %v4754 = vpop.f32.mrb[0].mxu0
    %4755 = vmatprep.mubr.f32.mxu0 %v4483
    %4756 = vmatmul.mubr.f32.gmra.mrb[0].mxu0 %v4482
    %v4757 = vpop.f32.mrb[0].mxu0
    %v4758 = vadd.f32 %v4613, %v4757
    %v4759 = vpop.f32.mrb[0].mxu0
    %4760 = vmatprep.mubr.f32.mxu0 %v4487
    %4761 = vmatmul.mubr.f32.gmra.mrb[0].mxu0 %v4486
    %v4762 = vpop.f32.mrb[0].mxu0
    %v4763 = vadd.f32 %v4618, %v4762
    %v4764 = vpop.f32.mrb[0].mxu0
    %4765 = vmatprep.mubr.f32.mxu0 %v4491
    %4766 = vmatmul.mubr.f32.gmra.mrb[0].mxu0 %v4490
    %v4767 = vpop.f32.mrb[0].mxu0
    %v4768 = vadd.f32 %v4623, %v4767
    %v4769 = vpop.f32.mrb[0].mxu0
    %4770 = vmatprep.mubr.f32.mxu0 %v4495
    %4771 = vmatmul.mubr.f32.gmra.mrb[0].mxu0 %v4494
    %v4772 = vpop.f32.mrb[0].mxu0
    %v4773 = vadd.f32 %v4628, %v4772
    %v4774 = vpop.f32.mrb[0].mxu0
    %4775 = vmatprep.mubr.f32.mxu0 %v4499
    %4776 = vmatmul.mubr.f32.gmra.mrb[0].mxu0 %v4498
    %v4777 = vpop.f32.mrb[0].mxu0
    %v4778 = vadd.f32 %v4633, %v4777
    %v4779 = vpop.f32.mrb[0].mxu0
    %4780 = vmatprep.mubr.f32.mxu0 %v4503
    %4781 = vmatmul.mubr.f32.gmra.mrb[0].mxu0 %v4502
    %v4782 = vpop.f32.mrb[0].mxu0
    %v4783 = vadd.f32 %v4638, %v4782
    %v4784 = vpop.f32.mrb[0].mxu0
    %4785 = vmatprep.mubr.f32.mxu0 %v4507
    %4786 = vmatmul.mubr.f32.gmra.mrb[0].mxu0 %v4506
    %v4787 = vpop.f32.mrb[0].mxu0
    %v4788 = vadd.f32 %v4643, %v4787
    %v4789 = vpop.f32.mrb[0].mxu0
    %4790 = vmatprep.mubr.f32.mxu0 %v4511
    %4791 = vmatmul.mubr.f32.gmra.mrb[0].mxu0 %v4510
    %v4792 = vpop.f32.mrb[0].mxu0
    %v4793 = vadd.f32 %v4648, %v4792
    %v4794 = vpop.f32.mrb[0].mxu0
    %4795 = vmatprep.mubr.f32.mxu0 %v4515
    %4796 = vmatmul.mubr.f32.gmra.mrb[0].mxu0 %v4514
    %v4797 = vpop.f32.mrb[0].mxu0
    %v4798 = vadd.f32 %v4653, %v4797
    %v4799 = vpop.f32.mrb[0].mxu0
    %4800 = vmatprep.mubr.f32.mxu0 %v4519
    %4801 = vmatmul.mubr.f32.gmra.mrb[0].mxu0 %v4518
    %v4802 = vpop.f32.mrb[0].mxu0
    %v4803 = vadd.f32 %v4658, %v4802
    %v4804 = vpop.f32.mrb[0].mxu0
    %4805 = vmatprep.mubr.f32.mxu0 %v4523
    %4806 = vmatmul.mubr.f32.gmra.mrb[0].mxu0 %v4522
    %v4807 = vpop.f32.mrb[0].mxu0
    %v4808 = vadd.f32 %v4663, %v4807
    %v4809 = vpop.f32.mrb[0].mxu0
    %4810 = vmatprep.mubr.f32.mxu0 %v4527
    %4811 = vmatmul.mubr.f32.gmra.mrb[0].mxu0 %v4526
    %v4812 = vpop.f32.mrb[0].mxu0
    %v4813 = vadd.f32 %v4668, %v4812
    %v4814 = vpop.f32.mrb[0].mxu0
    %4815 = vmatprep.mubr.f32.mxu0 %v4531
    %4816 = vmatmul.mubr.f32.gmra.mrb[0].mxu0 %v4530
    %v4817 = vpop.f32.mrb[0].mxu0
    %v4818 = vadd.f32 %v4673, %v4817
    %v4819 = vpop.f32.mrb[0].mxu0
    %4820 = vmatprep.mubr.f32.mxu0 %v4535
    %4821 = vmatmul.mubr.f32.gmra.mrb[0].mxu0 %v4534
    %v4822 = vpop.f32.mrb[0].mxu0
    %v4823 = vadd.f32 %v4678, %v4822
    %v4824 = vpop.f32.mrb[0].mxu0
    %4825 = vdwg.mxu0
    %s4826 = scalar_lea.vmem [#allocation10], 1024
    %v4827 = vld [vmem:[%s4826] sm:$0xff]
    %v4828 = vld [vmem:[%s4826 + $0x8] sm:$0xff]
    %v4829 = vld [vmem:[%s4826 + $0x10] sm:$0xff]
    %v4830 = vld [vmem:[%s4826 + $0x18] sm:$0xff]
    %v4831 = vld [vmem:[%s4826 + $0x20] sm:$0xff]
    %v4832 = vld [vmem:[%s4826 + $0x28] sm:$0xff]
    %v4833 = vld [vmem:[%s4826 + $0x30] sm:$0xff]
    %v4834 = vld [vmem:[%s4826 + $0x38] sm:$0xff]
    %v4835 = vld [vmem:[%s4826 + $0x40] sm:$0xff]
    %v4836 = vld [vmem:[%s4826 + $0x48] sm:$0xff]
    %v4837 = vld [vmem:[%s4826 + $0x50] sm:$0xff]
    %v4838 = vld [vmem:[%s4826 + $0x58] sm:$0xff]
    %v4839 = vld [vmem:[%s4826 + $0x60] sm:$0xff]
    %v4840 = vld [vmem:[%s4826 + $0x68] sm:$0xff]
    %v4841 = vld [vmem:[%s4826 + $0x70] sm:$0xff]
    %v4842 = vld [vmem:[%s4826 + $0x78] sm:$0xff]
    %4843 = vmatprep.subr.mxu0 0.0
    %4844 = vmatpush1.msra.mxu0 %v4827
    %4845 = vmatprep.subr.mxu0 0.0
    %4846 = vmatpush1.msra.mxu0 %v4828
    %4847 = vmatprep.subr.mxu0 0.0
    %4848 = vmatpush1.msra.mxu0 %v4829
    %4849 = vmatprep.subr.mxu0 0.0
    %4850 = vmatpush1.msra.mxu0 %v4830
    %4851 = vmatprep.subr.mxu0 0.0
    %4852 = vmatpush1.msra.mxu0 %v4831
    %4853 = vmatprep.subr.mxu0 0.0
    %4854 = vmatpush1.msra.mxu0 %v4832
    %4855 = vmatprep.subr.mxu0 0.0
    %4856 = vmatpush1.msra.mxu0 %v4833
    %4857 = vmatprep.subr.mxu0 0.0
    %4858 = vmatpush1.msra.mxu0 %v4834
    %4859 = vmatprep.subr.mxu0 0.0
    %4860 = vmatpush1.msra.mxu0 %v4835
    %4861 = vmatprep.subr.mxu0 0.0
    %4862 = vmatpush1.msra.mxu0 %v4836
    %4863 = vmatprep.subr.mxu0 0.0
    %4864 = vmatpush1.msra.mxu0 %v4837
    %4865 = vmatprep.subr.mxu0 0.0
    %4866 = vmatpush1.msra.mxu0 %v4838
    %4867 = vmatprep.subr.mxu0 0.0
    %4868 = vmatpush1.msra.mxu0 %v4839
    %4869 = vmatprep.subr.mxu0 0.0
    %4870 = vmatpush1.msra.mxu0 %v4840
    %4871 = vmatprep.subr.mxu0 0.0
    %4872 = vmatpush1.msra.mxu0 %v4841
    %4873 = vmatprep.subr.mxu0 0.0
    %4874 = vmatpush1.msra.mxu0 %v4842
    %4875 = vmatprep.subr.mxu0 0.0
    %4876 = vmatpush1.msra.mxu0 0.0
    %4877 = vmatprep.subr.mxu0 0.0
    %4878 = vmatpush1.msra.mxu0 0.0
    %4879 = vmatprep.subr.mxu0 0.0
    %4880 = vmatpush1.msra.mxu0 0.0
    %4881 = vmatprep.subr.mxu0 0.0
    %4882 = vmatpush1.msra.mxu0 0.0
    %4883 = vmatprep.subr.mxu0 0.0
    %4884 = vmatpush1.msra.mxu0 0.0
    %4885 = vmatprep.subr.mxu0 0.0
    %4886 = vmatpush1.msra.mxu0 0.0
    %4887 = vmatprep.subr.mxu0 0.0
    %4888 = vmatpush1.msra.mxu0 0.0
    %4889 = vmatprep.subr.mxu0 0.0
    %4890 = vmatpush1.msra.mxu0 0.0
    %4891 = vmatprep.subr.mxu0 0.0
    %4892 = vmatpush1.msra.mxu0 0.0
    %4893 = vmatprep.subr.mxu0 0.0
    %4894 = vmatpush1.msra.mxu0 0.0
    %4895 = vmatprep.subr.mxu0 0.0
    %4896 = vmatpush1.msra.mxu0 0.0
    %4897 = vmatprep.subr.mxu0 0.0
    %4898 = vmatpush1.msra.mxu0 0.0
    %4899 = vmatprep.subr.mxu0 0.0
    %4900 = vmatpush1.msra.mxu0 0.0
    %4901 = vmatprep.subr.mxu0 0.0
    %4902 = vmatpush1.msra.mxu0 0.0
    %4903 = vmatprep.subr.mxu0 0.0
    %4904 = vmatpush1.msra.mxu0 0.0
    %4905 = vmatprep.subr.mxu0 0.0
    %4906 = vmatpush1.msra.mxu0 0.0
    %4907 = vmatprep.mubr.f32.mxu0 0.0
    %4908 = vmatmul.mubr.f32.gmra.mrb[0].mxu0 %v4748
    %v4909 = vpop.f32.mrb[0].mxu0
    %v4910 = vadd.f32 0.0, %v4909
    %v4911 = vpop.f32.mrb[0].mxu0
    %4912 = vmatprep.mubr.f32.mxu0 0.0
    %4913 = vmatmul.mubr.f32.gmra.mrb[0].mxu0 %v4753
    %v4914 = vpop.f32.mrb[0].mxu0
    %v4915 = vadd.f32 0.0, %v4914
    %v4916 = vpop.f32.mrb[0].mxu0
    %4917 = vmatprep.mubr.f32.mxu0 0.0
    %4918 = vmatmul.mubr.f32.gmra.mrb[0].mxu0 %v4758
    %v4919 = vpop.f32.mrb[0].mxu0
    %v4920 = vadd.f32 0.0, %v4919
    %v4921 = vpop.f32.mrb[0].mxu0
    %4922 = vmatprep.mubr.f32.mxu0 0.0
    %4923 = vmatmul.mubr.f32.gmra.mrb[0].mxu0 %v4763
    %v4924 = vpop.f32.mrb[0].mxu0
    %v4925 = vadd.f32 0.0, %v4924
    %v4926 = vpop.f32.mrb[0].mxu0
    %4927 = vmatprep.mubr.f32.mxu0 0.0
    %4928 = vmatmul.mubr.f32.gmra.mrb[0].mxu0 %v4768
    %v4929 = vpop.f32.mrb[0].mxu0
    %v4930 = vadd.f32 0.0, %v4929
    %v4931 = vpop.f32.mrb[0].mxu0
    %4932 = vmatprep.mubr.f32.mxu0 0.0
    %4933 = vmatmul.mubr.f32.gmra.mrb[0].mxu0 %v4773
    %v4934 = vpop.f32.mrb[0].mxu0
    %v4935 = vadd.f32 0.0, %v4934
    %v4936 = vpop.f32.mrb[0].mxu0
    %4937 = vmatprep.mubr.f32.mxu0 0.0
    %4938 = vmatmul.mubr.f32.gmra.mrb[0].mxu0 %v4778
    %v4939 = vpop.f32.mrb[0].mxu0
    %v4940 = vadd.f32 0.0, %v4939
    %v4941 = vpop.f32.mrb[0].mxu0
    %4942 = vmatprep.mubr.f32.mxu0 0.0
    %4943 = vmatmul.mubr.f32.gmra.mrb[0].mxu0 %v4783
    %v4944 = vpop.f32.mrb[0].mxu0
    %v4945 = vadd.f32 0.0, %v4944
    %v4946 = vpop.f32.mrb[0].mxu0
    %4947 = vmatprep.mubr.f32.mxu0 0.0
    %4948 = vmatmul.mubr.f32.gmra.mrb[0].mxu0 %v4788
    %v4949 = vpop.f32.mrb[0].mxu0
    %v4950 = vadd.f32 0.0, %v4949
    %v4951 = vpop.f32.mrb[0].mxu0
    %4952 = vmatprep.mubr.f32.mxu0 0.0
    %4953 = vmatmul.mubr.f32.gmra.mrb[0].mxu0 %v4793
    %v4954 = vpop.f32.mrb[0].mxu0
    %v4955 = vadd.f32 0.0, %v4954
    %v4956 = vpop.f32.mrb[0].mxu0
    %4957 = vmatprep.mubr.f32.mxu0 0.0
    %4958 = vmatmul.mubr.f32.gmra.mrb[0].mxu0 %v4798
    %v4959 = vpop.f32.mrb[0].mxu0
    %v4960 = vadd.f32 0.0, %v4959
    %v4961 = vpop.f32.mrb[0].mxu0
    %4962 = vmatprep.mubr.f32.mxu0 0.0
    %4963 = vmatmul.mubr.f32.gmra.mrb[0].mxu0 %v4803
    %v4964 = vpop.f32.mrb[0].mxu0
    %v4965 = vadd.f32 0.0, %v4964
    %v4966 = vpop.f32.mrb[0].mxu0
    %4967 = vmatprep.mubr.f32.mxu0 0.0
    %4968 = vmatmul.mubr.f32.gmra.mrb[0].mxu0 %v4808
    %v4969 = vpop.f32.mrb[0].mxu0
    %v4970 = vadd.f32 0.0, %v4969
    %v4971 = vpop.f32.mrb[0].mxu0
    %4972 = vmatprep.mubr.f32.mxu0 0.0
    %4973 = vmatmul.mubr.f32.gmra.mrb[0].mxu0 %v4813
    %v4974 = vpop.f32.mrb[0].mxu0
    %v4975 = vadd.f32 0.0, %v4974
    %v4976 = vpop.f32.mrb[0].mxu0
    %4977 = vmatprep.mubr.f32.mxu0 0.0
    %4978 = vmatmul.mubr.f32.gmra.mrb[0].mxu0 %v4818
    %v4979 = vpop.f32.mrb[0].mxu0
    %v4980 = vadd.f32 0.0, %v4979
    %v4981 = vpop.f32.mrb[0].mxu0
    %4982 = vmatprep.mubr.f32.mxu0 0.0
    %4983 = vmatmul.mubr.f32.gmra.mrb[0].mxu0 %v4823
    %v4984 = vpop.f32.mrb[0].mxu0
    %v4985 = vadd.f32 0.0, %v4984
    %v4986 = vpop.f32.mrb[0].mxu0
    %4987 = vdwg.mxu0
    %v4988 = vadd.f32 %v4455, %v4910
    %v4989 = vadd.f32 %v4456, %v4915
    %v4990 = vadd.f32 %v4457, %v4920
    %v4991 = vadd.f32 %v4458, %v4925
    %v4992 = vadd.f32 %v4459, %v4930
    %v4993 = vadd.f32 %v4460, %v4935
    %v4994 = vadd.f32 %v4461, %v4940
    %v4995 = vadd.f32 %v4462, %v4945
    %v4996 = vadd.f32 %v4463, %v4950
    %v4997 = vadd.f32 %v4464, %v4955
    %v4998 = vadd.f32 %v4465, %v4960
    %v4999 = vadd.f32 %v4466, %v4965
    %v5000 = vadd.f32 %v4467, %v4970
    %v5001 = vadd.f32 %v4468, %v4975
    %v5002 = vadd.f32 %v4469, %v4980
    %v5003 = vadd.f32 %v4470, %v4985
    %v5004 = vld [vmem:[#allocation11] sm:$0x1]
    %v5006 = vlaneseq
    %v5007 = vshrl.u32 %v5006, 7
    %v5008 = vsub.s32 0, %v5007
    %v5009 = vrot.slane %v5004, %v5008
    %v5011 = vadd.f32 %v4988, %v5009
    %v5012 = vadd.f32 %v4989, %v5009
    %v5013 = vadd.f32 %v4990, %v5009
    %v5014 = vadd.f32 %v4991, %v5009
    %v5015 = vadd.f32 %v4992, %v5009
    %v5016 = vadd.f32 %v4993, %v5009
    %v5017 = vadd.f32 %v4994, %v5009
    %v5018 = vadd.f32 %v4995, %v5009
    %v5019 = vadd.f32 %v4996, %v5009
    %v5020 = vadd.f32 %v4997, %v5009
    %v5021 = vadd.f32 %v4998, %v5009
    %v5022 = vadd.f32 %v4999, %v5009
    %v5023 = vadd.f32 %v5000, %v5009
    %v5024 = vadd.f32 %v5001, %v5009
    %v5025 = vadd.f32 %v5002, %v5009
    %v5026 = vadd.f32 %v5003, %v5009
    %vm5027 = vcmp.gt.f32.partialorder %v5011, 0.0
    %vm5028 = vcmp.gt.f32.partialorder %v5012, 0.0
    %vm5029 = vcmp.gt.f32.partialorder %v5013, 0.0
    %vm5030 = vcmp.gt.f32.partialorder %v5014, 0.0
    %vm5031 = vcmp.gt.f32.partialorder %v5015, 0.0
    %vm5032 = vcmp.gt.f32.partialorder %v5016, 0.0
    %vm5033 = vcmp.gt.f32.partialorder %v5017, 0.0
    %vm5034 = vcmp.gt.f32.partialorder %v5018, 0.0
    %vm5035 = vcmp.gt.f32.partialorder %v5019, 0.0
    %vm5036 = vcmp.gt.f32.partialorder %v5020, 0.0
    %vm5037 = vcmp.gt.f32.partialorder %v5021, 0.0
    %vm5038 = vcmp.gt.f32.partialorder %v5022, 0.0
    %vm5039 = vcmp.gt.f32.partialorder %v5023, 0.0
    %vm5040 = vcmp.gt.f32.partialorder %v5024, 0.0
    %vm5041 = vcmp.gt.f32.partialorder %v5025, 0.0
    %vm5042 = vcmp.gt.f32.partialorder %v5026, 0.0
    %v5043 = vmul.f32 %v5011, 0.2
    %v5044 = vmul.f32 %v5012, 0.2
    %v5045 = vmul.f32 %v5013, 0.2
    %v5046 = vmul.f32 %v5014, 0.2
    %v5047 = vmul.f32 %v5015, 0.2
    %v5048 = vmul.f32 %v5016, 0.2
    %v5049 = vmul.f32 %v5017, 0.2
    %v5050 = vmul.f32 %v5018, 0.2
    %v5051 = vmul.f32 %v5019, 0.2
    %v5052 = vmul.f32 %v5020, 0.2
    %v5053 = vmul.f32 %v5021, 0.2
    %v5054 = vmul.f32 %v5022, 0.2
    %v5055 = vmul.f32 %v5023, 0.2
    %v5056 = vmul.f32 %v5024, 0.2
    %v5057 = vmul.f32 %v5025, 0.2
    %v5058 = vmul.f32 %v5026, 0.2
    %v5059 = vsel %vm5027, %v5011, %v5043
    %v5060 = vsel %vm5028, %v5012, %v5044
    %v5061 = vsel %vm5029, %v5013, %v5045
    %v5062 = vsel %vm5030, %v5014, %v5046
    %v5063 = vsel %vm5031, %v5015, %v5047
    %v5064 = vsel %vm5032, %v5016, %v5048
    %v5065 = vsel %vm5033, %v5017, %v5049
    %v5066 = vsel %vm5034, %v5018, %v5050
    %v5067 = vsel %vm5035, %v5019, %v5051
    %v5068 = vsel %vm5036, %v5020, %v5052
    %v5069 = vsel %vm5037, %v5021, %v5053
    %v5070 = vsel %vm5038, %v5022, %v5054
    %v5071 = vsel %vm5039, %v5023, %v5055
    %v5072 = vsel %vm5040, %v5024, %v5056
    %v5073 = vsel %vm5041, %v5025, %v5057
    %v5074 = vsel %vm5042, %v5026, %v5058
    %v5075 = vld [vmem:[#allocation13] sm:$0x1]
    %v5077 = vlaneseq
    %v5078 = vshrl.u32 %v5077, 7
    %v5079 = vsub.s32 0, %v5078
    %v5080 = vrot.slane %v5075, %v5079
    %v5082 = vmul.f32 %v5059, %v5080
    %v5083 = vmul.f32 %v5060, %v5080
    %v5084 = vmul.f32 %v5061, %v5080
    %v5085 = vmul.f32 %v5062, %v5080
    %v5086 = vmul.f32 %v5063, %v5080
    %v5087 = vmul.f32 %v5064, %v5080
    %v5088 = vmul.f32 %v5065, %v5080
    %v5089 = vmul.f32 %v5066, %v5080
    %v5090 = vmul.f32 %v5067, %v5080
    %v5091 = vmul.f32 %v5068, %v5080
    %v5092 = vmul.f32 %v5069, %v5080
    %v5093 = vmul.f32 %v5070, %v5080
    %v5094 = vmul.f32 %v5071, %v5080
    %v5095 = vmul.f32 %v5072, %v5080
    %v5096 = vmul.f32 %v5073, %v5080
    %v5097 = vmul.f32 %v5074, %v5080
    %v5098 = vld [vmem:[#allocation14] sm:$0x1]
    %v5100 = vlaneseq
    %v5101 = vshrl.u32 %v5100, 7
    %v5102 = vsub.s32 0, %v5101
    %v5103 = vrot.slane %v5098, %v5102
    %v5105 = vadd.f32 %v5082, %v5103
    %v5106 = vadd.f32 %v5083, %v5103
    %v5107 = vadd.f32 %v5084, %v5103
    %v5108 = vadd.f32 %v5085, %v5103
    %v5109 = vadd.f32 %v5086, %v5103
    %v5110 = vadd.f32 %v5087, %v5103
    %v5111 = vadd.f32 %v5088, %v5103
    %v5112 = vadd.f32 %v5089, %v5103
    %v5113 = vadd.f32 %v5090, %v5103
    %v5114 = vadd.f32 %v5091, %v5103
    %v5115 = vadd.f32 %v5092, %v5103
    %v5116 = vadd.f32 %v5093, %v5103
    %v5117 = vadd.f32 %v5094, %v5103
    %v5118 = vadd.f32 %v5095, %v5103
    %v5119 = vadd.f32 %v5096, %v5103
    %v5120 = vadd.f32 %v5097, %v5103
    %v5121 = vld [vmem:[#allocation5] sm:$0xff]
    %v5122 = vld [vmem:[#allocation5 + $0x8] sm:$0xff]
    %v5123 = vld [vmem:[#allocation5 + $0x10] sm:$0xff]
    %v5124 = vld [vmem:[#allocation5 + $0x18] sm:$0xff]
    %5125 = vmatprep.subr.mxu0 0.0
    %5126 = vmatpush1.msra.mxu0 %v5105
    %5127 = vmatprep.subr.mxu0 0.0
    %5128 = vmatpush1.msra.mxu0 %v5106
    %5129 = vmatprep.subr.mxu0 0.0
    %5130 = vmatpush1.msra.mxu0 %v5107
    %5131 = vmatprep.subr.mxu0 0.0
    %5132 = vmatpush1.msra.mxu0 %v5108
    %5133 = vmatprep.subr.mxu0 0.0
    %5134 = vmatpush1.msra.mxu0 %v5109
    %5135 = vmatprep.subr.mxu0 0.0
    %5136 = vmatpush1.msra.mxu0 %v5110
    %5137 = vmatprep.subr.mxu0 0.0
    %5138 = vmatpush1.msra.mxu0 %v5111
    %5139 = vmatprep.subr.mxu0 0.0
    %5140 = vmatpush1.msra.mxu0 %v5112
    %5141 = vmatprep.subr.mxu0 0.0
    %5142 = vmatpush1.msra.mxu0 %v5113
    %5143 = vmatprep.subr.mxu0 0.0
    %5144 = vmatpush1.msra.mxu0 %v5114
    %5145 = vmatprep.subr.mxu0 0.0
    %5146 = vmatpush1.msra.mxu0 %v5115
    %5147 = vmatprep.subr.mxu0 0.0
    %5148 = vmatpush1.msra.mxu0 %v5116
    %5149 = vmatprep.subr.mxu0 0.0
    %5150 = vmatpush1.msra.mxu0 %v5117
    %5151 = vmatprep.subr.mxu0 0.0
    %5152 = vmatpush1.msra.mxu0 %v5118
    %5153 = vmatprep.subr.mxu0 0.0
    %5154 = vmatpush1.msra.mxu0 %v5119
    %5155 = vmatprep.subr.mxu0 0.0
    %5156 = vmatpush1.msra.mxu0 %v5120
    %5157 = vmatprep.subr.mxu0 0.0
    %5158 = vmatpush1.msra.mxu0 0.0
    %5159 = vmatprep.subr.mxu0 0.0
    %5160 = vmatpush1.msra.mxu0 0.0
    %5161 = vmatprep.subr.mxu0 0.0
    %5162 = vmatpush1.msra.mxu0 0.0
    %5163 = vmatprep.subr.mxu0 0.0
    %5164 = vmatpush1.msra.mxu0 0.0
    %5165 = vmatprep.subr.mxu0 0.0
    %5166 = vmatpush1.msra.mxu0 0.0
    %5167 = vmatprep.subr.mxu0 0.0
    %5168 = vmatpush1.msra.mxu0 0.0
    %5169 = vmatprep.subr.mxu0 0.0
    %5170 = vmatpush1.msra.mxu0 0.0
    %5171 = vmatprep.subr.mxu0 0.0
    %5172 = vmatpush1.msra.mxu0 0.0
    %5173 = vmatprep.subr.mxu0 0.0
    %5174 = vmatpush1.msra.mxu0 0.0
    %5175 = vmatprep.subr.mxu0 0.0
    %5176 = vmatpush1.msra.mxu0 0.0
    %5177 = vmatprep.subr.mxu0 0.0
    %5178 = vmatpush1.msra.mxu0 0.0
    %5179 = vmatprep.subr.mxu0 0.0
    %5180 = vmatpush1.msra.mxu0 0.0
    %5181 = vmatprep.subr.mxu0 0.0
    %5182 = vmatpush1.msra.mxu0 0.0
    %5183 = vmatprep.subr.mxu0 0.0
    %5184 = vmatpush1.msra.mxu0 0.0
    %5185 = vmatprep.subr.mxu0 0.0
    %5186 = vmatpush1.msra.mxu0 0.0
    %5187 = vmatprep.subr.mxu0 0.0
    %5188 = vmatpush1.msra.mxu0 0.0
    %5189 = vmatprep.mubr.f32.mxu0 0.0
    %5190 = vmatmul.mubr.f32.gmra.mrb[0].mxu0 %v5121
    %v5191 = vpop.f32.mrb[0].mxu0
    %v5192 = vadd.f32 0.0, %v5191
    %v5193 = vpop.f32.mrb[0].mxu0
    %5194 = vmatprep.mubr.f32.mxu0 0.0
    %5195 = vmatmul.mubr.f32.gmra.mrb[0].mxu0 %v5122
    %v5196 = vpop.f32.mrb[0].mxu0
    %v5197 = vadd.f32 0.0, %v5196
    %v5198 = vpop.f32.mrb[0].mxu0
    %5199 = vmatprep.mubr.f32.mxu0 0.0
    %5200 = vmatmul.mubr.f32.gmra.mrb[0].mxu0 %v5123
    %v5201 = vpop.f32.mrb[0].mxu0
    %v5202 = vadd.f32 0.0, %v5201
    %v5203 = vpop.f32.mrb[0].mxu0
    %5204 = vmatprep.mubr.f32.mxu0 0.0
    %5205 = vmatmul.mubr.f32.gmra.mrb[0].mxu0 %v5124
    %v5206 = vpop.f32.mrb[0].mxu0
    %v5207 = vadd.f32 0.0, %v5206
    %v5208 = vpop.f32.mrb[0].mxu0
    %5209 = vdwg.mxu0
    %s5210 = scalar_lea.vmem [#allocation10], 1152
    %v5211 = vld [vmem:[%s5210] sm:$0xff]
    %v5212 = vld [vmem:[%s5210 + $0x8] sm:$0xff]
    %v5213 = vld [vmem:[%s5210 + $0x10] sm:$0xff]
    %v5214 = vld [vmem:[%s5210 + $0x18] sm:$0xff]
    %v5215 = vld [vmem:[%s5210 + $0x20] sm:$0xff]
    %v5216 = vld [vmem:[%s5210 + $0x28] sm:$0xff]
    %v5217 = vld [vmem:[%s5210 + $0x30] sm:$0xff]
    %v5218 = vld [vmem:[%s5210 + $0x38] sm:$0xff]
    %v5219 = vld [vmem:[%s5210 + $0x40] sm:$0xff]
    %v5220 = vld [vmem:[%s5210 + $0x48] sm:$0xff]
    %v5221 = vld [vmem:[%s5210 + $0x50] sm:$0xff]
    %v5222 = vld [vmem:[%s5210 + $0x58] sm:$0xff]
    %v5223 = vld [vmem:[%s5210 + $0x60] sm:$0xff]
    %v5224 = vld [vmem:[%s5210 + $0x68] sm:$0xff]
    %v5225 = vld [vmem:[%s5210 + $0x70] sm:$0xff]
    %v5226 = vld [vmem:[%s5210 + $0x78] sm:$0xff]
    %s5227 = scalar_lea.vmem [#allocation5], 32
    %v5228 = vld [vmem:[%s5227] sm:$0xff]
    %v5229 = vld [vmem:[%s5227 + $0x8] sm:$0xff]
    %v5230 = vld [vmem:[%s5227 + $0x10] sm:$0xff]
    %v5231 = vld [vmem:[%s5227 + $0x18] sm:$0xff]
    %5232 = vmatprep.subr.mxu0 0.0
    %5233 = vmatpush1.msra.mxu0 %v5105
    %5234 = vmatprep.subr.mxu0 0.0
    %5235 = vmatpush1.msra.mxu0 %v5106
    %5236 = vmatprep.subr.mxu0 0.0
    %5237 = vmatpush1.msra.mxu0 %v5107
    %5238 = vmatprep.subr.mxu0 0.0
    %5239 = vmatpush1.msra.mxu0 %v5108
    %5240 = vmatprep.subr.mxu0 0.0
    %5241 = vmatpush1.msra.mxu0 %v5109
    %5242 = vmatprep.subr.mxu0 0.0
    %5243 = vmatpush1.msra.mxu0 %v5110
    %5244 = vmatprep.subr.mxu0 0.0
    %5245 = vmatpush1.msra.mxu0 %v5111
    %5246 = vmatprep.subr.mxu0 0.0
    %5247 = vmatpush1.msra.mxu0 %v5112
    %5248 = vmatprep.subr.mxu0 0.0
    %5249 = vmatpush1.msra.mxu0 %v5113
    %5250 = vmatprep.subr.mxu0 0.0
    %5251 = vmatpush1.msra.mxu0 %v5114
    %5252 = vmatprep.subr.mxu0 0.0
    %5253 = vmatpush1.msra.mxu0 %v5115
    %5254 = vmatprep.subr.mxu0 0.0
    %5255 = vmatpush1.msra.mxu0 %v5116
    %5256 = vmatprep.subr.mxu0 0.0
    %5257 = vmatpush1.msra.mxu0 %v5117
    %5258 = vmatprep.subr.mxu0 0.0
    %5259 = vmatpush1.msra.mxu0 %v5118
    %5260 = vmatprep.subr.mxu0 0.0
    %5261 = vmatpush1.msra.mxu0 %v5119
    %5262 = vmatprep.subr.mxu0 0.0
    %5263 = vmatpush1.msra.mxu0 %v5120
    %5264 = vmatprep.subr.mxu0 0.0
    %5265 = vmatpush1.msra.mxu0 0.0
    %5266 = vmatprep.subr.mxu0 0.0
    %5267 = vmatpush1.msra.mxu0 0.0
    %5268 = vmatprep.subr.mxu0 0.0
    %5269 = vmatpush1.msra.mxu0 0.0
    %5270 = vmatprep.subr.mxu0 0.0
    %5271 = vmatpush1.msra.mxu0 0.0
    %5272 = vmatprep.subr.mxu0 0.0
    %5273 = vmatpush1.msra.mxu0 0.0
    %5274 = vmatprep.subr.mxu0 0.0
    %5275 = vmatpush1.msra.mxu0 0.0
    %5276 = vmatprep.subr.mxu0 0.0
    %5277 = vmatpush1.msra.mxu0 0.0
    %5278 = vmatprep.subr.mxu0 0.0
    %5279 = vmatpush1.msra.mxu0 0.0
    %5280 = vmatprep.subr.mxu0 0.0
    %5281 = vmatpush1.msra.mxu0 0.0
    %5282 = vmatprep.subr.mxu0 0.0
    %5283 = vmatpush1.msra.mxu0 0.0
    %5284 = vmatprep.subr.mxu0 0.0
    %5285 = vmatpush1.msra.mxu0 0.0
    %5286 = vmatprep.subr.mxu0 0.0
    %5287 = vmatpush1.msra.mxu0 0.0
    %5288 = vmatprep.subr.mxu0 0.0
    %5289 = vmatpush1.msra.mxu0 0.0
    %5290 = vmatprep.subr.mxu0 0.0
    %5291 = vmatpush1.msra.mxu0 0.0
    %5292 = vmatprep.subr.mxu0 0.0
    %5293 = vmatpush1.msra.mxu0 0.0
    %5294 = vmatprep.subr.mxu0 0.0
    %5295 = vmatpush1.msra.mxu0 0.0
    %5296 = vmatprep.mubr.f32.mxu0 0.0
    %5297 = vmatmul.mubr.f32.gmra.mrb[0].mxu0 %v5228
    %v5298 = vpop.f32.mrb[0].mxu0
    %v5299 = vadd.f32 0.0, %v5298
    %v5300 = vpop.f32.mrb[0].mxu0
    %5301 = vmatprep.mubr.f32.mxu0 0.0
    %5302 = vmatmul.mubr.f32.gmra.mrb[0].mxu0 %v5229
    %v5303 = vpop.f32.mrb[0].mxu0
    %v5304 = vadd.f32 0.0, %v5303
    %v5305 = vpop.f32.mrb[0].mxu0
    %5306 = vmatprep.mubr.f32.mxu0 0.0
    %5307 = vmatmul.mubr.f32.gmra.mrb[0].mxu0 %v5230
    %v5308 = vpop.f32.mrb[0].mxu0
    %v5309 = vadd.f32 0.0, %v5308
    %v5310 = vpop.f32.mrb[0].mxu0
    %5311 = vmatprep.mubr.f32.mxu0 0.0
    %5312 = vmatmul.mubr.f32.gmra.mrb[0].mxu0 %v5231
    %v5313 = vpop.f32.mrb[0].mxu0
    %v5314 = vadd.f32 0.0, %v5313
    %v5315 = vpop.f32.mrb[0].mxu0
    %5316 = vdwg.mxu0
    %s5317 = scalar_lea.vmem [#allocation10], 1280
    %v5318 = vld [vmem:[%s5317] sm:$0xff]
    %v5319 = vld [vmem:[%s5317 + $0x8] sm:$0xff]
    %v5320 = vld [vmem:[%s5317 + $0x10] sm:$0xff]
    %v5321 = vld [vmem:[%s5317 + $0x18] sm:$0xff]
    %v5322 = vld [vmem:[%s5317 + $0x20] sm:$0xff]
    %v5323 = vld [vmem:[%s5317 + $0x28] sm:$0xff]
    %v5324 = vld [vmem:[%s5317 + $0x30] sm:$0xff]
    %v5325 = vld [vmem:[%s5317 + $0x38] sm:$0xff]
    %v5326 = vld [vmem:[%s5317 + $0x40] sm:$0xff]
    %v5327 = vld [vmem:[%s5317 + $0x48] sm:$0xff]
    %v5328 = vld [vmem:[%s5317 + $0x50] sm:$0xff]
    %v5329 = vld [vmem:[%s5317 + $0x58] sm:$0xff]
    %v5330 = vld [vmem:[%s5317 + $0x60] sm:$0xff]
    %v5331 = vld [vmem:[%s5317 + $0x68] sm:$0xff]
    %v5332 = vld [vmem:[%s5317 + $0x70] sm:$0xff]
    %v5333 = vld [vmem:[%s5317 + $0x78] sm:$0xff]
    %5334 = vmatprep.subr.mxu0 0.0
    %5335 = vmatpush1.msra.mxu0 %v5318
    %5336 = vmatprep.subr.mxu0 0.0
    %5337 = vmatpush1.msra.mxu0 %v5319
    %5338 = vmatprep.subr.mxu0 0.0
    %5339 = vmatpush1.msra.mxu0 %v5320
    %5340 = vmatprep.subr.mxu0 0.0
    %5341 = vmatpush1.msra.mxu0 %v5321
    %5342 = vmatprep.subr.mxu0 0.0
    %5343 = vmatpush1.msra.mxu0 %v5322
    %5344 = vmatprep.subr.mxu0 0.0
    %5345 = vmatpush1.msra.mxu0 %v5323
    %5346 = vmatprep.subr.mxu0 0.0
    %5347 = vmatpush1.msra.mxu0 %v5324
    %5348 = vmatprep.subr.mxu0 0.0
    %5349 = vmatpush1.msra.mxu0 %v5325
    %5350 = vmatprep.subr.mxu0 0.0
    %5351 = vmatpush1.msra.mxu0 %v5326
    %5352 = vmatprep.subr.mxu0 0.0
    %5353 = vmatpush1.msra.mxu0 %v5327
    %5354 = vmatprep.subr.mxu0 0.0
    %5355 = vmatpush1.msra.mxu0 %v5328
    %5356 = vmatprep.subr.mxu0 0.0
    %5357 = vmatpush1.msra.mxu0 %v5329
    %5358 = vmatprep.subr.mxu0 0.0
    %5359 = vmatpush1.msra.mxu0 %v5330
    %5360 = vmatprep.subr.mxu0 0.0
    %5361 = vmatpush1.msra.mxu0 %v5331
    %5362 = vmatprep.subr.mxu0 0.0
    %5363 = vmatpush1.msra.mxu0 %v5332
    %5364 = vmatprep.subr.mxu0 0.0
    %5365 = vmatpush1.msra.mxu0 %v5333
    %5366 = vmatprep.subr.mxu0 0.0
    %5367 = vmatpush1.msra.mxu0 0.0
    %5368 = vmatprep.subr.mxu0 0.0
    %5369 = vmatpush1.msra.mxu0 0.0
    %5370 = vmatprep.subr.mxu0 0.0
    %5371 = vmatpush1.msra.mxu0 0.0
    %5372 = vmatprep.subr.mxu0 0.0
    %5373 = vmatpush1.msra.mxu0 0.0
    %5374 = vmatprep.subr.mxu0 0.0
    %5375 = vmatpush1.msra.mxu0 0.0
    %5376 = vmatprep.subr.mxu0 0.0
    %5377 = vmatpush1.msra.mxu0 0.0
    %5378 = vmatprep.subr.mxu0 0.0
    %5379 = vmatpush1.msra.mxu0 0.0
    %5380 = vmatprep.subr.mxu0 0.0
    %5381 = vmatpush1.msra.mxu0 0.0
    %5382 = vmatprep.subr.mxu0 0.0
    %5383 = vmatpush1.msra.mxu0 0.0
    %5384 = vmatprep.subr.mxu0 0.0
    %5385 = vmatpush1.msra.mxu0 0.0
    %5386 = vmatprep.subr.mxu0 0.0
    %5387 = vmatpush1.msra.mxu0 0.0
    %5388 = vmatprep.subr.mxu0 0.0
    %5389 = vmatpush1.msra.mxu0 0.0
    %5390 = vmatprep.subr.mxu0 0.0
    %5391 = vmatpush1.msra.mxu0 0.0
    %5392 = vmatprep.subr.mxu0 0.0
    %5393 = vmatpush1.msra.mxu0 0.0
    %5394 = vmatprep.subr.mxu0 0.0
    %5395 = vmatpush1.msra.mxu0 0.0
    %5396 = vmatprep.subr.mxu0 0.0
    %5397 = vmatpush1.msra.mxu0 0.0
    %5398 = vmatprep.mubr.f32.mxu0 0.0
    %5399 = vmatmul.mubr.f32.gmra.mrb[0].mxu0 %v5299
    %v5400 = vpop.f32.mrb[0].mxu0
    %v5401 = vadd.f32 0.0, %v5400
    %v5402 = vpop.f32.mrb[0].mxu0
    %5403 = vmatprep.mubr.f32.mxu0 0.0
    %5404 = vmatmul.mubr.f32.gmra.mrb[0].mxu0 %v5304
    %v5405 = vpop.f32.mrb[0].mxu0
    %v5406 = vadd.f32 0.0, %v5405
    %v5407 = vpop.f32.mrb[0].mxu0
    %5408 = vmatprep.mubr.f32.mxu0 0.0
    %5409 = vmatmul.mubr.f32.gmra.mrb[0].mxu0 %v5309
    %v5410 = vpop.f32.mrb[0].mxu0
    %v5411 = vadd.f32 0.0, %v5410
    %v5412 = vpop.f32.mrb[0].mxu0
    %5413 = vmatprep.mubr.f32.mxu0 0.0
    %5414 = vmatmul.mubr.f32.gmra.mrb[0].mxu0 %v5314
    %v5415 = vpop.f32.mrb[0].mxu0
    %v5416 = vadd.f32 0.0, %v5415
    %v5417 = vpop.f32.mrb[0].mxu0
    %5418 = vdwg.mxu0
    %5419 = vmatprep.subr.mxu0 0.0
    %5420 = vmatpush1.msra.mxu0 %v5211
    %5421 = vmatprep.subr.mxu0 0.0
    %5422 = vmatpush1.msra.mxu0 %v5212
    %5423 = vmatprep.subr.mxu0 0.0
    %5424 = vmatpush1.msra.mxu0 %v5213
    %5425 = vmatprep.subr.mxu0 0.0
    %5426 = vmatpush1.msra.mxu0 %v5214
    %5427 = vmatprep.subr.mxu0 0.0
    %5428 = vmatpush1.msra.mxu0 %v5215
    %5429 = vmatprep.subr.mxu0 0.0
    %5430 = vmatpush1.msra.mxu0 %v5216
    %5431 = vmatprep.subr.mxu0 0.0
    %5432 = vmatpush1.msra.mxu0 %v5217
    %5433 = vmatprep.subr.mxu0 0.0
    %5434 = vmatpush1.msra.mxu0 %v5218
    %5435 = vmatprep.subr.mxu0 0.0
    %5436 = vmatpush1.msra.mxu0 %v5219
    %5437 = vmatprep.subr.mxu0 0.0
    %5438 = vmatpush1.msra.mxu0 %v5220
    %5439 = vmatprep.subr.mxu0 0.0
    %5440 = vmatpush1.msra.mxu0 %v5221
    %5441 = vmatprep.subr.mxu0 0.0
    %5442 = vmatpush1.msra.mxu0 %v5222
    %5443 = vmatprep.subr.mxu0 0.0
    %5444 = vmatpush1.msra.mxu0 %v5223
    %5445 = vmatprep.subr.mxu0 0.0
    %5446 = vmatpush1.msra.mxu0 %v5224
    %5447 = vmatprep.subr.mxu0 0.0
    %5448 = vmatpush1.msra.mxu0 %v5225
    %5449 = vmatprep.subr.mxu0 0.0
    %5450 = vmatpush1.msra.mxu0 %v5226
    %5451 = vmatprep.subr.mxu0 0.0
    %5452 = vmatpush1.msra.mxu0 0.0
    %5453 = vmatprep.subr.mxu0 0.0
    %5454 = vmatpush1.msra.mxu0 0.0
    %5455 = vmatprep.subr.mxu0 0.0
    %5456 = vmatpush1.msra.mxu0 0.0
    %5457 = vmatprep.subr.mxu0 0.0
    %5458 = vmatpush1.msra.mxu0 0.0
    %5459 = vmatprep.subr.mxu0 0.0
    %5460 = vmatpush1.msra.mxu0 0.0
    %5461 = vmatprep.subr.mxu0 0.0
    %5462 = vmatpush1.msra.mxu0 0.0
    %5463 = vmatprep.subr.mxu0 0.0
    %5464 = vmatpush1.msra.mxu0 0.0
    %5465 = vmatprep.subr.mxu0 0.0
    %5466 = vmatpush1.msra.mxu0 0.0
    %5467 = vmatprep.subr.mxu0 0.0
    %5468 = vmatpush1.msra.mxu0 0.0
    %5469 = vmatprep.subr.mxu0 0.0
    %5470 = vmatpush1.msra.mxu0 0.0
    %5471 = vmatprep.subr.mxu0 0.0
    %5472 = vmatpush1.msra.mxu0 0.0
    %5473 = vmatprep.subr.mxu0 0.0
    %5474 = vmatpush1.msra.mxu0 0.0
    %5475 = vmatprep.subr.mxu0 0.0
    %5476 = vmatpush1.msra.mxu0 0.0
    %5477 = vmatprep.subr.mxu0 0.0
    %5478 = vmatpush1.msra.mxu0 0.0
    %5479 = vmatprep.subr.mxu0 0.0
    %5480 = vmatpush1.msra.mxu0 0.0
    %5481 = vmatprep.subr.mxu0 0.0
    %5482 = vmatpush1.msra.mxu0 0.0
    %5483 = vmatprep.mubr.f32.mxu0 0.0
    %5484 = vmatmul.mubr.f32.gmra.mrb[0].mxu0 %v5192
    %v5485 = vpop.f32.mrb[0].mxu0
    %v5486 = vadd.f32 %v5401, %v5485
    %v5487 = vpop.f32.mrb[0].mxu0
    %5488 = vmatprep.mubr.f32.mxu0 0.0
    %5489 = vmatmul.mubr.f32.gmra.mrb[0].mxu0 %v5197
    %v5490 = vpop.f32.mrb[0].mxu0
    %v5491 = vadd.f32 %v5406, %v5490
    %v5492 = vpop.f32.mrb[0].mxu0
    %5493 = vmatprep.mubr.f32.mxu0 0.0
    %5494 = vmatmul.mubr.f32.gmra.mrb[0].mxu0 %v5202
    %v5495 = vpop.f32.mrb[0].mxu0
    %v5496 = vadd.f32 %v5411, %v5495
    %v5497 = vpop.f32.mrb[0].mxu0
    %5498 = vmatprep.mubr.f32.mxu0 0.0
    %5499 = vmatmul.mubr.f32.gmra.mrb[0].mxu0 %v5207
    %v5500 = vpop.f32.mrb[0].mxu0
    %v5501 = vadd.f32 %v5416, %v5500
    %v5502 = vpop.f32.mrb[0].mxu0
    %5503 = vdwg.mxu0
    %s5504 = scalar_lea.vmem [#allocation5], 64
    %v5505 = vld [vmem:[%s5504] sm:$0xff]
    %v5506 = vld [vmem:[%s5504 + $0x8] sm:$0xff]
    %v5507 = vld [vmem:[%s5504 + $0x10] sm:$0xff]
    %v5508 = vld [vmem:[%s5504 + $0x18] sm:$0xff]
    %5509 = vmatprep.subr.mxu0 0.0
    %5510 = vmatpush1.msra.mxu0 %v5105
    %5511 = vmatprep.subr.mxu0 0.0
    %5512 = vmatpush1.msra.mxu0 %v5106
    %5513 = vmatprep.subr.mxu0 0.0
    %5514 = vmatpush1.msra.mxu0 %v5107
    %5515 = vmatprep.subr.mxu0 0.0
    %5516 = vmatpush1.msra.mxu0 %v5108
    %5517 = vmatprep.subr.mxu0 0.0
    %5518 = vmatpush1.msra.mxu0 %v5109
    %5519 = vmatprep.subr.mxu0 0.0
    %5520 = vmatpush1.msra.mxu0 %v5110
    %5521 = vmatprep.subr.mxu0 0.0
    %5522 = vmatpush1.msra.mxu0 %v5111
    %5523 = vmatprep.subr.mxu0 0.0
    %5524 = vmatpush1.msra.mxu0 %v5112
    %5525 = vmatprep.subr.mxu0 0.0
    %5526 = vmatpush1.msra.mxu0 %v5113
    %5527 = vmatprep.subr.mxu0 0.0
    %5528 = vmatpush1.msra.mxu0 %v5114
    %5529 = vmatprep.subr.mxu0 0.0
    %5530 = vmatpush1.msra.mxu0 %v5115
    %5531 = vmatprep.subr.mxu0 0.0
    %5532 = vmatpush1.msra.mxu0 %v5116
    %5533 = vmatprep.subr.mxu0 0.0
    %5534 = vmatpush1.msra.mxu0 %v5117
    %5535 = vmatprep.subr.mxu0 0.0
    %5536 = vmatpush1.msra.mxu0 %v5118
    %5537 = vmatprep.subr.mxu0 0.0
    %5538 = vmatpush1.msra.mxu0 %v5119
    %5539 = vmatprep.subr.mxu0 0.0
    %5540 = vmatpush1.msra.mxu0 %v5120
    %5541 = vmatprep.subr.mxu0 0.0
    %5542 = vmatpush1.msra.mxu0 0.0
    %5543 = vmatprep.subr.mxu0 0.0
    %5544 = vmatpush1.msra.mxu0 0.0
    %5545 = vmatprep.subr.mxu0 0.0
    %5546 = vmatpush1.msra.mxu0 0.0
    %5547 = vmatprep.subr.mxu0 0.0
    %5548 = vmatpush1.msra.mxu0 0.0
    %5549 = vmatprep.subr.mxu0 0.0
    %5550 = vmatpush1.msra.mxu0 0.0
    %5551 = vmatprep.subr.mxu0 0.0
    %5552 = vmatpush1.msra.mxu0 0.0
    %5553 = vmatprep.subr.mxu0 0.0
    %5554 = vmatpush1.msra.mxu0 0.0
    %5555 = vmatprep.subr.mxu0 0.0
    %5556 = vmatpush1.msra.mxu0 0.0
    %5557 = vmatprep.subr.mxu0 0.0
    %5558 = vmatpush1.msra.mxu0 0.0
    %5559 = vmatprep.subr.mxu0 0.0
    %5560 = vmatpush1.msra.mxu0 0.0
    %5561 = vmatprep.subr.mxu0 0.0
    %5562 = vmatpush1.msra.mxu0 0.0
    %5563 = vmatprep.subr.mxu0 0.0
    %5564 = vmatpush1.msra.mxu0 0.0
    %5565 = vmatprep.subr.mxu0 0.0
    %5566 = vmatpush1.msra.mxu0 0.0
    %5567 = vmatprep.subr.mxu0 0.0
    %5568 = vmatpush1.msra.mxu0 0.0
    %5569 = vmatprep.subr.mxu0 0.0
    %5570 = vmatpush1.msra.mxu0 0.0
    %5571 = vmatprep.subr.mxu0 0.0
    %5572 = vmatpush1.msra.mxu0 0.0
    %5573 = vmatprep.mubr.f32.mxu0 0.0
    %5574 = vmatmul.mubr.f32.gmra.mrb[0].mxu0 %v5505
    %v5575 = vpop.f32.mrb[0].mxu0
    %v5576 = vadd.f32 0.0, %v5575
    %v5577 = vpop.f32.mrb[0].mxu0
    %5578 = vmatprep.mubr.f32.mxu0 0.0
    %5579 = vmatmul.mubr.f32.gmra.mrb[0].mxu0 %v5506
    %v5580 = vpop.f32.mrb[0].mxu0
    %v5581 = vadd.f32 0.0, %v5580
    %v5582 = vpop.f32.mrb[0].mxu0
    %5583 = vmatprep.mubr.f32.mxu0 0.0
    %5584 = vmatmul.mubr.f32.gmra.mrb[0].mxu0 %v5507
    %v5585 = vpop.f32.mrb[0].mxu0
    %v5586 = vadd.f32 0.0, %v5585
    %v5587 = vpop.f32.mrb[0].mxu0
    %5588 = vmatprep.mubr.f32.mxu0 0.0
    %5589 = vmatmul.mubr.f32.gmra.mrb[0].mxu0 %v5508
    %v5590 = vpop.f32.mrb[0].mxu0
    %v5591 = vadd.f32 0.0, %v5590
    %v5592 = vpop.f32.mrb[0].mxu0
    %5593 = vdwg.mxu0
    %s5594 = scalar_lea.vmem [#allocation10], 1408
    %v5595 = vld [vmem:[%s5594] sm:$0xff]
    %v5596 = vld [vmem:[%s5594 + $0x8] sm:$0xff]
    %v5597 = vld [vmem:[%s5594 + $0x10] sm:$0xff]
    %v5598 = vld [vmem:[%s5594 + $0x18] sm:$0xff]
    %v5599 = vld [vmem:[%s5594 + $0x20] sm:$0xff]
    %v5600 = vld [vmem:[%s5594 + $0x28] sm:$0xff]
    %v5601 = vld [vmem:[%s5594 + $0x30] sm:$0xff]
    %v5602 = vld [vmem:[%s5594 + $0x38] sm:$0xff]
    %v5603 = vld [vmem:[%s5594 + $0x40] sm:$0xff]
    %v5604 = vld [vmem:[%s5594 + $0x48] sm:$0xff]
    %v5605 = vld [vmem:[%s5594 + $0x50] sm:$0xff]
    %v5606 = vld [vmem:[%s5594 + $0x58] sm:$0xff]
    %v5607 = vld [vmem:[%s5594 + $0x60] sm:$0xff]
    %v5608 = vld [vmem:[%s5594 + $0x68] sm:$0xff]
    %v5609 = vld [vmem:[%s5594 + $0x70] sm:$0xff]
    %v5610 = vld [vmem:[%s5594 + $0x78] sm:$0xff]
    %5611 = vmatprep.subr.mxu0 0.0
    %5612 = vmatpush1.msra.mxu0 %v5595
    %5613 = vmatprep.subr.mxu0 0.0
    %5614 = vmatpush1.msra.mxu0 %v5596
    %5615 = vmatprep.subr.mxu0 0.0
    %5616 = vmatpush1.msra.mxu0 %v5597
    %5617 = vmatprep.subr.mxu0 0.0
    %5618 = vmatpush1.msra.mxu0 %v5598
    %5619 = vmatprep.subr.mxu0 0.0
    %5620 = vmatpush1.msra.mxu0 %v5599
    %5621 = vmatprep.subr.mxu0 0.0
    %5622 = vmatpush1.msra.mxu0 %v5600
    %5623 = vmatprep.subr.mxu0 0.0
    %5624 = vmatpush1.msra.mxu0 %v5601
    %5625 = vmatprep.subr.mxu0 0.0
    %5626 = vmatpush1.msra.mxu0 %v5602
    %5627 = vmatprep.subr.mxu0 0.0
    %5628 = vmatpush1.msra.mxu0 %v5603
    %5629 = vmatprep.subr.mxu0 0.0
    %5630 = vmatpush1.msra.mxu0 %v5604
    %5631 = vmatprep.subr.mxu0 0.0
    %5632 = vmatpush1.msra.mxu0 %v5605
    %5633 = vmatprep.subr.mxu0 0.0
    %5634 = vmatpush1.msra.mxu0 %v5606
    %5635 = vmatprep.subr.mxu0 0.0
    %5636 = vmatpush1.msra.mxu0 %v5607
    %5637 = vmatprep.subr.mxu0 0.0
    %5638 = vmatpush1.msra.mxu0 %v5608
    %5639 = vmatprep.subr.mxu0 0.0
    %5640 = vmatpush1.msra.mxu0 %v5609
    %5641 = vmatprep.subr.mxu0 0.0
    %5642 = vmatpush1.msra.mxu0 %v5610
    %5643 = vmatprep.subr.mxu0 0.0
    %5644 = vmatpush1.msra.mxu0 0.0
    %5645 = vmatprep.subr.mxu0 0.0
    %5646 = vmatpush1.msra.mxu0 0.0
    %5647 = vmatprep.subr.mxu0 0.0
    %5648 = vmatpush1.msra.mxu0 0.0
    %5649 = vmatprep.subr.mxu0 0.0
    %5650 = vmatpush1.msra.mxu0 0.0
    %5651 = vmatprep.subr.mxu0 0.0
    %5652 = vmatpush1.msra.mxu0 0.0
    %5653 = vmatprep.subr.mxu0 0.0
    %5654 = vmatpush1.msra.mxu0 0.0
    %5655 = vmatprep.subr.mxu0 0.0
    %5656 = vmatpush1.msra.mxu0 0.0
    %5657 = vmatprep.subr.mxu0 0.0
    %5658 = vmatpush1.msra.mxu0 0.0
    %5659 = vmatprep.subr.mxu0 0.0
    %5660 = vmatpush1.msra.mxu0 0.0
    %5661 = vmatprep.subr.mxu0 0.0
    %5662 = vmatpush1.msra.mxu0 0.0
    %5663 = vmatprep.subr.mxu0 0.0
    %5664 = vmatpush1.msra.mxu0 0.0
    %5665 = vmatprep.subr.mxu0 0.0
    %5666 = vmatpush1.msra.mxu0 0.0
    %5667 = vmatprep.subr.mxu0 0.0
    %5668 = vmatpush1.msra.mxu0 0.0
    %5669 = vmatprep.subr.mxu0 0.0
    %5670 = vmatpush1.msra.mxu0 0.0
    %5671 = vmatprep.subr.mxu0 0.0
    %5672 = vmatpush1.msra.mxu0 0.0
    %5673 = vmatprep.subr.mxu0 0.0
    %5674 = vmatpush1.msra.mxu0 0.0
    %5675 = vmatprep.mubr.f32.mxu0 0.0
    %5676 = vmatmul.mubr.f32.gmra.mrb[0].mxu0 %v5576
    %v5677 = vpop.f32.mrb[0].mxu0
    %v5678 = vadd.f32 0.0, %v5677
    %v5679 = vpop.f32.mrb[0].mxu0
    %5680 = vmatprep.mubr.f32.mxu0 0.0
    %5681 = vmatmul.mubr.f32.gmra.mrb[0].mxu0 %v5581
    %v5682 = vpop.f32.mrb[0].mxu0
    %v5683 = vadd.f32 0.0, %v5682
    %v5684 = vpop.f32.mrb[0].mxu0
    %5685 = vmatprep.mubr.f32.mxu0 0.0
    %5686 = vmatmul.mubr.f32.gmra.mrb[0].mxu0 %v5586
    %v5687 = vpop.f32.mrb[0].mxu0
    %v5688 = vadd.f32 0.0, %v5687
    %v5689 = vpop.f32.mrb[0].mxu0
    %5690 = vmatprep.mubr.f32.mxu0 0.0
    %5691 = vmatmul.mubr.f32.gmra.mrb[0].mxu0 %v5591
    %v5692 = vpop.f32.mrb[0].mxu0
    %v5693 = vadd.f32 0.0, %v5692
    %v5694 = vpop.f32.mrb[0].mxu0
    %5695 = vdwg.mxu0
    %v5696 = vadd.f32 %v5486, %v5678
    %v5697 = vadd.f32 %v5491, %v5683
    %v5698 = vadd.f32 %v5496, %v5688
    %v5699 = vadd.f32 %v5501, %v5693
    %s5700 = scalar_lea.vmem [#allocation5], 96
    %v5701 = vld [vmem:[%s5700] sm:$0xff]
    %v5702 = vld [vmem:[%s5700 + $0x8] sm:$0xff]
    %v5703 = vld [vmem:[%s5700 + $0x10] sm:$0xff]
    %v5704 = vld [vmem:[%s5700 + $0x18] sm:$0xff]
    %5705 = vmatprep.subr.mxu0 0.0
    %5706 = vmatpush1.msra.mxu0 %v5105
    %5707 = vmatprep.subr.mxu0 0.0
    %5708 = vmatpush1.msra.mxu0 %v5106
    %5709 = vmatprep.subr.mxu0 0.0
    %5710 = vmatpush1.msra.mxu0 %v5107
    %5711 = vmatprep.subr.mxu0 0.0
    %5712 = vmatpush1.msra.mxu0 %v5108
    %5713 = vmatprep.subr.mxu0 0.0
    %5714 = vmatpush1.msra.mxu0 %v5109
    %5715 = vmatprep.subr.mxu0 0.0
    %5716 = vmatpush1.msra.mxu0 %v5110
    %5717 = vmatprep.subr.mxu0 0.0
    %5718 = vmatpush1.msra.mxu0 %v5111
    %5719 = vmatprep.subr.mxu0 0.0
    %5720 = vmatpush1.msra.mxu0 %v5112
    %5721 = vmatprep.subr.mxu0 0.0
    %5722 = vmatpush1.msra.mxu0 %v5113
    %5723 = vmatprep.subr.mxu0 0.0
    %5724 = vmatpush1.msra.mxu0 %v5114
    %5725 = vmatprep.subr.mxu0 0.0
    %5726 = vmatpush1.msra.mxu0 %v5115
    %5727 = vmatprep.subr.mxu0 0.0
    %5728 = vmatpush1.msra.mxu0 %v5116
    %5729 = vmatprep.subr.mxu0 0.0
    %5730 = vmatpush1.msra.mxu0 %v5117
    %5731 = vmatprep.subr.mxu0 0.0
    %5732 = vmatpush1.msra.mxu0 %v5118
    %5733 = vmatprep.subr.mxu0 0.0
    %5734 = vmatpush1.msra.mxu0 %v5119
    %5735 = vmatprep.subr.mxu0 0.0
    %5736 = vmatpush1.msra.mxu0 %v5120
    %5737 = vmatprep.subr.mxu0 0.0
    %5738 = vmatpush1.msra.mxu0 0.0
    %5739 = vmatprep.subr.mxu0 0.0
    %5740 = vmatpush1.msra.mxu0 0.0
    %5741 = vmatprep.subr.mxu0 0.0
    %5742 = vmatpush1.msra.mxu0 0.0
    %5743 = vmatprep.subr.mxu0 0.0
    %5744 = vmatpush1.msra.mxu0 0.0
    %5745 = vmatprep.subr.mxu0 0.0
    %5746 = vmatpush1.msra.mxu0 0.0
    %5747 = vmatprep.subr.mxu0 0.0
    %5748 = vmatpush1.msra.mxu0 0.0
    %5749 = vmatprep.subr.mxu0 0.0
    %5750 = vmatpush1.msra.mxu0 0.0
    %5751 = vmatprep.subr.mxu0 0.0
    %5752 = vmatpush1.msra.mxu0 0.0
    %5753 = vmatprep.subr.mxu0 0.0
    %5754 = vmatpush1.msra.mxu0 0.0
    %5755 = vmatprep.subr.mxu0 0.0
    %5756 = vmatpush1.msra.mxu0 0.0
    %5757 = vmatprep.subr.mxu0 0.0
    %5758 = vmatpush1.msra.mxu0 0.0
    %5759 = vmatprep.subr.mxu0 0.0
    %5760 = vmatpush1.msra.mxu0 0.0
    %5761 = vmatprep.subr.mxu0 0.0
    %5762 = vmatpush1.msra.mxu0 0.0
    %5763 = vmatprep.subr.mxu0 0.0
    %5764 = vmatpush1.msra.mxu0 0.0
    %5765 = vmatprep.subr.mxu0 0.0
    %5766 = vmatpush1.msra.mxu0 0.0
    %5767 = vmatprep.subr.mxu0 0.0
    %5768 = vmatpush1.msra.mxu0 0.0
    %5769 = vmatprep.mubr.f32.mxu0 0.0
    %5770 = vmatmul.mubr.f32.gmra.mrb[0].mxu0 %v5701
    %v5771 = vpop.f32.mrb[0].mxu0
    %v5772 = vadd.f32 0.0, %v5771
    %v5773 = vpop.f32.mrb[0].mxu0
    %5774 = vmatprep.mubr.f32.mxu0 0.0
    %5775 = vmatmul.mubr.f32.gmra.mrb[0].mxu0 %v5702
    %v5776 = vpop.f32.mrb[0].mxu0
    %v5777 = vadd.f32 0.0, %v5776
    %v5778 = vpop.f32.mrb[0].mxu0
    %5779 = vmatprep.mubr.f32.mxu0 0.0
    %5780 = vmatmul.mubr.f32.gmra.mrb[0].mxu0 %v5703
    %v5781 = vpop.f32.mrb[0].mxu0
    %v5782 = vadd.f32 0.0, %v5781
    %v5783 = vpop.f32.mrb[0].mxu0
    %5784 = vmatprep.mubr.f32.mxu0 0.0
    %5785 = vmatmul.mubr.f32.gmra.mrb[0].mxu0 %v5704
    %v5786 = vpop.f32.mrb[0].mxu0
    %v5787 = vadd.f32 0.0, %v5786
    %v5788 = vpop.f32.mrb[0].mxu0
    %5789 = vdwg.mxu0
    %s5790 = scalar_lea.vmem [#allocation10], 1536
    %v5791 = vld [vmem:[%s5790] sm:$0xff]
    %v5792 = vld [vmem:[%s5790 + $0x8] sm:$0xff]
    %v5793 = vld [vmem:[%s5790 + $0x10] sm:$0xff]
    %v5794 = vld [vmem:[%s5790 + $0x18] sm:$0xff]
    %v5795 = vld [vmem:[%s5790 + $0x20] sm:$0xff]
    %v5796 = vld [vmem:[%s5790 + $0x28] sm:$0xff]
    %v5797 = vld [vmem:[%s5790 + $0x30] sm:$0xff]
    %v5798 = vld [vmem:[%s5790 + $0x38] sm:$0xff]
    %v5799 = vld [vmem:[%s5790 + $0x40] sm:$0xff]
    %v5800 = vld [vmem:[%s5790 + $0x48] sm:$0xff]
    %v5801 = vld [vmem:[%s5790 + $0x50] sm:$0xff]
    %v5802 = vld [vmem:[%s5790 + $0x58] sm:$0xff]
    %v5803 = vld [vmem:[%s5790 + $0x60] sm:$0xff]
    %v5804 = vld [vmem:[%s5790 + $0x68] sm:$0xff]
    %v5805 = vld [vmem:[%s5790 + $0x70] sm:$0xff]
    %v5806 = vld [vmem:[%s5790 + $0x78] sm:$0xff]
    %5807 = vmatprep.subr.mxu0 0.0
    %5808 = vmatpush1.msra.mxu0 %v5791
    %5809 = vmatprep.subr.mxu0 0.0
    %5810 = vmatpush1.msra.mxu0 %v5792
    %5811 = vmatprep.subr.mxu0 0.0
    %5812 = vmatpush1.msra.mxu0 %v5793
    %5813 = vmatprep.subr.mxu0 0.0
    %5814 = vmatpush1.msra.mxu0 %v5794
    %5815 = vmatprep.subr.mxu0 0.0
    %5816 = vmatpush1.msra.mxu0 %v5795
    %5817 = vmatprep.subr.mxu0 0.0
    %5818 = vmatpush1.msra.mxu0 %v5796
    %5819 = vmatprep.subr.mxu0 0.0
    %5820 = vmatpush1.msra.mxu0 %v5797
    %5821 = vmatprep.subr.mxu0 0.0
    %5822 = vmatpush1.msra.mxu0 %v5798
    %5823 = vmatprep.subr.mxu0 0.0
    %5824 = vmatpush1.msra.mxu0 %v5799
    %5825 = vmatprep.subr.mxu0 0.0
    %5826 = vmatpush1.msra.mxu0 %v5800
    %5827 = vmatprep.subr.mxu0 0.0
    %5828 = vmatpush1.msra.mxu0 %v5801
    %5829 = vmatprep.subr.mxu0 0.0
    %5830 = vmatpush1.msra.mxu0 %v5802
    %5831 = vmatprep.subr.mxu0 0.0
    %5832 = vmatpush1.msra.mxu0 %v5803
    %5833 = vmatprep.subr.mxu0 0.0
    %5834 = vmatpush1.msra.mxu0 %v5804
    %5835 = vmatprep.subr.mxu0 0.0
    %5836 = vmatpush1.msra.mxu0 %v5805
    %5837 = vmatprep.subr.mxu0 0.0
    %5838 = vmatpush1.msra.mxu0 %v5806
    %5839 = vmatprep.subr.mxu0 0.0
    %5840 = vmatpush1.msra.mxu0 0.0
    %5841 = vmatprep.subr.mxu0 0.0
    %5842 = vmatpush1.msra.mxu0 0.0
    %5843 = vmatprep.subr.mxu0 0.0
    %5844 = vmatpush1.msra.mxu0 0.0
    %5845 = vmatprep.subr.mxu0 0.0
    %5846 = vmatpush1.msra.mxu0 0.0
    %5847 = vmatprep.subr.mxu0 0.0
    %5848 = vmatpush1.msra.mxu0 0.0
    %5849 = vmatprep.subr.mxu0 0.0
    %5850 = vmatpush1.msra.mxu0 0.0
    %5851 = vmatprep.subr.mxu0 0.0
    %5852 = vmatpush1.msra.mxu0 0.0
    %5853 = vmatprep.subr.mxu0 0.0
    %5854 = vmatpush1.msra.mxu0 0.0
    %5855 = vmatprep.subr.mxu0 0.0
    %5856 = vmatpush1.msra.mxu0 0.0
    %5857 = vmatprep.subr.mxu0 0.0
    %5858 = vmatpush1.msra.mxu0 0.0
    %5859 = vmatprep.subr.mxu0 0.0
    %5860 = vmatpush1.msra.mxu0 0.0
    %5861 = vmatprep.subr.mxu0 0.0
    %5862 = vmatpush1.msra.mxu0 0.0
    %5863 = vmatprep.subr.mxu0 0.0
    %5864 = vmatpush1.msra.mxu0 0.0
    %5865 = vmatprep.subr.mxu0 0.0
    %5866 = vmatpush1.msra.mxu0 0.0
    %5867 = vmatprep.subr.mxu0 0.0
    %5868 = vmatpush1.msra.mxu0 0.0
    %5869 = vmatprep.subr.mxu0 0.0
    %5870 = vmatpush1.msra.mxu0 0.0
    %5871 = vmatprep.mubr.f32.mxu0 0.0
    %5872 = vmatmul.mubr.f32.gmra.mrb[0].mxu0 %v5772
    %v5873 = vpop.f32.mrb[0].mxu0
    %v5874 = vadd.f32 0.0, %v5873
    %v5875 = vpop.f32.mrb[0].mxu0
    %5876 = vmatprep.mubr.f32.mxu0 0.0
    %5877 = vmatmul.mubr.f32.gmra.mrb[0].mxu0 %v5777
    %v5878 = vpop.f32.mrb[0].mxu0
    %v5879 = vadd.f32 0.0, %v5878
    %v5880 = vpop.f32.mrb[0].mxu0
    %5881 = vmatprep.mubr.f32.mxu0 0.0
    %5882 = vmatmul.mubr.f32.gmra.mrb[0].mxu0 %v5782
    %v5883 = vpop.f32.mrb[0].mxu0
    %v5884 = vadd.f32 0.0, %v5883
    %v5885 = vpop.f32.mrb[0].mxu0
    %5886 = vmatprep.mubr.f32.mxu0 0.0
    %5887 = vmatmul.mubr.f32.gmra.mrb[0].mxu0 %v5787
    %v5888 = vpop.f32.mrb[0].mxu0
    %v5889 = vadd.f32 0.0, %v5888
    %v5890 = vpop.f32.mrb[0].mxu0
    %5891 = vdwg.mxu0
    %v5892 = vadd.f32 %v5696, %v5874
    %v5893 = vadd.f32 %v5697, %v5879
    %v5894 = vadd.f32 %v5698, %v5884
    %v5895 = vadd.f32 %v5699, %v5889
    %s5896 = scalar_lea.vmem [#allocation5], 128
    %v5897 = vld [vmem:[%s5896] sm:$0xff]
    %v5898 = vld [vmem:[%s5896 + $0x8] sm:$0xff]
    %v5899 = vld [vmem:[%s5896 + $0x10] sm:$0xff]
    %v5900 = vld [vmem:[%s5896 + $0x18] sm:$0xff]
    %5901 = vmatprep.subr.mxu0 0.0
    %5902 = vmatpush1.msra.mxu0 %v5105
    %5903 = vmatprep.subr.mxu0 0.0
    %5904 = vmatpush1.msra.mxu0 %v5106
    %5905 = vmatprep.subr.mxu0 0.0
    %5906 = vmatpush1.msra.mxu0 %v5107
    %5907 = vmatprep.subr.mxu0 0.0
    %5908 = vmatpush1.msra.mxu0 %v5108
    %5909 = vmatprep.subr.mxu0 0.0
    %5910 = vmatpush1.msra.mxu0 %v5109
    %5911 = vmatprep.subr.mxu0 0.0
    %5912 = vmatpush1.msra.mxu0 %v5110
    %5913 = vmatprep.subr.mxu0 0.0
    %5914 = vmatpush1.msra.mxu0 %v5111
    %5915 = vmatprep.subr.mxu0 0.0
    %5916 = vmatpush1.msra.mxu0 %v5112
    %5917 = vmatprep.subr.mxu0 0.0
    %5918 = vmatpush1.msra.mxu0 %v5113
    %5919 = vmatprep.subr.mxu0 0.0
    %5920 = vmatpush1.msra.mxu0 %v5114
    %5921 = vmatprep.subr.mxu0 0.0
    %5922 = vmatpush1.msra.mxu0 %v5115
    %5923 = vmatprep.subr.mxu0 0.0
    %5924 = vmatpush1.msra.mxu0 %v5116
    %5925 = vmatprep.subr.mxu0 0.0
    %5926 = vmatpush1.msra.mxu0 %v5117
    %5927 = vmatprep.subr.mxu0 0.0
    %5928 = vmatpush1.msra.mxu0 %v5118
    %5929 = vmatprep.subr.mxu0 0.0
    %5930 = vmatpush1.msra.mxu0 %v5119
    %5931 = vmatprep.subr.mxu0 0.0
    %5932 = vmatpush1.msra.mxu0 %v5120
    %5933 = vmatprep.subr.mxu0 0.0
    %5934 = vmatpush1.msra.mxu0 0.0
    %5935 = vmatprep.subr.mxu0 0.0
    %5936 = vmatpush1.msra.mxu0 0.0
    %5937 = vmatprep.subr.mxu0 0.0
    %5938 = vmatpush1.msra.mxu0 0.0
    %5939 = vmatprep.subr.mxu0 0.0
    %5940 = vmatpush1.msra.mxu0 0.0
    %5941 = vmatprep.subr.mxu0 0.0
    %5942 = vmatpush1.msra.mxu0 0.0
    %5943 = vmatprep.subr.mxu0 0.0
    %5944 = vmatpush1.msra.mxu0 0.0
    %5945 = vmatprep.subr.mxu0 0.0
    %5946 = vmatpush1.msra.mxu0 0.0
    %5947 = vmatprep.subr.mxu0 0.0
    %5948 = vmatpush1.msra.mxu0 0.0
    %5949 = vmatprep.subr.mxu0 0.0
    %5950 = vmatpush1.msra.mxu0 0.0
    %5951 = vmatprep.subr.mxu0 0.0
    %5952 = vmatpush1.msra.mxu0 0.0
    %5953 = vmatprep.subr.mxu0 0.0
    %5954 = vmatpush1.msra.mxu0 0.0
    %5955 = vmatprep.subr.mxu0 0.0
    %5956 = vmatpush1.msra.mxu0 0.0
    %5957 = vmatprep.subr.mxu0 0.0
    %5958 = vmatpush1.msra.mxu0 0.0
    %5959 = vmatprep.subr.mxu0 0.0
    %5960 = vmatpush1.msra.mxu0 0.0
    %5961 = vmatprep.subr.mxu0 0.0
    %5962 = vmatpush1.msra.mxu0 0.0
    %5963 = vmatprep.subr.mxu0 0.0
    %5964 = vmatpush1.msra.mxu0 0.0
    %5965 = vmatprep.mubr.f32.mxu0 0.0
    %5966 = vmatmul.mubr.f32.gmra.mrb[0].mxu0 %v5897
    %v5967 = vpop.f32.mrb[0].mxu0
    %v5968 = vadd.f32 0.0, %v5967
    %v5969 = vpop.f32.mrb[0].mxu0
    %5970 = vmatprep.mubr.f32.mxu0 0.0
    %5971 = vmatmul.mubr.f32.gmra.mrb[0].mxu0 %v5898
    %v5972 = vpop.f32.mrb[0].mxu0
    %v5973 = vadd.f32 0.0, %v5972
    %v5974 = vpop.f32.mrb[0].mxu0
    %5975 = vmatprep.mubr.f32.mxu0 0.0
    %5976 = vmatmul.mubr.f32.gmra.mrb[0].mxu0 %v5899
    %v5977 = vpop.f32.mrb[0].mxu0
    %v5978 = vadd.f32 0.0, %v5977
    %v5979 = vpop.f32.mrb[0].mxu0
    %5980 = vmatprep.mubr.f32.mxu0 0.0
    %5981 = vmatmul.mubr.f32.gmra.mrb[0].mxu0 %v5900
    %v5982 = vpop.f32.mrb[0].mxu0
    %v5983 = vadd.f32 0.0, %v5982
    %v5984 = vpop.f32.mrb[0].mxu0
    %5985 = vdwg.mxu0
    %s5986 = scalar_lea.vmem [#allocation10], 1664
    %v5987 = vld [vmem:[%s5986] sm:$0xff]
    %v5988 = vld [vmem:[%s5986 + $0x8] sm:$0xff]
    %v5989 = vld [vmem:[%s5986 + $0x10] sm:$0xff]
    %v5990 = vld [vmem:[%s5986 + $0x18] sm:$0xff]
    %v5991 = vld [vmem:[%s5986 + $0x20] sm:$0xff]
    %v5992 = vld [vmem:[%s5986 + $0x28] sm:$0xff]
    %v5993 = vld [vmem:[%s5986 + $0x30] sm:$0xff]
    %v5994 = vld [vmem:[%s5986 + $0x38] sm:$0xff]
    %v5995 = vld [vmem:[%s5986 + $0x40] sm:$0xff]
    %v5996 = vld [vmem:[%s5986 + $0x48] sm:$0xff]
    %v5997 = vld [vmem:[%s5986 + $0x50] sm:$0xff]
    %v5998 = vld [vmem:[%s5986 + $0x58] sm:$0xff]
    %v5999 = vld [vmem:[%s5986 + $0x60] sm:$0xff]
    %v6000 = vld [vmem:[%s5986 + $0x68] sm:$0xff]
    %v6001 = vld [vmem:[%s5986 + $0x70] sm:$0xff]
    %v6002 = vld [vmem:[%s5986 + $0x78] sm:$0xff]
    %6003 = vmatprep.subr.mxu0 0.0
    %6004 = vmatpush1.msra.mxu0 %v5987
    %6005 = vmatprep.subr.mxu0 0.0
    %6006 = vmatpush1.msra.mxu0 %v5988
    %6007 = vmatprep.subr.mxu0 0.0
    %6008 = vmatpush1.msra.mxu0 %v5989
    %6009 = vmatprep.subr.mxu0 0.0
    %6010 = vmatpush1.msra.mxu0 %v5990
    %6011 = vmatprep.subr.mxu0 0.0
    %6012 = vmatpush1.msra.mxu0 %v5991
    %6013 = vmatprep.subr.mxu0 0.0
    %6014 = vmatpush1.msra.mxu0 %v5992
    %6015 = vmatprep.subr.mxu0 0.0
    %6016 = vmatpush1.msra.mxu0 %v5993
    %6017 = vmatprep.subr.mxu0 0.0
    %6018 = vmatpush1.msra.mxu0 %v5994
    %6019 = vmatprep.subr.mxu0 0.0
    %6020 = vmatpush1.msra.mxu0 %v5995
    %6021 = vmatprep.subr.mxu0 0.0
    %6022 = vmatpush1.msra.mxu0 %v5996
    %6023 = vmatprep.subr.mxu0 0.0
    %6024 = vmatpush1.msra.mxu0 %v5997
    %6025 = vmatprep.subr.mxu0 0.0
    %6026 = vmatpush1.msra.mxu0 %v5998
    %6027 = vmatprep.subr.mxu0 0.0
    %6028 = vmatpush1.msra.mxu0 %v5999
    %6029 = vmatprep.subr.mxu0 0.0
    %6030 = vmatpush1.msra.mxu0 %v6000
    %6031 = vmatprep.subr.mxu0 0.0
    %6032 = vmatpush1.msra.mxu0 %v6001
    %6033 = vmatprep.subr.mxu0 0.0
    %6034 = vmatpush1.msra.mxu0 %v6002
    %6035 = vmatprep.subr.mxu0 0.0
    %6036 = vmatpush1.msra.mxu0 0.0
    %6037 = vmatprep.subr.mxu0 0.0
    %6038 = vmatpush1.msra.mxu0 0.0
    %6039 = vmatprep.subr.mxu0 0.0
    %6040 = vmatpush1.msra.mxu0 0.0
    %6041 = vmatprep.subr.mxu0 0.0
    %6042 = vmatpush1.msra.mxu0 0.0
    %6043 = vmatprep.subr.mxu0 0.0
    %6044 = vmatpush1.msra.mxu0 0.0
    %6045 = vmatprep.subr.mxu0 0.0
    %6046 = vmatpush1.msra.mxu0 0.0
    %6047 = vmatprep.subr.mxu0 0.0
    %6048 = vmatpush1.msra.mxu0 0.0
    %6049 = vmatprep.subr.mxu0 0.0
    %6050 = vmatpush1.msra.mxu0 0.0
    %6051 = vmatprep.subr.mxu0 0.0
    %6052 = vmatpush1.msra.mxu0 0.0
    %6053 = vmatprep.subr.mxu0 0.0
    %6054 = vmatpush1.msra.mxu0 0.0
    %6055 = vmatprep.subr.mxu0 0.0
    %6056 = vmatpush1.msra.mxu0 0.0
    %6057 = vmatprep.subr.mxu0 0.0
    %6058 = vmatpush1.msra.mxu0 0.0
    %6059 = vmatprep.subr.mxu0 0.0
    %6060 = vmatpush1.msra.mxu0 0.0
    %6061 = vmatprep.subr.mxu0 0.0
    %6062 = vmatpush1.msra.mxu0 0.0
    %6063 = vmatprep.subr.mxu0 0.0
    %6064 = vmatpush1.msra.mxu0 0.0
    %6065 = vmatprep.subr.mxu0 0.0
    %6066 = vmatpush1.msra.mxu0 0.0
    %6067 = vmatprep.mubr.f32.mxu0 0.0
    %6068 = vmatmul.mubr.f32.gmra.mrb[0].mxu0 %v5968
    %v6069 = vpop.f32.mrb[0].mxu0
    %v6070 = vadd.f32 0.0, %v6069
    %v6071 = vpop.f32.mrb[0].mxu0
    %6072 = vmatprep.mubr.f32.mxu0 0.0
    %6073 = vmatmul.mubr.f32.gmra.mrb[0].mxu0 %v5973
    %v6074 = vpop.f32.mrb[0].mxu0
    %v6075 = vadd.f32 0.0, %v6074
    %v6076 = vpop.f32.mrb[0].mxu0
    %6077 = vmatprep.mubr.f32.mxu0 0.0
    %6078 = vmatmul.mubr.f32.gmra.mrb[0].mxu0 %v5978
    %v6079 = vpop.f32.mrb[0].mxu0
    %v6080 = vadd.f32 0.0, %v6079
    %v6081 = vpop.f32.mrb[0].mxu0
    %6082 = vmatprep.mubr.f32.mxu0 0.0
    %6083 = vmatmul.mubr.f32.gmra.mrb[0].mxu0 %v5983
    %v6084 = vpop.f32.mrb[0].mxu0
    %v6085 = vadd.f32 0.0, %v6084
    %v6086 = vpop.f32.mrb[0].mxu0
    %6087 = vdwg.mxu0
    %v6088 = vadd.f32 %v5892, %v6070
    %v6089 = vadd.f32 %v5893, %v6075
    %v6090 = vadd.f32 %v5894, %v6080
    %v6091 = vadd.f32 %v5895, %v6085
    %s6092 = scalar_lea.vmem [#allocation5], 160
    %v6093 = vld [vmem:[%s6092] sm:$0xff]
    %v6094 = vld [vmem:[%s6092 + $0x8] sm:$0xff]
    %v6095 = vld [vmem:[%s6092 + $0x10] sm:$0xff]
    %v6096 = vld [vmem:[%s6092 + $0x18] sm:$0xff]
    %6097 = vmatprep.subr.mxu0 0.0
    %6098 = vmatpush1.msra.mxu0 %v5105
    %6099 = vmatprep.subr.mxu0 0.0
    %6100 = vmatpush1.msra.mxu0 %v5106
    %6101 = vmatprep.subr.mxu0 0.0
    %6102 = vmatpush1.msra.mxu0 %v5107
    %6103 = vmatprep.subr.mxu0 0.0
    %6104 = vmatpush1.msra.mxu0 %v5108
    %6105 = vmatprep.subr.mxu0 0.0
    %6106 = vmatpush1.msra.mxu0 %v5109
    %6107 = vmatprep.subr.mxu0 0.0
    %6108 = vmatpush1.msra.mxu0 %v5110
    %6109 = vmatprep.subr.mxu0 0.0
    %6110 = vmatpush1.msra.mxu0 %v5111
    %6111 = vmatprep.subr.mxu0 0.0
    %6112 = vmatpush1.msra.mxu0 %v5112
    %6113 = vmatprep.subr.mxu0 0.0
    %6114 = vmatpush1.msra.mxu0 %v5113
    %6115 = vmatprep.subr.mxu0 0.0
    %6116 = vmatpush1.msra.mxu0 %v5114
    %6117 = vmatprep.subr.mxu0 0.0
    %6118 = vmatpush1.msra.mxu0 %v5115
    %6119 = vmatprep.subr.mxu0 0.0
    %6120 = vmatpush1.msra.mxu0 %v5116
    %6121 = vmatprep.subr.mxu0 0.0
    %6122 = vmatpush1.msra.mxu0 %v5117
    %6123 = vmatprep.subr.mxu0 0.0
    %6124 = vmatpush1.msra.mxu0 %v5118
    %6125 = vmatprep.subr.mxu0 0.0
    %6126 = vmatpush1.msra.mxu0 %v5119
    %6127 = vmatprep.subr.mxu0 0.0
    %6128 = vmatpush1.msra.mxu0 %v5120
    %6129 = vmatprep.subr.mxu0 0.0
    %6130 = vmatpush1.msra.mxu0 0.0
    %6131 = vmatprep.subr.mxu0 0.0
    %6132 = vmatpush1.msra.mxu0 0.0
    %6133 = vmatprep.subr.mxu0 0.0
    %6134 = vmatpush1.msra.mxu0 0.0
    %6135 = vmatprep.subr.mxu0 0.0
    %6136 = vmatpush1.msra.mxu0 0.0
    %6137 = vmatprep.subr.mxu0 0.0
    %6138 = vmatpush1.msra.mxu0 0.0
    %6139 = vmatprep.subr.mxu0 0.0
    %6140 = vmatpush1.msra.mxu0 0.0
    %6141 = vmatprep.subr.mxu0 0.0
    %6142 = vmatpush1.msra.mxu0 0.0
    %6143 = vmatprep.subr.mxu0 0.0
    %6144 = vmatpush1.msra.mxu0 0.0
    %6145 = vmatprep.subr.mxu0 0.0
    %6146 = vmatpush1.msra.mxu0 0.0
    %6147 = vmatprep.subr.mxu0 0.0
    %6148 = vmatpush1.msra.mxu0 0.0
    %6149 = vmatprep.subr.mxu0 0.0
    %6150 = vmatpush1.msra.mxu0 0.0
    %6151 = vmatprep.subr.mxu0 0.0
    %6152 = vmatpush1.msra.mxu0 0.0
    %6153 = vmatprep.subr.mxu0 0.0
    %6154 = vmatpush1.msra.mxu0 0.0
    %6155 = vmatprep.subr.mxu0 0.0
    %6156 = vmatpush1.msra.mxu0 0.0
    %6157 = vmatprep.subr.mxu0 0.0
    %6158 = vmatpush1.msra.mxu0 0.0
    %6159 = vmatprep.subr.mxu0 0.0
    %6160 = vmatpush1.msra.mxu0 0.0
    %6161 = vmatprep.mubr.f32.mxu0 0.0
    %6162 = vmatmul.mubr.f32.gmra.mrb[0].mxu0 %v6093
    %v6163 = vpop.f32.mrb[0].mxu0
    %v6164 = vadd.f32 0.0, %v6163
    %v6165 = vpop.f32.mrb[0].mxu0
    %6166 = vmatprep.mubr.f32.mxu0 0.0
    %6167 = vmatmul.mubr.f32.gmra.mrb[0].mxu0 %v6094
    %v6168 = vpop.f32.mrb[0].mxu0
    %v6169 = vadd.f32 0.0, %v6168
    %v6170 = vpop.f32.mrb[0].mxu0
    %6171 = vmatprep.mubr.f32.mxu0 0.0
    %6172 = vmatmul.mubr.f32.gmra.mrb[0].mxu0 %v6095
    %v6173 = vpop.f32.mrb[0].mxu0
    %v6174 = vadd.f32 0.0, %v6173
    %v6175 = vpop.f32.mrb[0].mxu0
    %6176 = vmatprep.mubr.f32.mxu0 0.0
    %6177 = vmatmul.mubr.f32.gmra.mrb[0].mxu0 %v6096
    %v6178 = vpop.f32.mrb[0].mxu0
    %v6179 = vadd.f32 0.0, %v6178
    %v6180 = vpop.f32.mrb[0].mxu0
    %6181 = vdwg.mxu0
    %s6182 = scalar_lea.vmem [#allocation10], 1792
    %v6183 = vld [vmem:[%s6182] sm:$0xff]
    %v6184 = vld [vmem:[%s6182 + $0x8] sm:$0xff]
    %v6185 = vld [vmem:[%s6182 + $0x10] sm:$0xff]
    %v6186 = vld [vmem:[%s6182 + $0x18] sm:$0xff]
    %v6187 = vld [vmem:[%s6182 + $0x20] sm:$0xff]
    %v6188 = vld [vmem:[%s6182 + $0x28] sm:$0xff]
    %v6189 = vld [vmem:[%s6182 + $0x30] sm:$0xff]
    %v6190 = vld [vmem:[%s6182 + $0x38] sm:$0xff]
    %v6191 = vld [vmem:[%s6182 + $0x40] sm:$0xff]
    %v6192 = vld [vmem:[%s6182 + $0x48] sm:$0xff]
    %v6193 = vld [vmem:[%s6182 + $0x50] sm:$0xff]
    %v6194 = vld [vmem:[%s6182 + $0x58] sm:$0xff]
    %v6195 = vld [vmem:[%s6182 + $0x60] sm:$0xff]
    %v6196 = vld [vmem:[%s6182 + $0x68] sm:$0xff]
    %v6197 = vld [vmem:[%s6182 + $0x70] sm:$0xff]
    %v6198 = vld [vmem:[%s6182 + $0x78] sm:$0xff]
    %6199 = vmatprep.subr.mxu0 0.0
    %6200 = vmatpush1.msra.mxu0 %v6183
    %6201 = vmatprep.subr.mxu0 0.0
    %6202 = vmatpush1.msra.mxu0 %v6184
    %6203 = vmatprep.subr.mxu0 0.0
    %6204 = vmatpush1.msra.mxu0 %v6185
    %6205 = vmatprep.subr.mxu0 0.0
    %6206 = vmatpush1.msra.mxu0 %v6186
    %6207 = vmatprep.subr.mxu0 0.0
    %6208 = vmatpush1.msra.mxu0 %v6187
    %6209 = vmatprep.subr.mxu0 0.0
    %6210 = vmatpush1.msra.mxu0 %v6188
    %6211 = vmatprep.subr.mxu0 0.0
    %6212 = vmatpush1.msra.mxu0 %v6189
    %6213 = vmatprep.subr.mxu0 0.0
    %6214 = vmatpush1.msra.mxu0 %v6190
    %6215 = vmatprep.subr.mxu0 0.0
    %6216 = vmatpush1.msra.mxu0 %v6191
    %6217 = vmatprep.subr.mxu0 0.0
    %6218 = vmatpush1.msra.mxu0 %v6192
    %6219 = vmatprep.subr.mxu0 0.0
    %6220 = vmatpush1.msra.mxu0 %v6193
    %6221 = vmatprep.subr.mxu0 0.0
    %6222 = vmatpush1.msra.mxu0 %v6194
    %6223 = vmatprep.subr.mxu0 0.0
    %6224 = vmatpush1.msra.mxu0 %v6195
    %6225 = vmatprep.subr.mxu0 0.0
    %6226 = vmatpush1.msra.mxu0 %v6196
    %6227 = vmatprep.subr.mxu0 0.0
    %6228 = vmatpush1.msra.mxu0 %v6197
    %6229 = vmatprep.subr.mxu0 0.0
    %6230 = vmatpush1.msra.mxu0 %v6198
    %6231 = vmatprep.subr.mxu0 0.0
    %6232 = vmatpush1.msra.mxu0 0.0
    %6233 = vmatprep.subr.mxu0 0.0
    %6234 = vmatpush1.msra.mxu0 0.0
    %6235 = vmatprep.subr.mxu0 0.0
    %6236 = vmatpush1.msra.mxu0 0.0
    %6237 = vmatprep.subr.mxu0 0.0
    %6238 = vmatpush1.msra.mxu0 0.0
    %6239 = vmatprep.subr.mxu0 0.0
    %6240 = vmatpush1.msra.mxu0 0.0
    %6241 = vmatprep.subr.mxu0 0.0
    %6242 = vmatpush1.msra.mxu0 0.0
    %6243 = vmatprep.subr.mxu0 0.0
    %6244 = vmatpush1.msra.mxu0 0.0
    %6245 = vmatprep.subr.mxu0 0.0
    %6246 = vmatpush1.msra.mxu0 0.0
    %6247 = vmatprep.subr.mxu0 0.0
    %6248 = vmatpush1.msra.mxu0 0.0
    %6249 = vmatprep.subr.mxu0 0.0
    %6250 = vmatpush1.msra.mxu0 0.0
    %6251 = vmatprep.subr.mxu0 0.0
    %6252 = vmatpush1.msra.mxu0 0.0
    %6253 = vmatprep.subr.mxu0 0.0
    %6254 = vmatpush1.msra.mxu0 0.0
    %6255 = vmatprep.subr.mxu0 0.0
    %6256 = vmatpush1.msra.mxu0 0.0
    %6257 = vmatprep.subr.mxu0 0.0
    %6258 = vmatpush1.msra.mxu0 0.0
    %6259 = vmatprep.subr.mxu0 0.0
    %6260 = vmatpush1.msra.mxu0 0.0
    %6261 = vmatprep.subr.mxu0 0.0
    %6262 = vmatpush1.msra.mxu0 0.0
    %6263 = vmatprep.mubr.f32.mxu0 0.0
    %6264 = vmatmul.mubr.f32.gmra.mrb[0].mxu0 %v6164
    %v6265 = vpop.f32.mrb[0].mxu0
    %v6266 = vadd.f32 0.0, %v6265
    %v6267 = vpop.f32.mrb[0].mxu0
    %6268 = vmatprep.mubr.f32.mxu0 0.0
    %6269 = vmatmul.mubr.f32.gmra.mrb[0].mxu0 %v6169
    %v6270 = vpop.f32.mrb[0].mxu0
    %v6271 = vadd.f32 0.0, %v6270
    %v6272 = vpop.f32.mrb[0].mxu0
    %6273 = vmatprep.mubr.f32.mxu0 0.0
    %6274 = vmatmul.mubr.f32.gmra.mrb[0].mxu0 %v6174
    %v6275 = vpop.f32.mrb[0].mxu0
    %v6276 = vadd.f32 0.0, %v6275
    %v6277 = vpop.f32.mrb[0].mxu0
    %6278 = vmatprep.mubr.f32.mxu0 0.0
    %6279 = vmatmul.mubr.f32.gmra.mrb[0].mxu0 %v6179
    %v6280 = vpop.f32.mrb[0].mxu0
    %v6281 = vadd.f32 0.0, %v6280
    %v6282 = vpop.f32.mrb[0].mxu0
    %6283 = vdwg.mxu0
    %v6284 = vadd.f32 %v6088, %v6266
    %v6285 = vadd.f32 %v6089, %v6271
    %v6286 = vadd.f32 %v6090, %v6276
    %v6287 = vadd.f32 %v6091, %v6281
    %s6288 = scalar_lea.vmem [#allocation5], 192
    %v6289 = vld [vmem:[%s6288] sm:$0xff]
    %v6290 = vld [vmem:[%s6288 + $0x8] sm:$0xff]
    %v6291 = vld [vmem:[%s6288 + $0x10] sm:$0xff]
    %v6292 = vld [vmem:[%s6288 + $0x18] sm:$0xff]
    %6293 = vmatprep.subr.mxu0 0.0
    %6294 = vmatpush1.msra.mxu0 %v5105
    %6295 = vmatprep.subr.mxu0 0.0
    %6296 = vmatpush1.msra.mxu0 %v5106
    %6297 = vmatprep.subr.mxu0 0.0
    %6298 = vmatpush1.msra.mxu0 %v5107
    %6299 = vmatprep.subr.mxu0 0.0
    %6300 = vmatpush1.msra.mxu0 %v5108
    %6301 = vmatprep.subr.mxu0 0.0
    %6302 = vmatpush1.msra.mxu0 %v5109
    %6303 = vmatprep.subr.mxu0 0.0
    %6304 = vmatpush1.msra.mxu0 %v5110
    %6305 = vmatprep.subr.mxu0 0.0
    %6306 = vmatpush1.msra.mxu0 %v5111
    %6307 = vmatprep.subr.mxu0 0.0
    %6308 = vmatpush1.msra.mxu0 %v5112
    %6309 = vmatprep.subr.mxu0 0.0
    %6310 = vmatpush1.msra.mxu0 %v5113
    %6311 = vmatprep.subr.mxu0 0.0
    %6312 = vmatpush1.msra.mxu0 %v5114
    %6313 = vmatprep.subr.mxu0 0.0
    %6314 = vmatpush1.msra.mxu0 %v5115
    %6315 = vmatprep.subr.mxu0 0.0
    %6316 = vmatpush1.msra.mxu0 %v5116
    %6317 = vmatprep.subr.mxu0 0.0
    %6318 = vmatpush1.msra.mxu0 %v5117
    %6319 = vmatprep.subr.mxu0 0.0
    %6320 = vmatpush1.msra.mxu0 %v5118
    %6321 = vmatprep.subr.mxu0 0.0
    %6322 = vmatpush1.msra.mxu0 %v5119
    %6323 = vmatprep.subr.mxu0 0.0
    %6324 = vmatpush1.msra.mxu0 %v5120
    %6325 = vmatprep.subr.mxu0 0.0
    %6326 = vmatpush1.msra.mxu0 0.0
    %6327 = vmatprep.subr.mxu0 0.0
    %6328 = vmatpush1.msra.mxu0 0.0
    %6329 = vmatprep.subr.mxu0 0.0
    %6330 = vmatpush1.msra.mxu0 0.0
    %6331 = vmatprep.subr.mxu0 0.0
    %6332 = vmatpush1.msra.mxu0 0.0
    %6333 = vmatprep.subr.mxu0 0.0
    %6334 = vmatpush1.msra.mxu0 0.0
    %6335 = vmatprep.subr.mxu0 0.0
    %6336 = vmatpush1.msra.mxu0 0.0
    %6337 = vmatprep.subr.mxu0 0.0
    %6338 = vmatpush1.msra.mxu0 0.0
    %6339 = vmatprep.subr.mxu0 0.0
    %6340 = vmatpush1.msra.mxu0 0.0
    %6341 = vmatprep.subr.mxu0 0.0
    %6342 = vmatpush1.msra.mxu0 0.0
    %6343 = vmatprep.subr.mxu0 0.0
    %6344 = vmatpush1.msra.mxu0 0.0
    %6345 = vmatprep.subr.mxu0 0.0
    %6346 = vmatpush1.msra.mxu0 0.0
    %6347 = vmatprep.subr.mxu0 0.0
    %6348 = vmatpush1.msra.mxu0 0.0
    %6349 = vmatprep.subr.mxu0 0.0
    %6350 = vmatpush1.msra.mxu0 0.0
    %6351 = vmatprep.subr.mxu0 0.0
    %6352 = vmatpush1.msra.mxu0 0.0
    %6353 = vmatprep.subr.mxu0 0.0
    %6354 = vmatpush1.msra.mxu0 0.0
    %6355 = vmatprep.subr.mxu0 0.0
    %6356 = vmatpush1.msra.mxu0 0.0
    %6357 = vmatprep.mubr.f32.mxu0 0.0
    %6358 = vmatmul.mubr.f32.gmra.mrb[0].mxu0 %v6289
    %v6359 = vpop.f32.mrb[0].mxu0
    %v6360 = vadd.f32 0.0, %v6359
    %v6361 = vpop.f32.mrb[0].mxu0
    %6362 = vmatprep.mubr.f32.mxu0 0.0
    %6363 = vmatmul.mubr.f32.gmra.mrb[0].mxu0 %v6290
    %v6364 = vpop.f32.mrb[0].mxu0
    %v6365 = vadd.f32 0.0, %v6364
    %v6366 = vpop.f32.mrb[0].mxu0
    %6367 = vmatprep.mubr.f32.mxu0 0.0
    %6368 = vmatmul.mubr.f32.gmra.mrb[0].mxu0 %v6291
    %v6369 = vpop.f32.mrb[0].mxu0
    %v6370 = vadd.f32 0.0, %v6369
    %v6371 = vpop.f32.mrb[0].mxu0
    %6372 = vmatprep.mubr.f32.mxu0 0.0
    %6373 = vmatmul.mubr.f32.gmra.mrb[0].mxu0 %v6292
    %v6374 = vpop.f32.mrb[0].mxu0
    %v6375 = vadd.f32 0.0, %v6374
    %v6376 = vpop.f32.mrb[0].mxu0
    %6377 = vdwg.mxu0
    %s6378 = scalar_lea.vmem [#allocation10], 1920
    %v6379 = vld [vmem:[%s6378] sm:$0xff]
    %v6380 = vld [vmem:[%s6378 + $0x8] sm:$0xff]
    %v6381 = vld [vmem:[%s6378 + $0x10] sm:$0xff]
    %v6382 = vld [vmem:[%s6378 + $0x18] sm:$0xff]
    %v6383 = vld [vmem:[%s6378 + $0x20] sm:$0xff]
    %v6384 = vld [vmem:[%s6378 + $0x28] sm:$0xff]
    %v6385 = vld [vmem:[%s6378 + $0x30] sm:$0xff]
    %v6386 = vld [vmem:[%s6378 + $0x38] sm:$0xff]
    %v6387 = vld [vmem:[%s6378 + $0x40] sm:$0xff]
    %v6388 = vld [vmem:[%s6378 + $0x48] sm:$0xff]
    %v6389 = vld [vmem:[%s6378 + $0x50] sm:$0xff]
    %v6390 = vld [vmem:[%s6378 + $0x58] sm:$0xff]
    %v6391 = vld [vmem:[%s6378 + $0x60] sm:$0xff]
    %v6392 = vld [vmem:[%s6378 + $0x68] sm:$0xff]
    %v6393 = vld [vmem:[%s6378 + $0x70] sm:$0xff]
    %v6394 = vld [vmem:[%s6378 + $0x78] sm:$0xff]
    %6395 = vmatprep.subr.mxu0 0.0
    %6396 = vmatpush1.msra.mxu0 %v6379
    %6397 = vmatprep.subr.mxu0 0.0
    %6398 = vmatpush1.msra.mxu0 %v6380
    %6399 = vmatprep.subr.mxu0 0.0
    %6400 = vmatpush1.msra.mxu0 %v6381
    %6401 = vmatprep.subr.mxu0 0.0
    %6402 = vmatpush1.msra.mxu0 %v6382
    %6403 = vmatprep.subr.mxu0 0.0
    %6404 = vmatpush1.msra.mxu0 %v6383
    %6405 = vmatprep.subr.mxu0 0.0
    %6406 = vmatpush1.msra.mxu0 %v6384
    %6407 = vmatprep.subr.mxu0 0.0
    %6408 = vmatpush1.msra.mxu0 %v6385
    %6409 = vmatprep.subr.mxu0 0.0
    %6410 = vmatpush1.msra.mxu0 %v6386
    %6411 = vmatprep.subr.mxu0 0.0
    %6412 = vmatpush1.msra.mxu0 %v6387
    %6413 = vmatprep.subr.mxu0 0.0
    %6414 = vmatpush1.msra.mxu0 %v6388
    %6415 = vmatprep.subr.mxu0 0.0
    %6416 = vmatpush1.msra.mxu0 %v6389
    %6417 = vmatprep.subr.mxu0 0.0
    %6418 = vmatpush1.msra.mxu0 %v6390
    %6419 = vmatprep.subr.mxu0 0.0
    %6420 = vmatpush1.msra.mxu0 %v6391
    %6421 = vmatprep.subr.mxu0 0.0
    %6422 = vmatpush1.msra.mxu0 %v6392
    %6423 = vmatprep.subr.mxu0 0.0
    %6424 = vmatpush1.msra.mxu0 %v6393
    %6425 = vmatprep.subr.mxu0 0.0
    %6426 = vmatpush1.msra.mxu0 %v6394
    %6427 = vmatprep.subr.mxu0 0.0
    %6428 = vmatpush1.msra.mxu0 0.0
    %6429 = vmatprep.subr.mxu0 0.0
    %6430 = vmatpush1.msra.mxu0 0.0
    %6431 = vmatprep.subr.mxu0 0.0
    %6432 = vmatpush1.msra.mxu0 0.0
    %6433 = vmatprep.subr.mxu0 0.0
    %6434 = vmatpush1.msra.mxu0 0.0
    %6435 = vmatprep.subr.mxu0 0.0
    %6436 = vmatpush1.msra.mxu0 0.0
    %6437 = vmatprep.subr.mxu0 0.0
    %6438 = vmatpush1.msra.mxu0 0.0
    %6439 = vmatprep.subr.mxu0 0.0
    %6440 = vmatpush1.msra.mxu0 0.0
    %6441 = vmatprep.subr.mxu0 0.0
    %6442 = vmatpush1.msra.mxu0 0.0
    %6443 = vmatprep.subr.mxu0 0.0
    %6444 = vmatpush1.msra.mxu0 0.0
    %6445 = vmatprep.subr.mxu0 0.0
    %6446 = vmatpush1.msra.mxu0 0.0
    %6447 = vmatprep.subr.mxu0 0.0
    %6448 = vmatpush1.msra.mxu0 0.0
    %6449 = vmatprep.subr.mxu0 0.0
    %6450 = vmatpush1.msra.mxu0 0.0
    %6451 = vmatprep.subr.mxu0 0.0
    %6452 = vmatpush1.msra.mxu0 0.0
    %6453 = vmatprep.subr.mxu0 0.0
    %6454 = vmatpush1.msra.mxu0 0.0
    %6455 = vmatprep.subr.mxu0 0.0
    %6456 = vmatpush1.msra.mxu0 0.0
    %6457 = vmatprep.subr.mxu0 0.0
    %6458 = vmatpush1.msra.mxu0 0.0
    %6459 = vmatprep.mubr.f32.mxu0 0.0
    %6460 = vmatmul.mubr.f32.gmra.mrb[0].mxu0 %v6360
    %v6461 = vpop.f32.mrb[0].mxu0
    %v6462 = vadd.f32 0.0, %v6461
    %v6463 = vpop.f32.mrb[0].mxu0
    %6464 = vmatprep.mubr.f32.mxu0 0.0
    %6465 = vmatmul.mubr.f32.gmra.mrb[0].mxu0 %v6365
    %v6466 = vpop.f32.mrb[0].mxu0
    %v6467 = vadd.f32 0.0, %v6466
    %v6468 = vpop.f32.mrb[0].mxu0
    %6469 = vmatprep.mubr.f32.mxu0 0.0
    %6470 = vmatmul.mubr.f32.gmra.mrb[0].mxu0 %v6370
    %v6471 = vpop.f32.mrb[0].mxu0
    %v6472 = vadd.f32 0.0, %v6471
    %v6473 = vpop.f32.mrb[0].mxu0
    %6474 = vmatprep.mubr.f32.mxu0 0.0
    %6475 = vmatmul.mubr.f32.gmra.mrb[0].mxu0 %v6375
    %v6476 = vpop.f32.mrb[0].mxu0
    %v6477 = vadd.f32 0.0, %v6476
    %v6478 = vpop.f32.mrb[0].mxu0
    %6479 = vdwg.mxu0
    %v6480 = vadd.f32 %v6284, %v6462
    %v6481 = vadd.f32 %v6285, %v6467
    %v6482 = vadd.f32 %v6286, %v6472
    %v6483 = vadd.f32 %v6287, %v6477
    %s6484 = scalar_lea.vmem [#allocation5], 224
    %v6485 = vld [vmem:[%s6484] sm:$0xff]
    %v6486 = vld [vmem:[%s6484 + $0x8] sm:$0xff]
    %v6487 = vld [vmem:[%s6484 + $0x10] sm:$0xff]
    %v6488 = vld [vmem:[%s6484 + $0x18] sm:$0xff]
    %6489 = vmatprep.subr.mxu0 0.0
    %6490 = vmatpush1.msra.mxu0 %v5105
    %6491 = vmatprep.subr.mxu0 0.0
    %6492 = vmatpush1.msra.mxu0 %v5106
    %6493 = vmatprep.subr.mxu0 0.0
    %6494 = vmatpush1.msra.mxu0 %v5107
    %6495 = vmatprep.subr.mxu0 0.0
    %6496 = vmatpush1.msra.mxu0 %v5108
    %6497 = vmatprep.subr.mxu0 0.0
    %6498 = vmatpush1.msra.mxu0 %v5109
    %6499 = vmatprep.subr.mxu0 0.0
    %6500 = vmatpush1.msra.mxu0 %v5110
    %6501 = vmatprep.subr.mxu0 0.0
    %6502 = vmatpush1.msra.mxu0 %v5111
    %6503 = vmatprep.subr.mxu0 0.0
    %6504 = vmatpush1.msra.mxu0 %v5112
    %6505 = vmatprep.subr.mxu0 0.0
    %6506 = vmatpush1.msra.mxu0 %v5113
    %6507 = vmatprep.subr.mxu0 0.0
    %6508 = vmatpush1.msra.mxu0 %v5114
    %6509 = vmatprep.subr.mxu0 0.0
    %6510 = vmatpush1.msra.mxu0 %v5115
    %6511 = vmatprep.subr.mxu0 0.0
    %6512 = vmatpush1.msra.mxu0 %v5116
    %6513 = vmatprep.subr.mxu0 0.0
    %6514 = vmatpush1.msra.mxu0 %v5117
    %6515 = vmatprep.subr.mxu0 0.0
    %6516 = vmatpush1.msra.mxu0 %v5118
    %6517 = vmatprep.subr.mxu0 0.0
    %6518 = vmatpush1.msra.mxu0 %v5119
    %6519 = vmatprep.subr.mxu0 0.0
    %6520 = vmatpush1.msra.mxu0 %v5120
    %6521 = vmatprep.subr.mxu0 0.0
    %6522 = vmatpush1.msra.mxu0 0.0
    %6523 = vmatprep.subr.mxu0 0.0
    %6524 = vmatpush1.msra.mxu0 0.0
    %6525 = vmatprep.subr.mxu0 0.0
    %6526 = vmatpush1.msra.mxu0 0.0
    %6527 = vmatprep.subr.mxu0 0.0
    %6528 = vmatpush1.msra.mxu0 0.0
    %6529 = vmatprep.subr.mxu0 0.0
    %6530 = vmatpush1.msra.mxu0 0.0
    %6531 = vmatprep.subr.mxu0 0.0
    %6532 = vmatpush1.msra.mxu0 0.0
    %6533 = vmatprep.subr.mxu0 0.0
    %6534 = vmatpush1.msra.mxu0 0.0
    %6535 = vmatprep.subr.mxu0 0.0
    %6536 = vmatpush1.msra.mxu0 0.0
    %6537 = vmatprep.subr.mxu0 0.0
    %6538 = vmatpush1.msra.mxu0 0.0
    %6539 = vmatprep.subr.mxu0 0.0
    %6540 = vmatpush1.msra.mxu0 0.0
    %6541 = vmatprep.subr.mxu0 0.0
    %6542 = vmatpush1.msra.mxu0 0.0
    %6543 = vmatprep.subr.mxu0 0.0
    %6544 = vmatpush1.msra.mxu0 0.0
    %6545 = vmatprep.subr.mxu0 0.0
    %6546 = vmatpush1.msra.mxu0 0.0
    %6547 = vmatprep.subr.mxu0 0.0
    %6548 = vmatpush1.msra.mxu0 0.0
    %6549 = vmatprep.subr.mxu0 0.0
    %6550 = vmatpush1.msra.mxu0 0.0
    %6551 = vmatprep.subr.mxu0 0.0
    %6552 = vmatpush1.msra.mxu0 0.0
    %6553 = vmatprep.mubr.f32.mxu0 0.0
    %6554 = vmatmul.mubr.f32.gmra.mrb[0].mxu0 %v6485
    %v6555 = vpop.f32.mrb[0].mxu0
    %v6556 = vadd.f32 0.0, %v6555
    %v6557 = vpop.f32.mrb[0].mxu0
    %6558 = vmatprep.mubr.f32.mxu0 0.0
    %6559 = vmatmul.mubr.f32.gmra.mrb[0].mxu0 %v6486
    %v6560 = vpop.f32.mrb[0].mxu0
    %v6561 = vadd.f32 0.0, %v6560
    %v6562 = vpop.f32.mrb[0].mxu0
    %6563 = vmatprep.mubr.f32.mxu0 0.0
    %6564 = vmatmul.mubr.f32.gmra.mrb[0].mxu0 %v6487
    %v6565 = vpop.f32.mrb[0].mxu0
    %v6566 = vadd.f32 0.0, %v6565
    %v6567 = vpop.f32.mrb[0].mxu0
    %6568 = vmatprep.mubr.f32.mxu0 0.0
    %6569 = vmatmul.mubr.f32.gmra.mrb[0].mxu0 %v6488
    %v6570 = vpop.f32.mrb[0].mxu0
    %v6571 = vadd.f32 0.0, %v6570
    %v6572 = vpop.f32.mrb[0].mxu0
    %6573 = vdwg.mxu0
    %s6574 = scalar_lea.vmem [#allocation10], 2048
    %v6575 = vld [vmem:[%s6574] sm:$0xff]
    %v6576 = vld [vmem:[%s6574 + $0x8] sm:$0xff]
    %v6577 = vld [vmem:[%s6574 + $0x10] sm:$0xff]
    %v6578 = vld [vmem:[%s6574 + $0x18] sm:$0xff]
    %v6579 = vld [vmem:[%s6574 + $0x20] sm:$0xff]
    %v6580 = vld [vmem:[%s6574 + $0x28] sm:$0xff]
    %v6581 = vld [vmem:[%s6574 + $0x30] sm:$0xff]
    %v6582 = vld [vmem:[%s6574 + $0x38] sm:$0xff]
    %v6583 = vld [vmem:[%s6574 + $0x40] sm:$0xff]
    %v6584 = vld [vmem:[%s6574 + $0x48] sm:$0xff]
    %v6585 = vld [vmem:[%s6574 + $0x50] sm:$0xff]
    %v6586 = vld [vmem:[%s6574 + $0x58] sm:$0xff]
    %v6587 = vld [vmem:[%s6574 + $0x60] sm:$0xff]
    %v6588 = vld [vmem:[%s6574 + $0x68] sm:$0xff]
    %v6589 = vld [vmem:[%s6574 + $0x70] sm:$0xff]
    %v6590 = vld [vmem:[%s6574 + $0x78] sm:$0xff]
    %6591 = vmatprep.subr.mxu0 0.0
    %6592 = vmatpush1.msra.mxu0 %v6575
    %6593 = vmatprep.subr.mxu0 0.0
    %6594 = vmatpush1.msra.mxu0 %v6576
    %6595 = vmatprep.subr.mxu0 0.0
    %6596 = vmatpush1.msra.mxu0 %v6577
    %6597 = vmatprep.subr.mxu0 0.0
    %6598 = vmatpush1.msra.mxu0 %v6578
    %6599 = vmatprep.subr.mxu0 0.0
    %6600 = vmatpush1.msra.mxu0 %v6579
    %6601 = vmatprep.subr.mxu0 0.0
    %6602 = vmatpush1.msra.mxu0 %v6580
    %6603 = vmatprep.subr.mxu0 0.0
    %6604 = vmatpush1.msra.mxu0 %v6581
    %6605 = vmatprep.subr.mxu0 0.0
    %6606 = vmatpush1.msra.mxu0 %v6582
    %6607 = vmatprep.subr.mxu0 0.0
    %6608 = vmatpush1.msra.mxu0 %v6583
    %6609 = vmatprep.subr.mxu0 0.0
    %6610 = vmatpush1.msra.mxu0 %v6584
    %6611 = vmatprep.subr.mxu0 0.0
    %6612 = vmatpush1.msra.mxu0 %v6585
    %6613 = vmatprep.subr.mxu0 0.0
    %6614 = vmatpush1.msra.mxu0 %v6586
    %6615 = vmatprep.subr.mxu0 0.0
    %6616 = vmatpush1.msra.mxu0 %v6587
    %6617 = vmatprep.subr.mxu0 0.0
    %6618 = vmatpush1.msra.mxu0 %v6588
    %6619 = vmatprep.subr.mxu0 0.0
    %6620 = vmatpush1.msra.mxu0 %v6589
    %6621 = vmatprep.subr.mxu0 0.0
    %6622 = vmatpush1.msra.mxu0 %v6590
    %6623 = vmatprep.subr.mxu0 0.0
    %6624 = vmatpush1.msra.mxu0 0.0
    %6625 = vmatprep.subr.mxu0 0.0
    %6626 = vmatpush1.msra.mxu0 0.0
    %6627 = vmatprep.subr.mxu0 0.0
    %6628 = vmatpush1.msra.mxu0 0.0
    %6629 = vmatprep.subr.mxu0 0.0
    %6630 = vmatpush1.msra.mxu0 0.0
    %6631 = vmatprep.subr.mxu0 0.0
    %6632 = vmatpush1.msra.mxu0 0.0
    %6633 = vmatprep.subr.mxu0 0.0
    %6634 = vmatpush1.msra.mxu0 0.0
    %6635 = vmatprep.subr.mxu0 0.0
    %6636 = vmatpush1.msra.mxu0 0.0
    %6637 = vmatprep.subr.mxu0 0.0
    %6638 = vmatpush1.msra.mxu0 0.0
    %6639 = vmatprep.subr.mxu0 0.0
    %6640 = vmatpush1.msra.mxu0 0.0
    %6641 = vmatprep.subr.mxu0 0.0
    %6642 = vmatpush1.msra.mxu0 0.0
    %6643 = vmatprep.subr.mxu0 0.0
    %6644 = vmatpush1.msra.mxu0 0.0
    %6645 = vmatprep.subr.mxu0 0.0
    %6646 = vmatpush1.msra.mxu0 0.0
    %6647 = vmatprep.subr.mxu0 0.0
    %6648 = vmatpush1.msra.mxu0 0.0
    %6649 = vmatprep.subr.mxu0 0.0
    %6650 = vmatpush1.msra.mxu0 0.0
    %6651 = vmatprep.subr.mxu0 0.0
    %6652 = vmatpush1.msra.mxu0 0.0
    %6653 = vmatprep.subr.mxu0 0.0
    %6654 = vmatpush1.msra.mxu0 0.0
    %6655 = vmatprep.mubr.f32.mxu0 0.0
    %6656 = vmatmul.mubr.f32.gmra.mrb[0].mxu0 %v6556
    %v6657 = vpop.f32.mrb[0].mxu0
    %v6658 = vadd.f32 0.0, %v6657
    %v6659 = vpop.f32.mrb[0].mxu0
    %6660 = vmatprep.mubr.f32.mxu0 0.0
    %6661 = vmatmul.mubr.f32.gmra.mrb[0].mxu0 %v6561
    %v6662 = vpop.f32.mrb[0].mxu0
    %v6663 = vadd.f32 0.0, %v6662
    %v6664 = vpop.f32.mrb[0].mxu0
    %6665 = vmatprep.mubr.f32.mxu0 0.0
    %6666 = vmatmul.mubr.f32.gmra.mrb[0].mxu0 %v6566
    %v6667 = vpop.f32.mrb[0].mxu0
    %v6668 = vadd.f32 0.0, %v6667
    %v6669 = vpop.f32.mrb[0].mxu0
    %6670 = vmatprep.mubr.f32.mxu0 0.0
    %6671 = vmatmul.mubr.f32.gmra.mrb[0].mxu0 %v6571
    %v6672 = vpop.f32.mrb[0].mxu0
    %v6673 = vadd.f32 0.0, %v6672
    %v6674 = vpop.f32.mrb[0].mxu0
    %6675 = vdwg.mxu0
    %v6676 = vadd.f32 %v6480, %v6658
    %v6677 = vadd.f32 %v6481, %v6663
    %v6678 = vadd.f32 %v6482, %v6668
    %v6679 = vadd.f32 %v6483, %v6673
    %s6680 = scalar_lea.vmem [#allocation5], 256
    %v6681 = vld [vmem:[%s6680] sm:$0xff]
    %v6682 = vld [vmem:[%s6680 + $0x8] sm:$0xff]
    %v6683 = vld [vmem:[%s6680 + $0x10] sm:$0xff]
    %v6684 = vld [vmem:[%s6680 + $0x18] sm:$0xff]
    %6685 = vmatprep.subr.mxu0 0.0
    %6686 = vmatpush1.msra.mxu0 %v5105
    %6687 = vmatprep.subr.mxu0 0.0
    %6688 = vmatpush1.msra.mxu0 %v5106
    %6689 = vmatprep.subr.mxu0 0.0
    %6690 = vmatpush1.msra.mxu0 %v5107
    %6691 = vmatprep.subr.mxu0 0.0
    %6692 = vmatpush1.msra.mxu0 %v5108
    %6693 = vmatprep.subr.mxu0 0.0
    %6694 = vmatpush1.msra.mxu0 %v5109
    %6695 = vmatprep.subr.mxu0 0.0
    %6696 = vmatpush1.msra.mxu0 %v5110
    %6697 = vmatprep.subr.mxu0 0.0
    %6698 = vmatpush1.msra.mxu0 %v5111
    %6699 = vmatprep.subr.mxu0 0.0
    %6700 = vmatpush1.msra.mxu0 %v5112
    %6701 = vmatprep.subr.mxu0 0.0
    %6702 = vmatpush1.msra.mxu0 %v5113
    %6703 = vmatprep.subr.mxu0 0.0
    %6704 = vmatpush1.msra.mxu0 %v5114
    %6705 = vmatprep.subr.mxu0 0.0
    %6706 = vmatpush1.msra.mxu0 %v5115
    %6707 = vmatprep.subr.mxu0 0.0
    %6708 = vmatpush1.msra.mxu0 %v5116
    %6709 = vmatprep.subr.mxu0 0.0
    %6710 = vmatpush1.msra.mxu0 %v5117
    %6711 = vmatprep.subr.mxu0 0.0
    %6712 = vmatpush1.msra.mxu0 %v5118
    %6713 = vmatprep.subr.mxu0 0.0
    %6714 = vmatpush1.msra.mxu0 %v5119
    %6715 = vmatprep.subr.mxu0 0.0
    %6716 = vmatpush1.msra.mxu0 %v5120
    %6717 = vmatprep.subr.mxu0 0.0
    %6718 = vmatpush1.msra.mxu0 0.0
    %6719 = vmatprep.subr.mxu0 0.0
    %6720 = vmatpush1.msra.mxu0 0.0
    %6721 = vmatprep.subr.mxu0 0.0
    %6722 = vmatpush1.msra.mxu0 0.0
    %6723 = vmatprep.subr.mxu0 0.0
    %6724 = vmatpush1.msra.mxu0 0.0
    %6725 = vmatprep.subr.mxu0 0.0
    %6726 = vmatpush1.msra.mxu0 0.0
    %6727 = vmatprep.subr.mxu0 0.0
    %6728 = vmatpush1.msra.mxu0 0.0
    %6729 = vmatprep.subr.mxu0 0.0
    %6730 = vmatpush1.msra.mxu0 0.0
    %6731 = vmatprep.subr.mxu0 0.0
    %6732 = vmatpush1.msra.mxu0 0.0
    %6733 = vmatprep.subr.mxu0 0.0
    %6734 = vmatpush1.msra.mxu0 0.0
    %6735 = vmatprep.subr.mxu0 0.0
    %6736 = vmatpush1.msra.mxu0 0.0
    %6737 = vmatprep.subr.mxu0 0.0
    %6738 = vmatpush1.msra.mxu0 0.0
    %6739 = vmatprep.subr.mxu0 0.0
    %6740 = vmatpush1.msra.mxu0 0.0
    %6741 = vmatprep.subr.mxu0 0.0
    %6742 = vmatpush1.msra.mxu0 0.0
    %6743 = vmatprep.subr.mxu0 0.0
    %6744 = vmatpush1.msra.mxu0 0.0
    %6745 = vmatprep.subr.mxu0 0.0
    %6746 = vmatpush1.msra.mxu0 0.0
    %6747 = vmatprep.subr.mxu0 0.0
    %6748 = vmatpush1.msra.mxu0 0.0
    %6749 = vmatprep.mubr.f32.mxu0 0.0
    %6750 = vmatmul.mubr.f32.gmra.mrb[0].mxu0 %v6681
    %v6751 = vpop.f32.mrb[0].mxu0
    %v6752 = vadd.f32 0.0, %v6751
    %v6753 = vpop.f32.mrb[0].mxu0
    %6754 = vmatprep.mubr.f32.mxu0 0.0
    %6755 = vmatmul.mubr.f32.gmra.mrb[0].mxu0 %v6682
    %v6756 = vpop.f32.mrb[0].mxu0
    %v6757 = vadd.f32 0.0, %v6756
    %v6758 = vpop.f32.mrb[0].mxu0
    %6759 = vmatprep.mubr.f32.mxu0 0.0
    %6760 = vmatmul.mubr.f32.gmra.mrb[0].mxu0 %v6683
    %v6761 = vpop.f32.mrb[0].mxu0
    %v6762 = vadd.f32 0.0, %v6761
    %v6763 = vpop.f32.mrb[0].mxu0
    %6764 = vmatprep.mubr.f32.mxu0 0.0
    %6765 = vmatmul.mubr.f32.gmra.mrb[0].mxu0 %v6684
    %v6766 = vpop.f32.mrb[0].mxu0
    %v6767 = vadd.f32 0.0, %v6766
    %v6768 = vpop.f32.mrb[0].mxu0
    %6769 = vdwg.mxu0
    %s6770 = scalar_lea.vmem [#allocation10], 2176
    %v6771 = vld [vmem:[%s6770] sm:$0xff]
    %v6772 = vld [vmem:[%s6770 + $0x8] sm:$0xff]
    %v6773 = vld [vmem:[%s6770 + $0x10] sm:$0xff]
    %v6774 = vld [vmem:[%s6770 + $0x18] sm:$0xff]
    %v6775 = vld [vmem:[%s6770 + $0x20] sm:$0xff]
    %v6776 = vld [vmem:[%s6770 + $0x28] sm:$0xff]
    %v6777 = vld [vmem:[%s6770 + $0x30] sm:$0xff]
    %v6778 = vld [vmem:[%s6770 + $0x38] sm:$0xff]
    %v6779 = vld [vmem:[%s6770 + $0x40] sm:$0xff]
    %v6780 = vld [vmem:[%s6770 + $0x48] sm:$0xff]
    %v6781 = vld [vmem:[%s6770 + $0x50] sm:$0xff]
    %v6782 = vld [vmem:[%s6770 + $0x58] sm:$0xff]
    %v6783 = vld [vmem:[%s6770 + $0x60] sm:$0xff]
    %v6784 = vld [vmem:[%s6770 + $0x68] sm:$0xff]
    %v6785 = vld [vmem:[%s6770 + $0x70] sm:$0xff]
    %v6786 = vld [vmem:[%s6770 + $0x78] sm:$0xff]
    %6787 = vmatprep.subr.mxu0 0.0
    %6788 = vmatpush1.msra.mxu0 %v6771
    %6789 = vmatprep.subr.mxu0 0.0
    %6790 = vmatpush1.msra.mxu0 %v6772
    %6791 = vmatprep.subr.mxu0 0.0
    %6792 = vmatpush1.msra.mxu0 %v6773
    %6793 = vmatprep.subr.mxu0 0.0
    %6794 = vmatpush1.msra.mxu0 %v6774
    %6795 = vmatprep.subr.mxu0 0.0
    %6796 = vmatpush1.msra.mxu0 %v6775
    %6797 = vmatprep.subr.mxu0 0.0
    %6798 = vmatpush1.msra.mxu0 %v6776
    %6799 = vmatprep.subr.mxu0 0.0
    %6800 = vmatpush1.msra.mxu0 %v6777
    %6801 = vmatprep.subr.mxu0 0.0
    %6802 = vmatpush1.msra.mxu0 %v6778
    %6803 = vmatprep.subr.mxu0 0.0
    %6804 = vmatpush1.msra.mxu0 %v6779
    %6805 = vmatprep.subr.mxu0 0.0
    %6806 = vmatpush1.msra.mxu0 %v6780
    %6807 = vmatprep.subr.mxu0 0.0
    %6808 = vmatpush1.msra.mxu0 %v6781
    %6809 = vmatprep.subr.mxu0 0.0
    %6810 = vmatpush1.msra.mxu0 %v6782
    %6811 = vmatprep.subr.mxu0 0.0
    %6812 = vmatpush1.msra.mxu0 %v6783
    %6813 = vmatprep.subr.mxu0 0.0
    %6814 = vmatpush1.msra.mxu0 %v6784
    %6815 = vmatprep.subr.mxu0 0.0
    %6816 = vmatpush1.msra.mxu0 %v6785
    %6817 = vmatprep.subr.mxu0 0.0
    %6818 = vmatpush1.msra.mxu0 %v6786
    %6819 = vmatprep.subr.mxu0 0.0
    %6820 = vmatpush1.msra.mxu0 0.0
    %6821 = vmatprep.subr.mxu0 0.0
    %6822 = vmatpush1.msra.mxu0 0.0
    %6823 = vmatprep.subr.mxu0 0.0
    %6824 = vmatpush1.msra.mxu0 0.0
    %6825 = vmatprep.subr.mxu0 0.0
    %6826 = vmatpush1.msra.mxu0 0.0
    %6827 = vmatprep.subr.mxu0 0.0
    %6828 = vmatpush1.msra.mxu0 0.0
    %6829 = vmatprep.subr.mxu0 0.0
    %6830 = vmatpush1.msra.mxu0 0.0
    %6831 = vmatprep.subr.mxu0 0.0
    %6832 = vmatpush1.msra.mxu0 0.0
    %6833 = vmatprep.subr.mxu0 0.0
    %6834 = vmatpush1.msra.mxu0 0.0
    %6835 = vmatprep.subr.mxu0 0.0
    %6836 = vmatpush1.msra.mxu0 0.0
    %6837 = vmatprep.subr.mxu0 0.0
    %6838 = vmatpush1.msra.mxu0 0.0
    %6839 = vmatprep.subr.mxu0 0.0
    %6840 = vmatpush1.msra.mxu0 0.0
    %6841 = vmatprep.subr.mxu0 0.0
    %6842 = vmatpush1.msra.mxu0 0.0
    %6843 = vmatprep.subr.mxu0 0.0
    %6844 = vmatpush1.msra.mxu0 0.0
    %6845 = vmatprep.subr.mxu0 0.0
    %6846 = vmatpush1.msra.mxu0 0.0
    %6847 = vmatprep.subr.mxu0 0.0
    %6848 = vmatpush1.msra.mxu0 0.0
    %6849 = vmatprep.subr.mxu0 0.0
    %6850 = vmatpush1.msra.mxu0 0.0
    %6851 = vmatprep.mubr.f32.mxu0 0.0
    %6852 = vmatmul.mubr.f32.gmra.mrb[0].mxu0 %v6752
    %v6853 = vpop.f32.mrb[0].mxu0
    %v6854 = vadd.f32 0.0, %v6853
    %v6855 = vpop.f32.mrb[0].mxu0
    %6856 = vmatprep.mubr.f32.mxu0 0.0
    %6857 = vmatmul.mubr.f32.gmra.mrb[0].mxu0 %v6757
    %v6858 = vpop.f32.mrb[0].mxu0
    %v6859 = vadd.f32 0.0, %v6858
    %v6860 = vpop.f32.mrb[0].mxu0
    %6861 = vmatprep.mubr.f32.mxu0 0.0
    %6862 = vmatmul.mubr.f32.gmra.mrb[0].mxu0 %v6762
    %v6863 = vpop.f32.mrb[0].mxu0
    %v6864 = vadd.f32 0.0, %v6863
    %v6865 = vpop.f32.mrb[0].mxu0
    %6866 = vmatprep.mubr.f32.mxu0 0.0
    %6867 = vmatmul.mubr.f32.gmra.mrb[0].mxu0 %v6767
    %v6868 = vpop.f32.mrb[0].mxu0
    %v6869 = vadd.f32 0.0, %v6868
    %v6870 = vpop.f32.mrb[0].mxu0
    %6871 = vdwg.mxu0
    %v6872 = vadd.f32 %v6676, %v6854
    %v6873 = vadd.f32 %v6677, %v6859
    %v6874 = vadd.f32 %v6678, %v6864
    %v6875 = vadd.f32 %v6679, %v6869
    %s6876 = scalar_lea.vmem [#allocation11], 1
    %v6877 = vld [vmem:[%s6876] sm:$0x1]
    %v6879 = vlaneseq
    %v6880 = vshrl.u32 %v6879, 7
    %v6881 = vsub.s32 0, %v6880
    %v6882 = vrot.slane %v6877, %v6881
    %v6884 = vadd.f32 %v6872, %v6882
    %v6885 = vadd.f32 %v6873, %v6882
    %v6886 = vadd.f32 %v6874, %v6882
    %v6887 = vadd.f32 %v6875, %v6882
    %vm6888 = vcmp.gt.f32.partialorder %v6884, 0.0
    %vm6889 = vcmp.gt.f32.partialorder %v6885, 0.0
    %vm6890 = vcmp.gt.f32.partialorder %v6886, 0.0
    %vm6891 = vcmp.gt.f32.partialorder %v6887, 0.0
    %v6892 = vmul.f32 %v6884, 0.2
    %v6893 = vmul.f32 %v6885, 0.2
    %v6894 = vmul.f32 %v6886, 0.2
    %v6895 = vmul.f32 %v6887, 0.2
    %v6896 = vsel %vm6888, %v6884, %v6892
    %v6897 = vsel %vm6889, %v6885, %v6893
    %v6898 = vsel %vm6890, %v6886, %v6894
    %v6899 = vsel %vm6891, %v6887, %v6895
    %s6900 = scalar_lea.vmem [#allocation13], 1
    %v6901 = vld [vmem:[%s6900] sm:$0x1]
    %v6903 = vlaneseq
    %v6904 = vshrl.u32 %v6903, 7
    %v6905 = vsub.s32 0, %v6904
    %v6906 = vrot.slane %v6901, %v6905
    %v6908 = vmul.f32 %v6896, %v6906
    %v6909 = vmul.f32 %v6897, %v6906
    %v6910 = vmul.f32 %v6898, %v6906
    %v6911 = vmul.f32 %v6899, %v6906
    %s6912 = scalar_lea.vmem [#allocation14], 1
    %v6913 = vld [vmem:[%s6912] sm:$0x1]
    %v6915 = vlaneseq
    %v6916 = vshrl.u32 %v6915, 7
    %v6917 = vsub.s32 0, %v6916
    %v6918 = vrot.slane %v6913, %v6917
    %v6920 = vadd.f32 %v6908, %v6918
    %v6921 = vadd.f32 %v6909, %v6918
    %v6922 = vadd.f32 %v6910, %v6918
    %v6923 = vadd.f32 %v6911, %v6918
    %v6924 = vld [vmem:[#allocation7] sm:$0xff]
    %vm6925 = vcmask 261120
    %v6927 = vsel %vm6925, %v6924, 0
    %6929 = vmatprep.subr.mxu0 0.0
    %6930 = vmatpush1.msra.mxu0 %v6920
    %6931 = vmatprep.subr.mxu0 0.0
    %6932 = vmatpush1.msra.mxu0 %v6921
    %6933 = vmatprep.subr.mxu0 0.0
    %6934 = vmatpush1.msra.mxu0 %v6922
    %6935 = vmatprep.subr.mxu0 0.0
    %6936 = vmatpush1.msra.mxu0 %v6923
    %6937 = vmatprep.subr.mxu0 0.0
    %6938 = vmatpush1.msra.mxu0 0.0
    %6939 = vmatprep.subr.mxu0 0.0
    %6940 = vmatpush1.msra.mxu0 0.0
    %6941 = vmatprep.subr.mxu0 0.0
    %6942 = vmatpush1.msra.mxu0 0.0
    %6943 = vmatprep.subr.mxu0 0.0
    %6944 = vmatpush1.msra.mxu0 0.0
    %6945 = vmatprep.subr.mxu0 0.0
    %6946 = vmatpush1.msra.mxu0 0.0
    %6947 = vmatprep.subr.mxu0 0.0
    %6948 = vmatpush1.msra.mxu0 0.0
    %6949 = vmatprep.subr.mxu0 0.0
    %6950 = vmatpush1.msra.mxu0 0.0
    %6951 = vmatprep.subr.mxu0 0.0
    %6952 = vmatpush1.msra.mxu0 0.0
    %6953 = vmatprep.subr.mxu0 0.0
    %6954 = vmatpush1.msra.mxu0 0.0
    %6955 = vmatprep.subr.mxu0 0.0
    %6956 = vmatpush1.msra.mxu0 0.0
    %6957 = vmatprep.subr.mxu0 0.0
    %6958 = vmatpush1.msra.mxu0 0.0
    %6959 = vmatprep.subr.mxu0 0.0
    %6960 = vmatpush1.msra.mxu0 0.0
    %6961 = vmatprep.subr.mxu0 0.0
    %6962 = vmatpush1.msra.mxu0 0.0
    %6963 = vmatprep.subr.mxu0 0.0
    %6964 = vmatpush1.msra.mxu0 0.0
    %6965 = vmatprep.subr.mxu0 0.0
    %6966 = vmatpush1.msra.mxu0 0.0
    %6967 = vmatprep.subr.mxu0 0.0
    %6968 = vmatpush1.msra.mxu0 0.0
    %6969 = vmatprep.subr.mxu0 0.0
    %6970 = vmatpush1.msra.mxu0 0.0
    %6971 = vmatprep.subr.mxu0 0.0
    %6972 = vmatpush1.msra.mxu0 0.0
    %6973 = vmatprep.subr.mxu0 0.0
    %6974 = vmatpush1.msra.mxu0 0.0
    %6975 = vmatprep.subr.mxu0 0.0
    %6976 = vmatpush1.msra.mxu0 0.0
    %6977 = vmatprep.subr.mxu0 0.0
    %6978 = vmatpush1.msra.mxu0 0.0
    %6979 = vmatprep.subr.mxu0 0.0
    %6980 = vmatpush1.msra.mxu0 0.0
    %6981 = vmatprep.subr.mxu0 0.0
    %6982 = vmatpush1.msra.mxu0 0.0
    %6983 = vmatprep.subr.mxu0 0.0
    %6984 = vmatpush1.msra.mxu0 0.0
    %6985 = vmatprep.subr.mxu0 0.0
    %6986 = vmatpush1.msra.mxu0 0.0
    %6987 = vmatprep.subr.mxu0 0.0
    %6988 = vmatpush1.msra.mxu0 0.0
    %6989 = vmatprep.subr.mxu0 0.0
    %6990 = vmatpush1.msra.mxu0 0.0
    %6991 = vmatprep.subr.mxu0 0.0
    %6992 = vmatpush1.msra.mxu0 0.0
    %6993 = vmatprep.mubr.f32.mxu0 0.0
    %6994 = vmatmul.mubr.f32.gmra.mrb[0].mxu0 %v6927
    %v6995 = vpop.f32.mrb[0].mxu0
    %v6996 = vadd.f32 0.0, %v6995
    %v6997 = vpop.f32.mrb[0].mxu0
    %6998 = vdwg.mxu0
    %s6999 = scalar_lea.vmem [#allocation10], 2304
    %v7000 = vld [vmem:[%s6999] sm:$0xff]
    %v7001 = vld [vmem:[%s6999 + $0x8] sm:$0xff]
    %v7002 = vld [vmem:[%s6999 + $0x10] sm:$0xff]
    %v7003 = vld [vmem:[%s6999 + $0x18] sm:$0xff]
    %v7004 = vld [vmem:[%s6999 + $0x20] sm:$0xff]
    %v7005 = vld [vmem:[%s6999 + $0x28] sm:$0xff]
    %v7006 = vld [vmem:[%s6999 + $0x30] sm:$0xff]
    %v7007 = vld [vmem:[%s6999 + $0x38] sm:$0xff]
    %v7008 = vld [vmem:[%s6999 + $0x40] sm:$0xff]
    %v7009 = vld [vmem:[%s6999 + $0x48] sm:$0xff]
    %v7010 = vld [vmem:[%s6999 + $0x50] sm:$0xff]
    %v7011 = vld [vmem:[%s6999 + $0x58] sm:$0xff]
    %v7012 = vld [vmem:[%s6999 + $0x60] sm:$0xff]
    %v7013 = vld [vmem:[%s6999 + $0x68] sm:$0xff]
    %v7014 = vld [vmem:[%s6999 + $0x70] sm:$0xff]
    %v7015 = vld [vmem:[%s6999 + $0x78] sm:$0xff]
    %s7016 = scalar_lea.vmem [#allocation7], 8
    %v7017 = vld [vmem:[%s7016] sm:$0xff]
    %v7019 = vsel %vm6925, %v7017, 0
    %7021 = vmatprep.subr.mxu0 0.0
    %7022 = vmatpush1.msra.mxu0 %v6920
    %7023 = vmatprep.subr.mxu0 0.0
    %7024 = vmatpush1.msra.mxu0 %v6921
    %7025 = vmatprep.subr.mxu0 0.0
    %7026 = vmatpush1.msra.mxu0 %v6922
    %7027 = vmatprep.subr.mxu0 0.0
    %7028 = vmatpush1.msra.mxu0 %v6923
    %7029 = vmatprep.subr.mxu0 0.0
    %7030 = vmatpush1.msra.mxu0 0.0
    %7031 = vmatprep.subr.mxu0 0.0
    %7032 = vmatpush1.msra.mxu0 0.0
    %7033 = vmatprep.subr.mxu0 0.0
    %7034 = vmatpush1.msra.mxu0 0.0
    %7035 = vmatprep.subr.mxu0 0.0
    %7036 = vmatpush1.msra.mxu0 0.0
    %7037 = vmatprep.subr.mxu0 0.0
    %7038 = vmatpush1.msra.mxu0 0.0
    %7039 = vmatprep.subr.mxu0 0.0
    %7040 = vmatpush1.msra.mxu0 0.0
    %7041 = vmatprep.subr.mxu0 0.0
    %7042 = vmatpush1.msra.mxu0 0.0
    %7043 = vmatprep.subr.mxu0 0.0
    %7044 = vmatpush1.msra.mxu0 0.0
    %7045 = vmatprep.subr.mxu0 0.0
    %7046 = vmatpush1.msra.mxu0 0.0
    %7047 = vmatprep.subr.mxu0 0.0
    %7048 = vmatpush1.msra.mxu0 0.0
    %7049 = vmatprep.subr.mxu0 0.0
    %7050 = vmatpush1.msra.mxu0 0.0
    %7051 = vmatprep.subr.mxu0 0.0
    %7052 = vmatpush1.msra.mxu0 0.0
    %7053 = vmatprep.subr.mxu0 0.0
    %7054 = vmatpush1.msra.mxu0 0.0
    %7055 = vmatprep.subr.mxu0 0.0
    %7056 = vmatpush1.msra.mxu0 0.0
    %7057 = vmatprep.subr.mxu0 0.0
    %7058 = vmatpush1.msra.mxu0 0.0
    %7059 = vmatprep.subr.mxu0 0.0
    %7060 = vmatpush1.msra.mxu0 0.0
    %7061 = vmatprep.subr.mxu0 0.0
    %7062 = vmatpush1.msra.mxu0 0.0
    %7063 = vmatprep.subr.mxu0 0.0
    %7064 = vmatpush1.msra.mxu0 0.0
    %7065 = vmatprep.subr.mxu0 0.0
    %7066 = vmatpush1.msra.mxu0 0.0
    %7067 = vmatprep.subr.mxu0 0.0
    %7068 = vmatpush1.msra.mxu0 0.0
    %7069 = vmatprep.subr.mxu0 0.0
    %7070 = vmatpush1.msra.mxu0 0.0
    %7071 = vmatprep.subr.mxu0 0.0
    %7072 = vmatpush1.msra.mxu0 0.0
    %7073 = vmatprep.subr.mxu0 0.0
    %7074 = vmatpush1.msra.mxu0 0.0
    %7075 = vmatprep.subr.mxu0 0.0
    %7076 = vmatpush1.msra.mxu0 0.0
    %7077 = vmatprep.subr.mxu0 0.0
    %7078 = vmatpush1.msra.mxu0 0.0
    %7079 = vmatprep.subr.mxu0 0.0
    %7080 = vmatpush1.msra.mxu0 0.0
    %7081 = vmatprep.subr.mxu0 0.0
    %7082 = vmatpush1.msra.mxu0 0.0
    %7083 = vmatprep.subr.mxu0 0.0
    %7084 = vmatpush1.msra.mxu0 0.0
    %7085 = vmatprep.mubr.f32.mxu0 0.0
    %7086 = vmatmul.mubr.f32.gmra.mrb[0].mxu0 %v7019
    %v7087 = vpop.f32.mrb[0].mxu0
    %v7088 = vadd.f32 0.0, %v7087
    %v7089 = vpop.f32.mrb[0].mxu0
    %7090 = vdwg.mxu0
    %s7091 = scalar_lea.vmem [#allocation10], 2432
    %v7092 = vld [vmem:[%s7091] sm:$0xff]
    %v7093 = vld [vmem:[%s7091 + $0x8] sm:$0xff]
    %v7094 = vld [vmem:[%s7091 + $0x10] sm:$0xff]
    %v7095 = vld [vmem:[%s7091 + $0x18] sm:$0xff]
    %v7096 = vld [vmem:[%s7091 + $0x20] sm:$0xff]
    %v7097 = vld [vmem:[%s7091 + $0x28] sm:$0xff]
    %v7098 = vld [vmem:[%s7091 + $0x30] sm:$0xff]
    %v7099 = vld [vmem:[%s7091 + $0x38] sm:$0xff]
    %v7100 = vld [vmem:[%s7091 + $0x40] sm:$0xff]
    %v7101 = vld [vmem:[%s7091 + $0x48] sm:$0xff]
    %v7102 = vld [vmem:[%s7091 + $0x50] sm:$0xff]
    %v7103 = vld [vmem:[%s7091 + $0x58] sm:$0xff]
    %v7104 = vld [vmem:[%s7091 + $0x60] sm:$0xff]
    %v7105 = vld [vmem:[%s7091 + $0x68] sm:$0xff]
    %v7106 = vld [vmem:[%s7091 + $0x70] sm:$0xff]
    %v7107 = vld [vmem:[%s7091 + $0x78] sm:$0xff]
    %7108 = vmatprep.subr.mxu0 0.0
    %7109 = vmatpush1.msra.mxu0 %v7092
    %7110 = vmatprep.subr.mxu0 0.0
    %7111 = vmatpush1.msra.mxu0 %v7093
    %7112 = vmatprep.subr.mxu0 0.0
    %7113 = vmatpush1.msra.mxu0 %v7094
    %7114 = vmatprep.subr.mxu0 0.0
    %7115 = vmatpush1.msra.mxu0 %v7095
    %7116 = vmatprep.subr.mxu0 0.0
    %7117 = vmatpush1.msra.mxu0 %v7096
    %7118 = vmatprep.subr.mxu0 0.0
    %7119 = vmatpush1.msra.mxu0 %v7097
    %7120 = vmatprep.subr.mxu0 0.0
    %7121 = vmatpush1.msra.mxu0 %v7098
    %7122 = vmatprep.subr.mxu0 0.0
    %7123 = vmatpush1.msra.mxu0 %v7099
    %7124 = vmatprep.subr.mxu0 0.0
    %7125 = vmatpush1.msra.mxu0 %v7100
    %7126 = vmatprep.subr.mxu0 0.0
    %7127 = vmatpush1.msra.mxu0 %v7101
    %7128 = vmatprep.subr.mxu0 0.0
    %7129 = vmatpush1.msra.mxu0 %v7102
    %7130 = vmatprep.subr.mxu0 0.0
    %7131 = vmatpush1.msra.mxu0 %v7103
    %7132 = vmatprep.subr.mxu0 0.0
    %7133 = vmatpush1.msra.mxu0 %v7104
    %7134 = vmatprep.subr.mxu0 0.0
    %7135 = vmatpush1.msra.mxu0 %v7105
    %7136 = vmatprep.subr.mxu0 0.0
    %7137 = vmatpush1.msra.mxu0 %v7106
    %7138 = vmatprep.subr.mxu0 0.0
    %7139 = vmatpush1.msra.mxu0 %v7107
    %7140 = vmatprep.subr.mxu0 0.0
    %7141 = vmatpush1.msra.mxu0 0.0
    %7142 = vmatprep.subr.mxu0 0.0
    %7143 = vmatpush1.msra.mxu0 0.0
    %7144 = vmatprep.subr.mxu0 0.0
    %7145 = vmatpush1.msra.mxu0 0.0
    %7146 = vmatprep.subr.mxu0 0.0
    %7147 = vmatpush1.msra.mxu0 0.0
    %7148 = vmatprep.subr.mxu0 0.0
    %7149 = vmatpush1.msra.mxu0 0.0
    %7150 = vmatprep.subr.mxu0 0.0
    %7151 = vmatpush1.msra.mxu0 0.0
    %7152 = vmatprep.subr.mxu0 0.0
    %7153 = vmatpush1.msra.mxu0 0.0
    %7154 = vmatprep.subr.mxu0 0.0
    %7155 = vmatpush1.msra.mxu0 0.0
    %7156 = vmatprep.subr.mxu0 0.0
    %7157 = vmatpush1.msra.mxu0 0.0
    %7158 = vmatprep.subr.mxu0 0.0
    %7159 = vmatpush1.msra.mxu0 0.0
    %7160 = vmatprep.subr.mxu0 0.0
    %7161 = vmatpush1.msra.mxu0 0.0
    %7162 = vmatprep.subr.mxu0 0.0
    %7163 = vmatpush1.msra.mxu0 0.0
    %7164 = vmatprep.subr.mxu0 0.0
    %7165 = vmatpush1.msra.mxu0 0.0
    %7166 = vmatprep.subr.mxu0 0.0
    %7167 = vmatpush1.msra.mxu0 0.0
    %7168 = vmatprep.subr.mxu0 0.0
    %7169 = vmatpush1.msra.mxu0 0.0
    %7170 = vmatprep.subr.mxu0 0.0
    %7171 = vmatpush1.msra.mxu0 0.0
    %7172 = vmatprep.mubr.f32.mxu0 0.0
    %7173 = vmatmul.mubr.f32.gmra.mrb[0].mxu0 %v7088
    %v7174 = vpop.f32.mrb[0].mxu0
    %v7175 = vadd.f32 0.0, %v7174
    %v7176 = vpop.f32.mrb[0].mxu0
    %7177 = vdwg.mxu0
    %7178 = vmatprep.subr.mxu0 0.0
    %7179 = vmatpush1.msra.mxu0 %v7000
    %7180 = vmatprep.subr.mxu0 0.0
    %7181 = vmatpush1.msra.mxu0 %v7001
    %7182 = vmatprep.subr.mxu0 0.0
    %7183 = vmatpush1.msra.mxu0 %v7002
    %7184 = vmatprep.subr.mxu0 0.0
    %7185 = vmatpush1.msra.mxu0 %v7003
    %7186 = vmatprep.subr.mxu0 0.0
    %7187 = vmatpush1.msra.mxu0 %v7004
    %7188 = vmatprep.subr.mxu0 0.0
    %7189 = vmatpush1.msra.mxu0 %v7005
    %7190 = vmatprep.subr.mxu0 0.0
    %7191 = vmatpush1.msra.mxu0 %v7006
    %7192 = vmatprep.subr.mxu0 0.0
    %7193 = vmatpush1.msra.mxu0 %v7007
    %7194 = vmatprep.subr.mxu0 0.0
    %7195 = vmatpush1.msra.mxu0 %v7008
    %7196 = vmatprep.subr.mxu0 0.0
    %7197 = vmatpush1.msra.mxu0 %v7009
    %7198 = vmatprep.subr.mxu0 0.0
    %7199 = vmatpush1.msra.mxu0 %v7010
    %7200 = vmatprep.subr.mxu0 0.0
    %7201 = vmatpush1.msra.mxu0 %v7011
    %7202 = vmatprep.subr.mxu0 0.0
    %7203 = vmatpush1.msra.mxu0 %v7012
    %7204 = vmatprep.subr.mxu0 0.0
    %7205 = vmatpush1.msra.mxu0 %v7013
    %7206 = vmatprep.subr.mxu0 0.0
    %7207 = vmatpush1.msra.mxu0 %v7014
    %7208 = vmatprep.subr.mxu0 0.0
    %7209 = vmatpush1.msra.mxu0 %v7015
    %7210 = vmatprep.subr.mxu0 0.0
    %7211 = vmatpush1.msra.mxu0 0.0
    %7212 = vmatprep.subr.mxu0 0.0
    %7213 = vmatpush1.msra.mxu0 0.0
    %7214 = vmatprep.subr.mxu0 0.0
    %7215 = vmatpush1.msra.mxu0 0.0
    %7216 = vmatprep.subr.mxu0 0.0
    %7217 = vmatpush1.msra.mxu0 0.0
    %7218 = vmatprep.subr.mxu0 0.0
    %7219 = vmatpush1.msra.mxu0 0.0
    %7220 = vmatprep.subr.mxu0 0.0
    %7221 = vmatpush1.msra.mxu0 0.0
    %7222 = vmatprep.subr.mxu0 0.0
    %7223 = vmatpush1.msra.mxu0 0.0
    %7224 = vmatprep.subr.mxu0 0.0
    %7225 = vmatpush1.msra.mxu0 0.0
    %7226 = vmatprep.subr.mxu0 0.0
    %7227 = vmatpush1.msra.mxu0 0.0
    %7228 = vmatprep.subr.mxu0 0.0
    %7229 = vmatpush1.msra.mxu0 0.0
    %7230 = vmatprep.subr.mxu0 0.0
    %7231 = vmatpush1.msra.mxu0 0.0
    %7232 = vmatprep.subr.mxu0 0.0
    %7233 = vmatpush1.msra.mxu0 0.0
    %7234 = vmatprep.subr.mxu0 0.0
    %7235 = vmatpush1.msra.mxu0 0.0
    %7236 = vmatprep.subr.mxu0 0.0
    %7237 = vmatpush1.msra.mxu0 0.0
    %7238 = vmatprep.subr.mxu0 0.0
    %7239 = vmatpush1.msra.mxu0 0.0
    %7240 = vmatprep.subr.mxu0 0.0
    %7241 = vmatpush1.msra.mxu0 0.0
    %7242 = vmatprep.mubr.f32.mxu0 0.0
    %7243 = vmatmul.mubr.f32.gmra.mrb[0].mxu0 %v6996
    %v7244 = vpop.f32.mrb[0].mxu0
    %v7245 = vadd.f32 %v7175, %v7244
    %v7246 = vpop.f32.mrb[0].mxu0
    %7247 = vdwg.mxu0
    %s7248 = scalar_lea.vmem [#allocation7], 16
    %v7249 = vld [vmem:[%s7248] sm:$0xff]
    %v7251 = vsel %vm6925, %v7249, 0
    %7253 = vmatprep.subr.mxu0 0.0
    %7254 = vmatpush1.msra.mxu0 %v6920
    %7255 = vmatprep.subr.mxu0 0.0
    %7256 = vmatpush1.msra.mxu0 %v6921
    %7257 = vmatprep.subr.mxu0 0.0
    %7258 = vmatpush1.msra.mxu0 %v6922
    %7259 = vmatprep.subr.mxu0 0.0
    %7260 = vmatpush1.msra.mxu0 %v6923
    %7261 = vmatprep.subr.mxu0 0.0
    %7262 = vmatpush1.msra.mxu0 0.0
    %7263 = vmatprep.subr.mxu0 0.0
    %7264 = vmatpush1.msra.mxu0 0.0
    %7265 = vmatprep.subr.mxu0 0.0
    %7266 = vmatpush1.msra.mxu0 0.0
    %7267 = vmatprep.subr.mxu0 0.0
    %7268 = vmatpush1.msra.mxu0 0.0
    %7269 = vmatprep.subr.mxu0 0.0
    %7270 = vmatpush1.msra.mxu0 0.0
    %7271 = vmatprep.subr.mxu0 0.0
    %7272 = vmatpush1.msra.mxu0 0.0
    %7273 = vmatprep.subr.mxu0 0.0
    %7274 = vmatpush1.msra.mxu0 0.0
    %7275 = vmatprep.subr.mxu0 0.0
    %7276 = vmatpush1.msra.mxu0 0.0
    %7277 = vmatprep.subr.mxu0 0.0
    %7278 = vmatpush1.msra.mxu0 0.0
    %7279 = vmatprep.subr.mxu0 0.0
    %7280 = vmatpush1.msra.mxu0 0.0
    %7281 = vmatprep.subr.mxu0 0.0
    %7282 = vmatpush1.msra.mxu0 0.0
    %7283 = vmatprep.subr.mxu0 0.0
    %7284 = vmatpush1.msra.mxu0 0.0
    %7285 = vmatprep.subr.mxu0 0.0
    %7286 = vmatpush1.msra.mxu0 0.0
    %7287 = vmatprep.subr.mxu0 0.0
    %7288 = vmatpush1.msra.mxu0 0.0
    %7289 = vmatprep.subr.mxu0 0.0
    %7290 = vmatpush1.msra.mxu0 0.0
    %7291 = vmatprep.subr.mxu0 0.0
    %7292 = vmatpush1.msra.mxu0 0.0
    %7293 = vmatprep.subr.mxu0 0.0
    %7294 = vmatpush1.msra.mxu0 0.0
    %7295 = vmatprep.subr.mxu0 0.0
    %7296 = vmatpush1.msra.mxu0 0.0
    %7297 = vmatprep.subr.mxu0 0.0
    %7298 = vmatpush1.msra.mxu0 0.0
    %7299 = vmatprep.subr.mxu0 0.0
    %7300 = vmatpush1.msra.mxu0 0.0
    %7301 = vmatprep.subr.mxu0 0.0
    %7302 = vmatpush1.msra.mxu0 0.0
    %7303 = vmatprep.subr.mxu0 0.0
    %7304 = vmatpush1.msra.mxu0 0.0
    %7305 = vmatprep.subr.mxu0 0.0
    %7306 = vmatpush1.msra.mxu0 0.0
    %7307 = vmatprep.subr.mxu0 0.0
    %7308 = vmatpush1.msra.mxu0 0.0
    %7309 = vmatprep.subr.mxu0 0.0
    %7310 = vmatpush1.msra.mxu0 0.0
    %7311 = vmatprep.subr.mxu0 0.0
    %7312 = vmatpush1.msra.mxu0 0.0
    %7313 = vmatprep.subr.mxu0 0.0
    %7314 = vmatpush1.msra.mxu0 0.0
    %7315 = vmatprep.subr.mxu0 0.0
    %7316 = vmatpush1.msra.mxu0 0.0
    %7317 = vmatprep.mubr.f32.mxu0 0.0
    %7318 = vmatmul.mubr.f32.gmra.mrb[0].mxu0 %v7251
    %v7319 = vpop.f32.mrb[0].mxu0
    %v7320 = vadd.f32 0.0, %v7319
    %v7321 = vpop.f32.mrb[0].mxu0
    %7322 = vdwg.mxu0
    %s7323 = scalar_lea.vmem [#allocation10], 2560
    %v7324 = vld [vmem:[%s7323] sm:$0xff]
    %v7325 = vld [vmem:[%s7323 + $0x8] sm:$0xff]
    %v7326 = vld [vmem:[%s7323 + $0x10] sm:$0xff]
    %v7327 = vld [vmem:[%s7323 + $0x18] sm:$0xff]
    %v7328 = vld [vmem:[%s7323 + $0x20] sm:$0xff]
    %v7329 = vld [vmem:[%s7323 + $0x28] sm:$0xff]
    %v7330 = vld [vmem:[%s7323 + $0x30] sm:$0xff]
    %v7331 = vld [vmem:[%s7323 + $0x38] sm:$0xff]
    %v7332 = vld [vmem:[%s7323 + $0x40] sm:$0xff]
    %v7333 = vld [vmem:[%s7323 + $0x48] sm:$0xff]
    %v7334 = vld [vmem:[%s7323 + $0x50] sm:$0xff]
    %v7335 = vld [vmem:[%s7323 + $0x58] sm:$0xff]
    %v7336 = vld [vmem:[%s7323 + $0x60] sm:$0xff]
    %v7337 = vld [vmem:[%s7323 + $0x68] sm:$0xff]
    %v7338 = vld [vmem:[%s7323 + $0x70] sm:$0xff]
    %v7339 = vld [vmem:[%s7323 + $0x78] sm:$0xff]
    %7340 = vmatprep.subr.mxu0 0.0
    %7341 = vmatpush1.msra.mxu0 %v7324
    %7342 = vmatprep.subr.mxu0 0.0
    %7343 = vmatpush1.msra.mxu0 %v7325
    %7344 = vmatprep.subr.mxu0 0.0
    %7345 = vmatpush1.msra.mxu0 %v7326
    %7346 = vmatprep.subr.mxu0 0.0
    %7347 = vmatpush1.msra.mxu0 %v7327
    %7348 = vmatprep.subr.mxu0 0.0
    %7349 = vmatpush1.msra.mxu0 %v7328
    %7350 = vmatprep.subr.mxu0 0.0
    %7351 = vmatpush1.msra.mxu0 %v7329
    %7352 = vmatprep.subr.mxu0 0.0
    %7353 = vmatpush1.msra.mxu0 %v7330
    %7354 = vmatprep.subr.mxu0 0.0
    %7355 = vmatpush1.msra.mxu0 %v7331
    %7356 = vmatprep.subr.mxu0 0.0
    %7357 = vmatpush1.msra.mxu0 %v7332
    %7358 = vmatprep.subr.mxu0 0.0
    %7359 = vmatpush1.msra.mxu0 %v7333
    %7360 = vmatprep.subr.mxu0 0.0
    %7361 = vmatpush1.msra.mxu0 %v7334
    %7362 = vmatprep.subr.mxu0 0.0
    %7363 = vmatpush1.msra.mxu0 %v7335
    %7364 = vmatprep.subr.mxu0 0.0
    %7365 = vmatpush1.msra.mxu0 %v7336
    %7366 = vmatprep.subr.mxu0 0.0
    %7367 = vmatpush1.msra.mxu0 %v7337
    %7368 = vmatprep.subr.mxu0 0.0
    %7369 = vmatpush1.msra.mxu0 %v7338
    %7370 = vmatprep.subr.mxu0 0.0
    %7371 = vmatpush1.msra.mxu0 %v7339
    %7372 = vmatprep.subr.mxu0 0.0
    %7373 = vmatpush1.msra.mxu0 0.0
    %7374 = vmatprep.subr.mxu0 0.0
    %7375 = vmatpush1.msra.mxu0 0.0
    %7376 = vmatprep.subr.mxu0 0.0
    %7377 = vmatpush1.msra.mxu0 0.0
    %7378 = vmatprep.subr.mxu0 0.0
    %7379 = vmatpush1.msra.mxu0 0.0
    %7380 = vmatprep.subr.mxu0 0.0
    %7381 = vmatpush1.msra.mxu0 0.0
    %7382 = vmatprep.subr.mxu0 0.0
    %7383 = vmatpush1.msra.mxu0 0.0
    %7384 = vmatprep.subr.mxu0 0.0
    %7385 = vmatpush1.msra.mxu0 0.0
    %7386 = vmatprep.subr.mxu0 0.0
    %7387 = vmatpush1.msra.mxu0 0.0
    %7388 = vmatprep.subr.mxu0 0.0
    %7389 = vmatpush1.msra.mxu0 0.0
    %7390 = vmatprep.subr.mxu0 0.0
    %7391 = vmatpush1.msra.mxu0 0.0
    %7392 = vmatprep.subr.mxu0 0.0
    %7393 = vmatpush1.msra.mxu0 0.0
    %7394 = vmatprep.subr.mxu0 0.0
    %7395 = vmatpush1.msra.mxu0 0.0
    %7396 = vmatprep.subr.mxu0 0.0
    %7397 = vmatpush1.msra.mxu0 0.0
    %7398 = vmatprep.subr.mxu0 0.0
    %7399 = vmatpush1.msra.mxu0 0.0
    %7400 = vmatprep.subr.mxu0 0.0
    %7401 = vmatpush1.msra.mxu0 0.0
    %7402 = vmatprep.subr.mxu0 0.0
    %7403 = vmatpush1.msra.mxu0 0.0
    %7404 = vmatprep.mubr.f32.mxu0 0.0
    %7405 = vmatmul.mubr.f32.gmra.mrb[0].mxu0 %v7320
    %v7406 = vpop.f32.mrb[0].mxu0
    %v7407 = vadd.f32 0.0, %v7406
    %v7408 = vpop.f32.mrb[0].mxu0
    %7409 = vdwg.mxu0
    %v7410 = vadd.f32 %v7245, %v7407
    %s7411 = scalar_lea.vmem [#allocation7], 24
    %v7412 = vld [vmem:[%s7411] sm:$0xff]
    %v7414 = vsel %vm6925, %v7412, 0
    %7416 = vmatprep.subr.mxu0 0.0
    %7417 = vmatpush1.msra.mxu0 %v6920
    %7418 = vmatprep.subr.mxu0 0.0
    %7419 = vmatpush1.msra.mxu0 %v6921
    %7420 = vmatprep.subr.mxu0 0.0
    %7421 = vmatpush1.msra.mxu0 %v6922
    %7422 = vmatprep.subr.mxu0 0.0
    %7423 = vmatpush1.msra.mxu0 %v6923
    %7424 = vmatprep.subr.mxu0 0.0
    %7425 = vmatpush1.msra.mxu0 0.0
    %7426 = vmatprep.subr.mxu0 0.0
    %7427 = vmatpush1.msra.mxu0 0.0
    %7428 = vmatprep.subr.mxu0 0.0
    %7429 = vmatpush1.msra.mxu0 0.0
    %7430 = vmatprep.subr.mxu0 0.0
    %7431 = vmatpush1.msra.mxu0 0.0
    %7432 = vmatprep.subr.mxu0 0.0
    %7433 = vmatpush1.msra.mxu0 0.0
    %7434 = vmatprep.subr.mxu0 0.0
    %7435 = vmatpush1.msra.mxu0 0.0
    %7436 = vmatprep.subr.mxu0 0.0
    %7437 = vmatpush1.msra.mxu0 0.0
    %7438 = vmatprep.subr.mxu0 0.0
    %7439 = vmatpush1.msra.mxu0 0.0
    %7440 = vmatprep.subr.mxu0 0.0
    %7441 = vmatpush1.msra.mxu0 0.0
    %7442 = vmatprep.subr.mxu0 0.0
    %7443 = vmatpush1.msra.mxu0 0.0
    %7444 = vmatprep.subr.mxu0 0.0
    %7445 = vmatpush1.msra.mxu0 0.0
    %7446 = vmatprep.subr.mxu0 0.0
    %7447 = vmatpush1.msra.mxu0 0.0
    %7448 = vmatprep.subr.mxu0 0.0
    %7449 = vmatpush1.msra.mxu0 0.0
    %7450 = vmatprep.subr.mxu0 0.0
    %7451 = vmatpush1.msra.mxu0 0.0
    %7452 = vmatprep.subr.mxu0 0.0
    %7453 = vmatpush1.msra.mxu0 0.0
    %7454 = vmatprep.subr.mxu0 0.0
    %7455 = vmatpush1.msra.mxu0 0.0
    %7456 = vmatprep.subr.mxu0 0.0
    %7457 = vmatpush1.msra.mxu0 0.0
    %7458 = vmatprep.subr.mxu0 0.0
    %7459 = vmatpush1.msra.mxu0 0.0
    %7460 = vmatprep.subr.mxu0 0.0
    %7461 = vmatpush1.msra.mxu0 0.0
    %7462 = vmatprep.subr.mxu0 0.0
    %7463 = vmatpush1.msra.mxu0 0.0
    %7464 = vmatprep.subr.mxu0 0.0
    %7465 = vmatpush1.msra.mxu0 0.0
    %7466 = vmatprep.subr.mxu0 0.0
    %7467 = vmatpush1.msra.mxu0 0.0
    %7468 = vmatprep.subr.mxu0 0.0
    %7469 = vmatpush1.msra.mxu0 0.0
    %7470 = vmatprep.subr.mxu0 0.0
    %7471 = vmatpush1.msra.mxu0 0.0
    %7472 = vmatprep.subr.mxu0 0.0
    %7473 = vmatpush1.msra.mxu0 0.0
    %7474 = vmatprep.subr.mxu0 0.0
    %7475 = vmatpush1.msra.mxu0 0.0
    %7476 = vmatprep.subr.mxu0 0.0
    %7477 = vmatpush1.msra.mxu0 0.0
    %7478 = vmatprep.subr.mxu0 0.0
    %7479 = vmatpush1.msra.mxu0 0.0
    %7480 = vmatprep.mubr.f32.mxu0 0.0
    %7481 = vmatmul.mubr.f32.gmra.mrb[0].mxu0 %v7414
    %v7482 = vpop.f32.mrb[0].mxu0
    %v7483 = vadd.f32 0.0, %v7482
    %v7484 = vpop.f32.mrb[0].mxu0
    %7485 = vdwg.mxu0
    %s7486 = scalar_lea.vmem [#allocation10], 2688
    %v7487 = vld [vmem:[%s7486] sm:$0xff]
    %v7488 = vld [vmem:[%s7486 + $0x8] sm:$0xff]
    %v7489 = vld [vmem:[%s7486 + $0x10] sm:$0xff]
    %v7490 = vld [vmem:[%s7486 + $0x18] sm:$0xff]
    %v7491 = vld [vmem:[%s7486 + $0x20] sm:$0xff]
    %v7492 = vld [vmem:[%s7486 + $0x28] sm:$0xff]
    %v7493 = vld [vmem:[%s7486 + $0x30] sm:$0xff]
    %v7494 = vld [vmem:[%s7486 + $0x38] sm:$0xff]
    %v7495 = vld [vmem:[%s7486 + $0x40] sm:$0xff]
    %v7496 = vld [vmem:[%s7486 + $0x48] sm:$0xff]
    %v7497 = vld [vmem:[%s7486 + $0x50] sm:$0xff]
    %v7498 = vld [vmem:[%s7486 + $0x58] sm:$0xff]
    %v7499 = vld [vmem:[%s7486 + $0x60] sm:$0xff]
    %v7500 = vld [vmem:[%s7486 + $0x68] sm:$0xff]
    %v7501 = vld [vmem:[%s7486 + $0x70] sm:$0xff]
    %v7502 = vld [vmem:[%s7486 + $0x78] sm:$0xff]
    %7503 = vmatprep.subr.mxu0 0.0
    %7504 = vmatpush1.msra.mxu0 %v7487
    %7505 = vmatprep.subr.mxu0 0.0
    %7506 = vmatpush1.msra.mxu0 %v7488
    %7507 = vmatprep.subr.mxu0 0.0
    %7508 = vmatpush1.msra.mxu0 %v7489
    %7509 = vmatprep.subr.mxu0 0.0
    %7510 = vmatpush1.msra.mxu0 %v7490
    %7511 = vmatprep.subr.mxu0 0.0
    %7512 = vmatpush1.msra.mxu0 %v7491
    %7513 = vmatprep.subr.mxu0 0.0
    %7514 = vmatpush1.msra.mxu0 %v7492
    %7515 = vmatprep.subr.mxu0 0.0
    %7516 = vmatpush1.msra.mxu0 %v7493
    %7517 = vmatprep.subr.mxu0 0.0
    %7518 = vmatpush1.msra.mxu0 %v7494
    %7519 = vmatprep.subr.mxu0 0.0
    %7520 = vmatpush1.msra.mxu0 %v7495
    %7521 = vmatprep.subr.mxu0 0.0
    %7522 = vmatpush1.msra.mxu0 %v7496
    %7523 = vmatprep.subr.mxu0 0.0
    %7524 = vmatpush1.msra.mxu0 %v7497
    %7525 = vmatprep.subr.mxu0 0.0
    %7526 = vmatpush1.msra.mxu0 %v7498
    %7527 = vmatprep.subr.mxu0 0.0
    %7528 = vmatpush1.msra.mxu0 %v7499
    %7529 = vmatprep.subr.mxu0 0.0
    %7530 = vmatpush1.msra.mxu0 %v7500
    %7531 = vmatprep.subr.mxu0 0.0
    %7532 = vmatpush1.msra.mxu0 %v7501
    %7533 = vmatprep.subr.mxu0 0.0
    %7534 = vmatpush1.msra.mxu0 %v7502
    %7535 = vmatprep.subr.mxu0 0.0
    %7536 = vmatpush1.msra.mxu0 0.0
    %7537 = vmatprep.subr.mxu0 0.0
    %7538 = vmatpush1.msra.mxu0 0.0
    %7539 = vmatprep.subr.mxu0 0.0
    %7540 = vmatpush1.msra.mxu0 0.0
    %7541 = vmatprep.subr.mxu0 0.0
    %7542 = vmatpush1.msra.mxu0 0.0
    %7543 = vmatprep.subr.mxu0 0.0
    %7544 = vmatpush1.msra.mxu0 0.0
    %7545 = vmatprep.subr.mxu0 0.0
    %7546 = vmatpush1.msra.mxu0 0.0
    %7547 = vmatprep.subr.mxu0 0.0
    %7548 = vmatpush1.msra.mxu0 0.0
    %7549 = vmatprep.subr.mxu0 0.0
    %7550 = vmatpush1.msra.mxu0 0.0
    %7551 = vmatprep.subr.mxu0 0.0
    %7552 = vmatpush1.msra.mxu0 0.0
    %7553 = vmatprep.subr.mxu0 0.0
    %7554 = vmatpush1.msra.mxu0 0.0
    %7555 = vmatprep.subr.mxu0 0.0
    %7556 = vmatpush1.msra.mxu0 0.0
    %7557 = vmatprep.subr.mxu0 0.0
    %7558 = vmatpush1.msra.mxu0 0.0
    %7559 = vmatprep.subr.mxu0 0.0
    %7560 = vmatpush1.msra.mxu0 0.0
    %7561 = vmatprep.subr.mxu0 0.0
    %7562 = vmatpush1.msra.mxu0 0.0
    %7563 = vmatprep.subr.mxu0 0.0
    %7564 = vmatpush1.msra.mxu0 0.0
    %7565 = vmatprep.subr.mxu0 0.0
    %7566 = vmatpush1.msra.mxu0 0.0
    %7567 = vmatprep.mubr.f32.mxu0 0.0
    %7568 = vmatmul.mubr.f32.gmra.mrb[0].mxu0 %v7483
    %v7569 = vpop.f32.mrb[0].mxu0
    %v7570 = vadd.f32 0.0, %v7569
    %v7571 = vpop.f32.mrb[0].mxu0
    %7572 = vdwg.mxu0
    %v7573 = vadd.f32 %v7410, %v7570
    %s7574 = scalar_lea.vmem [#allocation7], 32
    %v7575 = vld [vmem:[%s7574] sm:$0xff]
    %v7577 = vsel %vm6925, %v7575, 0
    %7579 = vmatprep.subr.mxu0 0.0
    %7580 = vmatpush1.msra.mxu0 %v6920
    %7581 = vmatprep.subr.mxu0 0.0
    %7582 = vmatpush1.msra.mxu0 %v6921
    %7583 = vmatprep.subr.mxu0 0.0
    %7584 = vmatpush1.msra.mxu0 %v6922
    %7585 = vmatprep.subr.mxu0 0.0
    %7586 = vmatpush1.msra.mxu0 %v6923
    %7587 = vmatprep.subr.mxu0 0.0
    %7588 = vmatpush1.msra.mxu0 0.0
    %7589 = vmatprep.subr.mxu0 0.0
    %7590 = vmatpush1.msra.mxu0 0.0
    %7591 = vmatprep.subr.mxu0 0.0
    %7592 = vmatpush1.msra.mxu0 0.0
    %7593 = vmatprep.subr.mxu0 0.0
    %7594 = vmatpush1.msra.mxu0 0.0
    %7595 = vmatprep.subr.mxu0 0.0
    %7596 = vmatpush1.msra.mxu0 0.0
    %7597 = vmatprep.subr.mxu0 0.0
    %7598 = vmatpush1.msra.mxu0 0.0
    %7599 = vmatprep.subr.mxu0 0.0
    %7600 = vmatpush1.msra.mxu0 0.0
    %7601 = vmatprep.subr.mxu0 0.0
    %7602 = vmatpush1.msra.mxu0 0.0
    %7603 = vmatprep.subr.mxu0 0.0
    %7604 = vmatpush1.msra.mxu0 0.0
    %7605 = vmatprep.subr.mxu0 0.0
    %7606 = vmatpush1.msra.mxu0 0.0
    %7607 = vmatprep.subr.mxu0 0.0
    %7608 = vmatpush1.msra.mxu0 0.0
    %7609 = vmatprep.subr.mxu0 0.0
    %7610 = vmatpush1.msra.mxu0 0.0
    %7611 = vmatprep.subr.mxu0 0.0
    %7612 = vmatpush1.msra.mxu0 0.0
    %7613 = vmatprep.subr.mxu0 0.0
    %7614 = vmatpush1.msra.mxu0 0.0
    %7615 = vmatprep.subr.mxu0 0.0
    %7616 = vmatpush1.msra.mxu0 0.0
    %7617 = vmatprep.subr.mxu0 0.0
    %7618 = vmatpush1.msra.mxu0 0.0
    %7619 = vmatprep.subr.mxu0 0.0
    %7620 = vmatpush1.msra.mxu0 0.0
    %7621 = vmatprep.subr.mxu0 0.0
    %7622 = vmatpush1.msra.mxu0 0.0
    %7623 = vmatprep.subr.mxu0 0.0
    %7624 = vmatpush1.msra.mxu0 0.0
    %7625 = vmatprep.subr.mxu0 0.0
    %7626 = vmatpush1.msra.mxu0 0.0
    %7627 = vmatprep.subr.mxu0 0.0
    %7628 = vmatpush1.msra.mxu0 0.0
    %7629 = vmatprep.subr.mxu0 0.0
    %7630 = vmatpush1.msra.mxu0 0.0
    %7631 = vmatprep.subr.mxu0 0.0
    %7632 = vmatpush1.msra.mxu0 0.0
    %7633 = vmatprep.subr.mxu0 0.0
    %7634 = vmatpush1.msra.mxu0 0.0
    %7635 = vmatprep.subr.mxu0 0.0
    %7636 = vmatpush1.msra.mxu0 0.0
    %7637 = vmatprep.subr.mxu0 0.0
    %7638 = vmatpush1.msra.mxu0 0.0
    %7639 = vmatprep.subr.mxu0 0.0
    %7640 = vmatpush1.msra.mxu0 0.0
    %7641 = vmatprep.subr.mxu0 0.0
    %7642 = vmatpush1.msra.mxu0 0.0
    %7643 = vmatprep.mubr.f32.mxu0 0.0
    %7644 = vmatmul.mubr.f32.gmra.mrb[0].mxu0 %v7577
    %v7645 = vpop.f32.mrb[0].mxu0
    %v7646 = vadd.f32 0.0, %v7645
    %v7647 = vpop.f32.mrb[0].mxu0
    %7648 = vdwg.mxu0
    %s7649 = scalar_lea.vmem [#allocation10], 2816
    %v7650 = vld [vmem:[%s7649] sm:$0xff]
    %v7651 = vld [vmem:[%s7649 + $0x8] sm:$0xff]
    %v7652 = vld [vmem:[%s7649 + $0x10] sm:$0xff]
    %v7653 = vld [vmem:[%s7649 + $0x18] sm:$0xff]
    %v7654 = vld [vmem:[%s7649 + $0x20] sm:$0xff]
    %v7655 = vld [vmem:[%s7649 + $0x28] sm:$0xff]
    %v7656 = vld [vmem:[%s7649 + $0x30] sm:$0xff]
    %v7657 = vld [vmem:[%s7649 + $0x38] sm:$0xff]
    %v7658 = vld [vmem:[%s7649 + $0x40] sm:$0xff]
    %v7659 = vld [vmem:[%s7649 + $0x48] sm:$0xff]
    %v7660 = vld [vmem:[%s7649 + $0x50] sm:$0xff]
    %v7661 = vld [vmem:[%s7649 + $0x58] sm:$0xff]
    %v7662 = vld [vmem:[%s7649 + $0x60] sm:$0xff]
    %v7663 = vld [vmem:[%s7649 + $0x68] sm:$0xff]
    %v7664 = vld [vmem:[%s7649 + $0x70] sm:$0xff]
    %v7665 = vld [vmem:[%s7649 + $0x78] sm:$0xff]
    %7666 = vmatprep.subr.mxu0 0.0
    %7667 = vmatpush1.msra.mxu0 %v7650
    %7668 = vmatprep.subr.mxu0 0.0
    %7669 = vmatpush1.msra.mxu0 %v7651
    %7670 = vmatprep.subr.mxu0 0.0
    %7671 = vmatpush1.msra.mxu0 %v7652
    %7672 = vmatprep.subr.mxu0 0.0
    %7673 = vmatpush1.msra.mxu0 %v7653
    %7674 = vmatprep.subr.mxu0 0.0
    %7675 = vmatpush1.msra.mxu0 %v7654
    %7676 = vmatprep.subr.mxu0 0.0
    %7677 = vmatpush1.msra.mxu0 %v7655
    %7678 = vmatprep.subr.mxu0 0.0
    %7679 = vmatpush1.msra.mxu0 %v7656
    %7680 = vmatprep.subr.mxu0 0.0
    %7681 = vmatpush1.msra.mxu0 %v7657
    %7682 = vmatprep.subr.mxu0 0.0
    %7683 = vmatpush1.msra.mxu0 %v7658
    %7684 = vmatprep.subr.mxu0 0.0
    %7685 = vmatpush1.msra.mxu0 %v7659
    %7686 = vmatprep.subr.mxu0 0.0
    %7687 = vmatpush1.msra.mxu0 %v7660
    %7688 = vmatprep.subr.mxu0 0.0
    %7689 = vmatpush1.msra.mxu0 %v7661
    %7690 = vmatprep.subr.mxu0 0.0
    %7691 = vmatpush1.msra.mxu0 %v7662
    %7692 = vmatprep.subr.mxu0 0.0
    %7693 = vmatpush1.msra.mxu0 %v7663
    %7694 = vmatprep.subr.mxu0 0.0
    %7695 = vmatpush1.msra.mxu0 %v7664
    %7696 = vmatprep.subr.mxu0 0.0
    %7697 = vmatpush1.msra.mxu0 %v7665
    %7698 = vmatprep.subr.mxu0 0.0
    %7699 = vmatpush1.msra.mxu0 0.0
    %7700 = vmatprep.subr.mxu0 0.0
    %7701 = vmatpush1.msra.mxu0 0.0
    %7702 = vmatprep.subr.mxu0 0.0
    %7703 = vmatpush1.msra.mxu0 0.0
    %7704 = vmatprep.subr.mxu0 0.0
    %7705 = vmatpush1.msra.mxu0 0.0
    %7706 = vmatprep.subr.mxu0 0.0
    %7707 = vmatpush1.msra.mxu0 0.0
    %7708 = vmatprep.subr.mxu0 0.0
    %7709 = vmatpush1.msra.mxu0 0.0
    %7710 = vmatprep.subr.mxu0 0.0
    %7711 = vmatpush1.msra.mxu0 0.0
    %7712 = vmatprep.subr.mxu0 0.0
    %7713 = vmatpush1.msra.mxu0 0.0
    %7714 = vmatprep.subr.mxu0 0.0
    %7715 = vmatpush1.msra.mxu0 0.0
    %7716 = vmatprep.subr.mxu0 0.0
    %7717 = vmatpush1.msra.mxu0 0.0
    %7718 = vmatprep.subr.mxu0 0.0
    %7719 = vmatpush1.msra.mxu0 0.0
    %7720 = vmatprep.subr.mxu0 0.0
    %7721 = vmatpush1.msra.mxu0 0.0
    %7722 = vmatprep.subr.mxu0 0.0
    %7723 = vmatpush1.msra.mxu0 0.0
    %7724 = vmatprep.subr.mxu0 0.0
    %7725 = vmatpush1.msra.mxu0 0.0
    %7726 = vmatprep.subr.mxu0 0.0
    %7727 = vmatpush1.msra.mxu0 0.0
    %7728 = vmatprep.subr.mxu0 0.0
    %7729 = vmatpush1.msra.mxu0 0.0
    %7730 = vmatprep.mubr.f32.mxu0 0.0
    %7731 = vmatmul.mubr.f32.gmra.mrb[0].mxu0 %v7646
    %v7732 = vpop.f32.mrb[0].mxu0
    %v7733 = vadd.f32 0.0, %v7732
    %v7734 = vpop.f32.mrb[0].mxu0
    %7735 = vdwg.mxu0
    %v7736 = vadd.f32 %v7573, %v7733
    %s7737 = scalar_lea.vmem [#allocation7], 40
    %v7738 = vld [vmem:[%s7737] sm:$0xff]
    %v7740 = vsel %vm6925, %v7738, 0
    %7742 = vmatprep.subr.mxu0 0.0
    %7743 = vmatpush1.msra.mxu0 %v6920
    %7744 = vmatprep.subr.mxu0 0.0
    %7745 = vmatpush1.msra.mxu0 %v6921
    %7746 = vmatprep.subr.mxu0 0.0
    %7747 = vmatpush1.msra.mxu0 %v6922
    %7748 = vmatprep.subr.mxu0 0.0
    %7749 = vmatpush1.msra.mxu0 %v6923
    %7750 = vmatprep.subr.mxu0 0.0
    %7751 = vmatpush1.msra.mxu0 0.0
    %7752 = vmatprep.subr.mxu0 0.0
    %7753 = vmatpush1.msra.mxu0 0.0
    %7754 = vmatprep.subr.mxu0 0.0
    %7755 = vmatpush1.msra.mxu0 0.0
    %7756 = vmatprep.subr.mxu0 0.0
    %7757 = vmatpush1.msra.mxu0 0.0
    %7758 = vmatprep.subr.mxu0 0.0
    %7759 = vmatpush1.msra.mxu0 0.0
    %7760 = vmatprep.subr.mxu0 0.0
    %7761 = vmatpush1.msra.mxu0 0.0
    %7762 = vmatprep.subr.mxu0 0.0
    %7763 = vmatpush1.msra.mxu0 0.0
    %7764 = vmatprep.subr.mxu0 0.0
    %7765 = vmatpush1.msra.mxu0 0.0
    %7766 = vmatprep.subr.mxu0 0.0
    %7767 = vmatpush1.msra.mxu0 0.0
    %7768 = vmatprep.subr.mxu0 0.0
    %7769 = vmatpush1.msra.mxu0 0.0
    %7770 = vmatprep.subr.mxu0 0.0
    %7771 = vmatpush1.msra.mxu0 0.0
    %7772 = vmatprep.subr.mxu0 0.0
    %7773 = vmatpush1.msra.mxu0 0.0
    %7774 = vmatprep.subr.mxu0 0.0
    %7775 = vmatpush1.msra.mxu0 0.0
    %7776 = vmatprep.subr.mxu0 0.0
    %7777 = vmatpush1.msra.mxu0 0.0
    %7778 = vmatprep.subr.mxu0 0.0
    %7779 = vmatpush1.msra.mxu0 0.0
    %7780 = vmatprep.subr.mxu0 0.0
    %7781 = vmatpush1.msra.mxu0 0.0
    %7782 = vmatprep.subr.mxu0 0.0
    %7783 = vmatpush1.msra.mxu0 0.0
    %7784 = vmatprep.subr.mxu0 0.0
    %7785 = vmatpush1.msra.mxu0 0.0
    %7786 = vmatprep.subr.mxu0 0.0
    %7787 = vmatpush1.msra.mxu0 0.0
    %7788 = vmatprep.subr.mxu0 0.0
    %7789 = vmatpush1.msra.mxu0 0.0
    %7790 = vmatprep.subr.mxu0 0.0
    %7791 = vmatpush1.msra.mxu0 0.0
    %7792 = vmatprep.subr.mxu0 0.0
    %7793 = vmatpush1.msra.mxu0 0.0
    %7794 = vmatprep.subr.mxu0 0.0
    %7795 = vmatpush1.msra.mxu0 0.0
    %7796 = vmatprep.subr.mxu0 0.0
    %7797 = vmatpush1.msra.mxu0 0.0
    %7798 = vmatprep.subr.mxu0 0.0
    %7799 = vmatpush1.msra.mxu0 0.0
    %7800 = vmatprep.subr.mxu0 0.0
    %7801 = vmatpush1.msra.mxu0 0.0
    %7802 = vmatprep.subr.mxu0 0.0
    %7803 = vmatpush1.msra.mxu0 0.0
    %7804 = vmatprep.subr.mxu0 0.0
    %7805 = vmatpush1.msra.mxu0 0.0
    %7806 = vmatprep.mubr.f32.mxu0 0.0
    %7807 = vmatmul.mubr.f32.gmra.mrb[0].mxu0 %v7740
    %v7808 = vpop.f32.mrb[0].mxu0
    %v7809 = vadd.f32 0.0, %v7808
    %v7810 = vpop.f32.mrb[0].mxu0
    %7811 = vdwg.mxu0
    %s7812 = scalar_lea.vmem [#allocation10], 2944
    %v7813 = vld [vmem:[%s7812] sm:$0xff]
    %v7814 = vld [vmem:[%s7812 + $0x8] sm:$0xff]
    %v7815 = vld [vmem:[%s7812 + $0x10] sm:$0xff]
    %v7816 = vld [vmem:[%s7812 + $0x18] sm:$0xff]
    %v7817 = vld [vmem:[%s7812 + $0x20] sm:$0xff]
    %v7818 = vld [vmem:[%s7812 + $0x28] sm:$0xff]
    %v7819 = vld [vmem:[%s7812 + $0x30] sm:$0xff]
    %v7820 = vld [vmem:[%s7812 + $0x38] sm:$0xff]
    %v7821 = vld [vmem:[%s7812 + $0x40] sm:$0xff]
    %v7822 = vld [vmem:[%s7812 + $0x48] sm:$0xff]
    %v7823 = vld [vmem:[%s7812 + $0x50] sm:$0xff]
    %v7824 = vld [vmem:[%s7812 + $0x58] sm:$0xff]
    %v7825 = vld [vmem:[%s7812 + $0x60] sm:$0xff]
    %v7826 = vld [vmem:[%s7812 + $0x68] sm:$0xff]
    %v7827 = vld [vmem:[%s7812 + $0x70] sm:$0xff]
    %v7828 = vld [vmem:[%s7812 + $0x78] sm:$0xff]
    %7829 = vmatprep.subr.mxu0 0.0
    %7830 = vmatpush1.msra.mxu0 %v7813
    %7831 = vmatprep.subr.mxu0 0.0
    %7832 = vmatpush1.msra.mxu0 %v7814
    %7833 = vmatprep.subr.mxu0 0.0
    %7834 = vmatpush1.msra.mxu0 %v7815
    %7835 = vmatprep.subr.mxu0 0.0
    %7836 = vmatpush1.msra.mxu0 %v7816
    %7837 = vmatprep.subr.mxu0 0.0
    %7838 = vmatpush1.msra.mxu0 %v7817
    %7839 = vmatprep.subr.mxu0 0.0
    %7840 = vmatpush1.msra.mxu0 %v7818
    %7841 = vmatprep.subr.mxu0 0.0
    %7842 = vmatpush1.msra.mxu0 %v7819
    %7843 = vmatprep.subr.mxu0 0.0
    %7844 = vmatpush1.msra.mxu0 %v7820
    %7845 = vmatprep.subr.mxu0 0.0
    %7846 = vmatpush1.msra.mxu0 %v7821
    %7847 = vmatprep.subr.mxu0 0.0
    %7848 = vmatpush1.msra.mxu0 %v7822
    %7849 = vmatprep.subr.mxu0 0.0
    %7850 = vmatpush1.msra.mxu0 %v7823
    %7851 = vmatprep.subr.mxu0 0.0
    %7852 = vmatpush1.msra.mxu0 %v7824
    %7853 = vmatprep.subr.mxu0 0.0
    %7854 = vmatpush1.msra.mxu0 %v7825
    %7855 = vmatprep.subr.mxu0 0.0
    %7856 = vmatpush1.msra.mxu0 %v7826
    %7857 = vmatprep.subr.mxu0 0.0
    %7858 = vmatpush1.msra.mxu0 %v7827
    %7859 = vmatprep.subr.mxu0 0.0
    %7860 = vmatpush1.msra.mxu0 %v7828
    %7861 = vmatprep.subr.mxu0 0.0
    %7862 = vmatpush1.msra.mxu0 0.0
    %7863 = vmatprep.subr.mxu0 0.0
    %7864 = vmatpush1.msra.mxu0 0.0
    %7865 = vmatprep.subr.mxu0 0.0
    %7866 = vmatpush1.msra.mxu0 0.0
    %7867 = vmatprep.subr.mxu0 0.0
    %7868 = vmatpush1.msra.mxu0 0.0
    %7869 = vmatprep.subr.mxu0 0.0
    %7870 = vmatpush1.msra.mxu0 0.0
    %7871 = vmatprep.subr.mxu0 0.0
    %7872 = vmatpush1.msra.mxu0 0.0
    %7873 = vmatprep.subr.mxu0 0.0
    %7874 = vmatpush1.msra.mxu0 0.0
    %7875 = vmatprep.subr.mxu0 0.0
    %7876 = vmatpush1.msra.mxu0 0.0
    %7877 = vmatprep.subr.mxu0 0.0
    %7878 = vmatpush1.msra.mxu0 0.0
    %7879 = vmatprep.subr.mxu0 0.0
    %7880 = vmatpush1.msra.mxu0 0.0
    %7881 = vmatprep.subr.mxu0 0.0
    %7882 = vmatpush1.msra.mxu0 0.0
    %7883 = vmatprep.subr.mxu0 0.0
    %7884 = vmatpush1.msra.mxu0 0.0
    %7885 = vmatprep.subr.mxu0 0.0
    %7886 = vmatpush1.msra.mxu0 0.0
    %7887 = vmatprep.subr.mxu0 0.0
    %7888 = vmatpush1.msra.mxu0 0.0
    %7889 = vmatprep.subr.mxu0 0.0
    %7890 = vmatpush1.msra.mxu0 0.0
    %7891 = vmatprep.subr.mxu0 0.0
    %7892 = vmatpush1.msra.mxu0 0.0
    %7893 = vmatprep.mubr.f32.mxu0 0.0
    %7894 = vmatmul.mubr.f32.gmra.mrb[0].mxu0 %v7809
    %v7895 = vpop.f32.mrb[0].mxu0
    %v7896 = vadd.f32 0.0, %v7895
    %v7897 = vpop.f32.mrb[0].mxu0
    %7898 = vdwg.mxu0
    %v7899 = vadd.f32 %v7736, %v7896
    %s7900 = scalar_lea.vmem [#allocation7], 48
    %v7901 = vld [vmem:[%s7900] sm:$0xff]
    %v7903 = vsel %vm6925, %v7901, 0
    %7905 = vmatprep.subr.mxu0 0.0
    %7906 = vmatpush1.msra.mxu0 %v6920
    %7907 = vmatprep.subr.mxu0 0.0
    %7908 = vmatpush1.msra.mxu0 %v6921
    %7909 = vmatprep.subr.mxu0 0.0
    %7910 = vmatpush1.msra.mxu0 %v6922
    %7911 = vmatprep.subr.mxu0 0.0
    %7912 = vmatpush1.msra.mxu0 %v6923
    %7913 = vmatprep.subr.mxu0 0.0
    %7914 = vmatpush1.msra.mxu0 0.0
    %7915 = vmatprep.subr.mxu0 0.0
    %7916 = vmatpush1.msra.mxu0 0.0
    %7917 = vmatprep.subr.mxu0 0.0
    %7918 = vmatpush1.msra.mxu0 0.0
    %7919 = vmatprep.subr.mxu0 0.0
    %7920 = vmatpush1.msra.mxu0 0.0
    %7921 = vmatprep.subr.mxu0 0.0
    %7922 = vmatpush1.msra.mxu0 0.0
    %7923 = vmatprep.subr.mxu0 0.0
    %7924 = vmatpush1.msra.mxu0 0.0
    %7925 = vmatprep.subr.mxu0 0.0
    %7926 = vmatpush1.msra.mxu0 0.0
    %7927 = vmatprep.subr.mxu0 0.0
    %7928 = vmatpush1.msra.mxu0 0.0
    %7929 = vmatprep.subr.mxu0 0.0
    %7930 = vmatpush1.msra.mxu0 0.0
    %7931 = vmatprep.subr.mxu0 0.0
    %7932 = vmatpush1.msra.mxu0 0.0
    %7933 = vmatprep.subr.mxu0 0.0
    %7934 = vmatpush1.msra.mxu0 0.0
    %7935 = vmatprep.subr.mxu0 0.0
    %7936 = vmatpush1.msra.mxu0 0.0
    %7937 = vmatprep.subr.mxu0 0.0
    %7938 = vmatpush1.msra.mxu0 0.0
    %7939 = vmatprep.subr.mxu0 0.0
    %7940 = vmatpush1.msra.mxu0 0.0
    %7941 = vmatprep.subr.mxu0 0.0
    %7942 = vmatpush1.msra.mxu0 0.0
    %7943 = vmatprep.subr.mxu0 0.0
    %7944 = vmatpush1.msra.mxu0 0.0
    %7945 = vmatprep.subr.mxu0 0.0
    %7946 = vmatpush1.msra.mxu0 0.0
    %7947 = vmatprep.subr.mxu0 0.0
    %7948 = vmatpush1.msra.mxu0 0.0
    %7949 = vmatprep.subr.mxu0 0.0
    %7950 = vmatpush1.msra.mxu0 0.0
    %7951 = vmatprep.subr.mxu0 0.0
    %7952 = vmatpush1.msra.mxu0 0.0
    %7953 = vmatprep.subr.mxu0 0.0
    %7954 = vmatpush1.msra.mxu0 0.0
    %7955 = vmatprep.subr.mxu0 0.0
    %7956 = vmatpush1.msra.mxu0 0.0
    %7957 = vmatprep.subr.mxu0 0.0
    %7958 = vmatpush1.msra.mxu0 0.0
    %7959 = vmatprep.subr.mxu0 0.0
    %7960 = vmatpush1.msra.mxu0 0.0
    %7961 = vmatprep.subr.mxu0 0.0
    %7962 = vmatpush1.msra.mxu0 0.0
    %7963 = vmatprep.subr.mxu0 0.0
    %7964 = vmatpush1.msra.mxu0 0.0
    %7965 = vmatprep.subr.mxu0 0.0
    %7966 = vmatpush1.msra.mxu0 0.0
    %7967 = vmatprep.subr.mxu0 0.0
    %7968 = vmatpush1.msra.mxu0 0.0
    %7969 = vmatprep.mubr.f32.mxu0 0.0
    %7970 = vmatmul.mubr.f32.gmra.mrb[0].mxu0 %v7903
    %v7971 = vpop.f32.mrb[0].mxu0
    %v7972 = vadd.f32 0.0, %v7971
    %v7973 = vpop.f32.mrb[0].mxu0
    %7974 = vdwg.mxu0
    %s7975 = scalar_lea.vmem [#allocation10], 3072
    %v7976 = vld [vmem:[%s7975] sm:$0xff]
    %v7977 = vld [vmem:[%s7975 + $0x8] sm:$0xff]
    %v7978 = vld [vmem:[%s7975 + $0x10] sm:$0xff]
    %v7979 = vld [vmem:[%s7975 + $0x18] sm:$0xff]
    %v7980 = vld [vmem:[%s7975 + $0x20] sm:$0xff]
    %v7981 = vld [vmem:[%s7975 + $0x28] sm:$0xff]
    %v7982 = vld [vmem:[%s7975 + $0x30] sm:$0xff]
    %v7983 = vld [vmem:[%s7975 + $0x38] sm:$0xff]
    %v7984 = vld [vmem:[%s7975 + $0x40] sm:$0xff]
    %v7985 = vld [vmem:[%s7975 + $0x48] sm:$0xff]
    %v7986 = vld [vmem:[%s7975 + $0x50] sm:$0xff]
    %v7987 = vld [vmem:[%s7975 + $0x58] sm:$0xff]
    %v7988 = vld [vmem:[%s7975 + $0x60] sm:$0xff]
    %v7989 = vld [vmem:[%s7975 + $0x68] sm:$0xff]
    %v7990 = vld [vmem:[%s7975 + $0x70] sm:$0xff]
    %v7991 = vld [vmem:[%s7975 + $0x78] sm:$0xff]
    %7992 = vmatprep.subr.mxu0 0.0
    %7993 = vmatpush1.msra.mxu0 %v7976
    %7994 = vmatprep.subr.mxu0 0.0
    %7995 = vmatpush1.msra.mxu0 %v7977
    %7996 = vmatprep.subr.mxu0 0.0
    %7997 = vmatpush1.msra.mxu0 %v7978
    %7998 = vmatprep.subr.mxu0 0.0
    %7999 = vmatpush1.msra.mxu0 %v7979
    %8000 = vmatprep.subr.mxu0 0.0
    %8001 = vmatpush1.msra.mxu0 %v7980
    %8002 = vmatprep.subr.mxu0 0.0
    %8003 = vmatpush1.msra.mxu0 %v7981
    %8004 = vmatprep.subr.mxu0 0.0
    %8005 = vmatpush1.msra.mxu0 %v7982
    %8006 = vmatprep.subr.mxu0 0.0
    %8007 = vmatpush1.msra.mxu0 %v7983
    %8008 = vmatprep.subr.mxu0 0.0
    %8009 = vmatpush1.msra.mxu0 %v7984
    %8010 = vmatprep.subr.mxu0 0.0
    %8011 = vmatpush1.msra.mxu0 %v7985
    %8012 = vmatprep.subr.mxu0 0.0
    %8013 = vmatpush1.msra.mxu0 %v7986
    %8014 = vmatprep.subr.mxu0 0.0
    %8015 = vmatpush1.msra.mxu0 %v7987
    %8016 = vmatprep.subr.mxu0 0.0
    %8017 = vmatpush1.msra.mxu0 %v7988
    %8018 = vmatprep.subr.mxu0 0.0
    %8019 = vmatpush1.msra.mxu0 %v7989
    %8020 = vmatprep.subr.mxu0 0.0
    %8021 = vmatpush1.msra.mxu0 %v7990
    %8022 = vmatprep.subr.mxu0 0.0
    %8023 = vmatpush1.msra.mxu0 %v7991
    %8024 = vmatprep.subr.mxu0 0.0
    %8025 = vmatpush1.msra.mxu0 0.0
    %8026 = vmatprep.subr.mxu0 0.0
    %8027 = vmatpush1.msra.mxu0 0.0
    %8028 = vmatprep.subr.mxu0 0.0
    %8029 = vmatpush1.msra.mxu0 0.0
    %8030 = vmatprep.subr.mxu0 0.0
    %8031 = vmatpush1.msra.mxu0 0.0
    %8032 = vmatprep.subr.mxu0 0.0
    %8033 = vmatpush1.msra.mxu0 0.0
    %8034 = vmatprep.subr.mxu0 0.0
    %8035 = vmatpush1.msra.mxu0 0.0
    %8036 = vmatprep.subr.mxu0 0.0
    %8037 = vmatpush1.msra.mxu0 0.0
    %8038 = vmatprep.subr.mxu0 0.0
    %8039 = vmatpush1.msra.mxu0 0.0
    %8040 = vmatprep.subr.mxu0 0.0
    %8041 = vmatpush1.msra.mxu0 0.0
    %8042 = vmatprep.subr.mxu0 0.0
    %8043 = vmatpush1.msra.mxu0 0.0
    %8044 = vmatprep.subr.mxu0 0.0
    %8045 = vmatpush1.msra.mxu0 0.0
    %8046 = vmatprep.subr.mxu0 0.0
    %8047 = vmatpush1.msra.mxu0 0.0
    %8048 = vmatprep.subr.mxu0 0.0
    %8049 = vmatpush1.msra.mxu0 0.0
    %8050 = vmatprep.subr.mxu0 0.0
    %8051 = vmatpush1.msra.mxu0 0.0
    %8052 = vmatprep.subr.mxu0 0.0
    %8053 = vmatpush1.msra.mxu0 0.0
    %8054 = vmatprep.subr.mxu0 0.0
    %8055 = vmatpush1.msra.mxu0 0.0
    %8056 = vmatprep.mubr.f32.mxu0 0.0
    %8057 = vmatmul.mubr.f32.gmra.mrb[0].mxu0 %v7972
    %v8058 = vpop.f32.mrb[0].mxu0
    %v8059 = vadd.f32 0.0, %v8058
    %v8060 = vpop.f32.mrb[0].mxu0
    %8061 = vdwg.mxu0
    %v8062 = vadd.f32 %v7899, %v8059
    %s8063 = scalar_lea.vmem [#allocation7], 56
    %v8064 = vld [vmem:[%s8063] sm:$0xff]
    %v8066 = vsel %vm6925, %v8064, 0
    %8068 = vmatprep.subr.mxu0 0.0
    %8069 = vmatpush1.msra.mxu0 %v6920
    %8070 = vmatprep.subr.mxu0 0.0
    %8071 = vmatpush1.msra.mxu0 %v6921
    %8072 = vmatprep.subr.mxu0 0.0
    %8073 = vmatpush1.msra.mxu0 %v6922
    %8074 = vmatprep.subr.mxu0 0.0
    %8075 = vmatpush1.msra.mxu0 %v6923
    %8076 = vmatprep.subr.mxu0 0.0
    %8077 = vmatpush1.msra.mxu0 0.0
    %8078 = vmatprep.subr.mxu0 0.0
    %8079 = vmatpush1.msra.mxu0 0.0
    %8080 = vmatprep.subr.mxu0 0.0
    %8081 = vmatpush1.msra.mxu0 0.0
    %8082 = vmatprep.subr.mxu0 0.0
    %8083 = vmatpush1.msra.mxu0 0.0
    %8084 = vmatprep.subr.mxu0 0.0
    %8085 = vmatpush1.msra.mxu0 0.0
    %8086 = vmatprep.subr.mxu0 0.0
    %8087 = vmatpush1.msra.mxu0 0.0
    %8088 = vmatprep.subr.mxu0 0.0
    %8089 = vmatpush1.msra.mxu0 0.0
    %8090 = vmatprep.subr.mxu0 0.0
    %8091 = vmatpush1.msra.mxu0 0.0
    %8092 = vmatprep.subr.mxu0 0.0
    %8093 = vmatpush1.msra.mxu0 0.0
    %8094 = vmatprep.subr.mxu0 0.0
    %8095 = vmatpush1.msra.mxu0 0.0
    %8096 = vmatprep.subr.mxu0 0.0
    %8097 = vmatpush1.msra.mxu0 0.0
    %8098 = vmatprep.subr.mxu0 0.0
    %8099 = vmatpush1.msra.mxu0 0.0
    %8100 = vmatprep.subr.mxu0 0.0
    %8101 = vmatpush1.msra.mxu0 0.0
    %8102 = vmatprep.subr.mxu0 0.0
    %8103 = vmatpush1.msra.mxu0 0.0
    %8104 = vmatprep.subr.mxu0 0.0
    %8105 = vmatpush1.msra.mxu0 0.0
    %8106 = vmatprep.subr.mxu0 0.0
    %8107 = vmatpush1.msra.mxu0 0.0
    %8108 = vmatprep.subr.mxu0 0.0
    %8109 = vmatpush1.msra.mxu0 0.0
    %8110 = vmatprep.subr.mxu0 0.0
    %8111 = vmatpush1.msra.mxu0 0.0
    %8112 = vmatprep.subr.mxu0 0.0
    %8113 = vmatpush1.msra.mxu0 0.0
    %8114 = vmatprep.subr.mxu0 0.0
    %8115 = vmatpush1.msra.mxu0 0.0
    %8116 = vmatprep.subr.mxu0 0.0
    %8117 = vmatpush1.msra.mxu0 0.0
    %8118 = vmatprep.subr.mxu0 0.0
    %8119 = vmatpush1.msra.mxu0 0.0
    %8120 = vmatprep.subr.mxu0 0.0
    %8121 = vmatpush1.msra.mxu0 0.0
    %8122 = vmatprep.subr.mxu0 0.0
    %8123 = vmatpush1.msra.mxu0 0.0
    %8124 = vmatprep.subr.mxu0 0.0
    %8125 = vmatpush1.msra.mxu0 0.0
    %8126 = vmatprep.subr.mxu0 0.0
    %8127 = vmatpush1.msra.mxu0 0.0
    %8128 = vmatprep.subr.mxu0 0.0
    %8129 = vmatpush1.msra.mxu0 0.0
    %8130 = vmatprep.subr.mxu0 0.0
    %8131 = vmatpush1.msra.mxu0 0.0
    %8132 = vmatprep.mubr.f32.mxu0 0.0
    %8133 = vmatmul.mubr.f32.gmra.mrb[0].mxu0 %v8066
    %v8134 = vpop.f32.mrb[0].mxu0
    %v8135 = vadd.f32 0.0, %v8134
    %v8136 = vpop.f32.mrb[0].mxu0
    %8137 = vdwg.mxu0
    %s8138 = scalar_lea.vmem [#allocation10], 3200
    %v8139 = vld [vmem:[%s8138] sm:$0xff]
    %v8140 = vld [vmem:[%s8138 + $0x8] sm:$0xff]
    %v8141 = vld [vmem:[%s8138 + $0x10] sm:$0xff]
    %v8142 = vld [vmem:[%s8138 + $0x18] sm:$0xff]
    %v8143 = vld [vmem:[%s8138 + $0x20] sm:$0xff]
    %v8144 = vld [vmem:[%s8138 + $0x28] sm:$0xff]
    %v8145 = vld [vmem:[%s8138 + $0x30] sm:$0xff]
    %v8146 = vld [vmem:[%s8138 + $0x38] sm:$0xff]
    %v8147 = vld [vmem:[%s8138 + $0x40] sm:$0xff]
    %v8148 = vld [vmem:[%s8138 + $0x48] sm:$0xff]
    %v8149 = vld [vmem:[%s8138 + $0x50] sm:$0xff]
    %v8150 = vld [vmem:[%s8138 + $0x58] sm:$0xff]
    %v8151 = vld [vmem:[%s8138 + $0x60] sm:$0xff]
    %v8152 = vld [vmem:[%s8138 + $0x68] sm:$0xff]
    %v8153 = vld [vmem:[%s8138 + $0x70] sm:$0xff]
    %v8154 = vld [vmem:[%s8138 + $0x78] sm:$0xff]
    %8155 = vmatprep.subr.mxu0 0.0
    %8156 = vmatpush1.msra.mxu0 %v8139
    %8157 = vmatprep.subr.mxu0 0.0
    %8158 = vmatpush1.msra.mxu0 %v8140
    %8159 = vmatprep.subr.mxu0 0.0
    %8160 = vmatpush1.msra.mxu0 %v8141
    %8161 = vmatprep.subr.mxu0 0.0
    %8162 = vmatpush1.msra.mxu0 %v8142
    %8163 = vmatprep.subr.mxu0 0.0
    %8164 = vmatpush1.msra.mxu0 %v8143
    %8165 = vmatprep.subr.mxu0 0.0
    %8166 = vmatpush1.msra.mxu0 %v8144
    %8167 = vmatprep.subr.mxu0 0.0
    %8168 = vmatpush1.msra.mxu0 %v8145
    %8169 = vmatprep.subr.mxu0 0.0
    %8170 = vmatpush1.msra.mxu0 %v8146
    %8171 = vmatprep.subr.mxu0 0.0
    %8172 = vmatpush1.msra.mxu0 %v8147
    %8173 = vmatprep.subr.mxu0 0.0
    %8174 = vmatpush1.msra.mxu0 %v8148
    %8175 = vmatprep.subr.mxu0 0.0
    %8176 = vmatpush1.msra.mxu0 %v8149
    %8177 = vmatprep.subr.mxu0 0.0
    %8178 = vmatpush1.msra.mxu0 %v8150
    %8179 = vmatprep.subr.mxu0 0.0
    %8180 = vmatpush1.msra.mxu0 %v8151
    %8181 = vmatprep.subr.mxu0 0.0
    %8182 = vmatpush1.msra.mxu0 %v8152
    %8183 = vmatprep.subr.mxu0 0.0
    %8184 = vmatpush1.msra.mxu0 %v8153
    %8185 = vmatprep.subr.mxu0 0.0
    %8186 = vmatpush1.msra.mxu0 %v8154
    %8187 = vmatprep.subr.mxu0 0.0
    %8188 = vmatpush1.msra.mxu0 0.0
    %8189 = vmatprep.subr.mxu0 0.0
    %8190 = vmatpush1.msra.mxu0 0.0
    %8191 = vmatprep.subr.mxu0 0.0
    %8192 = vmatpush1.msra.mxu0 0.0
    %8193 = vmatprep.subr.mxu0 0.0
    %8194 = vmatpush1.msra.mxu0 0.0
    %8195 = vmatprep.subr.mxu0 0.0
    %8196 = vmatpush1.msra.mxu0 0.0
    %8197 = vmatprep.subr.mxu0 0.0
    %8198 = vmatpush1.msra.mxu0 0.0
    %8199 = vmatprep.subr.mxu0 0.0
    %8200 = vmatpush1.msra.mxu0 0.0
    %8201 = vmatprep.subr.mxu0 0.0
    %8202 = vmatpush1.msra.mxu0 0.0
    %8203 = vmatprep.subr.mxu0 0.0
    %8204 = vmatpush1.msra.mxu0 0.0
    %8205 = vmatprep.subr.mxu0 0.0
    %8206 = vmatpush1.msra.mxu0 0.0
    %8207 = vmatprep.subr.mxu0 0.0
    %8208 = vmatpush1.msra.mxu0 0.0
    %8209 = vmatprep.subr.mxu0 0.0
    %8210 = vmatpush1.msra.mxu0 0.0
    %8211 = vmatprep.subr.mxu0 0.0
    %8212 = vmatpush1.msra.mxu0 0.0
    %8213 = vmatprep.subr.mxu0 0.0
    %8214 = vmatpush1.msra.mxu0 0.0
    %8215 = vmatprep.subr.mxu0 0.0
    %8216 = vmatpush1.msra.mxu0 0.0
    %8217 = vmatprep.subr.mxu0 0.0
    %8218 = vmatpush1.msra.mxu0 0.0
    %8219 = vmatprep.mubr.f32.mxu0 0.0
    %8220 = vmatmul.mubr.f32.gmra.mrb[0].mxu0 %v8135
    %v8221 = vpop.f32.mrb[0].mxu0
    %v8222 = vadd.f32 0.0, %v8221
    %v8223 = vpop.f32.mrb[0].mxu0
    %8224 = vdwg.mxu0
    %v8225 = vadd.f32 %v8062, %v8222
    %s8226 = scalar_lea.vmem [#allocation7], 64
    %v8227 = vld [vmem:[%s8226] sm:$0xff]
    %v8229 = vsel %vm6925, %v8227, 0
    %8231 = vmatprep.subr.mxu0 0.0
    %8232 = vmatpush1.msra.mxu0 %v6920
    %8233 = vmatprep.subr.mxu0 0.0
    %8234 = vmatpush1.msra.mxu0 %v6921
    %8235 = vmatprep.subr.mxu0 0.0
    %8236 = vmatpush1.msra.mxu0 %v6922
    %8237 = vmatprep.subr.mxu0 0.0
    %8238 = vmatpush1.msra.mxu0 %v6923
    %8239 = vmatprep.subr.mxu0 0.0
    %8240 = vmatpush1.msra.mxu0 0.0
    %8241 = vmatprep.subr.mxu0 0.0
    %8242 = vmatpush1.msra.mxu0 0.0
    %8243 = vmatprep.subr.mxu0 0.0
    %8244 = vmatpush1.msra.mxu0 0.0
    %8245 = vmatprep.subr.mxu0 0.0
    %8246 = vmatpush1.msra.mxu0 0.0
    %8247 = vmatprep.subr.mxu0 0.0
    %8248 = vmatpush1.msra.mxu0 0.0
    %8249 = vmatprep.subr.mxu0 0.0
    %8250 = vmatpush1.msra.mxu0 0.0
    %8251 = vmatprep.subr.mxu0 0.0
    %8252 = vmatpush1.msra.mxu0 0.0
    %8253 = vmatprep.subr.mxu0 0.0
    %8254 = vmatpush1.msra.mxu0 0.0
    %8255 = vmatprep.subr.mxu0 0.0
    %8256 = vmatpush1.msra.mxu0 0.0
    %8257 = vmatprep.subr.mxu0 0.0
    %8258 = vmatpush1.msra.mxu0 0.0
    %8259 = vmatprep.subr.mxu0 0.0
    %8260 = vmatpush1.msra.mxu0 0.0
    %8261 = vmatprep.subr.mxu0 0.0
    %8262 = vmatpush1.msra.mxu0 0.0
    %8263 = vmatprep.subr.mxu0 0.0
    %8264 = vmatpush1.msra.mxu0 0.0
    %8265 = vmatprep.subr.mxu0 0.0
    %8266 = vmatpush1.msra.mxu0 0.0
    %8267 = vmatprep.subr.mxu0 0.0
    %8268 = vmatpush1.msra.mxu0 0.0
    %8269 = vmatprep.subr.mxu0 0.0
    %8270 = vmatpush1.msra.mxu0 0.0
    %8271 = vmatprep.subr.mxu0 0.0
    %8272 = vmatpush1.msra.mxu0 0.0
    %8273 = vmatprep.subr.mxu0 0.0
    %8274 = vmatpush1.msra.mxu0 0.0
    %8275 = vmatprep.subr.mxu0 0.0
    %8276 = vmatpush1.msra.mxu0 0.0
    %8277 = vmatprep.subr.mxu0 0.0
    %8278 = vmatpush1.msra.mxu0 0.0
    %8279 = vmatprep.subr.mxu0 0.0
    %8280 = vmatpush1.msra.mxu0 0.0
    %8281 = vmatprep.subr.mxu0 0.0
    %8282 = vmatpush1.msra.mxu0 0.0
    %8283 = vmatprep.subr.mxu0 0.0
    %8284 = vmatpush1.msra.mxu0 0.0
    %8285 = vmatprep.subr.mxu0 0.0
    %8286 = vmatpush1.msra.mxu0 0.0
    %8287 = vmatprep.subr.mxu0 0.0
    %8288 = vmatpush1.msra.mxu0 0.0
    %8289 = vmatprep.subr.mxu0 0.0
    %8290 = vmatpush1.msra.mxu0 0.0
    %8291 = vmatprep.subr.mxu0 0.0
    %8292 = vmatpush1.msra.mxu0 0.0
    %8293 = vmatprep.subr.mxu0 0.0
    %8294 = vmatpush1.msra.mxu0 0.0
    %8295 = vmatprep.mubr.f32.mxu0 0.0
    %8296 = vmatmul.mubr.f32.gmra.mrb[0].mxu0 %v8229
    %v8297 = vpop.f32.mrb[0].mxu0
    %v8298 = vadd.f32 0.0, %v8297
    %v8299 = vpop.f32.mrb[0].mxu0
    %8300 = vdwg.mxu0
    %s8301 = scalar_lea.vmem [#allocation10], 3328
    %v8302 = vld [vmem:[%s8301] sm:$0xff]
    %v8303 = vld [vmem:[%s8301 + $0x8] sm:$0xff]
    %v8304 = vld [vmem:[%s8301 + $0x10] sm:$0xff]
    %v8305 = vld [vmem:[%s8301 + $0x18] sm:$0xff]
    %v8306 = vld [vmem:[%s8301 + $0x20] sm:$0xff]
    %v8307 = vld [vmem:[%s8301 + $0x28] sm:$0xff]
    %v8308 = vld [vmem:[%s8301 + $0x30] sm:$0xff]
    %v8309 = vld [vmem:[%s8301 + $0x38] sm:$0xff]
    %v8310 = vld [vmem:[%s8301 + $0x40] sm:$0xff]
    %v8311 = vld [vmem:[%s8301 + $0x48] sm:$0xff]
    %v8312 = vld [vmem:[%s8301 + $0x50] sm:$0xff]
    %v8313 = vld [vmem:[%s8301 + $0x58] sm:$0xff]
    %v8314 = vld [vmem:[%s8301 + $0x60] sm:$0xff]
    %v8315 = vld [vmem:[%s8301 + $0x68] sm:$0xff]
    %v8316 = vld [vmem:[%s8301 + $0x70] sm:$0xff]
    %v8317 = vld [vmem:[%s8301 + $0x78] sm:$0xff]
    %8318 = vmatprep.subr.mxu0 0.0
    %8319 = vmatpush1.msra.mxu0 %v8302
    %8320 = vmatprep.subr.mxu0 0.0
    %8321 = vmatpush1.msra.mxu0 %v8303
    %8322 = vmatprep.subr.mxu0 0.0
    %8323 = vmatpush1.msra.mxu0 %v8304
    %8324 = vmatprep.subr.mxu0 0.0
    %8325 = vmatpush1.msra.mxu0 %v8305
    %8326 = vmatprep.subr.mxu0 0.0
    %8327 = vmatpush1.msra.mxu0 %v8306
    %8328 = vmatprep.subr.mxu0 0.0
    %8329 = vmatpush1.msra.mxu0 %v8307
    %8330 = vmatprep.subr.mxu0 0.0
    %8331 = vmatpush1.msra.mxu0 %v8308
    %8332 = vmatprep.subr.mxu0 0.0
    %8333 = vmatpush1.msra.mxu0 %v8309
    %8334 = vmatprep.subr.mxu0 0.0
    %8335 = vmatpush1.msra.mxu0 %v8310
    %8336 = vmatprep.subr.mxu0 0.0
    %8337 = vmatpush1.msra.mxu0 %v8311
    %8338 = vmatprep.subr.mxu0 0.0
    %8339 = vmatpush1.msra.mxu0 %v8312
    %8340 = vmatprep.subr.mxu0 0.0
    %8341 = vmatpush1.msra.mxu0 %v8313
    %8342 = vmatprep.subr.mxu0 0.0
    %8343 = vmatpush1.msra.mxu0 %v8314
    %8344 = vmatprep.subr.mxu0 0.0
    %8345 = vmatpush1.msra.mxu0 %v8315
    %8346 = vmatprep.subr.mxu0 0.0
    %8347 = vmatpush1.msra.mxu0 %v8316
    %8348 = vmatprep.subr.mxu0 0.0
    %8349 = vmatpush1.msra.mxu0 %v8317
    %8350 = vmatprep.subr.mxu0 0.0
    %8351 = vmatpush1.msra.mxu0 0.0
    %8352 = vmatprep.subr.mxu0 0.0
    %8353 = vmatpush1.msra.mxu0 0.0
    %8354 = vmatprep.subr.mxu0 0.0
    %8355 = vmatpush1.msra.mxu0 0.0
    %8356 = vmatprep.subr.mxu0 0.0
    %8357 = vmatpush1.msra.mxu0 0.0
    %8358 = vmatprep.subr.mxu0 0.0
    %8359 = vmatpush1.msra.mxu0 0.0
    %8360 = vmatprep.subr.mxu0 0.0
    %8361 = vmatpush1.msra.mxu0 0.0
    %8362 = vmatprep.subr.mxu0 0.0
    %8363 = vmatpush1.msra.mxu0 0.0
    %8364 = vmatprep.subr.mxu0 0.0
    %8365 = vmatpush1.msra.mxu0 0.0
    %8366 = vmatprep.subr.mxu0 0.0
    %8367 = vmatpush1.msra.mxu0 0.0
    %8368 = vmatprep.subr.mxu0 0.0
    %8369 = vmatpush1.msra.mxu0 0.0
    %8370 = vmatprep.subr.mxu0 0.0
    %8371 = vmatpush1.msra.mxu0 0.0
    %8372 = vmatprep.subr.mxu0 0.0
    %8373 = vmatpush1.msra.mxu0 0.0
    %8374 = vmatprep.subr.mxu0 0.0
    %8375 = vmatpush1.msra.mxu0 0.0
    %8376 = vmatprep.subr.mxu0 0.0
    %8377 = vmatpush1.msra.mxu0 0.0
    %8378 = vmatprep.subr.mxu0 0.0
    %8379 = vmatpush1.msra.mxu0 0.0
    %8380 = vmatprep.subr.mxu0 0.0
    %8381 = vmatpush1.msra.mxu0 0.0
    %8382 = vmatprep.mubr.f32.mxu0 0.0
    %8383 = vmatmul.mubr.f32.gmra.mrb[0].mxu0 %v8298
    %v8384 = vpop.f32.mrb[0].mxu0
    %v8385 = vadd.f32 0.0, %v8384
    %v8386 = vpop.f32.mrb[0].mxu0
    %8387 = vdwg.mxu0
    %v8388 = vadd.f32 %v8225, %v8385
    %s8389 = scalar_lea.vmem [#allocation11], 2
    %v8390 = vld [vmem:[%s8389] sm:$0x1]
    %v8392 = vlaneseq
    %v8393 = vshrl.u32 %v8392, 7
    %v8394 = vsub.s32 0, %v8393
    %v8395 = vrot.slane %v8390, %v8394
    %v8397 = vadd.f32 %v8388, %v8395
    %vm8398 = vcmp.gt.f32.partialorder %v8397, 0.0
    %v8399 = vmul.f32 %v8397, 0.2
    %v8400 = vsel %vm8398, %v8397, %v8399
    %s8401 = scalar_lea.vmem [#allocation13], 2
    %v8402 = vld [vmem:[%s8401] sm:$0x1]
    %v8404 = vlaneseq
    %v8405 = vshrl.u32 %v8404, 7
    %v8406 = vsub.s32 0, %v8405
    %v8407 = vrot.slane %v8402, %v8406
    %v8409 = vmul.f32 %v8400, %v8407
    %s8410 = scalar_lea.vmem [#allocation14], 2
    %v8411 = vld [vmem:[%s8410] sm:$0x1]
    %v8413 = vlaneseq
    %v8414 = vshrl.u32 %v8413, 7
    %v8415 = vsub.s32 0, %v8414
    %v8416 = vrot.slane %v8411, %v8415
    %v8418 = vadd.f32 %v8409, %v8416
    %v8419 = vld [vmem:[#allocation8] sm:$0x3]
    %vm8420 = vcmask 64512
    %v8422 = vsel %vm8420, %v8419, 0
    %8424 = vmatprep.subr.mxu0 0.0
    %8425 = vmatpush1.msra.mxu0 %v8418
    %8426 = vmatprep.subr.mxu0 0.0
    %8427 = vmatpush1.msra.mxu0 0.0
    %8428 = vmatprep.subr.mxu0 0.0
    %8429 = vmatpush1.msra.mxu0 0.0
    %8430 = vmatprep.subr.mxu0 0.0
    %8431 = vmatpush1.msra.mxu0 0.0
    %8432 = vmatprep.subr.mxu0 0.0
    %8433 = vmatpush1.msra.mxu0 0.0
    %8434 = vmatprep.subr.mxu0 0.0
    %8435 = vmatpush1.msra.mxu0 0.0
    %8436 = vmatprep.subr.mxu0 0.0
    %8437 = vmatpush1.msra.mxu0 0.0
    %8438 = vmatprep.subr.mxu0 0.0
    %8439 = vmatpush1.msra.mxu0 0.0
    %8440 = vmatprep.subr.mxu0 0.0
    %8441 = vmatpush1.msra.mxu0 0.0
    %8442 = vmatprep.subr.mxu0 0.0
    %8443 = vmatpush1.msra.mxu0 0.0
    %8444 = vmatprep.subr.mxu0 0.0
    %8445 = vmatpush1.msra.mxu0 0.0
    %8446 = vmatprep.subr.mxu0 0.0
    %8447 = vmatpush1.msra.mxu0 0.0
    %8448 = vmatprep.subr.mxu0 0.0
    %8449 = vmatpush1.msra.mxu0 0.0
    %8450 = vmatprep.subr.mxu0 0.0
    %8451 = vmatpush1.msra.mxu0 0.0
    %8452 = vmatprep.subr.mxu0 0.0
    %8453 = vmatpush1.msra.mxu0 0.0
    %8454 = vmatprep.subr.mxu0 0.0
    %8455 = vmatpush1.msra.mxu0 0.0
    %8456 = vmatprep.subr.mxu0 0.0
    %8457 = vmatpush1.msra.mxu0 0.0
    %8458 = vmatprep.subr.mxu0 0.0
    %8459 = vmatpush1.msra.mxu0 0.0
    %8460 = vmatprep.subr.mxu0 0.0
    %8461 = vmatpush1.msra.mxu0 0.0
    %8462 = vmatprep.subr.mxu0 0.0
    %8463 = vmatpush1.msra.mxu0 0.0
    %8464 = vmatprep.subr.mxu0 0.0
    %8465 = vmatpush1.msra.mxu0 0.0
    %8466 = vmatprep.subr.mxu0 0.0
    %8467 = vmatpush1.msra.mxu0 0.0
    %8468 = vmatprep.subr.mxu0 0.0
    %8469 = vmatpush1.msra.mxu0 0.0
    %8470 = vmatprep.subr.mxu0 0.0
    %8471 = vmatpush1.msra.mxu0 0.0
    %8472 = vmatprep.subr.mxu0 0.0
    %8473 = vmatpush1.msra.mxu0 0.0
    %8474 = vmatprep.subr.mxu0 0.0
    %8475 = vmatpush1.msra.mxu0 0.0
    %8476 = vmatprep.subr.mxu0 0.0
    %8477 = vmatpush1.msra.mxu0 0.0
    %8478 = vmatprep.subr.mxu0 0.0
    %8479 = vmatpush1.msra.mxu0 0.0
    %8480 = vmatprep.subr.mxu0 0.0
    %8481 = vmatpush1.msra.mxu0 0.0
    %8482 = vmatprep.subr.mxu0 0.0
    %8483 = vmatpush1.msra.mxu0 0.0
    %8484 = vmatprep.subr.mxu0 0.0
    %8485 = vmatpush1.msra.mxu0 0.0
    %8486 = vmatprep.subr.mxu0 0.0
    %8487 = vmatpush1.msra.mxu0 0.0
    %8488 = vmatprep.mubr.f32.mxu0 0.0
    %8489 = vmatmul.mubr.f32.gmra.mrb[0].mxu0 %v8422
    %v8490 = vpop.f32.mrb[0].mxu0
    %v8491 = vadd.f32 0.0, %v8490
    %v8492 = vpop.f32.mrb[0].mxu0
    %8493 = vdwg.mxu0
    %s8494 = scalar_lea.vmem [#allocation10], 3456
    %v8495 = vld [vmem:[%s8494] sm:$0xff]
    %v8496 = vld [vmem:[%s8494 + $0x8] sm:$0xff]
    %v8497 = vld [vmem:[%s8494 + $0x10] sm:$0xff]
    %v8498 = vld [vmem:[%s8494 + $0x18] sm:$0xff]
    %v8499 = vld [vmem:[%s8494 + $0x20] sm:$0xff]
    %v8500 = vld [vmem:[%s8494 + $0x28] sm:$0xff]
    %v8501 = vld [vmem:[%s8494 + $0x30] sm:$0xff]
    %v8502 = vld [vmem:[%s8494 + $0x38] sm:$0xff]
    %v8503 = vld [vmem:[%s8494 + $0x40] sm:$0xff]
    %v8504 = vld [vmem:[%s8494 + $0x48] sm:$0xff]
    %v8505 = vld [vmem:[%s8494 + $0x50] sm:$0xff]
    %v8506 = vld [vmem:[%s8494 + $0x58] sm:$0xff]
    %v8507 = vld [vmem:[%s8494 + $0x60] sm:$0xff]
    %v8508 = vld [vmem:[%s8494 + $0x68] sm:$0xff]
    %v8509 = vld [vmem:[%s8494 + $0x70] sm:$0xff]
    %v8510 = vld [vmem:[%s8494 + $0x78] sm:$0xff]
    %s8511 = scalar_lea.vmem [#allocation8], 2
    %v8512 = vld [vmem:[%s8511] sm:$0x3]
    %v8514 = vsel %vm8420, %v8512, 0
    %8516 = vmatprep.subr.mxu0 0.0
    %8517 = vmatpush1.msra.mxu0 %v8418
    %8518 = vmatprep.subr.mxu0 0.0
    %8519 = vmatpush1.msra.mxu0 0.0
    %8520 = vmatprep.subr.mxu0 0.0
    %8521 = vmatpush1.msra.mxu0 0.0
    %8522 = vmatprep.subr.mxu0 0.0
    %8523 = vmatpush1.msra.mxu0 0.0
    %8524 = vmatprep.subr.mxu0 0.0
    %8525 = vmatpush1.msra.mxu0 0.0
    %8526 = vmatprep.subr.mxu0 0.0
    %8527 = vmatpush1.msra.mxu0 0.0
    %8528 = vmatprep.subr.mxu0 0.0
    %8529 = vmatpush1.msra.mxu0 0.0
    %8530 = vmatprep.subr.mxu0 0.0
    %8531 = vmatpush1.msra.mxu0 0.0
    %8532 = vmatprep.subr.mxu0 0.0
    %8533 = vmatpush1.msra.mxu0 0.0
    %8534 = vmatprep.subr.mxu0 0.0
    %8535 = vmatpush1.msra.mxu0 0.0
    %8536 = vmatprep.subr.mxu0 0.0
    %8537 = vmatpush1.msra.mxu0 0.0
    %8538 = vmatprep.subr.mxu0 0.0
    %8539 = vmatpush1.msra.mxu0 0.0
    %8540 = vmatprep.subr.mxu0 0.0
    %8541 = vmatpush1.msra.mxu0 0.0
    %8542 = vmatprep.subr.mxu0 0.0
    %8543 = vmatpush1.msra.mxu0 0.0
    %8544 = vmatprep.subr.mxu0 0.0
    %8545 = vmatpush1.msra.mxu0 0.0
    %8546 = vmatprep.subr.mxu0 0.0
    %8547 = vmatpush1.msra.mxu0 0.0
    %8548 = vmatprep.subr.mxu0 0.0
    %8549 = vmatpush1.msra.mxu0 0.0
    %8550 = vmatprep.subr.mxu0 0.0
    %8551 = vmatpush1.msra.mxu0 0.0
    %8552 = vmatprep.subr.mxu0 0.0
    %8553 = vmatpush1.msra.mxu0 0.0
    %8554 = vmatprep.subr.mxu0 0.0
    %8555 = vmatpush1.msra.mxu0 0.0
    %8556 = vmatprep.subr.mxu0 0.0
    %8557 = vmatpush1.msra.mxu0 0.0
    %8558 = vmatprep.subr.mxu0 0.0
    %8559 = vmatpush1.msra.mxu0 0.0
    %8560 = vmatprep.subr.mxu0 0.0
    %8561 = vmatpush1.msra.mxu0 0.0
    %8562 = vmatprep.subr.mxu0 0.0
    %8563 = vmatpush1.msra.mxu0 0.0
    %8564 = vmatprep.subr.mxu0 0.0
    %8565 = vmatpush1.msra.mxu0 0.0
    %8566 = vmatprep.subr.mxu0 0.0
    %8567 = vmatpush1.msra.mxu0 0.0
    %8568 = vmatprep.subr.mxu0 0.0
    %8569 = vmatpush1.msra.mxu0 0.0
    %8570 = vmatprep.subr.mxu0 0.0
    %8571 = vmatpush1.msra.mxu0 0.0
    %8572 = vmatprep.subr.mxu0 0.0
    %8573 = vmatpush1.msra.mxu0 0.0
    %8574 = vmatprep.subr.mxu0 0.0
    %8575 = vmatpush1.msra.mxu0 0.0
    %8576 = vmatprep.subr.mxu0 0.0
    %8577 = vmatpush1.msra.mxu0 0.0
    %8578 = vmatprep.subr.mxu0 0.0
    %8579 = vmatpush1.msra.mxu0 0.0
    %8580 = vmatprep.mubr.f32.mxu0 0.0
    %8581 = vmatmul.mubr.f32.gmra.mrb[0].mxu0 %v8514
    %v8582 = vpop.f32.mrb[0].mxu0
    %v8583 = vadd.f32 0.0, %v8582
    %v8584 = vpop.f32.mrb[0].mxu0
    %8585 = vdwg.mxu0
    %s8586 = scalar_lea.vmem [#allocation10], 3584
    %v8587 = vld [vmem:[%s8586] sm:$0xff]
    %v8588 = vld [vmem:[%s8586 + $0x8] sm:$0xff]
    %v8589 = vld [vmem:[%s8586 + $0x10] sm:$0xff]
    %v8590 = vld [vmem:[%s8586 + $0x18] sm:$0xff]
    %v8591 = vld [vmem:[%s8586 + $0x20] sm:$0xff]
    %v8592 = vld [vmem:[%s8586 + $0x28] sm:$0xff]
    %v8593 = vld [vmem:[%s8586 + $0x30] sm:$0xff]
    %v8594 = vld [vmem:[%s8586 + $0x38] sm:$0xff]
    %v8595 = vld [vmem:[%s8586 + $0x40] sm:$0xff]
    %v8596 = vld [vmem:[%s8586 + $0x48] sm:$0xff]
    %v8597 = vld [vmem:[%s8586 + $0x50] sm:$0xff]
    %v8598 = vld [vmem:[%s8586 + $0x58] sm:$0xff]
    %v8599 = vld [vmem:[%s8586 + $0x60] sm:$0xff]
    %v8600 = vld [vmem:[%s8586 + $0x68] sm:$0xff]
    %v8601 = vld [vmem:[%s8586 + $0x70] sm:$0xff]
    %v8602 = vld [vmem:[%s8586 + $0x78] sm:$0xff]
    %8603 = vmatprep.subr.mxu0 0.0
    %8604 = vmatpush1.msra.mxu0 %v8587
    %8605 = vmatprep.subr.mxu0 0.0
    %8606 = vmatpush1.msra.mxu0 %v8588
    %8607 = vmatprep.subr.mxu0 0.0
    %8608 = vmatpush1.msra.mxu0 %v8589
    %8609 = vmatprep.subr.mxu0 0.0
    %8610 = vmatpush1.msra.mxu0 %v8590
    %8611 = vmatprep.subr.mxu0 0.0
    %8612 = vmatpush1.msra.mxu0 %v8591
    %8613 = vmatprep.subr.mxu0 0.0
    %8614 = vmatpush1.msra.mxu0 %v8592
    %8615 = vmatprep.subr.mxu0 0.0
    %8616 = vmatpush1.msra.mxu0 %v8593
    %8617 = vmatprep.subr.mxu0 0.0
    %8618 = vmatpush1.msra.mxu0 %v8594
    %8619 = vmatprep.subr.mxu0 0.0
    %8620 = vmatpush1.msra.mxu0 %v8595
    %8621 = vmatprep.subr.mxu0 0.0
    %8622 = vmatpush1.msra.mxu0 %v8596
    %8623 = vmatprep.subr.mxu0 0.0
    %8624 = vmatpush1.msra.mxu0 %v8597
    %8625 = vmatprep.subr.mxu0 0.0
    %8626 = vmatpush1.msra.mxu0 %v8598
    %8627 = vmatprep.subr.mxu0 0.0
    %8628 = vmatpush1.msra.mxu0 %v8599
    %8629 = vmatprep.subr.mxu0 0.0
    %8630 = vmatpush1.msra.mxu0 %v8600
    %8631 = vmatprep.subr.mxu0 0.0
    %8632 = vmatpush1.msra.mxu0 %v8601
    %8633 = vmatprep.subr.mxu0 0.0
    %8634 = vmatpush1.msra.mxu0 %v8602
    %8635 = vmatprep.subr.mxu0 0.0
    %8636 = vmatpush1.msra.mxu0 0.0
    %8637 = vmatprep.subr.mxu0 0.0
    %8638 = vmatpush1.msra.mxu0 0.0
    %8639 = vmatprep.subr.mxu0 0.0
    %8640 = vmatpush1.msra.mxu0 0.0
    %8641 = vmatprep.subr.mxu0 0.0
    %8642 = vmatpush1.msra.mxu0 0.0
    %8643 = vmatprep.subr.mxu0 0.0
    %8644 = vmatpush1.msra.mxu0 0.0
    %8645 = vmatprep.subr.mxu0 0.0
    %8646 = vmatpush1.msra.mxu0 0.0
    %8647 = vmatprep.subr.mxu0 0.0
    %8648 = vmatpush1.msra.mxu0 0.0
    %8649 = vmatprep.subr.mxu0 0.0
    %8650 = vmatpush1.msra.mxu0 0.0
    %8651 = vmatprep.subr.mxu0 0.0
    %8652 = vmatpush1.msra.mxu0 0.0
    %8653 = vmatprep.subr.mxu0 0.0
    %8654 = vmatpush1.msra.mxu0 0.0
    %8655 = vmatprep.subr.mxu0 0.0
    %8656 = vmatpush1.msra.mxu0 0.0
    %8657 = vmatprep.subr.mxu0 0.0
    %8658 = vmatpush1.msra.mxu0 0.0
    %8659 = vmatprep.subr.mxu0 0.0
    %8660 = vmatpush1.msra.mxu0 0.0
    %8661 = vmatprep.subr.mxu0 0.0
    %8662 = vmatpush1.msra.mxu0 0.0
    %8663 = vmatprep.subr.mxu0 0.0
    %8664 = vmatpush1.msra.mxu0 0.0
    %8665 = vmatprep.subr.mxu0 0.0
    %8666 = vmatpush1.msra.mxu0 0.0
    %8667 = vmatprep.mubr.f32.mxu0 0.0
    %8668 = vmatmul.mubr.f32.gmra.mrb[0].mxu0 %v8583
    %v8669 = vpop.f32.mrb[0].mxu0
    %v8670 = vadd.f32 0.0, %v8669
    %v8671 = vpop.f32.mrb[0].mxu0
    %8672 = vdwg.mxu0
    %8673 = vmatprep.subr.mxu0 0.0
    %8674 = vmatpush1.msra.mxu0 %v8495
    %8675 = vmatprep.subr.mxu0 0.0
    %8676 = vmatpush1.msra.mxu0 %v8496
    %8677 = vmatprep.subr.mxu0 0.0
    %8678 = vmatpush1.msra.mxu0 %v8497
    %8679 = vmatprep.subr.mxu0 0.0
    %8680 = vmatpush1.msra.mxu0 %v8498
    %8681 = vmatprep.subr.mxu0 0.0
    %8682 = vmatpush1.msra.mxu0 %v8499
    %8683 = vmatprep.subr.mxu0 0.0
    %8684 = vmatpush1.msra.mxu0 %v8500
    %8685 = vmatprep.subr.mxu0 0.0
    %8686 = vmatpush1.msra.mxu0 %v8501
    %8687 = vmatprep.subr.mxu0 0.0
    %8688 = vmatpush1.msra.mxu0 %v8502
    %8689 = vmatprep.subr.mxu0 0.0
    %8690 = vmatpush1.msra.mxu0 %v8503
    %8691 = vmatprep.subr.mxu0 0.0
    %8692 = vmatpush1.msra.mxu0 %v8504
    %8693 = vmatprep.subr.mxu0 0.0
    %8694 = vmatpush1.msra.mxu0 %v8505
    %8695 = vmatprep.subr.mxu0 0.0
    %8696 = vmatpush1.msra.mxu0 %v8506
    %8697 = vmatprep.subr.mxu0 0.0
    %8698 = vmatpush1.msra.mxu0 %v8507
    %8699 = vmatprep.subr.mxu0 0.0
    %8700 = vmatpush1.msra.mxu0 %v8508
    %8701 = vmatprep.subr.mxu0 0.0
    %8702 = vmatpush1.msra.mxu0 %v8509
    %8703 = vmatprep.subr.mxu0 0.0
    %8704 = vmatpush1.msra.mxu0 %v8510
    %8705 = vmatprep.subr.mxu0 0.0
    %8706 = vmatpush1.msra.mxu0 0.0
    %8707 = vmatprep.subr.mxu0 0.0
    %8708 = vmatpush1.msra.mxu0 0.0
    %8709 = vmatprep.subr.mxu0 0.0
    %8710 = vmatpush1.msra.mxu0 0.0
    %8711 = vmatprep.subr.mxu0 0.0
    %8712 = vmatpush1.msra.mxu0 0.0
    %8713 = vmatprep.subr.mxu0 0.0
    %8714 = vmatpush1.msra.mxu0 0.0
    %8715 = vmatprep.subr.mxu0 0.0
    %8716 = vmatpush1.msra.mxu0 0.0
    %8717 = vmatprep.subr.mxu0 0.0
    %8718 = vmatpush1.msra.mxu0 0.0
    %8719 = vmatprep.subr.mxu0 0.0
    %8720 = vmatpush1.msra.mxu0 0.0
    %8721 = vmatprep.subr.mxu0 0.0
    %8722 = vmatpush1.msra.mxu0 0.0
    %8723 = vmatprep.subr.mxu0 0.0
    %8724 = vmatpush1.msra.mxu0 0.0
    %8725 = vmatprep.subr.mxu0 0.0
    %8726 = vmatpush1.msra.mxu0 0.0
    %8727 = vmatprep.subr.mxu0 0.0
    %8728 = vmatpush1.msra.mxu0 0.0
    %8729 = vmatprep.subr.mxu0 0.0
    %8730 = vmatpush1.msra.mxu0 0.0
    %8731 = vmatprep.subr.mxu0 0.0
    %8732 = vmatpush1.msra.mxu0 0.0
    %8733 = vmatprep.subr.mxu0 0.0
    %8734 = vmatpush1.msra.mxu0 0.0
    %8735 = vmatprep.subr.mxu0 0.0
    %8736 = vmatpush1.msra.mxu0 0.0
    %8737 = vmatprep.mubr.f32.mxu0 0.0
    %8738 = vmatmul.mubr.f32.gmra.mrb[0].mxu0 %v8491
    %v8739 = vpop.f32.mrb[0].mxu0
    %v8740 = vadd.f32 %v8670, %v8739
    %v8741 = vpop.f32.mrb[0].mxu0
    %8742 = vdwg.mxu0
    %s8743 = scalar_lea.vmem [#allocation8], 4
    %v8744 = vld [vmem:[%s8743] sm:$0x3]
    %v8746 = vsel %vm8420, %v8744, 0
    %8748 = vmatprep.subr.mxu0 0.0
    %8749 = vmatpush1.msra.mxu0 %v8418
    %8750 = vmatprep.subr.mxu0 0.0
    %8751 = vmatpush1.msra.mxu0 0.0
    %8752 = vmatprep.subr.mxu0 0.0
    %8753 = vmatpush1.msra.mxu0 0.0
    %8754 = vmatprep.subr.mxu0 0.0
    %8755 = vmatpush1.msra.mxu0 0.0
    %8756 = vmatprep.subr.mxu0 0.0
    %8757 = vmatpush1.msra.mxu0 0.0
    %8758 = vmatprep.subr.mxu0 0.0
    %8759 = vmatpush1.msra.mxu0 0.0
    %8760 = vmatprep.subr.mxu0 0.0
    %8761 = vmatpush1.msra.mxu0 0.0
    %8762 = vmatprep.subr.mxu0 0.0
    %8763 = vmatpush1.msra.mxu0 0.0
    %8764 = vmatprep.subr.mxu0 0.0
    %8765 = vmatpush1.msra.mxu0 0.0
    %8766 = vmatprep.subr.mxu0 0.0
    %8767 = vmatpush1.msra.mxu0 0.0
    %8768 = vmatprep.subr.mxu0 0.0
    %8769 = vmatpush1.msra.mxu0 0.0
    %8770 = vmatprep.subr.mxu0 0.0
    %8771 = vmatpush1.msra.mxu0 0.0
    %8772 = vmatprep.subr.mxu0 0.0
    %8773 = vmatpush1.msra.mxu0 0.0
    %8774 = vmatprep.subr.mxu0 0.0
    %8775 = vmatpush1.msra.mxu0 0.0
    %8776 = vmatprep.subr.mxu0 0.0
    %8777 = vmatpush1.msra.mxu0 0.0
    %8778 = vmatprep.subr.mxu0 0.0
    %8779 = vmatpush1.msra.mxu0 0.0
    %8780 = vmatprep.subr.mxu0 0.0
    %8781 = vmatpush1.msra.mxu0 0.0
    %8782 = vmatprep.subr.mxu0 0.0
    %8783 = vmatpush1.msra.mxu0 0.0
    %8784 = vmatprep.subr.mxu0 0.0
    %8785 = vmatpush1.msra.mxu0 0.0
    %8786 = vmatprep.subr.mxu0 0.0
    %8787 = vmatpush1.msra.mxu0 0.0
    %8788 = vmatprep.subr.mxu0 0.0
    %8789 = vmatpush1.msra.mxu0 0.0
    %8790 = vmatprep.subr.mxu0 0.0
    %8791 = vmatpush1.msra.mxu0 0.0
    %8792 = vmatprep.subr.mxu0 0.0
    %8793 = vmatpush1.msra.mxu0 0.0
    %8794 = vmatprep.subr.mxu0 0.0
    %8795 = vmatpush1.msra.mxu0 0.0
    %8796 = vmatprep.subr.mxu0 0.0
    %8797 = vmatpush1.msra.mxu0 0.0
    %8798 = vmatprep.subr.mxu0 0.0
    %8799 = vmatpush1.msra.mxu0 0.0
    %8800 = vmatprep.subr.mxu0 0.0
    %8801 = vmatpush1.msra.mxu0 0.0
    %8802 = vmatprep.subr.mxu0 0.0
    %8803 = vmatpush1.msra.mxu0 0.0
    %8804 = vmatprep.subr.mxu0 0.0
    %8805 = vmatpush1.msra.mxu0 0.0
    %8806 = vmatprep.subr.mxu0 0.0
    %8807 = vmatpush1.msra.mxu0 0.0
    %8808 = vmatprep.subr.mxu0 0.0
    %8809 = vmatpush1.msra.mxu0 0.0
    %8810 = vmatprep.subr.mxu0 0.0
    %8811 = vmatpush1.msra.mxu0 0.0
    %8812 = vmatprep.mubr.f32.mxu0 0.0
    %8813 = vmatmul.mubr.f32.gmra.mrb[0].mxu0 %v8746
    %v8814 = vpop.f32.mrb[0].mxu0
    %v8815 = vadd.f32 0.0, %v8814
    %v8816 = vpop.f32.mrb[0].mxu0
    %8817 = vdwg.mxu0
    %s8818 = scalar_lea.vmem [#allocation10], 3712
    %v8819 = vld [vmem:[%s8818] sm:$0xff]
    %v8820 = vld [vmem:[%s8818 + $0x8] sm:$0xff]
    %v8821 = vld [vmem:[%s8818 + $0x10] sm:$0xff]
    %v8822 = vld [vmem:[%s8818 + $0x18] sm:$0xff]
    %v8823 = vld [vmem:[%s8818 + $0x20] sm:$0xff]
    %v8824 = vld [vmem:[%s8818 + $0x28] sm:$0xff]
    %v8825 = vld [vmem:[%s8818 + $0x30] sm:$0xff]
    %v8826 = vld [vmem:[%s8818 + $0x38] sm:$0xff]
    %v8827 = vld [vmem:[%s8818 + $0x40] sm:$0xff]
    %v8828 = vld [vmem:[%s8818 + $0x48] sm:$0xff]
    %v8829 = vld [vmem:[%s8818 + $0x50] sm:$0xff]
    %v8830 = vld [vmem:[%s8818 + $0x58] sm:$0xff]
    %v8831 = vld [vmem:[%s8818 + $0x60] sm:$0xff]
    %v8832 = vld [vmem:[%s8818 + $0x68] sm:$0xff]
    %v8833 = vld [vmem:[%s8818 + $0x70] sm:$0xff]
    %v8834 = vld [vmem:[%s8818 + $0x78] sm:$0xff]
    %8835 = vmatprep.subr.mxu0 0.0
    %8836 = vmatpush1.msra.mxu0 %v8819
    %8837 = vmatprep.subr.mxu0 0.0
    %8838 = vmatpush1.msra.mxu0 %v8820
    %8839 = vmatprep.subr.mxu0 0.0
    %8840 = vmatpush1.msra.mxu0 %v8821
    %8841 = vmatprep.subr.mxu0 0.0
    %8842 = vmatpush1.msra.mxu0 %v8822
    %8843 = vmatprep.subr.mxu0 0.0
    %8844 = vmatpush1.msra.mxu0 %v8823
    %8845 = vmatprep.subr.mxu0 0.0
    %8846 = vmatpush1.msra.mxu0 %v8824
    %8847 = vmatprep.subr.mxu0 0.0
    %8848 = vmatpush1.msra.mxu0 %v8825
    %8849 = vmatprep.subr.mxu0 0.0
    %8850 = vmatpush1.msra.mxu0 %v8826
    %8851 = vmatprep.subr.mxu0 0.0
    %8852 = vmatpush1.msra.mxu0 %v8827
    %8853 = vmatprep.subr.mxu0 0.0
    %8854 = vmatpush1.msra.mxu0 %v8828
    %8855 = vmatprep.subr.mxu0 0.0
    %8856 = vmatpush1.msra.mxu0 %v8829
    %8857 = vmatprep.subr.mxu0 0.0
    %8858 = vmatpush1.msra.mxu0 %v8830
    %8859 = vmatprep.subr.mxu0 0.0
    %8860 = vmatpush1.msra.mxu0 %v8831
    %8861 = vmatprep.subr.mxu0 0.0
    %8862 = vmatpush1.msra.mxu0 %v8832
    %8863 = vmatprep.subr.mxu0 0.0
    %8864 = vmatpush1.msra.mxu0 %v8833
    %8865 = vmatprep.subr.mxu0 0.0
    %8866 = vmatpush1.msra.mxu0 %v8834
    %8867 = vmatprep.subr.mxu0 0.0
    %8868 = vmatpush1.msra.mxu0 0.0
    %8869 = vmatprep.subr.mxu0 0.0
    %8870 = vmatpush1.msra.mxu0 0.0
    %8871 = vmatprep.subr.mxu0 0.0
    %8872 = vmatpush1.msra.mxu0 0.0
    %8873 = vmatprep.subr.mxu0 0.0
    %8874 = vmatpush1.msra.mxu0 0.0
    %8875 = vmatprep.subr.mxu0 0.0
    %8876 = vmatpush1.msra.mxu0 0.0
    %8877 = vmatprep.subr.mxu0 0.0
    %8878 = vmatpush1.msra.mxu0 0.0
    %8879 = vmatprep.subr.mxu0 0.0
    %8880 = vmatpush1.msra.mxu0 0.0
    %8881 = vmatprep.subr.mxu0 0.0
    %8882 = vmatpush1.msra.mxu0 0.0
    %8883 = vmatprep.subr.mxu0 0.0
    %8884 = vmatpush1.msra.mxu0 0.0
    %8885 = vmatprep.subr.mxu0 0.0
    %8886 = vmatpush1.msra.mxu0 0.0
    %8887 = vmatprep.subr.mxu0 0.0
    %8888 = vmatpush1.msra.mxu0 0.0
    %8889 = vmatprep.subr.mxu0 0.0
    %8890 = vmatpush1.msra.mxu0 0.0
    %8891 = vmatprep.subr.mxu0 0.0
    %8892 = vmatpush1.msra.mxu0 0.0
    %8893 = vmatprep.subr.mxu0 0.0
    %8894 = vmatpush1.msra.mxu0 0.0
    %8895 = vmatprep.subr.mxu0 0.0
    %8896 = vmatpush1.msra.mxu0 0.0
    %8897 = vmatprep.subr.mxu0 0.0
    %8898 = vmatpush1.msra.mxu0 0.0
    %8899 = vmatprep.mubr.f32.mxu0 0.0
    %8900 = vmatmul.mubr.f32.gmra.mrb[0].mxu0 %v8815
    %v8901 = vpop.f32.mrb[0].mxu0
    %v8902 = vadd.f32 0.0, %v8901
    %v8903 = vpop.f32.mrb[0].mxu0
    %8904 = vdwg.mxu0
    %v8905 = vadd.f32 %v8740, %v8902
    %s8906 = scalar_lea.vmem [#allocation8], 6
    %v8907 = vld [vmem:[%s8906] sm:$0x3]
    %v8909 = vsel %vm8420, %v8907, 0
    %8911 = vmatprep.subr.mxu0 0.0
    %8912 = vmatpush1.msra.mxu0 %v8418
    %8913 = vmatprep.subr.mxu0 0.0
    %8914 = vmatpush1.msra.mxu0 0.0
    %8915 = vmatprep.subr.mxu0 0.0
    %8916 = vmatpush1.msra.mxu0 0.0
    %8917 = vmatprep.subr.mxu0 0.0
    %8918 = vmatpush1.msra.mxu0 0.0
    %8919 = vmatprep.subr.mxu0 0.0
    %8920 = vmatpush1.msra.mxu0 0.0
    %8921 = vmatprep.subr.mxu0 0.0
    %8922 = vmatpush1.msra.mxu0 0.0
    %8923 = vmatprep.subr.mxu0 0.0
    %8924 = vmatpush1.msra.mxu0 0.0
    %8925 = vmatprep.subr.mxu0 0.0
    %8926 = vmatpush1.msra.mxu0 0.0
    %8927 = vmatprep.subr.mxu0 0.0
    %8928 = vmatpush1.msra.mxu0 0.0
    %8929 = vmatprep.subr.mxu0 0.0
    %8930 = vmatpush1.msra.mxu0 0.0
    %8931 = vmatprep.subr.mxu0 0.0
    %8932 = vmatpush1.msra.mxu0 0.0
    %8933 = vmatprep.subr.mxu0 0.0
    %8934 = vmatpush1.msra.mxu0 0.0
    %8935 = vmatprep.subr.mxu0 0.0
    %8936 = vmatpush1.msra.mxu0 0.0
    %8937 = vmatprep.subr.mxu0 0.0
    %8938 = vmatpush1.msra.mxu0 0.0
    %8939 = vmatprep.subr.mxu0 0.0
    %8940 = vmatpush1.msra.mxu0 0.0
    %8941 = vmatprep.subr.mxu0 0.0
    %8942 = vmatpush1.msra.mxu0 0.0
    %8943 = vmatprep.subr.mxu0 0.0
    %8944 = vmatpush1.msra.mxu0 0.0
    %8945 = vmatprep.subr.mxu0 0.0
    %8946 = vmatpush1.msra.mxu0 0.0
    %8947 = vmatprep.subr.mxu0 0.0
    %8948 = vmatpush1.msra.mxu0 0.0
    %8949 = vmatprep.subr.mxu0 0.0
    %8950 = vmatpush1.msra.mxu0 0.0
    %8951 = vmatprep.subr.mxu0 0.0
    %8952 = vmatpush1.msra.mxu0 0.0
    %8953 = vmatprep.subr.mxu0 0.0
    %8954 = vmatpush1.msra.mxu0 0.0
    %8955 = vmatprep.subr.mxu0 0.0
    %8956 = vmatpush1.msra.mxu0 0.0
    %8957 = vmatprep.subr.mxu0 0.0
    %8958 = vmatpush1.msra.mxu0 0.0
    %8959 = vmatprep.subr.mxu0 0.0
    %8960 = vmatpush1.msra.mxu0 0.0
    %8961 = vmatprep.subr.mxu0 0.0
    %8962 = vmatpush1.msra.mxu0 0.0
    %8963 = vmatprep.subr.mxu0 0.0
    %8964 = vmatpush1.msra.mxu0 0.0
    %8965 = vmatprep.subr.mxu0 0.0
    %8966 = vmatpush1.msra.mxu0 0.0
    %8967 = vmatprep.subr.mxu0 0.0
    %8968 = vmatpush1.msra.mxu0 0.0
    %8969 = vmatprep.subr.mxu0 0.0
    %8970 = vmatpush1.msra.mxu0 0.0
    %8971 = vmatprep.subr.mxu0 0.0
    %8972 = vmatpush1.msra.mxu0 0.0
    %8973 = vmatprep.subr.mxu0 0.0
    %8974 = vmatpush1.msra.mxu0 0.0
    %8975 = vmatprep.mubr.f32.mxu0 0.0
    %8976 = vmatmul.mubr.f32.gmra.mrb[0].mxu0 %v8909
    %v8977 = vpop.f32.mrb[0].mxu0
    %v8978 = vadd.f32 0.0, %v8977
    %v8979 = vpop.f32.mrb[0].mxu0
    %8980 = vdwg.mxu0
    %s8981 = scalar_lea.vmem [#allocation10], 3840
    %v8982 = vld [vmem:[%s8981] sm:$0xff]
    %v8983 = vld [vmem:[%s8981 + $0x8] sm:$0xff]
    %v8984 = vld [vmem:[%s8981 + $0x10] sm:$0xff]
    %v8985 = vld [vmem:[%s8981 + $0x18] sm:$0xff]
    %v8986 = vld [vmem:[%s8981 + $0x20] sm:$0xff]
    %v8987 = vld [vmem:[%s8981 + $0x28] sm:$0xff]
    %v8988 = vld [vmem:[%s8981 + $0x30] sm:$0xff]
    %v8989 = vld [vmem:[%s8981 + $0x38] sm:$0xff]
    %v8990 = vld [vmem:[%s8981 + $0x40] sm:$0xff]
    %v8991 = vld [vmem:[%s8981 + $0x48] sm:$0xff]
    %v8992 = vld [vmem:[%s8981 + $0x50] sm:$0xff]
    %v8993 = vld [vmem:[%s8981 + $0x58] sm:$0xff]
    %v8994 = vld [vmem:[%s8981 + $0x60] sm:$0xff]
    %v8995 = vld [vmem:[%s8981 + $0x68] sm:$0xff]
    %v8996 = vld [vmem:[%s8981 + $0x70] sm:$0xff]
    %v8997 = vld [vmem:[%s8981 + $0x78] sm:$0xff]
    %8998 = vmatprep.subr.mxu0 0.0
    %8999 = vmatpush1.msra.mxu0 %v8982
    %9000 = vmatprep.subr.mxu0 0.0
    %9001 = vmatpush1.msra.mxu0 %v8983
    %9002 = vmatprep.subr.mxu0 0.0
    %9003 = vmatpush1.msra.mxu0 %v8984
    %9004 = vmatprep.subr.mxu0 0.0
    %9005 = vmatpush1.msra.mxu0 %v8985
    %9006 = vmatprep.subr.mxu0 0.0
    %9007 = vmatpush1.msra.mxu0 %v8986
    %9008 = vmatprep.subr.mxu0 0.0
    %9009 = vmatpush1.msra.mxu0 %v8987
    %9010 = vmatprep.subr.mxu0 0.0
    %9011 = vmatpush1.msra.mxu0 %v8988
    %9012 = vmatprep.subr.mxu0 0.0
    %9013 = vmatpush1.msra.mxu0 %v8989
    %9014 = vmatprep.subr.mxu0 0.0
    %9015 = vmatpush1.msra.mxu0 %v8990
    %9016 = vmatprep.subr.mxu0 0.0
    %9017 = vmatpush1.msra.mxu0 %v8991
    %9018 = vmatprep.subr.mxu0 0.0
    %9019 = vmatpush1.msra.mxu0 %v8992
    %9020 = vmatprep.subr.mxu0 0.0
    %9021 = vmatpush1.msra.mxu0 %v8993
    %9022 = vmatprep.subr.mxu0 0.0
    %9023 = vmatpush1.msra.mxu0 %v8994
    %9024 = vmatprep.subr.mxu0 0.0
    %9025 = vmatpush1.msra.mxu0 %v8995
    %9026 = vmatprep.subr.mxu0 0.0
    %9027 = vmatpush1.msra.mxu0 %v8996
    %9028 = vmatprep.subr.mxu0 0.0
    %9029 = vmatpush1.msra.mxu0 %v8997
    %9030 = vmatprep.subr.mxu0 0.0
    %9031 = vmatpush1.msra.mxu0 0.0
    %9032 = vmatprep.subr.mxu0 0.0
    %9033 = vmatpush1.msra.mxu0 0.0
    %9034 = vmatprep.subr.mxu0 0.0
    %9035 = vmatpush1.msra.mxu0 0.0
    %9036 = vmatprep.subr.mxu0 0.0
    %9037 = vmatpush1.msra.mxu0 0.0
    %9038 = vmatprep.subr.mxu0 0.0
    %9039 = vmatpush1.msra.mxu0 0.0
    %9040 = vmatprep.subr.mxu0 0.0
    %9041 = vmatpush1.msra.mxu0 0.0
    %9042 = vmatprep.subr.mxu0 0.0
    %9043 = vmatpush1.msra.mxu0 0.0
    %9044 = vmatprep.subr.mxu0 0.0
    %9045 = vmatpush1.msra.mxu0 0.0
    %9046 = vmatprep.subr.mxu0 0.0
    %9047 = vmatpush1.msra.mxu0 0.0
    %9048 = vmatprep.subr.mxu0 0.0
    %9049 = vmatpush1.msra.mxu0 0.0
    %9050 = vmatprep.subr.mxu0 0.0
    %9051 = vmatpush1.msra.mxu0 0.0
    %9052 = vmatprep.subr.mxu0 0.0
    %9053 = vmatpush1.msra.mxu0 0.0
    %9054 = vmatprep.subr.mxu0 0.0
    %9055 = vmatpush1.msra.mxu0 0.0
    %9056 = vmatprep.subr.mxu0 0.0
    %9057 = vmatpush1.msra.mxu0 0.0
    %9058 = vmatprep.subr.mxu0 0.0
    %9059 = vmatpush1.msra.mxu0 0.0
    %9060 = vmatprep.subr.mxu0 0.0
    %9061 = vmatpush1.msra.mxu0 0.0
    %9062 = vmatprep.mubr.f32.mxu0 0.0
    %9063 = vmatmul.mubr.f32.gmra.mrb[0].mxu0 %v8978
    %v9064 = vpop.f32.mrb[0].mxu0
    %v9065 = vadd.f32 0.0, %v9064
    %v9066 = vpop.f32.mrb[0].mxu0
    %9067 = vdwg.mxu0
    %v9068 = vadd.f32 %v8905, %v9065
    %s9069 = scalar_lea.vmem [#allocation8], 8
    %v9070 = vld [vmem:[%s9069] sm:$0x3]
    %v9072 = vsel %vm8420, %v9070, 0
    %9074 = vmatprep.subr.mxu0 0.0
    %9075 = vmatpush1.msra.mxu0 %v8418
    %9076 = vmatprep.subr.mxu0 0.0
    %9077 = vmatpush1.msra.mxu0 0.0
    %9078 = vmatprep.subr.mxu0 0.0
    %9079 = vmatpush1.msra.mxu0 0.0
    %9080 = vmatprep.subr.mxu0 0.0
    %9081 = vmatpush1.msra.mxu0 0.0
    %9082 = vmatprep.subr.mxu0 0.0
    %9083 = vmatpush1.msra.mxu0 0.0
    %9084 = vmatprep.subr.mxu0 0.0
    %9085 = vmatpush1.msra.mxu0 0.0
    %9086 = vmatprep.subr.mxu0 0.0
    %9087 = vmatpush1.msra.mxu0 0.0
    %9088 = vmatprep.subr.mxu0 0.0
    %9089 = vmatpush1.msra.mxu0 0.0
    %9090 = vmatprep.subr.mxu0 0.0
    %9091 = vmatpush1.msra.mxu0 0.0
    %9092 = vmatprep.subr.mxu0 0.0
    %9093 = vmatpush1.msra.mxu0 0.0
    %9094 = vmatprep.subr.mxu0 0.0
    %9095 = vmatpush1.msra.mxu0 0.0
    %9096 = vmatprep.subr.mxu0 0.0
    %9097 = vmatpush1.msra.mxu0 0.0
    %9098 = vmatprep.subr.mxu0 0.0
    %9099 = vmatpush1.msra.mxu0 0.0
    %9100 = vmatprep.subr.mxu0 0.0
    %9101 = vmatpush1.msra.mxu0 0.0
    %9102 = vmatprep.subr.mxu0 0.0
    %9103 = vmatpush1.msra.mxu0 0.0
    %9104 = vmatprep.subr.mxu0 0.0
    %9105 = vmatpush1.msra.mxu0 0.0
    %9106 = vmatprep.subr.mxu0 0.0
    %9107 = vmatpush1.msra.mxu0 0.0
    %9108 = vmatprep.subr.mxu0 0.0
    %9109 = vmatpush1.msra.mxu0 0.0
    %9110 = vmatprep.subr.mxu0 0.0
    %9111 = vmatpush1.msra.mxu0 0.0
    %9112 = vmatprep.subr.mxu0 0.0
    %9113 = vmatpush1.msra.mxu0 0.0
    %9114 = vmatprep.subr.mxu0 0.0
    %9115 = vmatpush1.msra.mxu0 0.0
    %9116 = vmatprep.subr.mxu0 0.0
    %9117 = vmatpush1.msra.mxu0 0.0
    %9118 = vmatprep.subr.mxu0 0.0
    %9119 = vmatpush1.msra.mxu0 0.0
    %9120 = vmatprep.subr.mxu0 0.0
    %9121 = vmatpush1.msra.mxu0 0.0
    %9122 = vmatprep.subr.mxu0 0.0
    %9123 = vmatpush1.msra.mxu0 0.0
    %9124 = vmatprep.subr.mxu0 0.0
    %9125 = vmatpush1.msra.mxu0 0.0
    %9126 = vmatprep.subr.mxu0 0.0
    %9127 = vmatpush1.msra.mxu0 0.0
    %9128 = vmatprep.subr.mxu0 0.0
    %9129 = vmatpush1.msra.mxu0 0.0
    %9130 = vmatprep.subr.mxu0 0.0
    %9131 = vmatpush1.msra.mxu0 0.0
    %9132 = vmatprep.subr.mxu0 0.0
    %9133 = vmatpush1.msra.mxu0 0.0
    %9134 = vmatprep.subr.mxu0 0.0
    %9135 = vmatpush1.msra.mxu0 0.0
    %9136 = vmatprep.subr.mxu0 0.0
    %9137 = vmatpush1.msra.mxu0 0.0
    %9138 = vmatprep.mubr.f32.mxu0 0.0
    %9139 = vmatmul.mubr.f32.gmra.mrb[0].mxu0 %v9072
    %v9140 = vpop.f32.mrb[0].mxu0
    %v9141 = vadd.f32 0.0, %v9140
    %v9142 = vpop.f32.mrb[0].mxu0
    %9143 = vdwg.mxu0
    %s9144 = scalar_lea.vmem [#allocation10], 3968
    %v9145 = vld [vmem:[%s9144] sm:$0xff]
    %v9146 = vld [vmem:[%s9144 + $0x8] sm:$0xff]
    %v9147 = vld [vmem:[%s9144 + $0x10] sm:$0xff]
    %v9148 = vld [vmem:[%s9144 + $0x18] sm:$0xff]
    %v9149 = vld [vmem:[%s9144 + $0x20] sm:$0xff]
    %v9150 = vld [vmem:[%s9144 + $0x28] sm:$0xff]
    %v9151 = vld [vmem:[%s9144 + $0x30] sm:$0xff]
    %v9152 = vld [vmem:[%s9144 + $0x38] sm:$0xff]
    %v9153 = vld [vmem:[%s9144 + $0x40] sm:$0xff]
    %v9154 = vld [vmem:[%s9144 + $0x48] sm:$0xff]
    %v9155 = vld [vmem:[%s9144 + $0x50] sm:$0xff]
    %v9156 = vld [vmem:[%s9144 + $0x58] sm:$0xff]
    %v9157 = vld [vmem:[%s9144 + $0x60] sm:$0xff]
    %v9158 = vld [vmem:[%s9144 + $0x68] sm:$0xff]
    %v9159 = vld [vmem:[%s9144 + $0x70] sm:$0xff]
    %v9160 = vld [vmem:[%s9144 + $0x78] sm:$0xff]
    %9161 = vmatprep.subr.mxu0 0.0
    %9162 = vmatpush1.msra.mxu0 %v9145
    %9163 = vmatprep.subr.mxu0 0.0
    %9164 = vmatpush1.msra.mxu0 %v9146
    %9165 = vmatprep.subr.mxu0 0.0
    %9166 = vmatpush1.msra.mxu0 %v9147
    %9167 = vmatprep.subr.mxu0 0.0
    %9168 = vmatpush1.msra.mxu0 %v9148
    %9169 = vmatprep.subr.mxu0 0.0
    %9170 = vmatpush1.msra.mxu0 %v9149
    %9171 = vmatprep.subr.mxu0 0.0
    %9172 = vmatpush1.msra.mxu0 %v9150
    %9173 = vmatprep.subr.mxu0 0.0
    %9174 = vmatpush1.msra.mxu0 %v9151
    %9175 = vmatprep.subr.mxu0 0.0
    %9176 = vmatpush1.msra.mxu0 %v9152
    %9177 = vmatprep.subr.mxu0 0.0
    %9178 = vmatpush1.msra.mxu0 %v9153
    %9179 = vmatprep.subr.mxu0 0.0
    %9180 = vmatpush1.msra.mxu0 %v9154
    %9181 = vmatprep.subr.mxu0 0.0
    %9182 = vmatpush1.msra.mxu0 %v9155
    %9183 = vmatprep.subr.mxu0 0.0
    %9184 = vmatpush1.msra.mxu0 %v9156
    %9185 = vmatprep.subr.mxu0 0.0
    %9186 = vmatpush1.msra.mxu0 %v9157
    %9187 = vmatprep.subr.mxu0 0.0
    %9188 = vmatpush1.msra.mxu0 %v9158
    %9189 = vmatprep.subr.mxu0 0.0
    %9190 = vmatpush1.msra.mxu0 %v9159
    %9191 = vmatprep.subr.mxu0 0.0
    %9192 = vmatpush1.msra.mxu0 %v9160
    %9193 = vmatprep.subr.mxu0 0.0
    %9194 = vmatpush1.msra.mxu0 0.0
    %9195 = vmatprep.subr.mxu0 0.0
    %9196 = vmatpush1.msra.mxu0 0.0
    %9197 = vmatprep.subr.mxu0 0.0
    %9198 = vmatpush1.msra.mxu0 0.0
    %9199 = vmatprep.subr.mxu0 0.0
    %9200 = vmatpush1.msra.mxu0 0.0
    %9201 = vmatprep.subr.mxu0 0.0
    %9202 = vmatpush1.msra.mxu0 0.0
    %9203 = vmatprep.subr.mxu0 0.0
    %9204 = vmatpush1.msra.mxu0 0.0
    %9205 = vmatprep.subr.mxu0 0.0
    %9206 = vmatpush1.msra.mxu0 0.0
    %9207 = vmatprep.subr.mxu0 0.0
    %9208 = vmatpush1.msra.mxu0 0.0
    %9209 = vmatprep.subr.mxu0 0.0
    %9210 = vmatpush1.msra.mxu0 0.0
    %9211 = vmatprep.subr.mxu0 0.0
    %9212 = vmatpush1.msra.mxu0 0.0
    %9213 = vmatprep.subr.mxu0 0.0
    %9214 = vmatpush1.msra.mxu0 0.0
    %9215 = vmatprep.subr.mxu0 0.0
    %9216 = vmatpush1.msra.mxu0 0.0
    %9217 = vmatprep.subr.mxu0 0.0
    %9218 = vmatpush1.msra.mxu0 0.0
    %9219 = vmatprep.subr.mxu0 0.0
    %9220 = vmatpush1.msra.mxu0 0.0
    %9221 = vmatprep.subr.mxu0 0.0
    %9222 = vmatpush1.msra.mxu0 0.0
    %9223 = vmatprep.subr.mxu0 0.0
    %9224 = vmatpush1.msra.mxu0 0.0
    %9225 = vmatprep.mubr.f32.mxu0 0.0
    %9226 = vmatmul.mubr.f32.gmra.mrb[0].mxu0 %v9141
    %v9227 = vpop.f32.mrb[0].mxu0
    %v9228 = vadd.f32 0.0, %v9227
    %v9229 = vpop.f32.mrb[0].mxu0
    %9230 = vdwg.mxu0
    %v9231 = vadd.f32 %v9068, %v9228
    %s9232 = scalar_lea.vmem [#allocation8], 10
    %v9233 = vld [vmem:[%s9232] sm:$0x3]
    %v9235 = vsel %vm8420, %v9233, 0
    %9237 = vmatprep.subr.mxu0 0.0
    %9238 = vmatpush1.msra.mxu0 %v8418
    %9239 = vmatprep.subr.mxu0 0.0
    %9240 = vmatpush1.msra.mxu0 0.0
    %9241 = vmatprep.subr.mxu0 0.0
    %9242 = vmatpush1.msra.mxu0 0.0
    %9243 = vmatprep.subr.mxu0 0.0
    %9244 = vmatpush1.msra.mxu0 0.0
    %9245 = vmatprep.subr.mxu0 0.0
    %9246 = vmatpush1.msra.mxu0 0.0
    %9247 = vmatprep.subr.mxu0 0.0
    %9248 = vmatpush1.msra.mxu0 0.0
    %9249 = vmatprep.subr.mxu0 0.0
    %9250 = vmatpush1.msra.mxu0 0.0
    %9251 = vmatprep.subr.mxu0 0.0
    %9252 = vmatpush1.msra.mxu0 0.0
    %9253 = vmatprep.subr.mxu0 0.0
    %9254 = vmatpush1.msra.mxu0 0.0
    %9255 = vmatprep.subr.mxu0 0.0
    %9256 = vmatpush1.msra.mxu0 0.0
    %9257 = vmatprep.subr.mxu0 0.0
    %9258 = vmatpush1.msra.mxu0 0.0
    %9259 = vmatprep.subr.mxu0 0.0
    %9260 = vmatpush1.msra.mxu0 0.0
    %9261 = vmatprep.subr.mxu0 0.0
    %9262 = vmatpush1.msra.mxu0 0.0
    %9263 = vmatprep.subr.mxu0 0.0
    %9264 = vmatpush1.msra.mxu0 0.0
    %9265 = vmatprep.subr.mxu0 0.0
    %9266 = vmatpush1.msra.mxu0 0.0
    %9267 = vmatprep.subr.mxu0 0.0
    %9268 = vmatpush1.msra.mxu0 0.0
    %9269 = vmatprep.subr.mxu0 0.0
    %9270 = vmatpush1.msra.mxu0 0.0
    %9271 = vmatprep.subr.mxu0 0.0
    %9272 = vmatpush1.msra.mxu0 0.0
    %9273 = vmatprep.subr.mxu0 0.0
    %9274 = vmatpush1.msra.mxu0 0.0
    %9275 = vmatprep.subr.mxu0 0.0
    %9276 = vmatpush1.msra.mxu0 0.0
    %9277 = vmatprep.subr.mxu0 0.0
    %9278 = vmatpush1.msra.mxu0 0.0
    %9279 = vmatprep.subr.mxu0 0.0
    %9280 = vmatpush1.msra.mxu0 0.0
    %9281 = vmatprep.subr.mxu0 0.0
    %9282 = vmatpush1.msra.mxu0 0.0
    %9283 = vmatprep.subr.mxu0 0.0
    %9284 = vmatpush1.msra.mxu0 0.0
    %9285 = vmatprep.subr.mxu0 0.0
    %9286 = vmatpush1.msra.mxu0 0.0
    %9287 = vmatprep.subr.mxu0 0.0
    %9288 = vmatpush1.msra.mxu0 0.0
    %9289 = vmatprep.subr.mxu0 0.0
    %9290 = vmatpush1.msra.mxu0 0.0
    %9291 = vmatprep.subr.mxu0 0.0
    %9292 = vmatpush1.msra.mxu0 0.0
    %9293 = vmatprep.subr.mxu0 0.0
    %9294 = vmatpush1.msra.mxu0 0.0
    %9295 = vmatprep.subr.mxu0 0.0
    %9296 = vmatpush1.msra.mxu0 0.0
    %9297 = vmatprep.subr.mxu0 0.0
    %9298 = vmatpush1.msra.mxu0 0.0
    %9299 = vmatprep.subr.mxu0 0.0
    %9300 = vmatpush1.msra.mxu0 0.0
    %9301 = vmatprep.mubr.f32.mxu0 0.0
    %9302 = vmatmul.mubr.f32.gmra.mrb[0].mxu0 %v9235
    %v9303 = vpop.f32.mrb[0].mxu0
    %v9304 = vadd.f32 0.0, %v9303
    %v9305 = vpop.f32.mrb[0].mxu0
    %9306 = vdwg.mxu0
    %s9307 = scalar_lea.vmem [#allocation10], 4096
    %v9308 = vld [vmem:[%s9307] sm:$0xff]
    %v9309 = vld [vmem:[%s9307 + $0x8] sm:$0xff]
    %v9310 = vld [vmem:[%s9307 + $0x10] sm:$0xff]
    %v9311 = vld [vmem:[%s9307 + $0x18] sm:$0xff]
    %v9312 = vld [vmem:[%s9307 + $0x20] sm:$0xff]
    %v9313 = vld [vmem:[%s9307 + $0x28] sm:$0xff]
    %v9314 = vld [vmem:[%s9307 + $0x30] sm:$0xff]
    %v9315 = vld [vmem:[%s9307 + $0x38] sm:$0xff]
    %v9316 = vld [vmem:[%s9307 + $0x40] sm:$0xff]
    %v9317 = vld [vmem:[%s9307 + $0x48] sm:$0xff]
    %v9318 = vld [vmem:[%s9307 + $0x50] sm:$0xff]
    %v9319 = vld [vmem:[%s9307 + $0x58] sm:$0xff]
    %v9320 = vld [vmem:[%s9307 + $0x60] sm:$0xff]
    %v9321 = vld [vmem:[%s9307 + $0x68] sm:$0xff]
    %v9322 = vld [vmem:[%s9307 + $0x70] sm:$0xff]
    %v9323 = vld [vmem:[%s9307 + $0x78] sm:$0xff]
    %9324 = vmatprep.subr.mxu0 0.0
    %9325 = vmatpush1.msra.mxu0 %v9308
    %9326 = vmatprep.subr.mxu0 0.0
    %9327 = vmatpush1.msra.mxu0 %v9309
    %9328 = vmatprep.subr.mxu0 0.0
    %9329 = vmatpush1.msra.mxu0 %v9310
    %9330 = vmatprep.subr.mxu0 0.0
    %9331 = vmatpush1.msra.mxu0 %v9311
    %9332 = vmatprep.subr.mxu0 0.0
    %9333 = vmatpush1.msra.mxu0 %v9312
    %9334 = vmatprep.subr.mxu0 0.0
    %9335 = vmatpush1.msra.mxu0 %v9313
    %9336 = vmatprep.subr.mxu0 0.0
    %9337 = vmatpush1.msra.mxu0 %v9314
    %9338 = vmatprep.subr.mxu0 0.0
    %9339 = vmatpush1.msra.mxu0 %v9315
    %9340 = vmatprep.subr.mxu0 0.0
    %9341 = vmatpush1.msra.mxu0 %v9316
    %9342 = vmatprep.subr.mxu0 0.0
    %9343 = vmatpush1.msra.mxu0 %v9317
    %9344 = vmatprep.subr.mxu0 0.0
    %9345 = vmatpush1.msra.mxu0 %v9318
    %9346 = vmatprep.subr.mxu0 0.0
    %9347 = vmatpush1.msra.mxu0 %v9319
    %9348 = vmatprep.subr.mxu0 0.0
    %9349 = vmatpush1.msra.mxu0 %v9320
    %9350 = vmatprep.subr.mxu0 0.0
    %9351 = vmatpush1.msra.mxu0 %v9321
    %9352 = vmatprep.subr.mxu0 0.0
    %9353 = vmatpush1.msra.mxu0 %v9322
    %9354 = vmatprep.subr.mxu0 0.0
    %9355 = vmatpush1.msra.mxu0 %v9323
    %9356 = vmatprep.subr.mxu0 0.0
    %9357 = vmatpush1.msra.mxu0 0.0
    %9358 = vmatprep.subr.mxu0 0.0
    %9359 = vmatpush1.msra.mxu0 0.0
    %9360 = vmatprep.subr.mxu0 0.0
    %9361 = vmatpush1.msra.mxu0 0.0
    %9362 = vmatprep.subr.mxu0 0.0
    %9363 = vmatpush1.msra.mxu0 0.0
    %9364 = vmatprep.subr.mxu0 0.0
    %9365 = vmatpush1.msra.mxu0 0.0
    %9366 = vmatprep.subr.mxu0 0.0
    %9367 = vmatpush1.msra.mxu0 0.0
    %9368 = vmatprep.subr.mxu0 0.0
    %9369 = vmatpush1.msra.mxu0 0.0
    %9370 = vmatprep.subr.mxu0 0.0
    %9371 = vmatpush1.msra.mxu0 0.0
    %9372 = vmatprep.subr.mxu0 0.0
    %9373 = vmatpush1.msra.mxu0 0.0
    %9374 = vmatprep.subr.mxu0 0.0
    %9375 = vmatpush1.msra.mxu0 0.0
    %9376 = vmatprep.subr.mxu0 0.0
    %9377 = vmatpush1.msra.mxu0 0.0
    %9378 = vmatprep.subr.mxu0 0.0
    %9379 = vmatpush1.msra.mxu0 0.0
    %9380 = vmatprep.subr.mxu0 0.0
    %9381 = vmatpush1.msra.mxu0 0.0
    %9382 = vmatprep.subr.mxu0 0.0
    %9383 = vmatpush1.msra.mxu0 0.0
    %9384 = vmatprep.subr.mxu0 0.0
    %9385 = vmatpush1.msra.mxu0 0.0
    %9386 = vmatprep.subr.mxu0 0.0
    %9387 = vmatpush1.msra.mxu0 0.0
    %9388 = vmatprep.mubr.f32.mxu0 0.0
    %9389 = vmatmul.mubr.f32.gmra.mrb[0].mxu0 %v9304
    %v9390 = vpop.f32.mrb[0].mxu0
    %v9391 = vadd.f32 0.0, %v9390
    %v9392 = vpop.f32.mrb[0].mxu0
    %9393 = vdwg.mxu0
    %v9394 = vadd.f32 %v9231, %v9391
    %s9395 = scalar_lea.vmem [#allocation8], 12
    %v9396 = vld [vmem:[%s9395] sm:$0x3]
    %v9398 = vsel %vm8420, %v9396, 0
    %9400 = vmatprep.subr.mxu0 0.0
    %9401 = vmatpush1.msra.mxu0 %v8418
    %9402 = vmatprep.subr.mxu0 0.0
    %9403 = vmatpush1.msra.mxu0 0.0
    %9404 = vmatprep.subr.mxu0 0.0
    %9405 = vmatpush1.msra.mxu0 0.0
    %9406 = vmatprep.subr.mxu0 0.0
    %9407 = vmatpush1.msra.mxu0 0.0
    %9408 = vmatprep.subr.mxu0 0.0
    %9409 = vmatpush1.msra.mxu0 0.0
    %9410 = vmatprep.subr.mxu0 0.0
    %9411 = vmatpush1.msra.mxu0 0.0
    %9412 = vmatprep.subr.mxu0 0.0
    %9413 = vmatpush1.msra.mxu0 0.0
    %9414 = vmatprep.subr.mxu0 0.0
    %9415 = vmatpush1.msra.mxu0 0.0
    %9416 = vmatprep.subr.mxu0 0.0
    %9417 = vmatpush1.msra.mxu0 0.0
    %9418 = vmatprep.subr.mxu0 0.0
    %9419 = vmatpush1.msra.mxu0 0.0
    %9420 = vmatprep.subr.mxu0 0.0
    %9421 = vmatpush1.msra.mxu0 0.0
    %9422 = vmatprep.subr.mxu0 0.0
    %9423 = vmatpush1.msra.mxu0 0.0
    %9424 = vmatprep.subr.mxu0 0.0
    %9425 = vmatpush1.msra.mxu0 0.0
    %9426 = vmatprep.subr.mxu0 0.0
    %9427 = vmatpush1.msra.mxu0 0.0
    %9428 = vmatprep.subr.mxu0 0.0
    %9429 = vmatpush1.msra.mxu0 0.0
    %9430 = vmatprep.subr.mxu0 0.0
    %9431 = vmatpush1.msra.mxu0 0.0
    %9432 = vmatprep.subr.mxu0 0.0
    %9433 = vmatpush1.msra.mxu0 0.0
    %9434 = vmatprep.subr.mxu0 0.0
    %9435 = vmatpush1.msra.mxu0 0.0
    %9436 = vmatprep.subr.mxu0 0.0
    %9437 = vmatpush1.msra.mxu0 0.0
    %9438 = vmatprep.subr.mxu0 0.0
    %9439 = vmatpush1.msra.mxu0 0.0
    %9440 = vmatprep.subr.mxu0 0.0
    %9441 = vmatpush1.msra.mxu0 0.0
    %9442 = vmatprep.subr.mxu0 0.0
    %9443 = vmatpush1.msra.mxu0 0.0
    %9444 = vmatprep.subr.mxu0 0.0
    %9445 = vmatpush1.msra.mxu0 0.0
    %9446 = vmatprep.subr.mxu0 0.0
    %9447 = vmatpush1.msra.mxu0 0.0
    %9448 = vmatprep.subr.mxu0 0.0
    %9449 = vmatpush1.msra.mxu0 0.0
    %9450 = vmatprep.subr.mxu0 0.0
    %9451 = vmatpush1.msra.mxu0 0.0
    %9452 = vmatprep.subr.mxu0 0.0
    %9453 = vmatpush1.msra.mxu0 0.0
    %9454 = vmatprep.subr.mxu0 0.0
    %9455 = vmatpush1.msra.mxu0 0.0
    %9456 = vmatprep.subr.mxu0 0.0
    %9457 = vmatpush1.msra.mxu0 0.0
    %9458 = vmatprep.subr.mxu0 0.0
    %9459 = vmatpush1.msra.mxu0 0.0
    %9460 = vmatprep.subr.mxu0 0.0
    %9461 = vmatpush1.msra.mxu0 0.0
    %9462 = vmatprep.subr.mxu0 0.0
    %9463 = vmatpush1.msra.mxu0 0.0
    %9464 = vmatprep.mubr.f32.mxu0 0.0
    %9465 = vmatmul.mubr.f32.gmra.mrb[0].mxu0 %v9398
    %v9466 = vpop.f32.mrb[0].mxu0
    %v9467 = vadd.f32 0.0, %v9466
    %v9468 = vpop.f32.mrb[0].mxu0
    %9469 = vdwg.mxu0
    %s9470 = scalar_lea.vmem [#allocation10], 4224
    %v9471 = vld [vmem:[%s9470] sm:$0xff]
    %v9472 = vld [vmem:[%s9470 + $0x8] sm:$0xff]
    %v9473 = vld [vmem:[%s9470 + $0x10] sm:$0xff]
    %v9474 = vld [vmem:[%s9470 + $0x18] sm:$0xff]
    %v9475 = vld [vmem:[%s9470 + $0x20] sm:$0xff]
    %v9476 = vld [vmem:[%s9470 + $0x28] sm:$0xff]
    %v9477 = vld [vmem:[%s9470 + $0x30] sm:$0xff]
    %v9478 = vld [vmem:[%s9470 + $0x38] sm:$0xff]
    %v9479 = vld [vmem:[%s9470 + $0x40] sm:$0xff]
    %v9480 = vld [vmem:[%s9470 + $0x48] sm:$0xff]
    %v9481 = vld [vmem:[%s9470 + $0x50] sm:$0xff]
    %v9482 = vld [vmem:[%s9470 + $0x58] sm:$0xff]
    %v9483 = vld [vmem:[%s9470 + $0x60] sm:$0xff]
    %v9484 = vld [vmem:[%s9470 + $0x68] sm:$0xff]
    %v9485 = vld [vmem:[%s9470 + $0x70] sm:$0xff]
    %v9486 = vld [vmem:[%s9470 + $0x78] sm:$0xff]
    %9487 = vmatprep.subr.mxu0 0.0
    %9488 = vmatpush1.msra.mxu0 %v9471
    %9489 = vmatprep.subr.mxu0 0.0
    %9490 = vmatpush1.msra.mxu0 %v9472
    %9491 = vmatprep.subr.mxu0 0.0
    %9492 = vmatpush1.msra.mxu0 %v9473
    %9493 = vmatprep.subr.mxu0 0.0
    %9494 = vmatpush1.msra.mxu0 %v9474
    %9495 = vmatprep.subr.mxu0 0.0
    %9496 = vmatpush1.msra.mxu0 %v9475
    %9497 = vmatprep.subr.mxu0 0.0
    %9498 = vmatpush1.msra.mxu0 %v9476
    %9499 = vmatprep.subr.mxu0 0.0
    %9500 = vmatpush1.msra.mxu0 %v9477
    %9501 = vmatprep.subr.mxu0 0.0
    %9502 = vmatpush1.msra.mxu0 %v9478
    %9503 = vmatprep.subr.mxu0 0.0
    %9504 = vmatpush1.msra.mxu0 %v9479
    %9505 = vmatprep.subr.mxu0 0.0
    %9506 = vmatpush1.msra.mxu0 %v9480
    %9507 = vmatprep.subr.mxu0 0.0
    %9508 = vmatpush1.msra.mxu0 %v9481
    %9509 = vmatprep.subr.mxu0 0.0
    %9510 = vmatpush1.msra.mxu0 %v9482
    %9511 = vmatprep.subr.mxu0 0.0
    %9512 = vmatpush1.msra.mxu0 %v9483
    %9513 = vmatprep.subr.mxu0 0.0
    %9514 = vmatpush1.msra.mxu0 %v9484
    %9515 = vmatprep.subr.mxu0 0.0
    %9516 = vmatpush1.msra.mxu0 %v9485
    %9517 = vmatprep.subr.mxu0 0.0
    %9518 = vmatpush1.msra.mxu0 %v9486
    %9519 = vmatprep.subr.mxu0 0.0
    %9520 = vmatpush1.msra.mxu0 0.0
    %9521 = vmatprep.subr.mxu0 0.0
    %9522 = vmatpush1.msra.mxu0 0.0
    %9523 = vmatprep.subr.mxu0 0.0
    %9524 = vmatpush1.msra.mxu0 0.0
    %9525 = vmatprep.subr.mxu0 0.0
    %9526 = vmatpush1.msra.mxu0 0.0
    %9527 = vmatprep.subr.mxu0 0.0
    %9528 = vmatpush1.msra.mxu0 0.0
    %9529 = vmatprep.subr.mxu0 0.0
    %9530 = vmatpush1.msra.mxu0 0.0
    %9531 = vmatprep.subr.mxu0 0.0
    %9532 = vmatpush1.msra.mxu0 0.0
    %9533 = vmatprep.subr.mxu0 0.0
    %9534 = vmatpush1.msra.mxu0 0.0
    %9535 = vmatprep.subr.mxu0 0.0
    %9536 = vmatpush1.msra.mxu0 0.0
    %9537 = vmatprep.subr.mxu0 0.0
    %9538 = vmatpush1.msra.mxu0 0.0
    %9539 = vmatprep.subr.mxu0 0.0
    %9540 = vmatpush1.msra.mxu0 0.0
    %9541 = vmatprep.subr.mxu0 0.0
    %9542 = vmatpush1.msra.mxu0 0.0
    %9543 = vmatprep.subr.mxu0 0.0
    %9544 = vmatpush1.msra.mxu0 0.0
    %9545 = vmatprep.subr.mxu0 0.0
    %9546 = vmatpush1.msra.mxu0 0.0
    %9547 = vmatprep.subr.mxu0 0.0
    %9548 = vmatpush1.msra.mxu0 0.0
    %9549 = vmatprep.subr.mxu0 0.0
    %9550 = vmatpush1.msra.mxu0 0.0
    %9551 = vmatprep.mubr.f32.mxu0 0.0
    %9552 = vmatmul.mubr.f32.gmra.mrb[0].mxu0 %v9467
    %v9553 = vpop.f32.mrb[0].mxu0
    %v9554 = vadd.f32 0.0, %v9553
    %v9555 = vpop.f32.mrb[0].mxu0
    %9556 = vdwg.mxu0
    %v9557 = vadd.f32 %v9394, %v9554
    %s9558 = scalar_lea.vmem [#allocation8], 14
    %v9559 = vld [vmem:[%s9558] sm:$0x3]
    %v9561 = vsel %vm8420, %v9559, 0
    %9563 = vmatprep.subr.mxu0 0.0
    %9564 = vmatpush1.msra.mxu0 %v8418
    %9565 = vmatprep.subr.mxu0 0.0
    %9566 = vmatpush1.msra.mxu0 0.0
    %9567 = vmatprep.subr.mxu0 0.0
    %9568 = vmatpush1.msra.mxu0 0.0
    %9569 = vmatprep.subr.mxu0 0.0
    %9570 = vmatpush1.msra.mxu0 0.0
    %9571 = vmatprep.subr.mxu0 0.0
    %9572 = vmatpush1.msra.mxu0 0.0
    %9573 = vmatprep.subr.mxu0 0.0
    %9574 = vmatpush1.msra.mxu0 0.0
    %9575 = vmatprep.subr.mxu0 0.0
    %9576 = vmatpush1.msra.mxu0 0.0
    %9577 = vmatprep.subr.mxu0 0.0
    %9578 = vmatpush1.msra.mxu0 0.0
    %9579 = vmatprep.subr.mxu0 0.0
    %9580 = vmatpush1.msra.mxu0 0.0
    %9581 = vmatprep.subr.mxu0 0.0
    %9582 = vmatpush1.msra.mxu0 0.0
    %9583 = vmatprep.subr.mxu0 0.0
    %9584 = vmatpush1.msra.mxu0 0.0
    %9585 = vmatprep.subr.mxu0 0.0
    %9586 = vmatpush1.msra.mxu0 0.0
    %9587 = vmatprep.subr.mxu0 0.0
    %9588 = vmatpush1.msra.mxu0 0.0
    %9589 = vmatprep.subr.mxu0 0.0
    %9590 = vmatpush1.msra.mxu0 0.0
    %9591 = vmatprep.subr.mxu0 0.0
    %9592 = vmatpush1.msra.mxu0 0.0
    %9593 = vmatprep.subr.mxu0 0.0
    %9594 = vmatpush1.msra.mxu0 0.0
    %9595 = vmatprep.subr.mxu0 0.0
    %9596 = vmatpush1.msra.mxu0 0.0
    %9597 = vmatprep.subr.mxu0 0.0
    %9598 = vmatpush1.msra.mxu0 0.0
    %9599 = vmatprep.subr.mxu0 0.0
    %9600 = vmatpush1.msra.mxu0 0.0
    %9601 = vmatprep.subr.mxu0 0.0
    %9602 = vmatpush1.msra.mxu0 0.0
    %9603 = vmatprep.subr.mxu0 0.0
    %9604 = vmatpush1.msra.mxu0 0.0
    %9605 = vmatprep.subr.mxu0 0.0
    %9606 = vmatpush1.msra.mxu0 0.0
    %9607 = vmatprep.subr.mxu0 0.0
    %9608 = vmatpush1.msra.mxu0 0.0
    %9609 = vmatprep.subr.mxu0 0.0
    %9610 = vmatpush1.msra.mxu0 0.0
    %9611 = vmatprep.subr.mxu0 0.0
    %9612 = vmatpush1.msra.mxu0 0.0
    %9613 = vmatprep.subr.mxu0 0.0
    %9614 = vmatpush1.msra.mxu0 0.0
    %9615 = vmatprep.subr.mxu0 0.0
    %9616 = vmatpush1.msra.mxu0 0.0
    %9617 = vmatprep.subr.mxu0 0.0
    %9618 = vmatpush1.msra.mxu0 0.0
    %9619 = vmatprep.subr.mxu0 0.0
    %9620 = vmatpush1.msra.mxu0 0.0
    %9621 = vmatprep.subr.mxu0 0.0
    %9622 = vmatpush1.msra.mxu0 0.0
    %9623 = vmatprep.subr.mxu0 0.0
    %9624 = vmatpush1.msra.mxu0 0.0
    %9625 = vmatprep.subr.mxu0 0.0
    %9626 = vmatpush1.msra.mxu0 0.0
    %9627 = vmatprep.mubr.f32.mxu0 0.0
    %9628 = vmatmul.mubr.f32.gmra.mrb[0].mxu0 %v9561
    %v9629 = vpop.f32.mrb[0].mxu0
    %v9630 = vadd.f32 0.0, %v9629
    %v9631 = vpop.f32.mrb[0].mxu0
    %9632 = vdwg.mxu0
    %s9633 = scalar_lea.vmem [#allocation10], 4352
    %v9634 = vld [vmem:[%s9633] sm:$0xff]
    %v9635 = vld [vmem:[%s9633 + $0x8] sm:$0xff]
    %v9636 = vld [vmem:[%s9633 + $0x10] sm:$0xff]
    %v9637 = vld [vmem:[%s9633 + $0x18] sm:$0xff]
    %v9638 = vld [vmem:[%s9633 + $0x20] sm:$0xff]
    %v9639 = vld [vmem:[%s9633 + $0x28] sm:$0xff]
    %v9640 = vld [vmem:[%s9633 + $0x30] sm:$0xff]
    %v9641 = vld [vmem:[%s9633 + $0x38] sm:$0xff]
    %v9642 = vld [vmem:[%s9633 + $0x40] sm:$0xff]
    %v9643 = vld [vmem:[%s9633 + $0x48] sm:$0xff]
    %v9644 = vld [vmem:[%s9633 + $0x50] sm:$0xff]
    %v9645 = vld [vmem:[%s9633 + $0x58] sm:$0xff]
    %v9646 = vld [vmem:[%s9633 + $0x60] sm:$0xff]
    %v9647 = vld [vmem:[%s9633 + $0x68] sm:$0xff]
    %v9648 = vld [vmem:[%s9633 + $0x70] sm:$0xff]
    %v9649 = vld [vmem:[%s9633 + $0x78] sm:$0xff]
    %9650 = vmatprep.subr.mxu0 0.0
    %9651 = vmatpush1.msra.mxu0 %v9634
    %9652 = vmatprep.subr.mxu0 0.0
    %9653 = vmatpush1.msra.mxu0 %v9635
    %9654 = vmatprep.subr.mxu0 0.0
    %9655 = vmatpush1.msra.mxu0 %v9636
    %9656 = vmatprep.subr.mxu0 0.0
    %9657 = vmatpush1.msra.mxu0 %v9637
    %9658 = vmatprep.subr.mxu0 0.0
    %9659 = vmatpush1.msra.mxu0 %v9638
    %9660 = vmatprep.subr.mxu0 0.0
    %9661 = vmatpush1.msra.mxu0 %v9639
    %9662 = vmatprep.subr.mxu0 0.0
    %9663 = vmatpush1.msra.mxu0 %v9640
    %9664 = vmatprep.subr.mxu0 0.0
    %9665 = vmatpush1.msra.mxu0 %v9641
    %9666 = vmatprep.subr.mxu0 0.0
    %9667 = vmatpush1.msra.mxu0 %v9642
    %9668 = vmatprep.subr.mxu0 0.0
    %9669 = vmatpush1.msra.mxu0 %v9643
    %9670 = vmatprep.subr.mxu0 0.0
    %9671 = vmatpush1.msra.mxu0 %v9644
    %9672 = vmatprep.subr.mxu0 0.0
    %9673 = vmatpush1.msra.mxu0 %v9645
    %9674 = vmatprep.subr.mxu0 0.0
    %9675 = vmatpush1.msra.mxu0 %v9646
    %9676 = vmatprep.subr.mxu0 0.0
    %9677 = vmatpush1.msra.mxu0 %v9647
    %9678 = vmatprep.subr.mxu0 0.0
    %9679 = vmatpush1.msra.mxu0 %v9648
    %9680 = vmatprep.subr.mxu0 0.0
    %9681 = vmatpush1.msra.mxu0 %v9649
    %9682 = vmatprep.subr.mxu0 0.0
    %9683 = vmatpush1.msra.mxu0 0.0
    %9684 = vmatprep.subr.mxu0 0.0
    %9685 = vmatpush1.msra.mxu0 0.0
    %9686 = vmatprep.subr.mxu0 0.0
    %9687 = vmatpush1.msra.mxu0 0.0
    %9688 = vmatprep.subr.mxu0 0.0
    %9689 = vmatpush1.msra.mxu0 0.0
    %9690 = vmatprep.subr.mxu0 0.0
    %9691 = vmatpush1.msra.mxu0 0.0
    %9692 = vmatprep.subr.mxu0 0.0
    %9693 = vmatpush1.msra.mxu0 0.0
    %9694 = vmatprep.subr.mxu0 0.0
    %9695 = vmatpush1.msra.mxu0 0.0
    %9696 = vmatprep.subr.mxu0 0.0
    %9697 = vmatpush1.msra.mxu0 0.0
    %9698 = vmatprep.subr.mxu0 0.0
    %9699 = vmatpush1.msra.mxu0 0.0
    %9700 = vmatprep.subr.mxu0 0.0
    %9701 = vmatpush1.msra.mxu0 0.0
    %9702 = vmatprep.subr.mxu0 0.0
    %9703 = vmatpush1.msra.mxu0 0.0
    %9704 = vmatprep.subr.mxu0 0.0
    %9705 = vmatpush1.msra.mxu0 0.0
    %9706 = vmatprep.subr.mxu0 0.0
    %9707 = vmatpush1.msra.mxu0 0.0
    %9708 = vmatprep.subr.mxu0 0.0
    %9709 = vmatpush1.msra.mxu0 0.0
    %9710 = vmatprep.subr.mxu0 0.0
    %9711 = vmatpush1.msra.mxu0 0.0
    %9712 = vmatprep.subr.mxu0 0.0
    %9713 = vmatpush1.msra.mxu0 0.0
    %9714 = vmatprep.mubr.f32.mxu0 0.0
    %9715 = vmatmul.mubr.f32.gmra.mrb[0].mxu0 %v9630
    %v9716 = vpop.f32.mrb[0].mxu0
    %v9717 = vadd.f32 0.0, %v9716
    %v9718 = vpop.f32.mrb[0].mxu0
    %9719 = vdwg.mxu0
    %v9720 = vadd.f32 %v9557, %v9717
    %s9721 = scalar_lea.vmem [#allocation8], 16
    %v9722 = vld [vmem:[%s9721] sm:$0x3]
    %v9724 = vsel %vm8420, %v9722, 0
    %9726 = vmatprep.subr.mxu0 0.0
    %9727 = vmatpush1.msra.mxu0 %v8418
    %9728 = vmatprep.subr.mxu0 0.0
    %9729 = vmatpush1.msra.mxu0 0.0
    %9730 = vmatprep.subr.mxu0 0.0
    %9731 = vmatpush1.msra.mxu0 0.0
    %9732 = vmatprep.subr.mxu0 0.0
    %9733 = vmatpush1.msra.mxu0 0.0
    %9734 = vmatprep.subr.mxu0 0.0
    %9735 = vmatpush1.msra.mxu0 0.0
    %9736 = vmatprep.subr.mxu0 0.0
    %9737 = vmatpush1.msra.mxu0 0.0
    %9738 = vmatprep.subr.mxu0 0.0
    %9739 = vmatpush1.msra.mxu0 0.0
    %9740 = vmatprep.subr.mxu0 0.0
    %9741 = vmatpush1.msra.mxu0 0.0
    %9742 = vmatprep.subr.mxu0 0.0
    %9743 = vmatpush1.msra.mxu0 0.0
    %9744 = vmatprep.subr.mxu0 0.0
    %9745 = vmatpush1.msra.mxu0 0.0
    %9746 = vmatprep.subr.mxu0 0.0
    %9747 = vmatpush1.msra.mxu0 0.0
    %9748 = vmatprep.subr.mxu0 0.0
    %9749 = vmatpush1.msra.mxu0 0.0
    %9750 = vmatprep.subr.mxu0 0.0
    %9751 = vmatpush1.msra.mxu0 0.0
    %9752 = vmatprep.subr.mxu0 0.0
    %9753 = vmatpush1.msra.mxu0 0.0
    %9754 = vmatprep.subr.mxu0 0.0
    %9755 = vmatpush1.msra.mxu0 0.0
    %9756 = vmatprep.subr.mxu0 0.0
    %9757 = vmatpush1.msra.mxu0 0.0
    %9758 = vmatprep.subr.mxu0 0.0
    %9759 = vmatpush1.msra.mxu0 0.0
    %9760 = vmatprep.subr.mxu0 0.0
    %9761 = vmatpush1.msra.mxu0 0.0
    %9762 = vmatprep.subr.mxu0 0.0
    %9763 = vmatpush1.msra.mxu0 0.0
    %9764 = vmatprep.subr.mxu0 0.0
    %9765 = vmatpush1.msra.mxu0 0.0
    %9766 = vmatprep.subr.mxu0 0.0
    %9767 = vmatpush1.msra.mxu0 0.0
    %9768 = vmatprep.subr.mxu0 0.0
    %9769 = vmatpush1.msra.mxu0 0.0
    %9770 = vmatprep.subr.mxu0 0.0
    %9771 = vmatpush1.msra.mxu0 0.0
    %9772 = vmatprep.subr.mxu0 0.0
    %9773 = vmatpush1.msra.mxu0 0.0
    %9774 = vmatprep.subr.mxu0 0.0
    %9775 = vmatpush1.msra.mxu0 0.0
    %9776 = vmatprep.subr.mxu0 0.0
    %9777 = vmatpush1.msra.mxu0 0.0
    %9778 = vmatprep.subr.mxu0 0.0
    %9779 = vmatpush1.msra.mxu0 0.0
    %9780 = vmatprep.subr.mxu0 0.0
    %9781 = vmatpush1.msra.mxu0 0.0
    %9782 = vmatprep.subr.mxu0 0.0
    %9783 = vmatpush1.msra.mxu0 0.0
    %9784 = vmatprep.subr.mxu0 0.0
    %9785 = vmatpush1.msra.mxu0 0.0
    %9786 = vmatprep.subr.mxu0 0.0
    %9787 = vmatpush1.msra.mxu0 0.0
    %9788 = vmatprep.subr.mxu0 0.0
    %9789 = vmatpush1.msra.mxu0 0.0
    %9790 = vmatprep.mubr.f32.mxu0 0.0
    %9791 = vmatmul.mubr.f32.gmra.mrb[0].mxu0 %v9724
    %v9792 = vpop.f32.mrb[0].mxu0
    %v9793 = vadd.f32 0.0, %v9792
    %v9794 = vpop.f32.mrb[0].mxu0
    %9795 = vdwg.mxu0
    %s9796 = scalar_lea.vmem [#allocation10], 4480
    %v9797 = vld [vmem:[%s9796] sm:$0xff]
    %v9798 = vld [vmem:[%s9796 + $0x8] sm:$0xff]
    %v9799 = vld [vmem:[%s9796 + $0x10] sm:$0xff]
    %v9800 = vld [vmem:[%s9796 + $0x18] sm:$0xff]
    %v9801 = vld [vmem:[%s9796 + $0x20] sm:$0xff]
    %v9802 = vld [vmem:[%s9796 + $0x28] sm:$0xff]
    %v9803 = vld [vmem:[%s9796 + $0x30] sm:$0xff]
    %v9804 = vld [vmem:[%s9796 + $0x38] sm:$0xff]
    %v9805 = vld [vmem:[%s9796 + $0x40] sm:$0xff]
    %v9806 = vld [vmem:[%s9796 + $0x48] sm:$0xff]
    %v9807 = vld [vmem:[%s9796 + $0x50] sm:$0xff]
    %v9808 = vld [vmem:[%s9796 + $0x58] sm:$0xff]
    %v9809 = vld [vmem:[%s9796 + $0x60] sm:$0xff]
    %v9810 = vld [vmem:[%s9796 + $0x68] sm:$0xff]
    %v9811 = vld [vmem:[%s9796 + $0x70] sm:$0xff]
    %v9812 = vld [vmem:[%s9796 + $0x78] sm:$0xff]
    %9813 = vmatprep.subr.mxu0 0.0
    %9814 = vmatpush1.msra.mxu0 %v9797
    %9815 = vmatprep.subr.mxu0 0.0
    %9816 = vmatpush1.msra.mxu0 %v9798
    %9817 = vmatprep.subr.mxu0 0.0
    %9818 = vmatpush1.msra.mxu0 %v9799
    %9819 = vmatprep.subr.mxu0 0.0
    %9820 = vmatpush1.msra.mxu0 %v9800
    %9821 = vmatprep.subr.mxu0 0.0
    %9822 = vmatpush1.msra.mxu0 %v9801
    %9823 = vmatprep.subr.mxu0 0.0
    %9824 = vmatpush1.msra.mxu0 %v9802
    %9825 = vmatprep.subr.mxu0 0.0
    %9826 = vmatpush1.msra.mxu0 %v9803
    %9827 = vmatprep.subr.mxu0 0.0
    %9828 = vmatpush1.msra.mxu0 %v9804
    %9829 = vmatprep.subr.mxu0 0.0
    %9830 = vmatpush1.msra.mxu0 %v9805
    %9831 = vmatprep.subr.mxu0 0.0
    %9832 = vmatpush1.msra.mxu0 %v9806
    %9833 = vmatprep.subr.mxu0 0.0
    %9834 = vmatpush1.msra.mxu0 %v9807
    %9835 = vmatprep.subr.mxu0 0.0
    %9836 = vmatpush1.msra.mxu0 %v9808
    %9837 = vmatprep.subr.mxu0 0.0
    %9838 = vmatpush1.msra.mxu0 %v9809
    %9839 = vmatprep.subr.mxu0 0.0
    %9840 = vmatpush1.msra.mxu0 %v9810
    %9841 = vmatprep.subr.mxu0 0.0
    %9842 = vmatpush1.msra.mxu0 %v9811
    %9843 = vmatprep.subr.mxu0 0.0
    %9844 = vmatpush1.msra.mxu0 %v9812
    %9845 = vmatprep.subr.mxu0 0.0
    %9846 = vmatpush1.msra.mxu0 0.0
    %9847 = vmatprep.subr.mxu0 0.0
    %9848 = vmatpush1.msra.mxu0 0.0
    %9849 = vmatprep.subr.mxu0 0.0
    %9850 = vmatpush1.msra.mxu0 0.0
    %9851 = vmatprep.subr.mxu0 0.0
    %9852 = vmatpush1.msra.mxu0 0.0
    %9853 = vmatprep.subr.mxu0 0.0
    %9854 = vmatpush1.msra.mxu0 0.0
    %9855 = vmatprep.subr.mxu0 0.0
    %9856 = vmatpush1.msra.mxu0 0.0
    %9857 = vmatprep.subr.mxu0 0.0
    %9858 = vmatpush1.msra.mxu0 0.0
    %9859 = vmatprep.subr.mxu0 0.0
    %9860 = vmatpush1.msra.mxu0 0.0
    %9861 = vmatprep.subr.mxu0 0.0
    %9862 = vmatpush1.msra.mxu0 0.0
    %9863 = vmatprep.subr.mxu0 0.0
    %9864 = vmatpush1.msra.mxu0 0.0
    %9865 = vmatprep.subr.mxu0 0.0
    %9866 = vmatpush1.msra.mxu0 0.0
    %9867 = vmatprep.subr.mxu0 0.0
    %9868 = vmatpush1.msra.mxu0 0.0
    %9869 = vmatprep.subr.mxu0 0.0
    %9870 = vmatpush1.msra.mxu0 0.0
    %9871 = vmatprep.subr.mxu0 0.0
    %9872 = vmatpush1.msra.mxu0 0.0
    %9873 = vmatprep.subr.mxu0 0.0
    %9874 = vmatpush1.msra.mxu0 0.0
    %9875 = vmatprep.subr.mxu0 0.0
    %9876 = vmatpush1.msra.mxu0 0.0
    %9877 = vmatprep.mubr.f32.mxu0 0.0
    %9878 = vmatmul.mubr.f32.gmra.mrb[0].mxu0 %v9793
    %v9879 = vpop.f32.mrb[0].mxu0
    %v9880 = vadd.f32 0.0, %v9879
    %v9881 = vpop.f32.mrb[0].mxu0
    %9882 = vdwg.mxu0
    %v9883 = vadd.f32 %v9720, %v9880
    %s9884 = scalar_lea.vmem [#allocation11], 3
    %v9885 = vld [vmem:[%s9884] sm:$0x1]
    %v9887 = vlaneseq
    %v9888 = vshrl.u32 %v9887, 7
    %v9889 = vsub.s32 0, %v9888
    %v9890 = vrot.slane %v9885, %v9889
    %v9892 = vadd.f32 %v9883, %v9890
    %vm9893 = vcmp.gt.f32.partialorder %v9892, 0.0
    %v9894 = vmul.f32 %v9892, 0.2
    %v9895 = vsel %vm9893, %v9892, %v9894
    %s9896 = scalar_lea.vmem [#allocation13], 3
    %v9897 = vld [vmem:[%s9896] sm:$0x1]
    %v9899 = vlaneseq
    %v9900 = vshrl.u32 %v9899, 7
    %v9901 = vsub.s32 0, %v9900
    %v9902 = vrot.slane %v9897, %v9901
    %v9904 = vmul.f32 %v9895, %v9902
    %s9905 = scalar_lea.vmem [#allocation14], 3
    %v9906 = vld [vmem:[%s9905] sm:$0x1]
    %v9908 = vlaneseq
    %v9909 = vshrl.u32 %v9908, 7
    %v9910 = vsub.s32 0, %v9909
    %v9911 = vrot.slane %v9906, %v9910
    %v9913 = vadd.f32 %v9904, %v9911
    %v9914 = vld [vmem:[#allocation16] sm:$0xff]
    %v9915 = vld [vmem:[#allocation16 + $0x8] sm:$0xff]
    %v9916 = vld [vmem:[#allocation16 + $0x10] sm:$0xff]
    %v9917 = vld [vmem:[#allocation16 + $0x18] sm:$0xff]
    %v9918 = vld [vmem:[#allocation16 + $0x20] sm:$0xff]
    %v9919 = vld [vmem:[#allocation16 + $0x28] sm:$0xff]
    %v9920 = vld [vmem:[#allocation16 + $0x30] sm:$0xff]
    %v9921 = vld [vmem:[#allocation16 + $0x38] sm:$0xff]
    %v9922 = vld [vmem:[#allocation16 + $0x40] sm:$0xff]
    %v9923 = vld [vmem:[#allocation16 + $0x48] sm:$0xff]
    %v9924 = vld [vmem:[#allocation16 + $0x50] sm:$0xff]
    %v9925 = vld [vmem:[#allocation16 + $0x58] sm:$0xff]
    %v9926 = vld [vmem:[#allocation16 + $0x60] sm:$0xff]
    %v9927 = vld [vmem:[#allocation16 + $0x68] sm:$0xff]
    %v9928 = vld [vmem:[#allocation16 + $0x70] sm:$0xff]
    %v9929 = vld [vmem:[#allocation16 + $0x78] sm:$0xff]
    %v9930 = vld [vmem:[#allocation17] sm:$0x1]
    %v9932 = vlaneseq
    %v9933 = vshrl.u32 %v9932, 7
    %v9934 = vsub.s32 0, %v9933
    %v9935 = vrot.slane %v9930, %v9934
    %9937 = vmatprep.subr.mxu0 0.0
    %9938 = vmatpush1.msra.mxu0 %v9914
    %9939 = vmatprep.subr.mxu0 0.0
    %9940 = vmatpush1.msra.mxu0 %v9915
    %9941 = vmatprep.subr.mxu0 0.0
    %9942 = vmatpush1.msra.mxu0 %v9916
    %9943 = vmatprep.subr.mxu0 0.0
    %9944 = vmatpush1.msra.mxu0 %v9917
    %9945 = vmatprep.subr.mxu0 0.0
    %9946 = vmatpush1.msra.mxu0 %v9918
    %9947 = vmatprep.subr.mxu0 0.0
    %9948 = vmatpush1.msra.mxu0 %v9919
    %9949 = vmatprep.subr.mxu0 0.0
    %9950 = vmatpush1.msra.mxu0 %v9920
    %9951 = vmatprep.subr.mxu0 0.0
    %9952 = vmatpush1.msra.mxu0 %v9921
    %9953 = vmatprep.subr.mxu0 0.0
    %9954 = vmatpush1.msra.mxu0 %v9922
    %9955 = vmatprep.subr.mxu0 0.0
    %9956 = vmatpush1.msra.mxu0 %v9923
    %9957 = vmatprep.subr.mxu0 0.0
    %9958 = vmatpush1.msra.mxu0 %v9924
    %9959 = vmatprep.subr.mxu0 0.0
    %9960 = vmatpush1.msra.mxu0 %v9925
    %9961 = vmatprep.subr.mxu0 0.0
    %9962 = vmatpush1.msra.mxu0 %v9926
    %9963 = vmatprep.subr.mxu0 0.0
    %9964 = vmatpush1.msra.mxu0 %v9927
    %9965 = vmatprep.subr.mxu0 0.0
    %9966 = vmatpush1.msra.mxu0 %v9928
    %9967 = vmatprep.subr.mxu0 0.0
    %9968 = vmatpush1.msra.mxu0 %v9929
    %9969 = vmatprep.subr.mxu0 0.0
    %9970 = vmatpush1.msra.mxu0 0.0
    %9971 = vmatprep.subr.mxu0 0.0
    %9972 = vmatpush1.msra.mxu0 0.0
    %9973 = vmatprep.subr.mxu0 0.0
    %9974 = vmatpush1.msra.mxu0 0.0
    %9975 = vmatprep.subr.mxu0 0.0
    %9976 = vmatpush1.msra.mxu0 0.0
    %9977 = vmatprep.subr.mxu0 0.0
    %9978 = vmatpush1.msra.mxu0 0.0
    %9979 = vmatprep.subr.mxu0 0.0
    %9980 = vmatpush1.msra.mxu0 0.0
    %9981 = vmatprep.subr.mxu0 0.0
    %9982 = vmatpush1.msra.mxu0 0.0
    %9983 = vmatprep.subr.mxu0 0.0
    %9984 = vmatpush1.msra.mxu0 0.0
    %9985 = vmatprep.subr.mxu0 0.0
    %9986 = vmatpush1.msra.mxu0 0.0
    %9987 = vmatprep.subr.mxu0 0.0
    %9988 = vmatpush1.msra.mxu0 0.0
    %9989 = vmatprep.subr.mxu0 0.0
    %9990 = vmatpush1.msra.mxu0 0.0
    %9991 = vmatprep.subr.mxu0 0.0
    %9992 = vmatpush1.msra.mxu0 0.0
    %9993 = vmatprep.subr.mxu0 0.0
    %9994 = vmatpush1.msra.mxu0 0.0
    %9995 = vmatprep.subr.mxu0 0.0
    %9996 = vmatpush1.msra.mxu0 0.0
    %9997 = vmatprep.subr.mxu0 0.0
    %9998 = vmatpush1.msra.mxu0 0.0
    %9999 = vmatprep.subr.mxu0 0.0
    %10000 = vmatpush1.msra.mxu0 0.0
    %10001 = vmatprep.mubr.f32.mxu0 0.0
    %10002 = vmatmul.mubr.f32.gmra.mrb[0].mxu0 %v9913
    %v10003 = vpop.f32.mrb[0].mxu0
    %v10004 = vadd.f32 %v9935, %v10003
    %v10005 = vpop.f32.mrb[0].mxu0
    %10006 = vdwg.mxu0
    %vm10007 = vcmask 74752
    %v10008 = vsel %vm10007, %v10004, -inf
    %10009 = vmax.xlane.f32.xlu0 %v10008
    %v10010 = vpop.xlane.xlu0 %10009
    %v10011 = vsub.f32 %v10004, %v10010
    %v10012 = vmul.f32 %v10011, 1.442695
    %v10013 = vpow.pop %v10012
    %v10014 = vsel %vm10007, %v10013, 0.0
    %10015 = vadd.xlane.f32.xlu0 %v10014
    %v10016 = vpop.xlane.xlu0 %10015
    %v10017 = vrcp.pop %v10016
    %v10018 = vmul.f32 %v10013, %v10017
    %10019 = vst.msk [vmem:[#allocation19] sm:$0x3] %vm10007, %v10018
    %10021 = vrot.lane.b32.xlu0 %v10004, 118
    %v10022 = vpop.permute.xlu0 %10021
    %vm10024 = vcmask 9216
    %10025 = vst.msk [vmem:[#allocation20] sm:$0x3] %vm10024, %v10022
    %10026 = vrot.lane.b32.xlu0 %v10004, 116
    %v10027 = vpop.permute.xlu0 %10026
    %vm10029 = vcmask 1024
    %10030 = vst.msk [vmem:[%s11] sm:$0x3] %vm10029, %v10027
    // Predicated region
    $region86: #{_lambda_.1} parent=1 // pred_check
      _
    $region87: #{_lambda_.1} parent=1 // pred_check_branch
      %10032 = sbr.rel (0) target = $region89
    $region88: #{_lambda_.1} parent=1 // pred_region
      _
    $region89: #{_lambda_.1} parent=1 // pred_fallthru
      _
    // Predicated region
    $region90: #{_lambda_.1} parent=1 // pred_check
      _
    $region91: #{_lambda_.1} parent=1 // pred_check_branch
      %10034 = sbr.rel (0) target = $region93
    $region92: #{_lambda_.1} parent=1 // pred_region
      %s10036 = ssub.s32 32, 32
      %10037 = vsyncadd [#allocation4], %s10036
      %s10039 = sshll.u32 [#allocation19], 4
      %s10040 = int_to_ptr.vmem [resolvable:$true] %s10039
      %10042 = dma.vmem_to_hbm [thread:$0]  %s10040, 32, %s12, [#allocation4]
    $region93: #{_lambda_.1} parent=1 // pred_fallthru
      _
    // Predicated region
    $region94: #{_lambda_.1} parent=1 // pred_check
      _
    $region95: #{_lambda_.1} parent=1 // pred_check_branch
      %10044 = sbr.rel (0) target = $region97
    $region96: #{_lambda_.1} parent=1 // pred_region
      %s10046 = ssub.s32 32, 32
      %10047 = vsyncadd [#allocation21], %s10046
      %s10049 = sshll.u32 [#allocation20], 4
      %s10050 = int_to_ptr.vmem [resolvable:$true] %s10049
      %10052 = dma.vmem_to_hbm [thread:$0]  %s10050, 32, %s13, [#allocation21]
    $region97: #{_lambda_.1} parent=1 // pred_fallthru
      _
    // Predicated region
    $region98: #{_lambda_.1} parent=1 // pred_check
      _
    $region99: #{_lambda_.1} parent=1 // pred_check_branch
      %10054 = sbr.rel (0) target = $region101
    $region100: #{_lambda_.1} parent=1 // pred_region
      _
    $region101: #{_lambda_.1} parent=1 // pred_fallthru
      _
    // Predicated region
    $region102: #{_lambda_.1} parent=1 // pred_check
      _
    $region103: #{_lambda_.1} parent=1 // pred_check_branch
      %10056 = sbr.rel (0) target = $region105
    $region104: #{_lambda_.1} parent=1 // pred_region
      %10057 = dma.done [#allocation4], 32
    $region105: #{_lambda_.1} parent=1 // pred_fallthru
      _
    // Predicated region
    $region106: #{_lambda_.1} parent=1 // pred_check
      _
    $region107: #{_lambda_.1} parent=1 // pred_check_branch
      %10059 = sbr.rel (0) target = $region109
    $region108: #{_lambda_.1} parent=1 // pred_region
      %10060 = dma.done [#allocation21], 32
    $region109: #{_lambda_.1} parent=1 // pred_fallthru
      _
    %10061 = vsyncpa [#allocation3], 1
    %10062 = vsyncpa [#allocation6], 1
    %10063 = vsyncpa [#allocation9], 1
    %10064 = vsyncpa [#allocation12], 1
    %10065 = vsyncpa [#allocation15], 1
    %10066 = vsyncpa [#allocation18], 1
    %10067 = vsyncpa [#allocation4], 1
    %10068 = vsyncpa [#allocation21], 1

</llo_original>
